<compile_context>
chip_gen: v5e
topology: v5e:2x2
jax: 0.10.0
libtpu: 0.0.40
codegen_flags: <defaults>
</compile_context>

<pallas_src>
import functools

import jax
import jax.numpy as jnp
from jax.experimental import pallas as pl
from jax.experimental.pallas import tpu as pltpu


# --------------------------- fused encoder kernel ----------------------------

def _rms(x, w):
    """T5 RMSNorm over the last axis; x (M, H) f32, w (1, H) f32."""
    var = jnp.mean(x * x, axis=-1, keepdims=True)
    return x * jax.lax.rsqrt(var + 1e-6) * w


def _encoder_kernel(h0_hbm, bias_hbm,
                    ln1_ref, wqkv_ref, wo_ref, ln2_ref, wi_ref, wo2_ref,
                    fln_ref, out_ref,
                    h_scr, bias_scr, qkv_scr,
                    *, S, nH, dk, Rt):
    b = pl.program_id(0)
    layer = pl.program_id(1)
    n_layers = pl.num_programs(1)
    hd = nH * dk
    H = h_scr.shape[-1]

    # --- layer 0: pull this batch's embedded tokens + shared bias into VMEM ---
    @pl.when(layer == 0)
    def _():
        pltpu.sync_copy(h0_hbm.at[b], h_scr)       # (S, H) f32
        pltpu.sync_copy(bias_hbm, bias_scr)        # (nH, S, S) bf16

    # ---- stage 1: fused QKV projection over all S rows (one MXU matmul) ----
    h_all = h_scr[...]                                            # (S, H) f32
    normed = _rms(h_all, ln1_ref[...])
    qkv = jnp.dot(normed.astype(jnp.bfloat16), wqkv_ref[...],
                  preferred_element_type=jnp.float32)             # (S, 3*hd)
    qkv_scr[...] = qkv.astype(jnp.bfloat16)

    # ---- stage 2: row-tiled attention + output proj + FFN ----
    def row_block(r):
        row0 = r * Rt
        if not isinstance(r, int):
            row0 = pl.multiple_of(row0, Rt)
        rows = pl.ds(row0, Rt)

        h_blk = h_scr[rows, :]                                    # (Rt, H) f32
        q_blk = qkv_scr[rows, 0:hd]                               # (Rt, hd) bf16

        # Per-head attention; output projection accumulated per head so all
        # stores stay lane-dense at width H (no concat over the dk axis).
        attn = jnp.zeros((Rt, H), jnp.float32)
        for hh in range(nH):
            qh = q_blk[:, hh * dk:(hh + 1) * dk]                  # (Rt, dk)
            kh = qkv_scr[:, hd + hh * dk: hd + (hh + 1) * dk]     # (S, dk) bf16
            vh = qkv_scr[:, 2 * hd + hh * dk: 2 * hd + (hh + 1) * dk]
            # T5: no 1/sqrt(d_kv) scaling; relative-position bias pre-softmax.
            s = jnp.einsum('qd,kd->qk', qh, kh,
                           preferred_element_type=jnp.float32)    # (Rt, S)
            s = s + bias_scr[hh, rows, :].astype(jnp.float32)
            s = s - jnp.max(s, axis=-1, keepdims=True)
            p = jnp.exp(s)
            inv_l = pl.reciprocal(jnp.sum(p, axis=-1, keepdims=True),
                                  approx=True)
            ctx = jnp.einsum('qk,kd->qd', p.astype(jnp.bfloat16), vh,
                             preferred_element_type=jnp.float32)  # (Rt, dk)
            ctx = (ctx * inv_l).astype(jnp.bfloat16)
            attn = attn + jnp.dot(ctx, wo_ref[hh * dk:(hh + 1) * dk, :],
                                  preferred_element_type=jnp.float32)

        h_blk = h_blk + attn

        # Feed-forward (DenseReluDense), rowwise -> safe to do per row block.
        normed2 = _rms(h_blk, ln2_ref[...])
        ff = jnp.dot(normed2.astype(jnp.bfloat16), wi_ref[...],
                     preferred_element_type=jnp.float32)
        ff = jnp.maximum(ff, 0.0)
        h_blk = h_blk + jnp.dot(ff.astype(jnp.bfloat16), wo2_ref[...],
                                preferred_element_type=jnp.float32)

        h_scr[rows, :] = h_blk

        # Final RMSNorm + the only activation HBM writeback, on the last layer.
        @pl.when(layer == n_layers - 1)
        def _():
            out_ref[rows, :] = _rms(h_blk, fln_ref[...]).astype(out_ref.dtype)

    n_r = S // Rt
    if n_r == 1:
        row_block(0)
    else:
        pl.loop(0, n_r)(row_block)


def _pick_row_tile(S, target=512):
    """Largest multiple-of-8 divisor of S that is <= target (or S itself)."""
    if S <= target:
        return S
    cand = [r for r in range(8, target + 1, 8) if S % r == 0]
    return max(cand) if cand else S


def _vmem_limit_bytes(S, H, nH, dk, F, Rt):
    """Explicit VMEM budget: scratch + double-buffered weights + transients."""
    hd = nH * dk
    scratch = S * H * 4 + nH * S * S * 2 + S * 3 * hd * 2
    weights = 2 * ((H * 3 * hd + hd * H + H * F + F * H) * 2 + 3 * 8 * H * 4)
    outbuf = 2 * S * H * 4
    transients = S * 3 * hd * 4 + Rt * F * 4 + 6 * Rt * H * 4 + 2 * Rt * S * 4
    est = scratch + weights + outbuf + transients
    try:
        cap = pltpu.get_tpu_info().vmem_capacity_bytes   # 128 MiB v5e/v6e, 64 MiB v7x
    except Exception:
        cap = 64 * 1024 * 1024                           # safe floor for any gen
    limit = min(int(est * 1.4), int(cap * 0.9))
    return max(limit, 32 * 1024 * 1024)


def encoder_pallas(h0, pos_bias, params, *, B, S, nH, dk, n_layers):
    """Fused encoder stack.

    h0:       (B, S, H) f32 embedded tokens.
    pos_bias: (nH, S, S) bf16 shared relative-position bias.
    Returns   (B*S, H) f32 last hidden state.
    """
    H = h0.shape[-1]
    F = params["wi"].shape[-1]
    hd = nH * dk
    Rt = _pick_row_tile(S)

    kernel = functools.partial(_encoder_kernel, S=S, nH=nH, dk=dk, Rt=Rt)

    grid_spec = pltpu.PrefetchScalarGridSpec(
        num_scalar_prefetch=0,
        grid=(B, n_layers),
        in_specs=[
            # Layer-invariant activations stay in HBM; DMA'd once at layer 0.
            pl.BlockSpec(memory_space=pl.ANY),                               # h0
            pl.BlockSpec(memory_space=pl.ANY),                               # pos bias (bf16)
            # Per-layer weights: streamed, double-buffered across the layer axis.
            pl.BlockSpec((pl.Squeezed(), 1, H), lambda b, l: (l, 0, 0)),     # ln1
            pl.BlockSpec((pl.Squeezed(), H, 3 * hd), lambda b, l: (l, 0, 0)),# wqkv
            pl.BlockSpec((pl.Squeezed(), hd, H), lambda b, l: (l, 0, 0)),    # wo
            pl.BlockSpec((pl.Squeezed(), 1, H), lambda b, l: (l, 0, 0)),     # ln2
            pl.BlockSpec((pl.Squeezed(), H, F), lambda b, l: (l, 0, 0)),     # wi
            pl.BlockSpec((pl.Squeezed(), F, H), lambda b, l: (l, 0, 0)),     # wo2
            pl.BlockSpec((1, H), lambda b, l: (0, 0)),                       # final_ln
        ],
        out_specs=pl.BlockSpec((S, H), lambda b, l: (b, 0)),
        scratch_shapes=[
            pltpu.VMEM((S, H), jnp.float32),          # resident hidden state
            pltpu.VMEM((nH, S, S), jnp.bfloat16),     # shared position bias
            pltpu.VMEM((S, 3 * hd), jnp.bfloat16),    # fused QKV activations
        ],
    )

    return pl.pallas_call(
        kernel,
        # Output kept f32 = the caller's (model) dtype, matching the module.
        out_shape=jax.ShapeDtypeStruct((B * S, H), jnp.float32),
        grid_spec=grid_spec,
        compiler_params=pltpu.CompilerParams(
            # batch axis parallel (uses both TCs on v7x); layer axis carries
            # the resident hidden state -> sequential.
            dimension_semantics=("parallel", "arbitrary"),
            vmem_limit_bytes=_vmem_limit_bytes(S, H, nH, dk, F, Rt),
        ),
    )(h0, pos_bias, params["ln1"], params["wqkv"], params["wo"],
      params["ln2"], params["wi"], params["wo2"], params["final_ln"])


# --------------------------- JAX glue (non hot-path) -------------------------

def _relative_position_bucket(relative_position, num_buckets, max_distance):
    # Bidirectional T5 bucketing.
    num_buckets = num_buckets // 2
    ret = (relative_position > 0).astype(jnp.int32) * num_buckets
    n = jnp.abs(relative_position)
    max_exact = num_buckets // 2
    is_small = n < max_exact
    n_f = jnp.maximum(n, 1).astype(jnp.float32)
    val_if_large = max_exact + (
        jnp.log(n_f / max_exact) / jnp.log(max_distance / max_exact)
        * (num_buckets - max_exact)
    ).astype(jnp.int32)
    val_if_large = jnp.minimum(val_if_large, num_buckets - 1)
    return ret + jnp.where(is_small, n, val_if_large)


def compute_position_bias(rel_bias_table, S, num_buckets, max_distance):
    ctx = jnp.arange(S)[:, None]
    mem = jnp.arange(S)[None, :]
    buckets = _relative_position_bucket(mem - ctx, num_buckets, max_distance)
    bias = rel_bias_table[buckets]            # (S, S, nH)
    return jnp.transpose(bias, (2, 0, 1))     # (nH, S, S)


def init_params(key, cfg):
    H, nH, dk, F, L = (cfg["d_model"], cfg["n_heads"], cfg["d_kv"],
                       cfg["d_ff"], cfg["n_layers"])
    hd = nH * dk

    def normal(k, shape, scale=0.02, dtype=jnp.float32):
        return (scale * jax.random.normal(k, shape)).astype(dtype)

    keys = jax.random.split(key, 6)
    return {
        "embed": normal(keys[0], (cfg["vocab"], H), 1.0),
        "rel_bias": normal(keys[1], (cfg["rel_buckets"], nH), 0.1),
        "final_ln": jnp.ones((1, H), jnp.float32),
        "ln1": jnp.ones((L, 1, H), jnp.float32),
        "ln2": jnp.ones((L, 1, H), jnp.float32),
        # MXU inputs stored in bf16 (f32 accumulation inside the kernel).
        "wqkv": normal(keys[2], (L, H, 3 * hd), dtype=jnp.bfloat16),
        "wo":   normal(keys[3], (L, hd, H), dtype=jnp.bfloat16),
        "wi":   normal(keys[4], (L, H, F), dtype=jnp.bfloat16),
        "wo2":  normal(keys[5], (L, F, H), dtype=jnp.bfloat16),
    }


def encoder_forward(params, input_ids, cfg):
    """Equivalent of Seq2SeqLMEncoderExportableModule.forward:
    returns encoder(input_ids).last_hidden_state -> (B, S, d_model) f32."""
    B, S = input_ids.shape
    H, nH, dk = cfg["d_model"], cfg["n_heads"], cfg["d_kv"]

    # Token embedding gather + shared relative-position bias (glue, not hot path).
    h0 = jnp.take(params["embed"], input_ids, axis=0)            # (B, S, H) f32
    pos_bias = compute_position_bias(params["rel_bias"], S,
                                     cfg["rel_buckets"], cfg["rel_max_dist"])

    out = encoder_pallas(h0.astype(jnp.float32),
                         pos_bias.astype(jnp.bfloat16),
                         params, B=B, S=S, nH=nH, dk=dk,
                         n_layers=cfg["n_layers"])
    return out.reshape(B, S, H)


# --------------------------------- main ---------------------------------------

if __name__ == "__main__":
    # Small but lane-dense config (H, S multiples of 128; dk=64 as in real T5).
    cfg = dict(vocab=128, d_model=256, n_heads=4, d_kv=64, d_ff=512,
               n_layers=2, rel_buckets=32, rel_max_dist=128)
    B, S = 2, 128

    key = jax.random.PRNGKey(0)
    pkey, ikey = jax.random.split(key)
    params = init_params(pkey, cfg)
    input_ids = jax.random.randint(ikey, (B, S), 0, cfg["vocab"], dtype=jnp.int32)

    fwd = jax.jit(functools.partial(encoder_forward, cfg=cfg))
    last_hidden_state = jax.block_until_ready(fwd(params, input_ids))

    assert last_hidden_state.shape == (B, S, cfg["d_model"])
    assert last_hidden_state.dtype == jnp.float32
    assert bool(jnp.all(jnp.isfinite(last_hidden_state)))
    print("KERNEL_OK")
</pallas_src>

<mosaic_0001>
module attributes {stable_mosaic.version = 11 : i64} {
  func.func @_encoder_kernel(%arg0: i32, %arg1: i32, %arg2: memref<2x128x256xf32, #tpu.memory_space<any>>, %arg3: memref<4x128x128xbf16, #tpu.memory_space<any>>, %arg4: memref<1x1x256xf32, #tpu.memory_space<vmem>>, %arg5: memref<1x256x768xbf16, #tpu.memory_space<vmem>>, %arg6: memref<1x256x256xbf16, #tpu.memory_space<vmem>>, %arg7: memref<1x1x256xf32, #tpu.memory_space<vmem>>, %arg8: memref<1x256x512xbf16, #tpu.memory_space<vmem>>, %arg9: memref<1x512x256xbf16, #tpu.memory_space<vmem>>, %arg10: memref<1x256xf32, #tpu.memory_space<vmem>>, %arg11: memref<128x256xf32, #tpu.memory_space<vmem>>, %arg12: memref<128x256xf32, #tpu.memory_space<vmem>>, %arg13: memref<4x128x128xbf16, #tpu.memory_space<vmem>>, %arg14: memref<128x768xbf16, #tpu.memory_space<vmem>>) attributes {dimension_semantics = [#tpu.dimension_semantics<parallel>, #tpu.dimension_semantics<arbitrary>], iteration_bounds = array<i64: 2, 2>, scalar_prefetch = 0 : i64, scratch_operands = 3 : i64, tpu.core_type = #tpu.core_type<tc>, window_params = [{}, {}, {transform_indices = @transform_2, window_bounds = array<i64: 1, 1, 256>}, {transform_indices = @transform_3, window_bounds = array<i64: 1, 256, 768>}, {transform_indices = @transform_4, window_bounds = array<i64: 1, 256, 256>}, {transform_indices = @transform_5, window_bounds = array<i64: 1, 1, 256>}, {transform_indices = @transform_6, window_bounds = array<i64: 1, 256, 512>}, {transform_indices = @transform_7, window_bounds = array<i64: 1, 512, 256>}, {pipeline_mode = #tpu.pipeline_mode<synchronous>, transform_indices = @transform_8, window_bounds = array<i64: 1, 256>}, {transform_indices = @transform_9, window_bounds = array<i64: 128, 256>}]} {
    %c0_i32 = arith.constant 0 : i32
    %0 = arith.cmpi eq, %arg1, %c0_i32 : i32
    %1 = arith.extui %0 : i1 to i32
    %c0_i32_0 = arith.constant 0 : i32
    %2 = arith.cmpi ne, %1, %c0_i32_0 : i32
    scf.if %2 {
      "tpu.region"() ({
        %157 = tpu.sem_alloc : memref<!tpu.dma_semaphore, #tpu.memory_space<semaphore_mem>>
        %c0_i32_82 = arith.constant 0 : i32
        %c0_i32_83 = arith.constant 0 : i32
        %158 = tpu.memref_slice %arg2[%arg0, %c0_i32_82, %c0_i32_83] : memref<2x128x256xf32, #tpu.memory_space<any>> -> memref<1x128x256xf32, #tpu.memory_space<any>>
        %159 = tpu.memref_squeeze %158 : memref<1x128x256xf32, #tpu.memory_space<any>> -> memref<128x256xf32, #tpu.memory_space<any>>
        tpu.enqueue_dma source(%159 : memref<128x256xf32, #tpu.memory_space<any>>) target(%arg12 : memref<128x256xf32, #tpu.memory_space<vmem>>) target_semaphore(%157 : memref<!tpu.dma_semaphore, #tpu.memory_space<semaphore_mem>>)
        %c0_i32_84 = arith.constant 0 : i32
        %c0_i32_85 = arith.constant 0 : i32
        %160 = tpu.memref_slice %arg2[%arg0, %c0_i32_84, %c0_i32_85] : memref<2x128x256xf32, #tpu.memory_space<any>> -> memref<1x128x256xf32, #tpu.memory_space<any>>
        %161 = tpu.memref_squeeze %160 : memref<1x128x256xf32, #tpu.memory_space<any>> -> memref<128x256xf32, #tpu.memory_space<any>>
        tpu.wait_dma2 semaphore(%157 : memref<!tpu.dma_semaphore, #tpu.memory_space<semaphore_mem>>) src(%161 : memref<128x256xf32, #tpu.memory_space<any>>) dst(%arg12 : memref<128x256xf32, #tpu.memory_space<vmem>>)
        tpu.yield
      }) : () -> ()
      "tpu.region"() ({
        %157 = tpu.sem_alloc : memref<!tpu.dma_semaphore, #tpu.memory_space<semaphore_mem>>
        tpu.enqueue_dma source(%arg3 : memref<4x128x128xbf16, #tpu.memory_space<any>>) target(%arg13 : memref<4x128x128xbf16, #tpu.memory_space<vmem>>) target_semaphore(%157 : memref<!tpu.dma_semaphore, #tpu.memory_space<semaphore_mem>>)
        tpu.wait_dma2 semaphore(%157 : memref<!tpu.dma_semaphore, #tpu.memory_space<semaphore_mem>>) src(%arg3 : memref<4x128x128xbf16, #tpu.memory_space<any>>) dst(%arg13 : memref<4x128x128xbf16, #tpu.memory_space<vmem>>)
        tpu.yield
      }) : () -> ()
    } else {
    }
    %c0 = arith.constant 0 : index
    %c0_1 = arith.constant 0 : index
    %3 = vector.load %arg12[%c0, %c0_1] : memref<128x256xf32, #tpu.memory_space<vmem>>, vector<128x256xf32>
    %c0_2 = arith.constant 0 : index
    %c0_3 = arith.constant 0 : index
    %c0_4 = arith.constant 0 : index
    %4 = vector.load %arg4[%c0_2, %c0_3, %c0_4] : memref<1x1x256xf32, #tpu.memory_space<vmem>>, vector<1x1x256xf32>
    %5 = vector.shape_cast %4 : vector<1x1x256xf32> to vector<1x256xf32>
    %6 = arith.mulf %3, %3 : vector<128x256xf32>
    %cst = arith.constant dense<0.000000e+00> : vector<128xf32>
    %7 = vector.multi_reduction <add>, %6, %cst [1] : vector<128x256xf32> to vector<128xf32>
    %8 = vector.shape_cast %7 : vector<128xf32> to vector<128x1xf32>
    %cst_5 = arith.constant 2.560000e+02 : f32
    %9 = vector.broadcast %cst_5 : f32 to vector<128x1xf32>
    %10 = arith.divf %8, %9 : vector<128x1xf32>
    %cst_6 = arith.constant 9.99999997E-7 : f32
    %11 = vector.broadcast %cst_6 : f32 to vector<128x1xf32>
    %12 = arith.addf %10, %11 : vector<128x1xf32>
    %13 = math.rsqrt %12 : vector<128x1xf32>
    %14 = vector.broadcast %13 : vector<128x1xf32> to vector<128x256xf32>
    %15 = arith.mulf %3, %14 : vector<128x256xf32>
    %16 = vector.broadcast %5 : vector<1x256xf32> to vector<128x256xf32>
    %17 = arith.mulf %15, %16 : vector<128x256xf32>
    %18 = arith.truncf %17 : vector<128x256xf32> to vector<128x256xbf16>
    %c0_7 = arith.constant 0 : index
    %c0_8 = arith.constant 0 : index
    %c0_9 = arith.constant 0 : index
    %19 = vector.load %arg5[%c0_7, %c0_8, %c0_9] : memref<1x256x768xbf16, #tpu.memory_space<vmem>>, vector<1x256x768xbf16>
    %20 = vector.shape_cast %19 : vector<1x256x768xbf16> to vector<256x768xbf16>
    %cst_10 = arith.constant dense<0.000000e+00> : vector<128x768xf32>
    %21 = tpu.matmul %18, %20, %cst_10 {dimension_numbers = #tpu.dot_dimension_numbers<[1], [0], [0], [1], [0, 0, 1, 1], [], []>} : vector<128x256xbf16>, vector<256x768xbf16>, vector<128x768xf32> -> vector<128x768xf32>
    %22 = arith.truncf %21 : vector<128x768xf32> to vector<128x768xbf16>
    %c0_11 = arith.constant 0 : index
    %c0_12 = arith.constant 0 : index
    %23 = vector.load %arg14[%c0_11, %c0_12] : memref<128x768xbf16, #tpu.memory_space<vmem>>, vector<128x768xbf16>
    tpu.vector_store %arg14[%c0_11, %c0_12], %22 {strides = array<i32>} : memref<128x768xbf16, #tpu.memory_space<vmem>>, vector<128x768xbf16>,
    %c0_13 = arith.constant 0 : index
    %c0_14 = arith.constant 0 : index
    %24 = vector.load %arg12[%c0_13, %c0_14] : memref<128x256xf32, #tpu.memory_space<vmem>>, vector<128x256xf32>
    %c0_15 = arith.constant 0 : index
    %c0_16 = arith.constant 0 : index
    %25 = vector.load %arg14[%c0_15, %c0_16] : memref<128x768xbf16, #tpu.memory_space<vmem>>, vector<128x256xbf16>
    %cst_17 = arith.constant 0.000000e+00 : f32
    %26 = vector.broadcast %cst_17 : f32 to vector<128x256xf32>
    %27 = vector.extract_strided_slice %25 {offsets = [0, 0], sizes = [128, 64], strides = [1, 1]} : vector<128x256xbf16> to vector<128x64xbf16>
    %c0_18 = arith.constant 0 : index
    %c256 = arith.constant 256 : index
    %28 = vector.load %arg14[%c0_18, %c256] : memref<128x768xbf16, #tpu.memory_space<vmem>>, vector<128x64xbf16>
    %c0_19 = arith.constant 0 : index
    %c512 = arith.constant 512 : index
    %29 = vector.load %arg14[%c0_19, %c512] : memref<128x768xbf16, #tpu.memory_space<vmem>>, vector<128x64xbf16>
    "tpu.trace_start"() <{level = 10 : i32, message = "qd,kd->qk"}> : () -> ()
    %cst_20 = arith.constant dense<0.000000e+00> : vector<128x128xf32>
    %30 = tpu.matmul %27, %28, %cst_20 {dimension_numbers = #tpu.dot_dimension_numbers<[1], [1], [0], [0], [0, 0, 1, 0], [], []>} : vector<128x64xbf16>, vector<128x64xbf16>, vector<128x128xf32> -> vector<128x128xf32>
    "tpu.trace_stop"() : () -> ()
    %c0_21 = arith.constant 0 : index
    %c0_22 = arith.constant 0 : index
    %c0_23 = arith.constant 0 : index
    %31 = vector.load %arg13[%c0_21, %c0_22, %c0_23] : memref<4x128x128xbf16, #tpu.memory_space<vmem>>, vector<1x128x128xbf16>
    %32 = vector.shape_cast %31 : vector<1x128x128xbf16> to vector<128x128xbf16>
    %33 = arith.extf %32 : vector<128x128xbf16> to vector<128x128xf32>
    %34 = arith.addf %30, %33 : vector<128x128xf32>
    %cst_24 = arith.constant dense<0xFF800000> : vector<128xf32>
    %35 = vector.multi_reduction <maximumf>, %34, %cst_24 [1] : vector<128x128xf32> to vector<128xf32>
    %36 = vector.shape_cast %35 : vector<128xf32> to vector<128x1xf32>
    %37 = vector.broadcast %36 : vector<128x1xf32> to vector<128x128xf32>
    %38 = arith.subf %34, %37 : vector<128x128xf32>
    %39 = math.exp %38 : vector<128x128xf32>
    %cst_25 = arith.constant dense<0.000000e+00> : vector<128xf32>
    %40 = vector.multi_reduction <add>, %39, %cst_25 [1] : vector<128x128xf32> to vector<128xf32>
    %41 = vector.shape_cast %40 : vector<128xf32> to vector<128x1xf32>
    %42 = tpu.reciprocal %41 {approx = true} : vector<128x1xf32> -> vector<128x1xf32>
    %43 = arith.truncf %39 : vector<128x128xf32> to vector<128x128xbf16>
    "tpu.trace_start"() <{level = 10 : i32, message = "qk,kd->qd"}> : () -> ()
    %cst_26 = arith.constant dense<0.000000e+00> : vector<128x64xf32>
    %44 = tpu.matmul %43, %29, %cst_26 {dimension_numbers = #tpu.dot_dimension_numbers<[1], [0], [0], [1], [0, 0, 1, 1], [], []>} : vector<128x128xbf16>, vector<128x64xbf16>, vector<128x64xf32> -> vector<128x64xf32>
    "tpu.trace_stop"() : () -> ()
    %45 = vector.broadcast %42 : vector<128x1xf32> to vector<128x64xf32>
    %46 = arith.mulf %44, %45 : vector<128x64xf32>
    %47 = arith.truncf %46 : vector<128x64xf32> to vector<128x64xbf16>
    %c0_27 = arith.constant 0 : index
    %c0_28 = arith.constant 0 : index
    %c0_29 = arith.constant 0 : index
    %48 = vector.load %arg6[%c0_27, %c0_28, %c0_29] : memref<1x256x256xbf16, #tpu.memory_space<vmem>>, vector<1x64x256xbf16>
    %49 = vector.shape_cast %48 : vector<1x64x256xbf16> to vector<64x256xbf16>
    %cst_30 = arith.constant dense<0.000000e+00> : vector<128x256xf32>
    %50 = tpu.matmul %47, %49, %cst_30 {dimension_numbers = #tpu.dot_dimension_numbers<[1], [0], [0], [1], [0, 0, 1, 1], [], []>} : vector<128x64xbf16>, vector<64x256xbf16>, vector<128x256xf32> -> vector<128x256xf32>
    %51 = arith.addf %26, %50 : vector<128x256xf32>
    %52 = vector.extract_strided_slice %25 {offsets = [0, 64], sizes = [128, 64], strides = [1, 1]} : vector<128x256xbf16> to vector<128x64xbf16>
    %c0_31 = arith.constant 0 : index
    %c320 = arith.constant 320 : index
    %53 = vector.load %arg14[%c0_31, %c320] : memref<128x768xbf16, #tpu.memory_space<vmem>>, vector<128x64xbf16>
    %c0_32 = arith.constant 0 : index
    %c576 = arith.constant 576 : index
    %54 = vector.load %arg14[%c0_32, %c576] : memref<128x768xbf16, #tpu.memory_space<vmem>>, vector<128x64xbf16>
    "tpu.trace_start"() <{level = 10 : i32, message = "qd,kd->qk"}> : () -> ()
    %cst_33 = arith.constant dense<0.000000e+00> : vector<128x128xf32>
    %55 = tpu.matmul %52, %53, %cst_33 {dimension_numbers = #tpu.dot_dimension_numbers<[1], [1], [0], [0], [0, 0, 1, 0], [], []>} : vector<128x64xbf16>, vector<128x64xbf16>, vector<128x128xf32> -> vector<128x128xf32>
    "tpu.trace_stop"() : () -> ()
    %c1 = arith.constant 1 : index
    %c0_34 = arith.constant 0 : index
    %c0_35 = arith.constant 0 : index
    %56 = vector.load %arg13[%c1, %c0_34, %c0_35] : memref<4x128x128xbf16, #tpu.memory_space<vmem>>, vector<1x128x128xbf16>
    %57 = vector.shape_cast %56 : vector<1x128x128xbf16> to vector<128x128xbf16>
    %58 = arith.extf %57 : vector<128x128xbf16> to vector<128x128xf32>
    %59 = arith.addf %55, %58 : vector<128x128xf32>
    %cst_36 = arith.constant dense<0xFF800000> : vector<128xf32>
    %60 = vector.multi_reduction <maximumf>, %59, %cst_36 [1] : vector<128x128xf32> to vector<128xf32>
    %61 = vector.shape_cast %60 : vector<128xf32> to vector<128x1xf32>
    %62 = vector.broadcast %61 : vector<128x1xf32> to vector<128x128xf32>
    %63 = arith.subf %59, %62 : vector<128x128xf32>
    %64 = math.exp %63 : vector<128x128xf32>
    %cst_37 = arith.constant dense<0.000000e+00> : vector<128xf32>
    %65 = vector.multi_reduction <add>, %64, %cst_37 [1] : vector<128x128xf32> to vector<128xf32>
    %66 = vector.shape_cast %65 : vector<128xf32> to vector<128x1xf32>
    %67 = tpu.reciprocal %66 {approx = true} : vector<128x1xf32> -> vector<128x1xf32>
    %68 = arith.truncf %64 : vector<128x128xf32> to vector<128x128xbf16>
    "tpu.trace_start"() <{level = 10 : i32, message = "qk,kd->qd"}> : () -> ()
    %cst_38 = arith.constant dense<0.000000e+00> : vector<128x64xf32>
    %69 = tpu.matmul %68, %54, %cst_38 {dimension_numbers = #tpu.dot_dimension_numbers<[1], [0], [0], [1], [0, 0, 1, 1], [], []>} : vector<128x128xbf16>, vector<128x64xbf16>, vector<128x64xf32> -> vector<128x64xf32>
    "tpu.trace_stop"() : () -> ()
    %70 = vector.broadcast %67 : vector<128x1xf32> to vector<128x64xf32>
    %71 = arith.mulf %69, %70 : vector<128x64xf32>
    %72 = arith.truncf %71 : vector<128x64xf32> to vector<128x64xbf16>
    %c0_39 = arith.constant 0 : index
    %c64 = arith.constant 64 : index
    %c0_40 = arith.constant 0 : index
    %73 = vector.load %arg6[%c0_39, %c64, %c0_40] : memref<1x256x256xbf16, #tpu.memory_space<vmem>>, vector<1x64x256xbf16>
    %74 = vector.shape_cast %73 : vector<1x64x256xbf16> to vector<64x256xbf16>
    %cst_41 = arith.constant dense<0.000000e+00> : vector<128x256xf32>
    %75 = tpu.matmul %72, %74, %cst_41 {dimension_numbers = #tpu.dot_dimension_numbers<[1], [0], [0], [1], [0, 0, 1, 1], [], []>} : vector<128x64xbf16>, vector<64x256xbf16>, vector<128x256xf32> -> vector<128x256xf32>
    %76 = arith.addf %51, %75 : vector<128x256xf32>
    %77 = vector.extract_strided_slice %25 {offsets = [0, 128], sizes = [128, 64], strides = [1, 1]} : vector<128x256xbf16> to vector<128x64xbf16>
    %c0_42 = arith.constant 0 : index
    %c384 = arith.constant 384 : index
    %78 = vector.load %arg14[%c0_42, %c384] : memref<128x768xbf16, #tpu.memory_space<vmem>>, vector<128x64xbf16>
    %c0_43 = arith.constant 0 : index
    %c640 = arith.constant 640 : index
    %79 = vector.load %arg14[%c0_43, %c640] : memref<128x768xbf16, #tpu.memory_space<vmem>>, vector<128x64xbf16>
    "tpu.trace_start"() <{level = 10 : i32, message = "qd,kd->qk"}> : () -> ()
    %cst_44 = arith.constant dense<0.000000e+00> : vector<128x128xf32>
    %80 = tpu.matmul %77, %78, %cst_44 {dimension_numbers = #tpu.dot_dimension_numbers<[1], [1], [0], [0], [0, 0, 1, 0], [], []>} : vector<128x64xbf16>, vector<128x64xbf16>, vector<128x128xf32> -> vector<128x128xf32>
    "tpu.trace_stop"() : () -> ()
    %c2 = arith.constant 2 : index
    %c0_45 = arith.constant 0 : index
    %c0_46 = arith.constant 0 : index
    %81 = vector.load %arg13[%c2, %c0_45, %c0_46] : memref<4x128x128xbf16, #tpu.memory_space<vmem>>, vector<1x128x128xbf16>
    %82 = vector.shape_cast %81 : vector<1x128x128xbf16> to vector<128x128xbf16>
    %83 = arith.extf %82 : vector<128x128xbf16> to vector<128x128xf32>
    %84 = arith.addf %80, %83 : vector<128x128xf32>
    %cst_47 = arith.constant dense<0xFF800000> : vector<128xf32>
    %85 = vector.multi_reduction <maximumf>, %84, %cst_47 [1] : vector<128x128xf32> to vector<128xf32>
    %86 = vector.shape_cast %85 : vector<128xf32> to vector<128x1xf32>
    %87 = vector.broadcast %86 : vector<128x1xf32> to vector<128x128xf32>
    %88 = arith.subf %84, %87 : vector<128x128xf32>
    %89 = math.exp %88 : vector<128x128xf32>
    %cst_48 = arith.constant dense<0.000000e+00> : vector<128xf32>
    %90 = vector.multi_reduction <add>, %89, %cst_48 [1] : vector<128x128xf32> to vector<128xf32>
    %91 = vector.shape_cast %90 : vector<128xf32> to vector<128x1xf32>
    %92 = tpu.reciprocal %91 {approx = true} : vector<128x1xf32> -> vector<128x1xf32>
    %93 = arith.truncf %89 : vector<128x128xf32> to vector<128x128xbf16>
    "tpu.trace_start"() <{level = 10 : i32, message = "qk,kd->qd"}> : () -> ()
    %cst_49 = arith.constant dense<0.000000e+00> : vector<128x64xf32>
    %94 = tpu.matmul %93, %79, %cst_49 {dimension_numbers = #tpu.dot_dimension_numbers<[1], [0], [0], [1], [0, 0, 1, 1], [], []>} : vector<128x128xbf16>, vector<128x64xbf16>, vector<128x64xf32> -> vector<128x64xf32>
    "tpu.trace_stop"() : () -> ()
    %95 = vector.broadcast %92 : vector<128x1xf32> to vector<128x64xf32>
    %96 = arith.mulf %94, %95 : vector<128x64xf32>
    %97 = arith.truncf %96 : vector<128x64xf32> to vector<128x64xbf16>
    %c0_50 = arith.constant 0 : index
    %c128 = arith.constant 128 : index
    %c0_51 = arith.constant 0 : index
    %98 = vector.load %arg6[%c0_50, %c128, %c0_51] : memref<1x256x256xbf16, #tpu.memory_space<vmem>>, vector<1x64x256xbf16>
    %99 = vector.shape_cast %98 : vector<1x64x256xbf16> to vector<64x256xbf16>
    %cst_52 = arith.constant dense<0.000000e+00> : vector<128x256xf32>
    %100 = tpu.matmul %97, %99, %cst_52 {dimension_numbers = #tpu.dot_dimension_numbers<[1], [0], [0], [1], [0, 0, 1, 1], [], []>} : vector<128x64xbf16>, vector<64x256xbf16>, vector<128x256xf32> -> vector<128x256xf32>
    %101 = arith.addf %76, %100 : vector<128x256xf32>
    %102 = vector.extract_strided_slice %25 {offsets = [0, 192], sizes = [128, 64], strides = [1, 1]} : vector<128x256xbf16> to vector<128x64xbf16>
    %c0_53 = arith.constant 0 : index
    %c448 = arith.constant 448 : index
    %103 = vector.load %arg14[%c0_53, %c448] : memref<128x768xbf16, #tpu.memory_space<vmem>>, vector<128x64xbf16>
    %c0_54 = arith.constant 0 : index
    %c704 = arith.constant 704 : index
    %104 = vector.load %arg14[%c0_54, %c704] : memref<128x768xbf16, #tpu.memory_space<vmem>>, vector<128x64xbf16>
    "tpu.trace_start"() <{level = 10 : i32, message = "qd,kd->qk"}> : () -> ()
    %cst_55 = arith.constant dense<0.000000e+00> : vector<128x128xf32>
    %105 = tpu.matmul %102, %103, %cst_55 {dimension_numbers = #tpu.dot_dimension_numbers<[1], [1], [0], [0], [0, 0, 1, 0], [], []>} : vector<128x64xbf16>, vector<128x64xbf16>, vector<128x128xf32> -> vector<128x128xf32>
    "tpu.trace_stop"() : () -> ()
    %c3 = arith.constant 3 : index
    %c0_56 = arith.constant 0 : index
    %c0_57 = arith.constant 0 : index
    %106 = vector.load %arg13[%c3, %c0_56, %c0_57] : memref<4x128x128xbf16, #tpu.memory_space<vmem>>, vector<1x128x128xbf16>
    %107 = vector.shape_cast %106 : vector<1x128x128xbf16> to vector<128x128xbf16>
    %108 = arith.extf %107 : vector<128x128xbf16> to vector<128x128xf32>
    %109 = arith.addf %105, %108 : vector<128x128xf32>
    %cst_58 = arith.constant dense<0xFF800000> : vector<128xf32>
    %110 = vector.multi_reduction <maximumf>, %109, %cst_58 [1] : vector<128x128xf32> to vector<128xf32>
    %111 = vector.shape_cast %110 : vector<128xf32> to vector<128x1xf32>
    %112 = vector.broadcast %111 : vector<128x1xf32> to vector<128x128xf32>
    %113 = arith.subf %109, %112 : vector<128x128xf32>
    %114 = math.exp %113 : vector<128x128xf32>
    %cst_59 = arith.constant dense<0.000000e+00> : vector<128xf32>
    %115 = vector.multi_reduction <add>, %114, %cst_59 [1] : vector<128x128xf32> to vector<128xf32>
    %116 = vector.shape_cast %115 : vector<128xf32> to vector<128x1xf32>
    %117 = tpu.reciprocal %116 {approx = true} : vector<128x1xf32> -> vector<128x1xf32>
    %118 = arith.truncf %114 : vector<128x128xf32> to vector<128x128xbf16>
    "tpu.trace_start"() <{level = 10 : i32, message = "qk,kd->qd"}> : () -> ()
    %cst_60 = arith.constant dense<0.000000e+00> : vector<128x64xf32>
    %119 = tpu.matmul %118, %104, %cst_60 {dimension_numbers = #tpu.dot_dimension_numbers<[1], [0], [0], [1], [0, 0, 1, 1], [], []>} : vector<128x128xbf16>, vector<128x64xbf16>, vector<128x64xf32> -> vector<128x64xf32>
    "tpu.trace_stop"() : () -> ()
    %120 = vector.broadcast %117 : vector<128x1xf32> to vector<128x64xf32>
    %121 = arith.mulf %119, %120 : vector<128x64xf32>
    %122 = arith.truncf %121 : vector<128x64xf32> to vector<128x64xbf16>
    %c0_61 = arith.constant 0 : index
    %c192 = arith.constant 192 : index
    %c0_62 = arith.constant 0 : index
    %123 = vector.load %arg6[%c0_61, %c192, %c0_62] : memref<1x256x256xbf16, #tpu.memory_space<vmem>>, vector<1x64x256xbf16>
    %124 = vector.shape_cast %123 : vector<1x64x256xbf16> to vector<64x256xbf16>
    %cst_63 = arith.constant dense<0.000000e+00> : vector<128x256xf32>
    %125 = tpu.matmul %122, %124, %cst_63 {dimension_numbers = #tpu.dot_dimension_numbers<[1], [0], [0], [1], [0, 0, 1, 1], [], []>} : vector<128x64xbf16>, vector<64x256xbf16>, vector<128x256xf32> -> vector<128x256xf32>
    %126 = arith.addf %101, %125 : vector<128x256xf32>
    %127 = arith.addf %24, %126 : vector<128x256xf32>
    %c0_64 = arith.constant 0 : index
    %c0_65 = arith.constant 0 : index
    %c0_66 = arith.constant 0 : index
    %128 = vector.load %arg7[%c0_64, %c0_65, %c0_66] : memref<1x1x256xf32, #tpu.memory_space<vmem>>, vector<1x1x256xf32>
    %129 = vector.shape_cast %128 : vector<1x1x256xf32> to vector<1x256xf32>
    %130 = arith.mulf %127, %127 : vector<128x256xf32>
    %cst_67 = arith.constant dense<0.000000e+00> : vector<128xf32>
    %131 = vector.multi_reduction <add>, %130, %cst_67 [1] : vector<128x256xf32> to vector<128xf32>
    %132 = vector.shape_cast %131 : vector<128xf32> to vector<128x1xf32>
    %cst_68 = arith.constant 2.560000e+02 : f32
    %133 = vector.broadcast %cst_68 : f32 to vector<128x1xf32>
    %134 = arith.divf %132, %133 : vector<128x1xf32>
    %cst_69 = arith.constant 9.99999997E-7 : f32
    %135 = vector.broadcast %cst_69 : f32 to vector<128x1xf32>
    %136 = arith.addf %134, %135 : vector<128x1xf32>
    %137 = math.rsqrt %136 : vector<128x1xf32>
    %138 = vector.broadcast %137 : vector<128x1xf32> to vector<128x256xf32>
    %139 = arith.mulf %127, %138 : vector<128x256xf32>
    %140 = vector.broadcast %129 : vector<1x256xf32> to vector<128x256xf32>
    %141 = arith.mulf %139, %140 : vector<128x256xf32>
    %142 = arith.truncf %141 : vector<128x256xf32> to vector<128x256xbf16>
    %c0_70 = arith.constant 0 : index
    %c0_71 = arith.constant 0 : index
    %c0_72 = arith.constant 0 : index
    %143 = vector.load %arg8[%c0_70, %c0_71, %c0_72] : memref<1x256x512xbf16, #tpu.memory_space<vmem>>, vector<1x256x512xbf16>
    %144 = vector.shape_cast %143 : vector<1x256x512xbf16> to vector<256x512xbf16>
    %cst_73 = arith.constant dense<0.000000e+00> : vector<128x512xf32>
    %145 = tpu.matmul %142, %144, %cst_73 {dimension_numbers = #tpu.dot_dimension_numbers<[1], [0], [0], [1], [0, 0, 1, 1], [], []>} : vector<128x256xbf16>, vector<256x512xbf16>, vector<128x512xf32> -> vector<128x512xf32>
    %cst_74 = arith.constant 0.000000e+00 : f32
    %146 = vector.broadcast %cst_74 : f32 to vector<128x512xf32>
    %147 = arith.maximumf %145, %146 : vector<128x512xf32>
    %148 = arith.truncf %147 : vector<128x512xf32> to vector<128x512xbf16>
    %c0_75 = arith.constant 0 : index
    %c0_76 = arith.constant 0 : index
    %c0_77 = arith.constant 0 : index
    %149 = vector.load %arg9[%c0_75, %c0_76, %c0_77] : memref<1x512x256xbf16, #tpu.memory_space<vmem>>, vector<1x512x256xbf16>
    %150 = vector.shape_cast %149 : vector<1x512x256xbf16> to vector<512x256xbf16>
    %cst_78 = arith.constant dense<0.000000e+00> : vector<128x256xf32>
    %151 = tpu.matmul %148, %150, %cst_78 {dimension_numbers = #tpu.dot_dimension_numbers<[1], [0], [0], [1], [0, 0, 1, 1], [], []>} : vector<128x512xbf16>, vector<512x256xbf16>, vector<128x256xf32> -> vector<128x256xf32>
    %152 = arith.addf %127, %151 : vector<128x256xf32>
    %c0_79 = arith.constant 0 : index
    %c0_80 = arith.constant 0 : index
    %153 = vector.load %arg12[%c0_79, %c0_80] : memref<128x256xf32, #tpu.memory_space<vmem>>, vector<128x256xf32>
    tpu.vector_store %arg12[%c0_79, %c0_80], %152 {strides = array<i32>} : memref<128x256xf32, #tpu.memory_space<vmem>>, vector<128x256xf32>,
    %c1_i32 = arith.constant 1 : i32
    %154 = arith.cmpi eq, %arg1, %c1_i32 : i32
    %155 = arith.extui %154 : i1 to i32
    %c0_i32_81 = arith.constant 0 : i32
    %156 = arith.cmpi ne, %155, %c0_i32_81 : i32
    scf.if %156 {
      %c0_82 = arith.constant 0 : index
      %c0_83 = arith.constant 0 : index
      %157 = vector.load %arg10[%c0_82, %c0_83] : memref<1x256xf32, #tpu.memory_space<vmem>>, vector<1x256xf32>
      %158 = arith.mulf %152, %152 : vector<128x256xf32>
      %cst_84 = arith.constant dense<0.000000e+00> : vector<128xf32>
      %159 = vector.multi_reduction <add>, %158, %cst_84 [1] : vector<128x256xf32> to vector<128xf32>
      %160 = vector.shape_cast %159 : vector<128xf32> to vector<128x1xf32>
      %cst_85 = arith.constant 2.560000e+02 : f32
      %161 = vector.broadcast %cst_85 : f32 to vector<128x1xf32>
      %162 = arith.divf %160, %161 : vector<128x1xf32>
      %cst_86 = arith.constant 9.99999997E-7 : f32
      %163 = vector.broadcast %cst_86 : f32 to vector<128x1xf32>
      %164 = arith.addf %162, %163 : vector<128x1xf32>
      %165 = math.rsqrt %164 : vector<128x1xf32>
      %166 = vector.broadcast %165 : vector<128x1xf32> to vector<128x256xf32>
      %167 = arith.mulf %152, %166 : vector<128x256xf32>
      %168 = vector.broadcast %157 : vector<1x256xf32> to vector<128x256xf32>
      %169 = arith.mulf %167, %168 : vector<128x256xf32>
      %c0_87 = arith.constant 0 : index
      %c0_88 = arith.constant 0 : index
      %170 = vector.load %arg11[%c0_87, %c0_88] : memref<128x256xf32, #tpu.memory_space<vmem>>, vector<128x256xf32>
      tpu.vector_store %arg11[%c0_87, %c0_88], %169 {strides = array<i32>} : memref<128x256xf32, #tpu.memory_space<vmem>>, vector<128x256xf32>,
    } else {
    }
    return
  }
  func.func @transform_2(%arg0: i32, %arg1: i32) -> (i32, i32, i32) {
    %c0_i32 = arith.constant 0 : i32
    %c0_i32_0 = arith.constant 0 : i32
    %c0_i32_1 = arith.constant 0 : i32
    return %arg1, %c0_i32, %c0_i32_0 : i32, i32, i32
  }
  func.func @transform_3(%arg0: i32, %arg1: i32) -> (i32, i32, i32) {
    %c0_i32 = arith.constant 0 : i32
    %c0_i32_0 = arith.constant 0 : i32
    %c0_i32_1 = arith.constant 0 : i32
    return %arg1, %c0_i32, %c0_i32_0 : i32, i32, i32
  }
  func.func @transform_4(%arg0: i32, %arg1: i32) -> (i32, i32, i32) {
    %c0_i32 = arith.constant 0 : i32
    %c0_i32_0 = arith.constant 0 : i32
    %c0_i32_1 = arith.constant 0 : i32
    return %arg1, %c0_i32, %c0_i32_0 : i32, i32, i32
  }
  func.func @transform_5(%arg0: i32, %arg1: i32) -> (i32, i32, i32) {
    %c0_i32 = arith.constant 0 : i32
    %c0_i32_0 = arith.constant 0 : i32
    %c0_i32_1 = arith.constant 0 : i32
    return %arg1, %c0_i32, %c0_i32_0 : i32, i32, i32
  }
  func.func @transform_6(%arg0: i32, %arg1: i32) -> (i32, i32, i32) {
    %c0_i32 = arith.constant 0 : i32
    %c0_i32_0 = arith.constant 0 : i32
    %c0_i32_1 = arith.constant 0 : i32
    return %arg1, %c0_i32, %c0_i32_0 : i32, i32, i32
  }
  func.func @transform_7(%arg0: i32, %arg1: i32) -> (i32, i32, i32) {
    %c0_i32 = arith.constant 0 : i32
    %c0_i32_0 = arith.constant 0 : i32
    %c0_i32_1 = arith.constant 0 : i32
    return %arg1, %c0_i32, %c0_i32_0 : i32, i32, i32
  }
  func.func @transform_8(%arg0: i32, %arg1: i32) -> (i32, i32) {
    %c0_i32 = arith.constant 0 : i32
    %c0_i32_0 = arith.constant 0 : i32
    %c0_i32_1 = arith.constant 0 : i32
    return %c0_i32, %c0_i32_0 : i32, i32
  }
  func.func @transform_9(%arg0: i32, %arg1: i32) -> (i32, i32) {
    %c0_i32 = arith.constant 0 : i32
    %c0_i32_0 = arith.constant 0 : i32
    return %arg0, %c0_i32 : i32, i32
  }
}

</mosaic_0001>

<llo_original>
// kernel: encoder_forward.1
$region0: #{encoder_forward.1}
  #allocation0 [shape = 'u32[]', space=smem, size = 0x4, offset = 0x4, fixed_abs, tag = 'smem constant byte address 0x4 - core index']
  #allocation1 [shape = 'u32[72,128]{1,0:T(1,128)}', space=vmem, size = 0x9000, scoped, tag = 'internal scratch']
  #allocation2 [shape = 'f32[128,256]{1,0:T(8,128)}', space=vmem, size = 0x20000, scoped, tag = 'scratch operand']
  #allocation3 [shape = 'bf16[4,128,128]{2,1,0:T(8,128)(2,1)}', space=vmem, size = 0x20000, scoped, tag = 'scratch operand']
  #allocation4 [shape = 'bf16[128,768]{1,0:T(8,128)(2,1)}', space=vmem, size = 0x30000, scoped, tag = 'scratch operand']
  #allocation8 [shape = 's32[]', space=sflag, size = 0x4, offset = 0, fixed_abs, tag = 'sflag constant byte address 0x0 - dummy sync flag']
  #allocation10 [shape = 's32[]', space=sflag, size = 0x4, offset = 0, fixed_abs, tag = 'sflag constant byte address 0x0 - dummy sync flag']
  %s0 = inlined_call_operand.vmem [shape: f32[2,128,256], index: 0, kind: input, shape index: {}]
  %s1 = inlined_call_operand.vmem [shape: bf16[4,128,128], index: 1, kind: input, shape index: {}]
  %s2 = inlined_call_operand.vmem [shape: f32[2,1,256], index: 2, kind: input, shape index: {}]
  %s3 = inlined_call_operand.vmem [shape: bf16[2,256,768], index: 3, kind: input, shape index: {}]
  %s4 = inlined_call_operand.vmem [shape: bf16[2,256,256], index: 4, kind: input, shape index: {}]
  %s5 = inlined_call_operand.vmem [shape: f32[2,1,256], index: 5, kind: input, shape index: {}]
  %s6 = inlined_call_operand.vmem [shape: bf16[2,256,512], index: 6, kind: input, shape index: {}]
  %s7 = inlined_call_operand.vmem [shape: bf16[2,512,256], index: 7, kind: input, shape index: {}]
  %s8 = inlined_call_operand.vmem [shape: f32[1,256], index: 8, kind: input, shape index: {}]
  %s9 = inlined_call_operand.hbm [shape: f32[256,256], index: 9, kind: output, shape index: {}]
  %s10 = sld [smem:[#allocation0]]
  $region109: #{encoder_forward.1} parent=0
    _
  %s12 = ssub.s32 1, %s10
  %s13 = scalar_select 0, %s12, %s10
  $region1: #{encoder_forward.1} parent=0
    #allocation5 [shape = 'u8[262144]{0}', space=vmem, size = 0x40000, scoped, tag = 'output window, operand 0']
    #allocation6 [shape = 's32[2]{0}', space=sflag, size = 0x8, scoped, tag = 'scoped memory for encoder_forward.1']
    %14 = vsyncpa [#allocation6], 0
    %s15 = scalar_lea.sflag [#allocation6], 1
    %16 = vsyncpa %s15, 0
    loop: start=0, step=1, limit=6
    $region2: #{encoder_forward.1} parent=1 // loop_pre_header
      _
    $region3: #{encoder_forward.1} parent=1 // loop_header
      %s18 = sphi 0, %s22
      %p19 = scmp.ge.s32.totalorder %s18, 6
      %s25 = sphi 0, %s37
      %s26 = sphi 0, %s33
      %s27 = sphi 0, %s25
      %s28 = sphi 0, %s26
      %s29 = sphi 0, %s27
      %s30 = sphi 0, %s28
      %s40 = sphi 0, %s42
      %s43 = sphi 0, %s40
      %s44 = sphi 0, %s43
      %s60 = sphi 0, %s44
      %s66 = sphi 0, %s68
      %s69 = sphi 0, %s66
      %s70 = sphi 0, %s69
      %s86 = sphi 0, %s70
      %s92 = sphi 0, %s94
      %s95 = sphi 0, %s92
      %s96 = sphi 0, %s95
      %s112 = sphi 0, %s96
      %s118 = sphi 0, %s120
      %s121 = sphi 0, %s118
      %s122 = sphi 0, %s121
      %s138 = sphi 0, %s122
      %s144 = sphi 0, %s146
      %s147 = sphi 0, %s144
      %s148 = sphi 0, %s147
      %s164 = sphi 0, %s148
      %s170 = sphi 0, %s172
      %s173 = sphi 0, %s170
      %s174 = sphi 0, %s173
      %s190 = sphi 0, %s174
      %s194 = sphi 0, %s194
      %s196 = sphi 0, %s194
      %s197 = sphi 0, %s196
      %s211 = sphi 0, %s197
      %s217 = sphi 0, %s219
      %s220 = sphi 0, %s217
      %s221 = sphi 0, %s220
      %s237 = sphi 0, %s221
    $region4: #{encoder_forward.1} parent=1 // loop_header_branch
      %21 = sbr.rel (%p19) target = $region8
    $region5: #{encoder_forward.1} parent=1 // loop_body
      %s23 = ssub.s32 %s18, 1
      %s24 = ssub.s32 %s18, 2
      %s31 = sadd.s32 1, %s26
      %p32 = scmp.ge.s32.totalorder %s31, 2
      %s33 = scalar_select %p32, 0, %s31
      %s34 = sadd.s32 1, %s25
      %s35 = scalar_select %p32, %s34, %s25
      %p36 = scmp.ge.s32.totalorder %s35, 2
      %s37 = scalar_select %p36, 0, %s35
      %s38 = ssub.s32 %s26, %s33
      %p39 = scmp.eq.s32.totalorder %s38, 0
      %s41 = sadd.s32 %s40, 1
      %s42 = scalar_select %p39, %s40, %s41
      %p45 = pneg %p39
      %p46 = scmp.eq.s32.totalorder %s18, 3
      %p47 = por %p45, %p46
      %p48 = scmp.ne.s32.totalorder %s40, %s43
      %p49 = scmp.eq.s32.totalorder %s18, 0
      %p50 = por %p48, %p49
      %p51 = scmp.ne.s32.totalorder %s40, %s43
      %p52 = scmp.eq.s32.totalorder %s23, 3
      %p53 = por %p51, %p52
      %p54 = scmp.ne.s32.totalorder %s43, %s44
      %p55 = scmp.eq.s32.totalorder %s23, 0
      %p56 = por %p54, %p55
      %p57 = scmp.ne.s32.totalorder %s43, %s44
      %p58 = scmp.eq.s32.totalorder %s24, 3
      %p59 = por %p57, %p58
      %p61 = scmp.ne.s32.totalorder %s44, %s60
      %p62 = scmp.eq.s32.totalorder %s24, 0
      %p63 = por %p61, %p62
      %s64 = ssub.s32 %s26, %s33
      %p65 = scmp.eq.s32.totalorder %s64, 0
      %s67 = sadd.s32 %s66, 1
      %s68 = scalar_select %p65, %s66, %s67
      %p71 = pneg %p65
      %p72 = scmp.eq.s32.totalorder %s18, 3
      %p73 = por %p71, %p72
      %p74 = scmp.ne.s32.totalorder %s66, %s69
      %p75 = scmp.eq.s32.totalorder %s18, 0
      %p76 = por %p74, %p75
      %p77 = scmp.ne.s32.totalorder %s66, %s69
      %p78 = scmp.eq.s32.totalorder %s23, 3
      %p79 = por %p77, %p78
      %p80 = scmp.ne.s32.totalorder %s69, %s70
      %p81 = scmp.eq.s32.totalorder %s23, 0
      %p82 = por %p80, %p81
      %p83 = scmp.ne.s32.totalorder %s69, %s70
      %p84 = scmp.eq.s32.totalorder %s24, 3
      %p85 = por %p83, %p84
      %p87 = scmp.ne.s32.totalorder %s70, %s86
      %p88 = scmp.eq.s32.totalorder %s24, 0
      %p89 = por %p87, %p88
      %s90 = ssub.s32 %s26, %s33
      %p91 = scmp.eq.s32.totalorder %s90, 0
      %s93 = sadd.s32 %s92, 1
      %s94 = scalar_select %p91, %s92, %s93
      %p97 = pneg %p91
      %p98 = scmp.eq.s32.totalorder %s18, 3
      %p99 = por %p97, %p98
      %p100 = scmp.ne.s32.totalorder %s92, %s95
      %p101 = scmp.eq.s32.totalorder %s18, 0
      %p102 = por %p100, %p101
      %p103 = scmp.ne.s32.totalorder %s92, %s95
      %p104 = scmp.eq.s32.totalorder %s23, 3
      %p105 = por %p103, %p104
      %p106 = scmp.ne.s32.totalorder %s95, %s96
      %p107 = scmp.eq.s32.totalorder %s23, 0
      %p108 = por %p106, %p107
      %p109 = scmp.ne.s32.totalorder %s95, %s96
      %p110 = scmp.eq.s32.totalorder %s24, 3
      %p111 = por %p109, %p110
      %p113 = scmp.ne.s32.totalorder %s96, %s112
      %p114 = scmp.eq.s32.totalorder %s24, 0
      %p115 = por %p113, %p114
      %s116 = ssub.s32 %s26, %s33
      %p117 = scmp.eq.s32.totalorder %s116, 0
      %s119 = sadd.s32 %s118, 1
      %s120 = scalar_select %p117, %s118, %s119
      %p123 = pneg %p117
      %p124 = scmp.eq.s32.totalorder %s18, 3
      %p125 = por %p123, %p124
      %p126 = scmp.ne.s32.totalorder %s118, %s121
      %p127 = scmp.eq.s32.totalorder %s18, 0
      %p128 = por %p126, %p127
      %p129 = scmp.ne.s32.totalorder %s118, %s121
      %p130 = scmp.eq.s32.totalorder %s23, 3
      %p131 = por %p129, %p130
      %p132 = scmp.ne.s32.totalorder %s121, %s122
      %p133 = scmp.eq.s32.totalorder %s23, 0
      %p134 = por %p132, %p133
      %p135 = scmp.ne.s32.totalorder %s121, %s122
      %p136 = scmp.eq.s32.totalorder %s24, 3
      %p137 = por %p135, %p136
      %p139 = scmp.ne.s32.totalorder %s122, %s138
      %p140 = scmp.eq.s32.totalorder %s24, 0
      %p141 = por %p139, %p140
      %s142 = ssub.s32 %s26, %s33
      %p143 = scmp.eq.s32.totalorder %s142, 0
      %s145 = sadd.s32 %s144, 1
      %s146 = scalar_select %p143, %s144, %s145
      %p149 = pneg %p143
      %p150 = scmp.eq.s32.totalorder %s18, 3
      %p151 = por %p149, %p150
      %p152 = scmp.ne.s32.totalorder %s144, %s147
      %p153 = scmp.eq.s32.totalorder %s18, 0
      %p154 = por %p152, %p153
      %p155 = scmp.ne.s32.totalorder %s144, %s147
      %p156 = scmp.eq.s32.totalorder %s23, 3
      %p157 = por %p155, %p156
      %p158 = scmp.ne.s32.totalorder %s147, %s148
      %p159 = scmp.eq.s32.totalorder %s23, 0
      %p160 = por %p158, %p159
      %p161 = scmp.ne.s32.totalorder %s147, %s148
      %p162 = scmp.eq.s32.totalorder %s24, 3
      %p163 = por %p161, %p162
      %p165 = scmp.ne.s32.totalorder %s148, %s164
      %p166 = scmp.eq.s32.totalorder %s24, 0
      %p167 = por %p165, %p166
      %s168 = ssub.s32 %s26, %s33
      %p169 = scmp.eq.s32.totalorder %s168, 0
      %s171 = sadd.s32 %s170, 1
      %s172 = scalar_select %p169, %s170, %s171
      %p175 = pneg %p169
      %p176 = scmp.eq.s32.totalorder %s18, 3
      %p177 = por %p175, %p176
      %p178 = scmp.ne.s32.totalorder %s170, %s173
      %p179 = scmp.eq.s32.totalorder %s18, 0
      %p180 = por %p178, %p179
      %p181 = scmp.ne.s32.totalorder %s170, %s173
      %p182 = scmp.eq.s32.totalorder %s23, 3
      %p183 = por %p181, %p182
      %p184 = scmp.ne.s32.totalorder %s173, %s174
      %p185 = scmp.eq.s32.totalorder %s23, 0
      %p186 = por %p184, %p185
      %p187 = scmp.ne.s32.totalorder %s173, %s174
      %p188 = scmp.eq.s32.totalorder %s24, 3
      %p189 = por %p187, %p188
      %p191 = scmp.ne.s32.totalorder %s174, %s190
      %p192 = scmp.eq.s32.totalorder %s24, 0
      %p193 = por %p191, %p192
      %s195 = sadd.s32 %s194, 1
      %p198 = scmp.eq.s32.totalorder %s18, 3
      %p199 = scmp.ne.s32.totalorder %s194, %s196
      %p200 = scmp.eq.s32.totalorder %s18, 0
      %p201 = por %p199, %p200
      %p202 = scmp.ne.s32.totalorder %s194, %s196
      %p203 = scmp.eq.s32.totalorder %s23, 3
      %p204 = por %p202, %p203
      %p205 = scmp.ne.s32.totalorder %s196, %s197
      %p206 = scmp.eq.s32.totalorder %s23, 0
      %p207 = por %p205, %p206
      %p208 = scmp.ne.s32.totalorder %s196, %s197
      %p209 = scmp.eq.s32.totalorder %s24, 3
      %p210 = por %p208, %p209
      %p212 = scmp.ne.s32.totalorder %s197, %s211
      %p213 = scmp.eq.s32.totalorder %s24, 0
      %p214 = por %p212, %p213
      %s215 = ssub.s32 %s25, %s37
      %p216 = scmp.eq.s32.totalorder %s215, 0
      %s218 = sadd.s32 %s217, 1
      %s219 = scalar_select %p216, %s217, %s218
      %p222 = pneg %p216
      %p223 = scmp.eq.s32.totalorder %s18, 3
      %p224 = por %p222, %p223
      %p225 = scmp.ne.s32.totalorder %s217, %s220
      %p226 = scmp.eq.s32.totalorder %s18, 0
      %p227 = por %p225, %p226
      %p228 = scmp.ne.s32.totalorder %s217, %s220
      %p229 = scmp.eq.s32.totalorder %s23, 3
      %p230 = por %p228, %p229
      %p231 = scmp.ne.s32.totalorder %s220, %s221
      %p232 = scmp.eq.s32.totalorder %s23, 0
      %p233 = por %p231, %p232
      %p234 = scmp.ne.s32.totalorder %s220, %s221
      %p235 = scmp.eq.s32.totalorder %s24, 3
      %p236 = por %p234, %p235
      %p238 = scmp.ne.s32.totalorder %s221, %s237
      %p239 = scmp.eq.s32.totalorder %s24, 0
      %p240 = por %p238, %p239
      %p241 = scmp.le.s32.totalorder 1, %s18
      %p242 = scmp.lt.s32.totalorder %s18, 5
      %p243 = pnand %p241, %p242
      %p244 = pneg %p243
      // Predicated region
      $region9: #{encoder_forward.1} parent=5 // pred_check
        _
      $region10: #{encoder_forward.1} parent=5 // pred_check_branch
        %246 = sbr.rel (%p243) target = $region12
      $region11: #{encoder_forward.1} parent=5 // pred_region
        %s247 = ssub.s32 %s18, 1
        // Predicated region
        $region13: #{encoder_forward.1} parent=11 // pred_check
          %p248 = pneg %p207
        $region14: #{encoder_forward.1} parent=11 // pred_check_branch
          %250 = sbr.rel (%p248) target = $region16
        $region15: #{encoder_forward.1} parent=11 // pred_region
          _
        $region16: #{encoder_forward.1} parent=11 // pred_fallthru
          _
      $region12: #{encoder_forward.1} parent=5 // pred_fallthru
        _
      %p251 = scmp.lt.s32.totalorder %s18, 4
      // Predicated region
      $region17: #{encoder_forward.1} parent=5 // pred_check
        %p252 = pneg %p251
      $region18: #{encoder_forward.1} parent=5 // pred_check_branch
        %254 = sbr.rel (%p252) target = $region20
      $region19: #{encoder_forward.1} parent=5 // pred_region
        // Predicated region
        $region21: #{encoder_forward.1} parent=19 // pred_check
          %p255 = pneg %p50
        $region22: #{encoder_forward.1} parent=19 // pred_check_branch
          %257 = sbr.rel (%p255) target = $region24
        $region23: #{encoder_forward.1} parent=19 // pred_region
          %p258 = scmp.lt.s32.totalorder %s26, 1
          %s259 = scalar_select %p258, %s26, 1
          %s260 = smul.addr %s259, 2
          %s261 = scalar_lea.vmem %s2, %s260
        $region24: #{encoder_forward.1} parent=19 // pred_fallthru
          _
        // Predicated region
        $region25: #{encoder_forward.1} parent=19 // pred_check
          %p262 = pneg %p76
        $region26: #{encoder_forward.1} parent=19 // pred_check_branch
          %264 = sbr.rel (%p262) target = $region28
        $region27: #{encoder_forward.1} parent=19 // pred_region
          %p265 = scmp.lt.s32.totalorder %s26, 1
          %s266 = scalar_select %p265, %s26, 1
          %s267 = smul.addr %s266, 192
          %s268 = smul.addr %s267, 4
          %s269 = scalar_lea.vmem %s3, %s268
        $region28: #{encoder_forward.1} parent=19 // pred_fallthru
          _
        // Predicated region
        $region29: #{encoder_forward.1} parent=19 // pred_check
          %p270 = pneg %p102
        $region30: #{encoder_forward.1} parent=19 // pred_check_branch
          %272 = sbr.rel (%p270) target = $region32
        $region31: #{encoder_forward.1} parent=19 // pred_region
          %p273 = scmp.lt.s32.totalorder %s26, 1
          %s274 = scalar_select %p273, %s26, 1
          %s275 = smul.addr %s274, 64
          %s276 = smul.addr %s275, 4
          %s277 = scalar_lea.vmem %s4, %s276
        $region32: #{encoder_forward.1} parent=19 // pred_fallthru
          _
        // Predicated region
        $region33: #{encoder_forward.1} parent=19 // pred_check
          %p278 = pneg %p128
        $region34: #{encoder_forward.1} parent=19 // pred_check_branch
          %280 = sbr.rel (%p278) target = $region36
        $region35: #{encoder_forward.1} parent=19 // pred_region
          %p281 = scmp.lt.s32.totalorder %s26, 1
          %s282 = scalar_select %p281, %s26, 1
          %s283 = smul.addr %s282, 2
          %s284 = scalar_lea.vmem %s5, %s283
        $region36: #{encoder_forward.1} parent=19 // pred_fallthru
          _
        // Predicated region
        $region37: #{encoder_forward.1} parent=19 // pred_check
          %p285 = pneg %p154
        $region38: #{encoder_forward.1} parent=19 // pred_check_branch
          %287 = sbr.rel (%p285) target = $region40
        $region39: #{encoder_forward.1} parent=19 // pred_region
          %p288 = scmp.lt.s32.totalorder %s26, 1
          %s289 = scalar_select %p288, %s26, 1
          %s290 = smul.addr %s289, 128
          %s291 = smul.addr %s290, 4
          %s292 = scalar_lea.vmem %s6, %s291
        $region40: #{encoder_forward.1} parent=19 // pred_fallthru
          _
        // Predicated region
        $region41: #{encoder_forward.1} parent=19 // pred_check
          %p293 = pneg %p180
        $region42: #{encoder_forward.1} parent=19 // pred_check_branch
          %295 = sbr.rel (%p293) target = $region44
        $region43: #{encoder_forward.1} parent=19 // pred_region
          %p296 = scmp.lt.s32.totalorder %s26, 1
          %s297 = scalar_select %p296, %s26, 1
          %s298 = smul.addr %s297, 128
          %s299 = smul.addr %s298, 4
          %s300 = scalar_lea.vmem %s7, %s299
        $region44: #{encoder_forward.1} parent=19 // pred_fallthru
          _
      $region20: #{encoder_forward.1} parent=5 // pred_fallthru
        _
      %p301 = scmp.le.s32.totalorder 1, %s18
      %p302 = scmp.lt.s32.totalorder %s18, 5
      %p303 = pnand %p301, %p302
      %p304 = pneg %p303
      // Predicated region
      $region45: #{encoder_forward.1} parent=5 // pred_check
        _
      $region46: #{encoder_forward.1} parent=5 // pred_check_branch
        %306 = sbr.rel (%p303) target = $region48
      $region47: #{encoder_forward.1} parent=5 // pred_region
        %s307 = ssub.s32 %s18, 1
        %p308 = scmp.lt.s32.totalorder %s28, 1
        %s309 = scalar_select %p308, %s28, 1
        %s310 = smul.addr %s309, 2
        %s311 = scalar_lea.vmem %s2, %s310
        %p312 = pneg %p56
        %p313 = pneg %p53
        %p314 = scmp.lt.s32.totalorder %s28, 1
        %s315 = scalar_select %p314, %s28, 1
        %s316 = smul.addr %s315, 192
        %s317 = smul.addr %s316, 4
        %s318 = scalar_lea.vmem %s3, %s317
        %p319 = pneg %p82
        %p320 = pneg %p79
        %p321 = scmp.lt.s32.totalorder %s28, 1
        %s322 = scalar_select %p321, %s28, 1
        %s323 = smul.addr %s322, 64
        %s324 = smul.addr %s323, 4
        %s325 = scalar_lea.vmem %s4, %s324
        %p326 = pneg %p108
        %p327 = pneg %p105
        %p328 = scmp.lt.s32.totalorder %s28, 1
        %s329 = scalar_select %p328, %s28, 1
        %s330 = smul.addr %s329, 2
        %s331 = scalar_lea.vmem %s5, %s330
        %p332 = pneg %p134
        %p333 = pneg %p131
        %p334 = scmp.lt.s32.totalorder %s28, 1
        %s335 = scalar_select %p334, %s28, 1
        %s336 = smul.addr %s335, 128
        %s337 = smul.addr %s336, 4
        %s338 = scalar_lea.vmem %s6, %s337
        %p339 = pneg %p160
        %p340 = pneg %p157
        %p341 = scmp.lt.s32.totalorder %s28, 1
        %s342 = scalar_select %p341, %s28, 1
        %s343 = smul.addr %s342, 128
        %s344 = smul.addr %s343, 4
        %s345 = scalar_lea.vmem %s7, %s344
        %p346 = pneg %p186
        %p347 = pneg %p183
        %p348 = pneg %p207
        %p349 = pneg %p204
        %p350 = pneg %p233
        %p351 = pneg %p230
        %s352 = sand.u32 %s220, 1
        %s353 = scalar_lea.sflag [#allocation6], %s352
        %s354 = sand.u32 %s220, 1
        %s355 = smul.addr %s354, 256
        %s356 = scalar_lea.vmem [#allocation5], %s355
        %p357 = scmp.lt.s32.totalorder %s28, 1
        %s358 = scalar_select %p357, %s28, 1
        %s359 = smul.addr %s358, 2
        %s360 = scalar_lea.vmem %s2, %s359
        %p361 = scmp.lt.s32.totalorder %s28, 1
        %s362 = scalar_select %p361, %s28, 1
        %s363 = smul.addr %s362, 192
        %s364 = smul.addr %s363, 4
        %s365 = scalar_lea.vmem %s3, %s364
        %p366 = scmp.lt.s32.totalorder %s28, 1
        %s367 = scalar_select %p366, %s28, 1
        %s368 = smul.addr %s367, 64
        %s369 = smul.addr %s368, 4
        %s370 = scalar_lea.vmem %s4, %s369
        %p371 = scmp.lt.s32.totalorder %s28, 1
        %s372 = scalar_select %p371, %s28, 1
        %s373 = smul.addr %s372, 2
        %s374 = scalar_lea.vmem %s5, %s373
        %p375 = scmp.lt.s32.totalorder %s28, 1
        %s376 = scalar_select %p375, %s28, 1
        %s377 = smul.addr %s376, 128
        %s378 = smul.addr %s377, 4
        %s379 = scalar_lea.vmem %s6, %s378
        %p380 = scmp.lt.s32.totalorder %s28, 1
        %s381 = scalar_select %p380, %s28, 1
        %s382 = smul.addr %s381, 128
        %s383 = smul.addr %s382, 4
        %s384 = scalar_lea.vmem %s7, %s383
        %s385 = smul.u32 16, %s27
        %p387 = scmp.eq.s32.totalorder %s28, 0
        // Predicated region
        $region49: #{encoder_forward.1} parent=47 // pred_check
          %p388 = pneg %p387
        $region50: #{encoder_forward.1} parent=47 // pred_check_branch
          %390 = sbr.rel (%p388) target = $region52
        $region51: #{encoder_forward.1} parent=47 // pred_region
          $region53: #{encoder_forward.1} parent=51
            #allocation7 [shape = 's32[1]{0}', space=sflag, size = 0x4, scoped, tag = 'scoped memory for encoder_forward.1']
            %s391 = smul.u32 %s27, 32
            %s392 = smul.addr %s391, 8
            %s393 = scalar_lea.vmem %s0, %s392
            // Predicated region
            $region54: #{encoder_forward.1} parent=53 // pred_check
              _
            $region55: #{encoder_forward.1} parent=53 // pred_check_branch
              %395 = sbr.rel (0) target = $region57
            $region56: #{encoder_forward.1} parent=53 // pred_region
              loop: start=0, step=1, limit=1
              $region58: #{encoder_forward.1} parent=56 // loop_pre_header
                _
              $region59: #{encoder_forward.1} parent=56 // loop_header
                %s397 = sphi 0, %s401
                %p398 = scmp.ge.s32.totalorder %s397, 1
                %s402 = sphi %s393, %s393
                %s403 = sphi [#allocation2], [#allocation2]
              $region60: #{encoder_forward.1} parent=56 // loop_header_branch
                %400 = sbr.rel (%p398) target = $region64
              $region61: #{encoder_forward.1} parent=56 // loop_body
                %v404 = vld [vmem:[%s402] sm:$0xff]
                %405 = vst [vmem:[%s403] sm:$0xff] %v404
                %v406 = vld [vmem:[%s402 + $0x8] sm:$0xff]
                %407 = vst [vmem:[%s403 + $0x8] sm:$0xff] %v406
                %v408 = vld [vmem:[%s402 + $0x10] sm:$0xff]
                %409 = vst [vmem:[%s403 + $0x10] sm:$0xff] %v408
                %v410 = vld [vmem:[%s402 + $0x18] sm:$0xff]
                %411 = vst [vmem:[%s403 + $0x18] sm:$0xff] %v410
                %v412 = vld [vmem:[%s402 + $0x20] sm:$0xff]
                %413 = vst [vmem:[%s403 + $0x20] sm:$0xff] %v412
                %v414 = vld [vmem:[%s402 + $0x28] sm:$0xff]
                %415 = vst [vmem:[%s403 + $0x28] sm:$0xff] %v414
                %v416 = vld [vmem:[%s402 + $0x30] sm:$0xff]
                %417 = vst [vmem:[%s403 + $0x30] sm:$0xff] %v416
                %v418 = vld [vmem:[%s402 + $0x38] sm:$0xff]
                %419 = vst [vmem:[%s403 + $0x38] sm:$0xff] %v418
                %v420 = vld [vmem:[%s402 + $0x40] sm:$0xff]
                %421 = vst [vmem:[%s403 + $0x40] sm:$0xff] %v420
                %v422 = vld [vmem:[%s402 + $0x48] sm:$0xff]
                %423 = vst [vmem:[%s403 + $0x48] sm:$0xff] %v422
                %v424 = vld [vmem:[%s402 + $0x50] sm:$0xff]
                %425 = vst [vmem:[%s403 + $0x50] sm:$0xff] %v424
                %v426 = vld [vmem:[%s402 + $0x58] sm:$0xff]
                %427 = vst [vmem:[%s403 + $0x58] sm:$0xff] %v426
                %v428 = vld [vmem:[%s402 + $0x60] sm:$0xff]
                %429 = vst [vmem:[%s403 + $0x60] sm:$0xff] %v428
                %v430 = vld [vmem:[%s402 + $0x68] sm:$0xff]
                %431 = vst [vmem:[%s403 + $0x68] sm:$0xff] %v430
                %v432 = vld [vmem:[%s402 + $0x70] sm:$0xff]
                %433 = vst [vmem:[%s403 + $0x70] sm:$0xff] %v432
                %v434 = vld [vmem:[%s402 + $0x78] sm:$0xff]
                %435 = vst [vmem:[%s403 + $0x78] sm:$0xff] %v434
                %v436 = vld [vmem:[%s402 + $0x80] sm:$0xff]
                %437 = vst [vmem:[%s403 + $0x80] sm:$0xff] %v436
                %v438 = vld [vmem:[%s402 + $0x88] sm:$0xff]
                %439 = vst [vmem:[%s403 + $0x88] sm:$0xff] %v438
                %v440 = vld [vmem:[%s402 + $0x90] sm:$0xff]
                %441 = vst [vmem:[%s403 + $0x90] sm:$0xff] %v440
                %v442 = vld [vmem:[%s402 + $0x98] sm:$0xff]
                %443 = vst [vmem:[%s403 + $0x98] sm:$0xff] %v442
                %v444 = vld [vmem:[%s402 + $0xa0] sm:$0xff]
                %445 = vst [vmem:[%s403 + $0xa0] sm:$0xff] %v444
                %v446 = vld [vmem:[%s402 + $0xa8] sm:$0xff]
                %447 = vst [vmem:[%s403 + $0xa8] sm:$0xff] %v446
                %v448 = vld [vmem:[%s402 + $0xb0] sm:$0xff]
                %449 = vst [vmem:[%s403 + $0xb0] sm:$0xff] %v448
                %v450 = vld [vmem:[%s402 + $0xb8] sm:$0xff]
                %451 = vst [vmem:[%s403 + $0xb8] sm:$0xff] %v450
                %v452 = vld [vmem:[%s402 + $0xc0] sm:$0xff]
                %453 = vst [vmem:[%s403 + $0xc0] sm:$0xff] %v452
                %v454 = vld [vmem:[%s402 + $0xc8] sm:$0xff]
                %455 = vst [vmem:[%s403 + $0xc8] sm:$0xff] %v454
                %v456 = vld [vmem:[%s402 + $0xd0] sm:$0xff]
                %457 = vst [vmem:[%s403 + $0xd0] sm:$0xff] %v456
                %v458 = vld [vmem:[%s402 + $0xd8] sm:$0xff]
                %459 = vst [vmem:[%s403 + $0xd8] sm:$0xff] %v458
                %v460 = vld [vmem:[%s402 + $0xe0] sm:$0xff]
                %461 = vst [vmem:[%s403 + $0xe0] sm:$0xff] %v460
                %v462 = vld [vmem:[%s402 + $0xe8] sm:$0xff]
                %463 = vst [vmem:[%s403 + $0xe8] sm:$0xff] %v462
                %v464 = vld [vmem:[%s402 + $0xf0] sm:$0xff]
                %465 = vst [vmem:[%s403 + $0xf0] sm:$0xff] %v464
                %v466 = vld [vmem:[%s402 + $0xf8] sm:$0xff]
                %467 = vst [vmem:[%s403 + $0xf8] sm:$0xff] %v466
              $region62: #{encoder_forward.1} parent=56 // loop_footer
                %s401 = sadd.s32 1, %s397
              $region63: #{encoder_forward.1} parent=56 // loop_footer_branch
                %396 = sbr.rel target = $region59
              $region64: #{encoder_forward.1} parent=56 // loop_exit
                _
            $region57: #{encoder_forward.1} parent=53 // pred_fallthru
              _
            // Predicated region
            $region65: #{encoder_forward.1} parent=53 // pred_check
              _
            $region66: #{encoder_forward.1} parent=53 // pred_check_branch
              %469 = sbr.rel target = $region68
            $region67: #{encoder_forward.1} parent=53 // pred_region
              _
            $region68: #{encoder_forward.1} parent=53 // pred_fallthru
              _
            // Predicated region
            $region69: #{encoder_forward.1} parent=53 // pred_check
              _
            $region70: #{encoder_forward.1} parent=53 // pred_check_branch
              %472 = sbr.rel (0) target = $region72
            $region71: #{encoder_forward.1} parent=53 // pred_region
              %473 = vsyncadd [#allocation7], 4096
            $region72: #{encoder_forward.1} parent=53 // pred_fallthru
              _
            %s474 = smul.u32 8, 16
            %s475 = smul.u32 %s474, 2
            %s476 = sshll.u32 %s475, 4
            %477 = dma.done [#allocation7], %s476
          $region73: #{encoder_forward.1} parent=51
            #allocation9 [shape = 's32[1]{0}', space=sflag, size = 0x4, scoped, tag = 'scoped memory for encoder_forward.1']
            // Predicated region
            $region74: #{encoder_forward.1} parent=73 // pred_check
              _
            $region75: #{encoder_forward.1} parent=73 // pred_check_branch
              %479 = sbr.rel (0) target = $region77
            $region76: #{encoder_forward.1} parent=73 // pred_region
              loop: start=0, step=1, limit=1
              $region78: #{encoder_forward.1} parent=76 // loop_pre_header
                _
              $region79: #{encoder_forward.1} parent=76 // loop_header
                %s481 = sphi 0, %s485
                %p482 = scmp.ge.s32.totalorder %s481, 1
                %s486 = sphi %s1, %s1
                %s487 = sphi [#allocation3], [#allocation3]
              $region80: #{encoder_forward.1} parent=76 // loop_header_branch
                %484 = sbr.rel (%p482) target = $region84
              $region81: #{encoder_forward.1} parent=76 // loop_body
                %v488 = vld [vmem:[%s486] sm:$0xff]
                %489 = vst [vmem:[%s487] sm:$0xff] %v488
                %v490 = vld [vmem:[%s486 + $0x8] sm:$0xff]
                %491 = vst [vmem:[%s487 + $0x8] sm:$0xff] %v490
                %v492 = vld [vmem:[%s486 + $0x10] sm:$0xff]
                %493 = vst [vmem:[%s487 + $0x10] sm:$0xff] %v492
                %v494 = vld [vmem:[%s486 + $0x18] sm:$0xff]
                %495 = vst [vmem:[%s487 + $0x18] sm:$0xff] %v494
                %v496 = vld [vmem:[%s486 + $0x20] sm:$0xff]
                %497 = vst [vmem:[%s487 + $0x20] sm:$0xff] %v496
                %v498 = vld [vmem:[%s486 + $0x28] sm:$0xff]
                %499 = vst [vmem:[%s487 + $0x28] sm:$0xff] %v498
                %v500 = vld [vmem:[%s486 + $0x30] sm:$0xff]
                %501 = vst [vmem:[%s487 + $0x30] sm:$0xff] %v500
                %v502 = vld [vmem:[%s486 + $0x38] sm:$0xff]
                %503 = vst [vmem:[%s487 + $0x38] sm:$0xff] %v502
                %v504 = vld [vmem:[%s486 + $0x40] sm:$0xff]
                %505 = vst [vmem:[%s487 + $0x40] sm:$0xff] %v504
                %v506 = vld [vmem:[%s486 + $0x48] sm:$0xff]
                %507 = vst [vmem:[%s487 + $0x48] sm:$0xff] %v506
                %v508 = vld [vmem:[%s486 + $0x50] sm:$0xff]
                %509 = vst [vmem:[%s487 + $0x50] sm:$0xff] %v508
                %v510 = vld [vmem:[%s486 + $0x58] sm:$0xff]
                %511 = vst [vmem:[%s487 + $0x58] sm:$0xff] %v510
                %v512 = vld [vmem:[%s486 + $0x60] sm:$0xff]
                %513 = vst [vmem:[%s487 + $0x60] sm:$0xff] %v512
                %v514 = vld [vmem:[%s486 + $0x68] sm:$0xff]
                %515 = vst [vmem:[%s487 + $0x68] sm:$0xff] %v514
                %v516 = vld [vmem:[%s486 + $0x70] sm:$0xff]
                %517 = vst [vmem:[%s487 + $0x70] sm:$0xff] %v516
                %v518 = vld [vmem:[%s486 + $0x78] sm:$0xff]
                %519 = vst [vmem:[%s487 + $0x78] sm:$0xff] %v518
                %v520 = vld [vmem:[%s486 + $0x80] sm:$0xff]
                %521 = vst [vmem:[%s487 + $0x80] sm:$0xff] %v520
                %v522 = vld [vmem:[%s486 + $0x88] sm:$0xff]
                %523 = vst [vmem:[%s487 + $0x88] sm:$0xff] %v522
                %v524 = vld [vmem:[%s486 + $0x90] sm:$0xff]
                %525 = vst [vmem:[%s487 + $0x90] sm:$0xff] %v524
                %v526 = vld [vmem:[%s486 + $0x98] sm:$0xff]
                %527 = vst [vmem:[%s487 + $0x98] sm:$0xff] %v526
                %v528 = vld [vmem:[%s486 + $0xa0] sm:$0xff]
                %529 = vst [vmem:[%s487 + $0xa0] sm:$0xff] %v528
                %v530 = vld [vmem:[%s486 + $0xa8] sm:$0xff]
                %531 = vst [vmem:[%s487 + $0xa8] sm:$0xff] %v530
                %v532 = vld [vmem:[%s486 + $0xb0] sm:$0xff]
                %533 = vst [vmem:[%s487 + $0xb0] sm:$0xff] %v532
                %v534 = vld [vmem:[%s486 + $0xb8] sm:$0xff]
                %535 = vst [vmem:[%s487 + $0xb8] sm:$0xff] %v534
                %v536 = vld [vmem:[%s486 + $0xc0] sm:$0xff]
                %537 = vst [vmem:[%s487 + $0xc0] sm:$0xff] %v536
                %v538 = vld [vmem:[%s486 + $0xc8] sm:$0xff]
                %539 = vst [vmem:[%s487 + $0xc8] sm:$0xff] %v538
                %v540 = vld [vmem:[%s486 + $0xd0] sm:$0xff]
                %541 = vst [vmem:[%s487 + $0xd0] sm:$0xff] %v540
                %v542 = vld [vmem:[%s486 + $0xd8] sm:$0xff]
                %543 = vst [vmem:[%s487 + $0xd8] sm:$0xff] %v542
                %v544 = vld [vmem:[%s486 + $0xe0] sm:$0xff]
                %545 = vst [vmem:[%s487 + $0xe0] sm:$0xff] %v544
                %v546 = vld [vmem:[%s486 + $0xe8] sm:$0xff]
                %547 = vst [vmem:[%s487 + $0xe8] sm:$0xff] %v546
                %v548 = vld [vmem:[%s486 + $0xf0] sm:$0xff]
                %549 = vst [vmem:[%s487 + $0xf0] sm:$0xff] %v548
                %v550 = vld [vmem:[%s486 + $0xf8] sm:$0xff]
                %551 = vst [vmem:[%s487 + $0xf8] sm:$0xff] %v550
              $region82: #{encoder_forward.1} parent=76 // loop_footer
                %s485 = sadd.s32 1, %s481
              $region83: #{encoder_forward.1} parent=76 // loop_footer_branch
                %480 = sbr.rel target = $region79
              $region84: #{encoder_forward.1} parent=76 // loop_exit
                _
            $region77: #{encoder_forward.1} parent=73 // pred_fallthru
              _
            // Predicated region
            $region85: #{encoder_forward.1} parent=73 // pred_check
              _
            $region86: #{encoder_forward.1} parent=73 // pred_check_branch
              %553 = sbr.rel target = $region88
            $region87: #{encoder_forward.1} parent=73 // pred_region
              _
            $region88: #{encoder_forward.1} parent=73 // pred_fallthru
              _
            // Predicated region
            $region89: #{encoder_forward.1} parent=73 // pred_check
              _
            $region90: #{encoder_forward.1} parent=73 // pred_check_branch
              %556 = sbr.rel (0) target = $region92
            $region91: #{encoder_forward.1} parent=73 // pred_region
              %557 = vsyncadd [#allocation9], 4096
            $region92: #{encoder_forward.1} parent=73 // pred_fallthru
              _
            %s558 = smul.u32 4, 4
            %s559 = smul.u32 %s558, 16
            %s560 = smul.u32 %s559, 1
            %s561 = sshll.u32 %s560, 4
            %562 = dma.done [#allocation9], %s561
        $region52: #{encoder_forward.1} parent=47 // pred_fallthru
          _
        %v563 = vld [vmem:[#allocation2] sm:$0xff]
        %v564 = vld [vmem:[#allocation2 + $0x8] sm:$0xff]
        %v565 = vld [vmem:[#allocation2 + $0x10] sm:$0xff]
        %v566 = vld [vmem:[#allocation2 + $0x18] sm:$0xff]
        %v567 = vld [vmem:[#allocation2 + $0x20] sm:$0xff]
        %v568 = vld [vmem:[#allocation2 + $0x28] sm:$0xff]
        %v569 = vld [vmem:[#allocation2 + $0x30] sm:$0xff]
        %v570 = vld [vmem:[#allocation2 + $0x38] sm:$0xff]
        %v571 = vld [vmem:[#allocation2 + $0x40] sm:$0xff]
        %v572 = vld [vmem:[#allocation2 + $0x48] sm:$0xff]
        %v573 = vld [vmem:[#allocation2 + $0x50] sm:$0xff]
        %v574 = vld [vmem:[#allocation2 + $0x58] sm:$0xff]
        %v575 = vld [vmem:[#allocation2 + $0x60] sm:$0xff]
        %v576 = vld [vmem:[#allocation2 + $0x68] sm:$0xff]
        %v577 = vld [vmem:[#allocation2 + $0x70] sm:$0xff]
        %v578 = vld [vmem:[#allocation2 + $0x78] sm:$0xff]
        %v579 = vld [vmem:[#allocation2 + $0x80] sm:$0xff]
        %v580 = vld [vmem:[#allocation2 + $0x88] sm:$0xff]
        %v581 = vld [vmem:[#allocation2 + $0x90] sm:$0xff]
        %v582 = vld [vmem:[#allocation2 + $0x98] sm:$0xff]
        %v583 = vld [vmem:[#allocation2 + $0xa0] sm:$0xff]
        %v584 = vld [vmem:[#allocation2 + $0xa8] sm:$0xff]
        %v585 = vld [vmem:[#allocation2 + $0xb0] sm:$0xff]
        %v586 = vld [vmem:[#allocation2 + $0xb8] sm:$0xff]
        %v587 = vld [vmem:[#allocation2 + $0xc0] sm:$0xff]
        %v588 = vld [vmem:[#allocation2 + $0xc8] sm:$0xff]
        %v589 = vld [vmem:[#allocation2 + $0xd0] sm:$0xff]
        %v590 = vld [vmem:[#allocation2 + $0xd8] sm:$0xff]
        %v591 = vld [vmem:[#allocation2 + $0xe0] sm:$0xff]
        %v592 = vld [vmem:[#allocation2 + $0xe8] sm:$0xff]
        %v593 = vld [vmem:[#allocation2 + $0xf0] sm:$0xff]
        %v594 = vld [vmem:[#allocation2 + $0xf8] sm:$0xff]
        %v595 = vld [vmem:[%s360] sm:$0x3]
        %v596 = vmul.f32 %v563, %v563
        %v597 = vmul.f32 %v564, %v564
        %v598 = vmul.f32 %v565, %v565
        %v599 = vmul.f32 %v566, %v566
        %v600 = vmul.f32 %v567, %v567
        %v601 = vmul.f32 %v568, %v568
        %v602 = vmul.f32 %v569, %v569
        %v603 = vmul.f32 %v570, %v570
        %v604 = vmul.f32 %v571, %v571
        %v605 = vmul.f32 %v572, %v572
        %v606 = vmul.f32 %v573, %v573
        %v607 = vmul.f32 %v574, %v574
        %v608 = vmul.f32 %v575, %v575
        %v609 = vmul.f32 %v576, %v576
        %v610 = vmul.f32 %v577, %v577
        %v611 = vmul.f32 %v578, %v578
        %v612 = vmul.f32 %v579, %v579
        %v613 = vmul.f32 %v580, %v580
        %v614 = vmul.f32 %v581, %v581
        %v615 = vmul.f32 %v582, %v582
        %v616 = vmul.f32 %v583, %v583
        %v617 = vmul.f32 %v584, %v584
        %v618 = vmul.f32 %v585, %v585
        %v619 = vmul.f32 %v586, %v586
        %v620 = vmul.f32 %v587, %v587
        %v621 = vmul.f32 %v588, %v588
        %v622 = vmul.f32 %v589, %v589
        %v623 = vmul.f32 %v590, %v590
        %v624 = vmul.f32 %v591, %v591
        %v625 = vmul.f32 %v592, %v592
        %v626 = vmul.f32 %v593, %v593
        %v627 = vmul.f32 %v594, %v594
        %v628 = vadd.f32 %v596, %v597
        %629 = vadd.xlane.f32.xlu0 %v628
        %v630 = vpop.xlane.xlu0 %629
        %v631 = vadd.f32 %v598, %v599
        %632 = vadd.xlane.f32.xlu0 %v631
        %v633 = vpop.xlane.xlu0 %632
        %v634 = vadd.f32 %v600, %v601
        %635 = vadd.xlane.f32.xlu0 %v634
        %v636 = vpop.xlane.xlu0 %635
        %v637 = vadd.f32 %v602, %v603
        %638 = vadd.xlane.f32.xlu0 %v637
        %v639 = vpop.xlane.xlu0 %638
        %v640 = vadd.f32 %v604, %v605
        %641 = vadd.xlane.f32.xlu0 %v640
        %v642 = vpop.xlane.xlu0 %641
        %v643 = vadd.f32 %v606, %v607
        %644 = vadd.xlane.f32.xlu0 %v643
        %v645 = vpop.xlane.xlu0 %644
        %v646 = vadd.f32 %v608, %v609
        %647 = vadd.xlane.f32.xlu0 %v646
        %v648 = vpop.xlane.xlu0 %647
        %v649 = vadd.f32 %v610, %v611
        %650 = vadd.xlane.f32.xlu0 %v649
        %v651 = vpop.xlane.xlu0 %650
        %v652 = vadd.f32 %v612, %v613
        %653 = vadd.xlane.f32.xlu0 %v652
        %v654 = vpop.xlane.xlu0 %653
        %v655 = vadd.f32 %v614, %v615
        %656 = vadd.xlane.f32.xlu0 %v655
        %v657 = vpop.xlane.xlu0 %656
        %v658 = vadd.f32 %v616, %v617
        %659 = vadd.xlane.f32.xlu0 %v658
        %v660 = vpop.xlane.xlu0 %659
        %v661 = vadd.f32 %v618, %v619
        %662 = vadd.xlane.f32.xlu0 %v661
        %v663 = vpop.xlane.xlu0 %662
        %v664 = vadd.f32 %v620, %v621
        %665 = vadd.xlane.f32.xlu0 %v664
        %v666 = vpop.xlane.xlu0 %665
        %v667 = vadd.f32 %v622, %v623
        %668 = vadd.xlane.f32.xlu0 %v667
        %v669 = vpop.xlane.xlu0 %668
        %v670 = vadd.f32 %v624, %v625
        %671 = vadd.xlane.f32.xlu0 %v670
        %v672 = vpop.xlane.xlu0 %671
        %v673 = vadd.f32 %v626, %v627
        %674 = vadd.xlane.f32.xlu0 %v673
        %v675 = vpop.xlane.xlu0 %674
        %v676 = vrcp.pop 256.0
        %v677 = vmul.f32 256.0, %v676
        %v678 = vsub.f32 1.0, %v677
        %v679 = vmul.f32 %v676, %v678
        %v680 = vadd.f32 %v676, %v679
        %vm681 = vweird.f32 %v676
        %v682 = vsel %vm681, %v676, %v680
        %v683 = vmul.f32 %v630, %v682
        %v684 = vmul.f32 %v633, %v682
        %v685 = vmul.f32 %v636, %v682
        %v686 = vmul.f32 %v639, %v682
        %v687 = vmul.f32 %v642, %v682
        %v688 = vmul.f32 %v645, %v682
        %v689 = vmul.f32 %v648, %v682
        %v690 = vmul.f32 %v651, %v682
        %v691 = vmul.f32 %v654, %v682
        %v692 = vmul.f32 %v657, %v682
        %v693 = vmul.f32 %v660, %v682
        %v694 = vmul.f32 %v663, %v682
        %v695 = vmul.f32 %v666, %v682
        %v696 = vmul.f32 %v669, %v682
        %v697 = vmul.f32 %v672, %v682
        %v698 = vmul.f32 %v675, %v682
        %v699 = vadd.f32 %v683, 1e-06
        %v700 = vadd.f32 %v684, 1e-06
        %v701 = vadd.f32 %v685, 1e-06
        %v702 = vadd.f32 %v686, 1e-06
        %v703 = vadd.f32 %v687, 1e-06
        %v704 = vadd.f32 %v688, 1e-06
        %v705 = vadd.f32 %v689, 1e-06
        %v706 = vadd.f32 %v690, 1e-06
        %v707 = vadd.f32 %v691, 1e-06
        %v708 = vadd.f32 %v692, 1e-06
        %v709 = vadd.f32 %v693, 1e-06
        %v710 = vadd.f32 %v694, 1e-06
        %v711 = vadd.f32 %v695, 1e-06
        %v712 = vadd.f32 %v696, 1e-06
        %v713 = vadd.f32 %v697, 1e-06
        %v714 = vadd.f32 %v698, 1e-06
        %v715 = vrsqrt.pop %v699
        %v716 = vmul.f32 %v715, %v699
        %v717 = vmul.f32 %v716, %v715
        %v718 = vmul.f32 0.5, %v717
        %v719 = vsub.f32 1.5, %v718
        %v720 = vmul.f32 %v715, %v719
        %vm721 = vweird.f32 %v699
        %vm722 = vweird.f32 %v715
        %vm723 = vmor %vm721, %vm722
        %v724 = vsel %vm723, %v715, %v720
        %v725 = vrsqrt.pop %v700
        %v726 = vmul.f32 %v725, %v700
        %v727 = vmul.f32 %v726, %v725
        %v728 = vmul.f32 0.5, %v727
        %v729 = vsub.f32 1.5, %v728
        %v730 = vmul.f32 %v725, %v729
        %vm731 = vweird.f32 %v700
        %vm732 = vweird.f32 %v725
        %vm733 = vmor %vm731, %vm732
        %v734 = vsel %vm733, %v725, %v730
        %v735 = vrsqrt.pop %v701
        %v736 = vmul.f32 %v735, %v701
        %v737 = vmul.f32 %v736, %v735
        %v738 = vmul.f32 0.5, %v737
        %v739 = vsub.f32 1.5, %v738
        %v740 = vmul.f32 %v735, %v739
        %vm741 = vweird.f32 %v701
        %vm742 = vweird.f32 %v735
        %vm743 = vmor %vm741, %vm742
        %v744 = vsel %vm743, %v735, %v740
        %v745 = vrsqrt.pop %v702
        %v746 = vmul.f32 %v745, %v702
        %v747 = vmul.f32 %v746, %v745
        %v748 = vmul.f32 0.5, %v747
        %v749 = vsub.f32 1.5, %v748
        %v750 = vmul.f32 %v745, %v749
        %vm751 = vweird.f32 %v702
        %vm752 = vweird.f32 %v745
        %vm753 = vmor %vm751, %vm752
        %v754 = vsel %vm753, %v745, %v750
        %v755 = vrsqrt.pop %v703
        %v756 = vmul.f32 %v755, %v703
        %v757 = vmul.f32 %v756, %v755
        %v758 = vmul.f32 0.5, %v757
        %v759 = vsub.f32 1.5, %v758
        %v760 = vmul.f32 %v755, %v759
        %vm761 = vweird.f32 %v703
        %vm762 = vweird.f32 %v755
        %vm763 = vmor %vm761, %vm762
        %v764 = vsel %vm763, %v755, %v760
        %v765 = vrsqrt.pop %v704
        %v766 = vmul.f32 %v765, %v704
        %v767 = vmul.f32 %v766, %v765
        %v768 = vmul.f32 0.5, %v767
        %v769 = vsub.f32 1.5, %v768
        %v770 = vmul.f32 %v765, %v769
        %vm771 = vweird.f32 %v704
        %vm772 = vweird.f32 %v765
        %vm773 = vmor %vm771, %vm772
        %v774 = vsel %vm773, %v765, %v770
        %v775 = vrsqrt.pop %v705
        %v776 = vmul.f32 %v775, %v705
        %v777 = vmul.f32 %v776, %v775
        %v778 = vmul.f32 0.5, %v777
        %v779 = vsub.f32 1.5, %v778
        %v780 = vmul.f32 %v775, %v779
        %vm781 = vweird.f32 %v705
        %vm782 = vweird.f32 %v775
        %vm783 = vmor %vm781, %vm782
        %v784 = vsel %vm783, %v775, %v780
        %v785 = vrsqrt.pop %v706
        %v786 = vmul.f32 %v785, %v706
        %v787 = vmul.f32 %v786, %v785
        %v788 = vmul.f32 0.5, %v787
        %v789 = vsub.f32 1.5, %v788
        %v790 = vmul.f32 %v785, %v789
        %vm791 = vweird.f32 %v706
        %vm792 = vweird.f32 %v785
        %vm793 = vmor %vm791, %vm792
        %v794 = vsel %vm793, %v785, %v790
        %v795 = vrsqrt.pop %v707
        %v796 = vmul.f32 %v795, %v707
        %v797 = vmul.f32 %v796, %v795
        %v798 = vmul.f32 0.5, %v797
        %v799 = vsub.f32 1.5, %v798
        %v800 = vmul.f32 %v795, %v799
        %vm801 = vweird.f32 %v707
        %vm802 = vweird.f32 %v795
        %vm803 = vmor %vm801, %vm802
        %v804 = vsel %vm803, %v795, %v800
        %v805 = vrsqrt.pop %v708
        %v806 = vmul.f32 %v805, %v708
        %v807 = vmul.f32 %v806, %v805
        %v808 = vmul.f32 0.5, %v807
        %v809 = vsub.f32 1.5, %v808
        %v810 = vmul.f32 %v805, %v809
        %vm811 = vweird.f32 %v708
        %vm812 = vweird.f32 %v805
        %vm813 = vmor %vm811, %vm812
        %v814 = vsel %vm813, %v805, %v810
        %v815 = vrsqrt.pop %v709
        %v816 = vmul.f32 %v815, %v709
        %v817 = vmul.f32 %v816, %v815
        %v818 = vmul.f32 0.5, %v817
        %v819 = vsub.f32 1.5, %v818
        %v820 = vmul.f32 %v815, %v819
        %vm821 = vweird.f32 %v709
        %vm822 = vweird.f32 %v815
        %vm823 = vmor %vm821, %vm822
        %v824 = vsel %vm823, %v815, %v820
        %v825 = vrsqrt.pop %v710
        %v826 = vmul.f32 %v825, %v710
        %v827 = vmul.f32 %v826, %v825
        %v828 = vmul.f32 0.5, %v827
        %v829 = vsub.f32 1.5, %v828
        %v830 = vmul.f32 %v825, %v829
        %vm831 = vweird.f32 %v710
        %vm832 = vweird.f32 %v825
        %vm833 = vmor %vm831, %vm832
        %v834 = vsel %vm833, %v825, %v830
        %v835 = vrsqrt.pop %v711
        %v836 = vmul.f32 %v835, %v711
        %v837 = vmul.f32 %v836, %v835
        %v838 = vmul.f32 0.5, %v837
        %v839 = vsub.f32 1.5, %v838
        %v840 = vmul.f32 %v835, %v839
        %vm841 = vweird.f32 %v711
        %vm842 = vweird.f32 %v835
        %vm843 = vmor %vm841, %vm842
        %v844 = vsel %vm843, %v835, %v840
        %v845 = vrsqrt.pop %v712
        %v846 = vmul.f32 %v845, %v712
        %v847 = vmul.f32 %v846, %v845
        %v848 = vmul.f32 0.5, %v847
        %v849 = vsub.f32 1.5, %v848
        %v850 = vmul.f32 %v845, %v849
        %vm851 = vweird.f32 %v712
        %vm852 = vweird.f32 %v845
        %vm853 = vmor %vm851, %vm852
        %v854 = vsel %vm853, %v845, %v850
        %v855 = vrsqrt.pop %v713
        %v856 = vmul.f32 %v855, %v713
        %v857 = vmul.f32 %v856, %v855
        %v858 = vmul.f32 0.5, %v857
        %v859 = vsub.f32 1.5, %v858
        %v860 = vmul.f32 %v855, %v859
        %vm861 = vweird.f32 %v713
        %vm862 = vweird.f32 %v855
        %vm863 = vmor %vm861, %vm862
        %v864 = vsel %vm863, %v855, %v860
        %v865 = vrsqrt.pop %v714
        %v866 = vmul.f32 %v865, %v714
        %v867 = vmul.f32 %v866, %v865
        %v868 = vmul.f32 0.5, %v867
        %v869 = vsub.f32 1.5, %v868
        %v870 = vmul.f32 %v865, %v869
        %vm871 = vweird.f32 %v714
        %vm872 = vweird.f32 %v865
        %vm873 = vmor %vm871, %vm872
        %v874 = vsel %vm873, %v865, %v870
        %v875 = vmul.f32 %v563, %v724
        %v876 = vmul.f32 %v564, %v724
        %v877 = vmul.f32 %v565, %v734
        %v878 = vmul.f32 %v566, %v734
        %v879 = vmul.f32 %v567, %v744
        %v880 = vmul.f32 %v568, %v744
        %v881 = vmul.f32 %v569, %v754
        %v882 = vmul.f32 %v570, %v754
        %v883 = vmul.f32 %v571, %v764
        %v884 = vmul.f32 %v572, %v764
        %v885 = vmul.f32 %v573, %v774
        %v886 = vmul.f32 %v574, %v774
        %v887 = vmul.f32 %v575, %v784
        %v888 = vmul.f32 %v576, %v784
        %v889 = vmul.f32 %v577, %v794
        %v890 = vmul.f32 %v578, %v794
        %v891 = vmul.f32 %v579, %v804
        %v892 = vmul.f32 %v580, %v804
        %v893 = vmul.f32 %v581, %v814
        %v894 = vmul.f32 %v582, %v814
        %v895 = vmul.f32 %v583, %v824
        %v896 = vmul.f32 %v584, %v824
        %v897 = vmul.f32 %v585, %v834
        %v898 = vmul.f32 %v586, %v834
        %v899 = vmul.f32 %v587, %v844
        %v900 = vmul.f32 %v588, %v844
        %v901 = vmul.f32 %v589, %v854
        %v902 = vmul.f32 %v590, %v854
        %v903 = vmul.f32 %v591, %v864
        %v904 = vmul.f32 %v592, %v864
        %v905 = vmul.f32 %v593, %v874
        %v906 = vmul.f32 %v594, %v874
        %v908 = vperm.slane %v595, 0
        %v909 = vperm.slane %v595, 1
        %v912 = vmul.f32 %v875, %v908
        %v913 = vmul.f32 %v876, %v909
        %v914 = vmul.f32 %v877, %v908
        %v915 = vmul.f32 %v878, %v909
        %v916 = vmul.f32 %v879, %v908
        %v917 = vmul.f32 %v880, %v909
        %v918 = vmul.f32 %v881, %v908
        %v919 = vmul.f32 %v882, %v909
        %v920 = vmul.f32 %v883, %v908
        %v921 = vmul.f32 %v884, %v909
        %v922 = vmul.f32 %v885, %v908
        %v923 = vmul.f32 %v886, %v909
        %v924 = vmul.f32 %v887, %v908
        %v925 = vmul.f32 %v888, %v909
        %v926 = vmul.f32 %v889, %v908
        %v927 = vmul.f32 %v890, %v909
        %v928 = vmul.f32 %v891, %v908
        %v929 = vmul.f32 %v892, %v909
        %v930 = vmul.f32 %v893, %v908
        %v931 = vmul.f32 %v894, %v909
        %v932 = vmul.f32 %v895, %v908
        %v933 = vmul.f32 %v896, %v909
        %v934 = vmul.f32 %v897, %v908
        %v935 = vmul.f32 %v898, %v909
        %v936 = vmul.f32 %v899, %v908
        %v937 = vmul.f32 %v900, %v909
        %v938 = vmul.f32 %v901, %v908
        %v939 = vmul.f32 %v902, %v909
        %v940 = vmul.f32 %v903, %v908
        %v941 = vmul.f32 %v904, %v909
        %v942 = vmul.f32 %v905, %v908
        %v943 = vmul.f32 %v906, %v909
        %v944 = vpack.c.bf16 %v914, %v912
        %v945 = vpack.c.bf16 %v915, %v913
        %v946 = vpack.c.bf16 %v918, %v916
        %v947 = vpack.c.bf16 %v919, %v917
        %v948 = vpack.c.bf16 %v922, %v920
        %v949 = vpack.c.bf16 %v923, %v921
        %v950 = vpack.c.bf16 %v926, %v924
        %v951 = vpack.c.bf16 %v927, %v925
        %v952 = vpack.c.bf16 %v930, %v928
        %v953 = vpack.c.bf16 %v931, %v929
        %v954 = vpack.c.bf16 %v934, %v932
        %v955 = vpack.c.bf16 %v935, %v933
        %v956 = vpack.c.bf16 %v938, %v936
        %v957 = vpack.c.bf16 %v939, %v937
        %v958 = vpack.c.bf16 %v942, %v940
        %v959 = vpack.c.bf16 %v943, %v941
        %v960 = vld [vmem:[%s365] sm:$0xff]
        %v961 = vld [vmem:[%s365 + $0x8] sm:$0xff]
        %v962 = vld [vmem:[%s365 + $0x10] sm:$0xff]
        %v963 = vld [vmem:[%s365 + $0x18] sm:$0xff]
        %v964 = vld [vmem:[%s365 + $0x20] sm:$0xff]
        %v965 = vld [vmem:[%s365 + $0x28] sm:$0xff]
        %v966 = vld [vmem:[%s365 + $0x30] sm:$0xff]
        %v967 = vld [vmem:[%s365 + $0x38] sm:$0xff]
        %v968 = vld [vmem:[%s365 + $0x40] sm:$0xff]
        %v969 = vld [vmem:[%s365 + $0x48] sm:$0xff]
        %v970 = vld [vmem:[%s365 + $0x50] sm:$0xff]
        %v971 = vld [vmem:[%s365 + $0x58] sm:$0xff]
        %v972 = vld [vmem:[%s365 + $0x60] sm:$0xff]
        %v973 = vld [vmem:[%s365 + $0x68] sm:$0xff]
        %v974 = vld [vmem:[%s365 + $0x70] sm:$0xff]
        %v975 = vld [vmem:[%s365 + $0x78] sm:$0xff]
        %v976 = vld [vmem:[%s365 + $0x80] sm:$0xff]
        %v977 = vld [vmem:[%s365 + $0x88] sm:$0xff]
        %v978 = vld [vmem:[%s365 + $0x90] sm:$0xff]
        %v979 = vld [vmem:[%s365 + $0x98] sm:$0xff]
        %v980 = vld [vmem:[%s365 + $0xa0] sm:$0xff]
        %v981 = vld [vmem:[%s365 + $0xa8] sm:$0xff]
        %v982 = vld [vmem:[%s365 + $0xb0] sm:$0xff]
        %v983 = vld [vmem:[%s365 + $0xb8] sm:$0xff]
        %v984 = vld [vmem:[%s365 + $0xc0] sm:$0xff]
        %v985 = vld [vmem:[%s365 + $0xc8] sm:$0xff]
        %v986 = vld [vmem:[%s365 + $0xd0] sm:$0xff]
        %v987 = vld [vmem:[%s365 + $0xd8] sm:$0xff]
        %v988 = vld [vmem:[%s365 + $0xe0] sm:$0xff]
        %v989 = vld [vmem:[%s365 + $0xe8] sm:$0xff]
        %v990 = vld [vmem:[%s365 + $0xf0] sm:$0xff]
        %v991 = vld [vmem:[%s365 + $0xf8] sm:$0xff]
        %v992 = vld [vmem:[%s365 + $0x100] sm:$0xff]
        %v993 = vld [vmem:[%s365 + $0x108] sm:$0xff]
        %v994 = vld [vmem:[%s365 + $0x110] sm:$0xff]
        %v995 = vld [vmem:[%s365 + $0x118] sm:$0xff]
        %v996 = vld [vmem:[%s365 + $0x120] sm:$0xff]
        %v997 = vld [vmem:[%s365 + $0x128] sm:$0xff]
        %v998 = vld [vmem:[%s365 + $0x130] sm:$0xff]
        %v999 = vld [vmem:[%s365 + $0x138] sm:$0xff]
        %v1000 = vld [vmem:[%s365 + $0x140] sm:$0xff]
        %v1001 = vld [vmem:[%s365 + $0x148] sm:$0xff]
        %v1002 = vld [vmem:[%s365 + $0x150] sm:$0xff]
        %v1003 = vld [vmem:[%s365 + $0x158] sm:$0xff]
        %v1004 = vld [vmem:[%s365 + $0x160] sm:$0xff]
        %v1005 = vld [vmem:[%s365 + $0x168] sm:$0xff]
        %v1006 = vld [vmem:[%s365 + $0x170] sm:$0xff]
        %v1007 = vld [vmem:[%s365 + $0x178] sm:$0xff]
        %v1008 = vld [vmem:[%s365 + $0x180] sm:$0xff]
        %v1009 = vld [vmem:[%s365 + $0x188] sm:$0xff]
        %v1010 = vld [vmem:[%s365 + $0x190] sm:$0xff]
        %v1011 = vld [vmem:[%s365 + $0x198] sm:$0xff]
        %v1012 = vld [vmem:[%s365 + $0x1a0] sm:$0xff]
        %v1013 = vld [vmem:[%s365 + $0x1a8] sm:$0xff]
        %v1014 = vld [vmem:[%s365 + $0x1b0] sm:$0xff]
        %v1015 = vld [vmem:[%s365 + $0x1b8] sm:$0xff]
        %v1016 = vld [vmem:[%s365 + $0x1c0] sm:$0xff]
        %v1017 = vld [vmem:[%s365 + $0x1c8] sm:$0xff]
        %v1018 = vld [vmem:[%s365 + $0x1d0] sm:$0xff]
        %v1019 = vld [vmem:[%s365 + $0x1d8] sm:$0xff]
        %v1020 = vld [vmem:[%s365 + $0x1e0] sm:$0xff]
        %v1021 = vld [vmem:[%s365 + $0x1e8] sm:$0xff]
        %v1022 = vld [vmem:[%s365 + $0x1f0] sm:$0xff]
        %v1023 = vld [vmem:[%s365 + $0x1f8] sm:$0xff]
        %v1024 = vld [vmem:[%s365 + $0x200] sm:$0xff]
        %v1025 = vld [vmem:[%s365 + $0x208] sm:$0xff]
        %v1026 = vld [vmem:[%s365 + $0x210] sm:$0xff]
        %v1027 = vld [vmem:[%s365 + $0x218] sm:$0xff]
        %v1028 = vld [vmem:[%s365 + $0x220] sm:$0xff]
        %v1029 = vld [vmem:[%s365 + $0x228] sm:$0xff]
        %v1030 = vld [vmem:[%s365 + $0x230] sm:$0xff]
        %v1031 = vld [vmem:[%s365 + $0x238] sm:$0xff]
        %v1032 = vld [vmem:[%s365 + $0x240] sm:$0xff]
        %v1033 = vld [vmem:[%s365 + $0x248] sm:$0xff]
        %v1034 = vld [vmem:[%s365 + $0x250] sm:$0xff]
        %v1035 = vld [vmem:[%s365 + $0x258] sm:$0xff]
        %v1036 = vld [vmem:[%s365 + $0x260] sm:$0xff]
        %v1037 = vld [vmem:[%s365 + $0x268] sm:$0xff]
        %v1038 = vld [vmem:[%s365 + $0x270] sm:$0xff]
        %v1039 = vld [vmem:[%s365 + $0x278] sm:$0xff]
        %v1040 = vld [vmem:[%s365 + $0x280] sm:$0xff]
        %v1041 = vld [vmem:[%s365 + $0x288] sm:$0xff]
        %v1042 = vld [vmem:[%s365 + $0x290] sm:$0xff]
        %v1043 = vld [vmem:[%s365 + $0x298] sm:$0xff]
        %v1044 = vld [vmem:[%s365 + $0x2a0] sm:$0xff]
        %v1045 = vld [vmem:[%s365 + $0x2a8] sm:$0xff]
        %v1046 = vld [vmem:[%s365 + $0x2b0] sm:$0xff]
        %v1047 = vld [vmem:[%s365 + $0x2b8] sm:$0xff]
        %v1048 = vld [vmem:[%s365 + $0x2c0] sm:$0xff]
        %v1049 = vld [vmem:[%s365 + $0x2c8] sm:$0xff]
        %v1050 = vld [vmem:[%s365 + $0x2d0] sm:$0xff]
        %v1051 = vld [vmem:[%s365 + $0x2d8] sm:$0xff]
        %v1052 = vld [vmem:[%s365 + $0x2e0] sm:$0xff]
        %v1053 = vld [vmem:[%s365 + $0x2e8] sm:$0xff]
        %v1054 = vld [vmem:[%s365 + $0x2f0] sm:$0xff]
        %v1055 = vld [vmem:[%s365 + $0x2f8] sm:$0xff]
        %v1152 = vunpack.c.l.b16 %v960
        %v1153 = vunpack.c.h.b16 %v960
        %v1154 = vunpack.c.l.b16 %v961
        %v1155 = vunpack.c.h.b16 %v961
        %v1156 = vunpack.c.l.b16 %v962
        %v1157 = vunpack.c.h.b16 %v962
        %v1158 = vunpack.c.l.b16 %v963
        %v1159 = vunpack.c.h.b16 %v963
        %v1160 = vunpack.c.l.b16 %v964
        %v1161 = vunpack.c.h.b16 %v964
        %v1162 = vunpack.c.l.b16 %v965
        %v1163 = vunpack.c.h.b16 %v965
        %v1164 = vunpack.c.l.b16 %v966
        %v1165 = vunpack.c.h.b16 %v966
        %v1166 = vunpack.c.l.b16 %v967
        %v1167 = vunpack.c.h.b16 %v967
        %v1168 = vunpack.c.l.b16 %v968
        %v1169 = vunpack.c.h.b16 %v968
        %v1170 = vunpack.c.l.b16 %v969
        %v1171 = vunpack.c.h.b16 %v969
        %v1172 = vunpack.c.l.b16 %v970
        %v1173 = vunpack.c.h.b16 %v970
        %v1174 = vunpack.c.l.b16 %v971
        %v1175 = vunpack.c.h.b16 %v971
        %v1176 = vunpack.c.l.b16 %v972
        %v1177 = vunpack.c.h.b16 %v972
        %v1178 = vunpack.c.l.b16 %v973
        %v1179 = vunpack.c.h.b16 %v973
        %v1180 = vunpack.c.l.b16 %v974
        %v1181 = vunpack.c.h.b16 %v974
        %v1182 = vunpack.c.l.b16 %v975
        %v1183 = vunpack.c.h.b16 %v975
        %v1184 = vunpack.c.l.b16 %v976
        %v1185 = vunpack.c.h.b16 %v976
        %v1186 = vunpack.c.l.b16 %v977
        %v1187 = vunpack.c.h.b16 %v977
        %v1188 = vunpack.c.l.b16 %v978
        %v1189 = vunpack.c.h.b16 %v978
        %v1190 = vunpack.c.l.b16 %v979
        %v1191 = vunpack.c.h.b16 %v979
        %v1192 = vunpack.c.l.b16 %v980
        %v1193 = vunpack.c.h.b16 %v980
        %v1194 = vunpack.c.l.b16 %v981
        %v1195 = vunpack.c.h.b16 %v981
        %v1196 = vunpack.c.l.b16 %v982
        %v1197 = vunpack.c.h.b16 %v982
        %v1198 = vunpack.c.l.b16 %v983
        %v1199 = vunpack.c.h.b16 %v983
        %v1200 = vunpack.c.l.b16 %v984
        %v1201 = vunpack.c.h.b16 %v984
        %v1202 = vunpack.c.l.b16 %v985
        %v1203 = vunpack.c.h.b16 %v985
        %v1204 = vunpack.c.l.b16 %v986
        %v1205 = vunpack.c.h.b16 %v986
        %v1206 = vunpack.c.l.b16 %v987
        %v1207 = vunpack.c.h.b16 %v987
        %v1208 = vunpack.c.l.b16 %v988
        %v1209 = vunpack.c.h.b16 %v988
        %v1210 = vunpack.c.l.b16 %v989
        %v1211 = vunpack.c.h.b16 %v989
        %v1212 = vunpack.c.l.b16 %v990
        %v1213 = vunpack.c.h.b16 %v990
        %v1214 = vunpack.c.l.b16 %v991
        %v1215 = vunpack.c.h.b16 %v991
        %v1216 = vunpack.c.l.b16 %v992
        %v1217 = vunpack.c.h.b16 %v992
        %v1218 = vunpack.c.l.b16 %v993
        %v1219 = vunpack.c.h.b16 %v993
        %v1220 = vunpack.c.l.b16 %v994
        %v1221 = vunpack.c.h.b16 %v994
        %v1222 = vunpack.c.l.b16 %v995
        %v1223 = vunpack.c.h.b16 %v995
        %v1224 = vunpack.c.l.b16 %v996
        %v1225 = vunpack.c.h.b16 %v996
        %v1226 = vunpack.c.l.b16 %v997
        %v1227 = vunpack.c.h.b16 %v997
        %v1228 = vunpack.c.l.b16 %v998
        %v1229 = vunpack.c.h.b16 %v998
        %v1230 = vunpack.c.l.b16 %v999
        %v1231 = vunpack.c.h.b16 %v999
        %v1232 = vunpack.c.l.b16 %v1000
        %v1233 = vunpack.c.h.b16 %v1000
        %v1234 = vunpack.c.l.b16 %v1001
        %v1235 = vunpack.c.h.b16 %v1001
        %v1236 = vunpack.c.l.b16 %v1002
        %v1237 = vunpack.c.h.b16 %v1002
        %v1238 = vunpack.c.l.b16 %v1003
        %v1239 = vunpack.c.h.b16 %v1003
        %v1240 = vunpack.c.l.b16 %v1004
        %v1241 = vunpack.c.h.b16 %v1004
        %v1242 = vunpack.c.l.b16 %v1005
        %v1243 = vunpack.c.h.b16 %v1005
        %v1244 = vunpack.c.l.b16 %v1006
        %v1245 = vunpack.c.h.b16 %v1006
        %v1246 = vunpack.c.l.b16 %v1007
        %v1247 = vunpack.c.h.b16 %v1007
        %v1248 = vunpack.c.l.b16 %v1008
        %v1249 = vunpack.c.h.b16 %v1008
        %v1250 = vunpack.c.l.b16 %v1009
        %v1251 = vunpack.c.h.b16 %v1009
        %v1252 = vunpack.c.l.b16 %v1010
        %v1253 = vunpack.c.h.b16 %v1010
        %v1254 = vunpack.c.l.b16 %v1011
        %v1255 = vunpack.c.h.b16 %v1011
        %v1256 = vunpack.c.l.b16 %v1012
        %v1257 = vunpack.c.h.b16 %v1012
        %v1258 = vunpack.c.l.b16 %v1013
        %v1259 = vunpack.c.h.b16 %v1013
        %v1260 = vunpack.c.l.b16 %v1014
        %v1261 = vunpack.c.h.b16 %v1014
        %v1262 = vunpack.c.l.b16 %v1015
        %v1263 = vunpack.c.h.b16 %v1015
        %v1264 = vunpack.c.l.b16 %v1016
        %v1265 = vunpack.c.h.b16 %v1016
        %v1266 = vunpack.c.l.b16 %v1017
        %v1267 = vunpack.c.h.b16 %v1017
        %v1268 = vunpack.c.l.b16 %v1018
        %v1269 = vunpack.c.h.b16 %v1018
        %v1270 = vunpack.c.l.b16 %v1019
        %v1271 = vunpack.c.h.b16 %v1019
        %v1272 = vunpack.c.l.b16 %v1020
        %v1273 = vunpack.c.h.b16 %v1020
        %v1274 = vunpack.c.l.b16 %v1021
        %v1275 = vunpack.c.h.b16 %v1021
        %v1276 = vunpack.c.l.b16 %v1022
        %v1277 = vunpack.c.h.b16 %v1022
        %v1278 = vunpack.c.l.b16 %v1023
        %v1279 = vunpack.c.h.b16 %v1023
        %v1280 = vunpack.c.l.b16 %v1024
        %v1281 = vunpack.c.h.b16 %v1024
        %v1282 = vunpack.c.l.b16 %v1025
        %v1283 = vunpack.c.h.b16 %v1025
        %v1284 = vunpack.c.l.b16 %v1026
        %v1285 = vunpack.c.h.b16 %v1026
        %v1286 = vunpack.c.l.b16 %v1027
        %v1287 = vunpack.c.h.b16 %v1027
        %v1288 = vunpack.c.l.b16 %v1028
        %v1289 = vunpack.c.h.b16 %v1028
        %v1290 = vunpack.c.l.b16 %v1029
        %v1291 = vunpack.c.h.b16 %v1029
        %v1292 = vunpack.c.l.b16 %v1030
        %v1293 = vunpack.c.h.b16 %v1030
        %v1294 = vunpack.c.l.b16 %v1031
        %v1295 = vunpack.c.h.b16 %v1031
        %v1296 = vunpack.c.l.b16 %v1032
        %v1297 = vunpack.c.h.b16 %v1032
        %v1298 = vunpack.c.l.b16 %v1033
        %v1299 = vunpack.c.h.b16 %v1033
        %v1300 = vunpack.c.l.b16 %v1034
        %v1301 = vunpack.c.h.b16 %v1034
        %v1302 = vunpack.c.l.b16 %v1035
        %v1303 = vunpack.c.h.b16 %v1035
        %v1304 = vunpack.c.l.b16 %v1036
        %v1305 = vunpack.c.h.b16 %v1036
        %v1306 = vunpack.c.l.b16 %v1037
        %v1307 = vunpack.c.h.b16 %v1037
        %v1308 = vunpack.c.l.b16 %v1038
        %v1309 = vunpack.c.h.b16 %v1038
        %v1310 = vunpack.c.l.b16 %v1039
        %v1311 = vunpack.c.h.b16 %v1039
        %v1312 = vunpack.c.l.b16 %v1040
        %v1313 = vunpack.c.h.b16 %v1040
        %v1314 = vunpack.c.l.b16 %v1041
        %v1315 = vunpack.c.h.b16 %v1041
        %v1316 = vunpack.c.l.b16 %v1042
        %v1317 = vunpack.c.h.b16 %v1042
        %v1318 = vunpack.c.l.b16 %v1043
        %v1319 = vunpack.c.h.b16 %v1043
        %v1320 = vunpack.c.l.b16 %v1044
        %v1321 = vunpack.c.h.b16 %v1044
        %v1322 = vunpack.c.l.b16 %v1045
        %v1323 = vunpack.c.h.b16 %v1045
        %v1324 = vunpack.c.l.b16 %v1046
        %v1325 = vunpack.c.h.b16 %v1046
        %v1326 = vunpack.c.l.b16 %v1047
        %v1327 = vunpack.c.h.b16 %v1047
        %v1328 = vunpack.c.l.b16 %v1048
        %v1329 = vunpack.c.h.b16 %v1048
        %v1330 = vunpack.c.l.b16 %v1049
        %v1331 = vunpack.c.h.b16 %v1049
        %v1332 = vunpack.c.l.b16 %v1050
        %v1333 = vunpack.c.h.b16 %v1050
        %v1334 = vunpack.c.l.b16 %v1051
        %v1335 = vunpack.c.h.b16 %v1051
        %v1336 = vunpack.c.l.b16 %v1052
        %v1337 = vunpack.c.h.b16 %v1052
        %v1338 = vunpack.c.l.b16 %v1053
        %v1339 = vunpack.c.h.b16 %v1053
        %v1340 = vunpack.c.l.b16 %v1054
        %v1341 = vunpack.c.h.b16 %v1054
        %v1342 = vunpack.c.l.b16 %v1055
        %v1343 = vunpack.c.h.b16 %v1055
        %v1344 = vpack.c.b16 %v1158, %v1152
        %v1345 = vpack.c.b16 %v1159, %v1153
        %v1346 = vpack.c.b16 %v1160, %v1154
        %v1347 = vpack.c.b16 %v1161, %v1155
        %v1348 = vpack.c.b16 %v1162, %v1156
        %v1349 = vpack.c.b16 %v1163, %v1157
        %v1350 = vpack.c.b16 %v1170, %v1164
        %v1351 = vpack.c.b16 %v1171, %v1165
        %v1352 = vpack.c.b16 %v1172, %v1166
        %v1353 = vpack.c.b16 %v1173, %v1167
        %v1354 = vpack.c.b16 %v1174, %v1168
        %v1355 = vpack.c.b16 %v1175, %v1169
        %v1356 = vpack.c.b16 %v1182, %v1176
        %v1357 = vpack.c.b16 %v1183, %v1177
        %v1358 = vpack.c.b16 %v1184, %v1178
        %v1359 = vpack.c.b16 %v1185, %v1179
        %v1360 = vpack.c.b16 %v1186, %v1180
        %v1361 = vpack.c.b16 %v1187, %v1181
        %v1362 = vpack.c.b16 %v1194, %v1188
        %v1363 = vpack.c.b16 %v1195, %v1189
        %v1364 = vpack.c.b16 %v1196, %v1190
        %v1365 = vpack.c.b16 %v1197, %v1191
        %v1366 = vpack.c.b16 %v1198, %v1192
        %v1367 = vpack.c.b16 %v1199, %v1193
        %v1368 = vpack.c.b16 %v1206, %v1200
        %v1369 = vpack.c.b16 %v1207, %v1201
        %v1370 = vpack.c.b16 %v1208, %v1202
        %v1371 = vpack.c.b16 %v1209, %v1203
        %v1372 = vpack.c.b16 %v1210, %v1204
        %v1373 = vpack.c.b16 %v1211, %v1205
        %v1374 = vpack.c.b16 %v1218, %v1212
        %v1375 = vpack.c.b16 %v1219, %v1213
        %v1376 = vpack.c.b16 %v1220, %v1214
        %v1377 = vpack.c.b16 %v1221, %v1215
        %v1378 = vpack.c.b16 %v1222, %v1216
        %v1379 = vpack.c.b16 %v1223, %v1217
        %v1380 = vpack.c.b16 %v1230, %v1224
        %v1381 = vpack.c.b16 %v1231, %v1225
        %v1382 = vpack.c.b16 %v1232, %v1226
        %v1383 = vpack.c.b16 %v1233, %v1227
        %v1384 = vpack.c.b16 %v1234, %v1228
        %v1385 = vpack.c.b16 %v1235, %v1229
        %v1386 = vpack.c.b16 %v1242, %v1236
        %v1387 = vpack.c.b16 %v1243, %v1237
        %v1388 = vpack.c.b16 %v1244, %v1238
        %v1389 = vpack.c.b16 %v1245, %v1239
        %v1390 = vpack.c.b16 %v1246, %v1240
        %v1391 = vpack.c.b16 %v1247, %v1241
        %v1392 = vpack.c.b16 %v1254, %v1248
        %v1393 = vpack.c.b16 %v1255, %v1249
        %v1394 = vpack.c.b16 %v1256, %v1250
        %v1395 = vpack.c.b16 %v1257, %v1251
        %v1396 = vpack.c.b16 %v1258, %v1252
        %v1397 = vpack.c.b16 %v1259, %v1253
        %v1398 = vpack.c.b16 %v1266, %v1260
        %v1399 = vpack.c.b16 %v1267, %v1261
        %v1400 = vpack.c.b16 %v1268, %v1262
        %v1401 = vpack.c.b16 %v1269, %v1263
        %v1402 = vpack.c.b16 %v1270, %v1264
        %v1403 = vpack.c.b16 %v1271, %v1265
        %v1404 = vpack.c.b16 %v1278, %v1272
        %v1405 = vpack.c.b16 %v1279, %v1273
        %v1406 = vpack.c.b16 %v1280, %v1274
        %v1407 = vpack.c.b16 %v1281, %v1275
        %v1408 = vpack.c.b16 %v1282, %v1276
        %v1409 = vpack.c.b16 %v1283, %v1277
        %v1410 = vpack.c.b16 %v1290, %v1284
        %v1411 = vpack.c.b16 %v1291, %v1285
        %v1412 = vpack.c.b16 %v1292, %v1286
        %v1413 = vpack.c.b16 %v1293, %v1287
        %v1414 = vpack.c.b16 %v1294, %v1288
        %v1415 = vpack.c.b16 %v1295, %v1289
        %v1416 = vpack.c.b16 %v1302, %v1296
        %v1417 = vpack.c.b16 %v1303, %v1297
        %v1418 = vpack.c.b16 %v1304, %v1298
        %v1419 = vpack.c.b16 %v1305, %v1299
        %v1420 = vpack.c.b16 %v1306, %v1300
        %v1421 = vpack.c.b16 %v1307, %v1301
        %v1422 = vpack.c.b16 %v1314, %v1308
        %v1423 = vpack.c.b16 %v1315, %v1309
        %v1424 = vpack.c.b16 %v1316, %v1310
        %v1425 = vpack.c.b16 %v1317, %v1311
        %v1426 = vpack.c.b16 %v1318, %v1312
        %v1427 = vpack.c.b16 %v1319, %v1313
        %v1428 = vpack.c.b16 %v1326, %v1320
        %v1429 = vpack.c.b16 %v1327, %v1321
        %v1430 = vpack.c.b16 %v1328, %v1322
        %v1431 = vpack.c.b16 %v1329, %v1323
        %v1432 = vpack.c.b16 %v1330, %v1324
        %v1433 = vpack.c.b16 %v1331, %v1325
        %v1434 = vpack.c.b16 %v1338, %v1332
        %v1435 = vpack.c.b16 %v1339, %v1333
        %v1436 = vpack.c.b16 %v1340, %v1334
        %v1437 = vpack.c.b16 %v1341, %v1335
        %v1438 = vpack.c.b16 %v1342, %v1336
        %v1439 = vpack.c.b16 %v1343, %v1337
        %1536 = vmatpush.bf16.msra.mxu0 %v1386
        %1537 = vmatpush.bf16.msra.mxu0 %v1380
        %1538 = vmatpush.bf16.msra.mxu0 %v1374
        %1539 = vmatpush.bf16.msra.mxu0 %v1368
        %1540 = vmatpush.bf16.msra.mxu0 %v1362
        %1541 = vmatpush.bf16.msra.mxu0 %v1356
        %1542 = vmatpush.bf16.msra.mxu0 %v1350
        %1543 = vmatpush.bf16.msra.mxu0 %v1344
        %1544 = vmatmul.bf16.gmra.mxu0 %v944
        %v1545 = vpop.f32.mrf.mxu0
        %v1546 = vadd.f32 0.0, %v1545
        %v1547 = vpop.f32.mrf.mxu0
        %v1548 = vadd.f32 0.0, %v1547
        %1549 = vmatmul.bf16.gmra.mxu0 %v946
        %v1550 = vpop.f32.mrf.mxu0
        %v1551 = vadd.f32 0.0, %v1550
        %v1552 = vpop.f32.mrf.mxu0
        %v1553 = vadd.f32 0.0, %v1552
        %1554 = vmatmul.bf16.gmra.mxu0 %v948
        %v1555 = vpop.f32.mrf.mxu0
        %v1556 = vadd.f32 0.0, %v1555
        %v1557 = vpop.f32.mrf.mxu0
        %v1558 = vadd.f32 0.0, %v1557
        %1559 = vmatmul.bf16.gmra.mxu0 %v950
        %v1560 = vpop.f32.mrf.mxu0
        %v1561 = vadd.f32 0.0, %v1560
        %v1562 = vpop.f32.mrf.mxu0
        %v1563 = vadd.f32 0.0, %v1562
        %1564 = vmatmul.bf16.gmra.mxu0 %v952
        %v1565 = vpop.f32.mrf.mxu0
        %v1566 = vadd.f32 0.0, %v1565
        %v1567 = vpop.f32.mrf.mxu0
        %v1568 = vadd.f32 0.0, %v1567
        %1569 = vmatmul.bf16.gmra.mxu0 %v954
        %v1570 = vpop.f32.mrf.mxu0
        %v1571 = vadd.f32 0.0, %v1570
        %v1572 = vpop.f32.mrf.mxu0
        %v1573 = vadd.f32 0.0, %v1572
        %1574 = vmatmul.bf16.gmra.mxu0 %v956
        %v1575 = vpop.f32.mrf.mxu0
        %v1576 = vadd.f32 0.0, %v1575
        %v1577 = vpop.f32.mrf.mxu0
        %v1578 = vadd.f32 0.0, %v1577
        %1579 = vmatmul.bf16.gmra.mxu0 %v958
        %v1580 = vpop.f32.mrf.mxu0
        %v1581 = vadd.f32 0.0, %v1580
        %v1582 = vpop.f32.mrf.mxu0
        %v1583 = vadd.f32 0.0, %v1582
        %1584 = vdwg.mxu0
        %1585 = vmatpush.bf16.msra.mxu0 %v1434
        %1586 = vmatpush.bf16.msra.mxu0 %v1428
        %1587 = vmatpush.bf16.msra.mxu0 %v1422
        %1588 = vmatpush.bf16.msra.mxu0 %v1416
        %1589 = vmatpush.bf16.msra.mxu0 %v1410
        %1590 = vmatpush.bf16.msra.mxu0 %v1404
        %1591 = vmatpush.bf16.msra.mxu0 %v1398
        %1592 = vmatpush.bf16.msra.mxu0 %v1392
        %1593 = vmatmul.bf16.gmra.mxu0 %v945
        %v1594 = vpop.f32.mrf.mxu0
        %v1595 = vadd.f32 %v1546, %v1594
        %v1596 = vpop.f32.mrf.mxu0
        %v1597 = vadd.f32 %v1548, %v1596
        %1598 = vmatmul.bf16.gmra.mxu0 %v947
        %v1599 = vpop.f32.mrf.mxu0
        %v1600 = vadd.f32 %v1551, %v1599
        %v1601 = vpop.f32.mrf.mxu0
        %v1602 = vadd.f32 %v1553, %v1601
        %1603 = vmatmul.bf16.gmra.mxu0 %v949
        %v1604 = vpop.f32.mrf.mxu0
        %v1605 = vadd.f32 %v1556, %v1604
        %v1606 = vpop.f32.mrf.mxu0
        %v1607 = vadd.f32 %v1558, %v1606
        %1608 = vmatmul.bf16.gmra.mxu0 %v951
        %v1609 = vpop.f32.mrf.mxu0
        %v1610 = vadd.f32 %v1561, %v1609
        %v1611 = vpop.f32.mrf.mxu0
        %v1612 = vadd.f32 %v1563, %v1611
        %1613 = vmatmul.bf16.gmra.mxu0 %v953
        %v1614 = vpop.f32.mrf.mxu0
        %v1615 = vadd.f32 %v1566, %v1614
        %v1616 = vpop.f32.mrf.mxu0
        %v1617 = vadd.f32 %v1568, %v1616
        %1618 = vmatmul.bf16.gmra.mxu0 %v955
        %v1619 = vpop.f32.mrf.mxu0
        %v1620 = vadd.f32 %v1571, %v1619
        %v1621 = vpop.f32.mrf.mxu0
        %v1622 = vadd.f32 %v1573, %v1621
        %1623 = vmatmul.bf16.gmra.mxu0 %v957
        %v1624 = vpop.f32.mrf.mxu0
        %v1625 = vadd.f32 %v1576, %v1624
        %v1626 = vpop.f32.mrf.mxu0
        %v1627 = vadd.f32 %v1578, %v1626
        %1628 = vmatmul.bf16.gmra.mxu0 %v959
        %v1629 = vpop.f32.mrf.mxu0
        %v1630 = vadd.f32 %v1581, %v1629
        %v1631 = vpop.f32.mrf.mxu0
        %v1632 = vadd.f32 %v1583, %v1631
        %1633 = vdwg.mxu0
        %1634 = vmatpush.bf16.msra.mxu0 %v1387
        %1635 = vmatpush.bf16.msra.mxu0 %v1381
        %1636 = vmatpush.bf16.msra.mxu0 %v1375
        %1637 = vmatpush.bf16.msra.mxu0 %v1369
        %1638 = vmatpush.bf16.msra.mxu0 %v1363
        %1639 = vmatpush.bf16.msra.mxu0 %v1357
        %1640 = vmatpush.bf16.msra.mxu0 %v1351
        %1641 = vmatpush.bf16.msra.mxu0 %v1345
        %1642 = vmatmul.bf16.gmra.mxu0 %v944
        %v1643 = vpop.f32.mrf.mxu0
        %v1644 = vadd.f32 0.0, %v1643
        %v1645 = vpop.f32.mrf.mxu0
        %v1646 = vadd.f32 0.0, %v1645
        %1647 = vmatmul.bf16.gmra.mxu0 %v946
        %v1648 = vpop.f32.mrf.mxu0
        %v1649 = vadd.f32 0.0, %v1648
        %v1650 = vpop.f32.mrf.mxu0
        %v1651 = vadd.f32 0.0, %v1650
        %1652 = vmatmul.bf16.gmra.mxu0 %v948
        %v1653 = vpop.f32.mrf.mxu0
        %v1654 = vadd.f32 0.0, %v1653
        %v1655 = vpop.f32.mrf.mxu0
        %v1656 = vadd.f32 0.0, %v1655
        %1657 = vmatmul.bf16.gmra.mxu0 %v950
        %v1658 = vpop.f32.mrf.mxu0
        %v1659 = vadd.f32 0.0, %v1658
        %v1660 = vpop.f32.mrf.mxu0
        %v1661 = vadd.f32 0.0, %v1660
        %1662 = vmatmul.bf16.gmra.mxu0 %v952
        %v1663 = vpop.f32.mrf.mxu0
        %v1664 = vadd.f32 0.0, %v1663
        %v1665 = vpop.f32.mrf.mxu0
        %v1666 = vadd.f32 0.0, %v1665
        %1667 = vmatmul.bf16.gmra.mxu0 %v954
        %v1668 = vpop.f32.mrf.mxu0
        %v1669 = vadd.f32 0.0, %v1668
        %v1670 = vpop.f32.mrf.mxu0
        %v1671 = vadd.f32 0.0, %v1670
        %1672 = vmatmul.bf16.gmra.mxu0 %v956
        %v1673 = vpop.f32.mrf.mxu0
        %v1674 = vadd.f32 0.0, %v1673
        %v1675 = vpop.f32.mrf.mxu0
        %v1676 = vadd.f32 0.0, %v1675
        %1677 = vmatmul.bf16.gmra.mxu0 %v958
        %v1678 = vpop.f32.mrf.mxu0
        %v1679 = vadd.f32 0.0, %v1678
        %v1680 = vpop.f32.mrf.mxu0
        %v1681 = vadd.f32 0.0, %v1680
        %1682 = vdwg.mxu0
        %1683 = vmatpush.bf16.msra.mxu0 %v1435
        %1684 = vmatpush.bf16.msra.mxu0 %v1429
        %1685 = vmatpush.bf16.msra.mxu0 %v1423
        %1686 = vmatpush.bf16.msra.mxu0 %v1417
        %1687 = vmatpush.bf16.msra.mxu0 %v1411
        %1688 = vmatpush.bf16.msra.mxu0 %v1405
        %1689 = vmatpush.bf16.msra.mxu0 %v1399
        %1690 = vmatpush.bf16.msra.mxu0 %v1393
        %1691 = vmatmul.bf16.gmra.mxu0 %v945
        %v1692 = vpop.f32.mrf.mxu0
        %v1693 = vadd.f32 %v1644, %v1692
        %v1694 = vpop.f32.mrf.mxu0
        %v1695 = vadd.f32 %v1646, %v1694
        %1696 = vmatmul.bf16.gmra.mxu0 %v947
        %v1697 = vpop.f32.mrf.mxu0
        %v1698 = vadd.f32 %v1649, %v1697
        %v1699 = vpop.f32.mrf.mxu0
        %v1700 = vadd.f32 %v1651, %v1699
        %1701 = vmatmul.bf16.gmra.mxu0 %v949
        %v1702 = vpop.f32.mrf.mxu0
        %v1703 = vadd.f32 %v1654, %v1702
        %v1704 = vpop.f32.mrf.mxu0
        %v1705 = vadd.f32 %v1656, %v1704
        %1706 = vmatmul.bf16.gmra.mxu0 %v951
        %v1707 = vpop.f32.mrf.mxu0
        %v1708 = vadd.f32 %v1659, %v1707
        %v1709 = vpop.f32.mrf.mxu0
        %v1710 = vadd.f32 %v1661, %v1709
        %1711 = vmatmul.bf16.gmra.mxu0 %v953
        %v1712 = vpop.f32.mrf.mxu0
        %v1713 = vadd.f32 %v1664, %v1712
        %v1714 = vpop.f32.mrf.mxu0
        %v1715 = vadd.f32 %v1666, %v1714
        %1716 = vmatmul.bf16.gmra.mxu0 %v955
        %v1717 = vpop.f32.mrf.mxu0
        %v1718 = vadd.f32 %v1669, %v1717
        %v1719 = vpop.f32.mrf.mxu0
        %v1720 = vadd.f32 %v1671, %v1719
        %1721 = vmatmul.bf16.gmra.mxu0 %v957
        %v1722 = vpop.f32.mrf.mxu0
        %v1723 = vadd.f32 %v1674, %v1722
        %v1724 = vpop.f32.mrf.mxu0
        %v1725 = vadd.f32 %v1676, %v1724
        %1726 = vmatmul.bf16.gmra.mxu0 %v959
        %v1727 = vpop.f32.mrf.mxu0
        %v1728 = vadd.f32 %v1679, %v1727
        %v1729 = vpop.f32.mrf.mxu0
        %v1730 = vadd.f32 %v1681, %v1729
        %1731 = vdwg.mxu0
        %1732 = vmatpush.bf16.msra.mxu0 %v1388
        %1733 = vmatpush.bf16.msra.mxu0 %v1382
        %1734 = vmatpush.bf16.msra.mxu0 %v1376
        %1735 = vmatpush.bf16.msra.mxu0 %v1370
        %1736 = vmatpush.bf16.msra.mxu0 %v1364
        %1737 = vmatpush.bf16.msra.mxu0 %v1358
        %1738 = vmatpush.bf16.msra.mxu0 %v1352
        %1739 = vmatpush.bf16.msra.mxu0 %v1346
        %1740 = vmatmul.bf16.gmra.mxu0 %v944
        %v1741 = vpop.f32.mrf.mxu0
        %v1742 = vadd.f32 0.0, %v1741
        %v1743 = vpop.f32.mrf.mxu0
        %v1744 = vadd.f32 0.0, %v1743
        %1745 = vmatmul.bf16.gmra.mxu0 %v946
        %v1746 = vpop.f32.mrf.mxu0
        %v1747 = vadd.f32 0.0, %v1746
        %v1748 = vpop.f32.mrf.mxu0
        %v1749 = vadd.f32 0.0, %v1748
        %1750 = vmatmul.bf16.gmra.mxu0 %v948
        %v1751 = vpop.f32.mrf.mxu0
        %v1752 = vadd.f32 0.0, %v1751
        %v1753 = vpop.f32.mrf.mxu0
        %v1754 = vadd.f32 0.0, %v1753
        %1755 = vmatmul.bf16.gmra.mxu0 %v950
        %v1756 = vpop.f32.mrf.mxu0
        %v1757 = vadd.f32 0.0, %v1756
        %v1758 = vpop.f32.mrf.mxu0
        %v1759 = vadd.f32 0.0, %v1758
        %1760 = vmatmul.bf16.gmra.mxu0 %v952
        %v1761 = vpop.f32.mrf.mxu0
        %v1762 = vadd.f32 0.0, %v1761
        %v1763 = vpop.f32.mrf.mxu0
        %v1764 = vadd.f32 0.0, %v1763
        %1765 = vmatmul.bf16.gmra.mxu0 %v954
        %v1766 = vpop.f32.mrf.mxu0
        %v1767 = vadd.f32 0.0, %v1766
        %v1768 = vpop.f32.mrf.mxu0
        %v1769 = vadd.f32 0.0, %v1768
        %1770 = vmatmul.bf16.gmra.mxu0 %v956
        %v1771 = vpop.f32.mrf.mxu0
        %v1772 = vadd.f32 0.0, %v1771
        %v1773 = vpop.f32.mrf.mxu0
        %v1774 = vadd.f32 0.0, %v1773
        %1775 = vmatmul.bf16.gmra.mxu0 %v958
        %v1776 = vpop.f32.mrf.mxu0
        %v1777 = vadd.f32 0.0, %v1776
        %v1778 = vpop.f32.mrf.mxu0
        %v1779 = vadd.f32 0.0, %v1778
        %1780 = vdwg.mxu0
        %1781 = vmatpush.bf16.msra.mxu0 %v1436
        %1782 = vmatpush.bf16.msra.mxu0 %v1430
        %1783 = vmatpush.bf16.msra.mxu0 %v1424
        %1784 = vmatpush.bf16.msra.mxu0 %v1418
        %1785 = vmatpush.bf16.msra.mxu0 %v1412
        %1786 = vmatpush.bf16.msra.mxu0 %v1406
        %1787 = vmatpush.bf16.msra.mxu0 %v1400
        %1788 = vmatpush.bf16.msra.mxu0 %v1394
        %1789 = vmatmul.bf16.gmra.mxu0 %v945
        %v1790 = vpop.f32.mrf.mxu0
        %v1791 = vadd.f32 %v1742, %v1790
        %v1792 = vpop.f32.mrf.mxu0
        %v1793 = vadd.f32 %v1744, %v1792
        %1794 = vmatmul.bf16.gmra.mxu0 %v947
        %v1795 = vpop.f32.mrf.mxu0
        %v1796 = vadd.f32 %v1747, %v1795
        %v1797 = vpop.f32.mrf.mxu0
        %v1798 = vadd.f32 %v1749, %v1797
        %1799 = vmatmul.bf16.gmra.mxu0 %v949
        %v1800 = vpop.f32.mrf.mxu0
        %v1801 = vadd.f32 %v1752, %v1800
        %v1802 = vpop.f32.mrf.mxu0
        %v1803 = vadd.f32 %v1754, %v1802
        %1804 = vmatmul.bf16.gmra.mxu0 %v951
        %v1805 = vpop.f32.mrf.mxu0
        %v1806 = vadd.f32 %v1757, %v1805
        %v1807 = vpop.f32.mrf.mxu0
        %v1808 = vadd.f32 %v1759, %v1807
        %1809 = vmatmul.bf16.gmra.mxu0 %v953
        %v1810 = vpop.f32.mrf.mxu0
        %v1811 = vadd.f32 %v1762, %v1810
        %v1812 = vpop.f32.mrf.mxu0
        %v1813 = vadd.f32 %v1764, %v1812
        %1814 = vmatmul.bf16.gmra.mxu0 %v955
        %v1815 = vpop.f32.mrf.mxu0
        %v1816 = vadd.f32 %v1767, %v1815
        %v1817 = vpop.f32.mrf.mxu0
        %v1818 = vadd.f32 %v1769, %v1817
        %1819 = vmatmul.bf16.gmra.mxu0 %v957
        %v1820 = vpop.f32.mrf.mxu0
        %v1821 = vadd.f32 %v1772, %v1820
        %v1822 = vpop.f32.mrf.mxu0
        %v1823 = vadd.f32 %v1774, %v1822
        %1824 = vmatmul.bf16.gmra.mxu0 %v959
        %v1825 = vpop.f32.mrf.mxu0
        %v1826 = vadd.f32 %v1777, %v1825
        %v1827 = vpop.f32.mrf.mxu0
        %v1828 = vadd.f32 %v1779, %v1827
        %1829 = vdwg.mxu0
        %1830 = vmatpush.bf16.msra.mxu0 %v1389
        %1831 = vmatpush.bf16.msra.mxu0 %v1383
        %1832 = vmatpush.bf16.msra.mxu0 %v1377
        %1833 = vmatpush.bf16.msra.mxu0 %v1371
        %1834 = vmatpush.bf16.msra.mxu0 %v1365
        %1835 = vmatpush.bf16.msra.mxu0 %v1359
        %1836 = vmatpush.bf16.msra.mxu0 %v1353
        %1837 = vmatpush.bf16.msra.mxu0 %v1347
        %1838 = vmatmul.bf16.gmra.mxu0 %v944
        %v1839 = vpop.f32.mrf.mxu0
        %v1840 = vadd.f32 0.0, %v1839
        %v1841 = vpop.f32.mrf.mxu0
        %v1842 = vadd.f32 0.0, %v1841
        %1843 = vmatmul.bf16.gmra.mxu0 %v946
        %v1844 = vpop.f32.mrf.mxu0
        %v1845 = vadd.f32 0.0, %v1844
        %v1846 = vpop.f32.mrf.mxu0
        %v1847 = vadd.f32 0.0, %v1846
        %1848 = vmatmul.bf16.gmra.mxu0 %v948
        %v1849 = vpop.f32.mrf.mxu0
        %v1850 = vadd.f32 0.0, %v1849
        %v1851 = vpop.f32.mrf.mxu0
        %v1852 = vadd.f32 0.0, %v1851
        %1853 = vmatmul.bf16.gmra.mxu0 %v950
        %v1854 = vpop.f32.mrf.mxu0
        %v1855 = vadd.f32 0.0, %v1854
        %v1856 = vpop.f32.mrf.mxu0
        %v1857 = vadd.f32 0.0, %v1856
        %1858 = vmatmul.bf16.gmra.mxu0 %v952
        %v1859 = vpop.f32.mrf.mxu0
        %v1860 = vadd.f32 0.0, %v1859
        %v1861 = vpop.f32.mrf.mxu0
        %v1862 = vadd.f32 0.0, %v1861
        %1863 = vmatmul.bf16.gmra.mxu0 %v954
        %v1864 = vpop.f32.mrf.mxu0
        %v1865 = vadd.f32 0.0, %v1864
        %v1866 = vpop.f32.mrf.mxu0
        %v1867 = vadd.f32 0.0, %v1866
        %1868 = vmatmul.bf16.gmra.mxu0 %v956
        %v1869 = vpop.f32.mrf.mxu0
        %v1870 = vadd.f32 0.0, %v1869
        %v1871 = vpop.f32.mrf.mxu0
        %v1872 = vadd.f32 0.0, %v1871
        %1873 = vmatmul.bf16.gmra.mxu0 %v958
        %v1874 = vpop.f32.mrf.mxu0
        %v1875 = vadd.f32 0.0, %v1874
        %v1876 = vpop.f32.mrf.mxu0
        %v1877 = vadd.f32 0.0, %v1876
        %1878 = vdwg.mxu0
        %1879 = vmatpush.bf16.msra.mxu0 %v1437
        %1880 = vmatpush.bf16.msra.mxu0 %v1431
        %1881 = vmatpush.bf16.msra.mxu0 %v1425
        %1882 = vmatpush.bf16.msra.mxu0 %v1419
        %1883 = vmatpush.bf16.msra.mxu0 %v1413
        %1884 = vmatpush.bf16.msra.mxu0 %v1407
        %1885 = vmatpush.bf16.msra.mxu0 %v1401
        %1886 = vmatpush.bf16.msra.mxu0 %v1395
        %1887 = vmatmul.bf16.gmra.mxu0 %v945
        %v1888 = vpop.f32.mrf.mxu0
        %v1889 = vadd.f32 %v1840, %v1888
        %v1890 = vpop.f32.mrf.mxu0
        %v1891 = vadd.f32 %v1842, %v1890
        %1892 = vmatmul.bf16.gmra.mxu0 %v947
        %v1893 = vpop.f32.mrf.mxu0
        %v1894 = vadd.f32 %v1845, %v1893
        %v1895 = vpop.f32.mrf.mxu0
        %v1896 = vadd.f32 %v1847, %v1895
        %1897 = vmatmul.bf16.gmra.mxu0 %v949
        %v1898 = vpop.f32.mrf.mxu0
        %v1899 = vadd.f32 %v1850, %v1898
        %v1900 = vpop.f32.mrf.mxu0
        %v1901 = vadd.f32 %v1852, %v1900
        %1902 = vmatmul.bf16.gmra.mxu0 %v951
        %v1903 = vpop.f32.mrf.mxu0
        %v1904 = vadd.f32 %v1855, %v1903
        %v1905 = vpop.f32.mrf.mxu0
        %v1906 = vadd.f32 %v1857, %v1905
        %1907 = vmatmul.bf16.gmra.mxu0 %v953
        %v1908 = vpop.f32.mrf.mxu0
        %v1909 = vadd.f32 %v1860, %v1908
        %v1910 = vpop.f32.mrf.mxu0
        %v1911 = vadd.f32 %v1862, %v1910
        %1912 = vmatmul.bf16.gmra.mxu0 %v955
        %v1913 = vpop.f32.mrf.mxu0
        %v1914 = vadd.f32 %v1865, %v1913
        %v1915 = vpop.f32.mrf.mxu0
        %v1916 = vadd.f32 %v1867, %v1915
        %1917 = vmatmul.bf16.gmra.mxu0 %v957
        %v1918 = vpop.f32.mrf.mxu0
        %v1919 = vadd.f32 %v1870, %v1918
        %v1920 = vpop.f32.mrf.mxu0
        %v1921 = vadd.f32 %v1872, %v1920
        %1922 = vmatmul.bf16.gmra.mxu0 %v959
        %v1923 = vpop.f32.mrf.mxu0
        %v1924 = vadd.f32 %v1875, %v1923
        %v1925 = vpop.f32.mrf.mxu0
        %v1926 = vadd.f32 %v1877, %v1925
        %1927 = vdwg.mxu0
        %1928 = vmatpush.bf16.msra.mxu0 %v1390
        %1929 = vmatpush.bf16.msra.mxu0 %v1384
        %1930 = vmatpush.bf16.msra.mxu0 %v1378
        %1931 = vmatpush.bf16.msra.mxu0 %v1372
        %1932 = vmatpush.bf16.msra.mxu0 %v1366
        %1933 = vmatpush.bf16.msra.mxu0 %v1360
        %1934 = vmatpush.bf16.msra.mxu0 %v1354
        %1935 = vmatpush.bf16.msra.mxu0 %v1348
        %1936 = vmatmul.bf16.gmra.mxu0 %v944
        %v1937 = vpop.f32.mrf.mxu0
        %v1938 = vadd.f32 0.0, %v1937
        %v1939 = vpop.f32.mrf.mxu0
        %v1940 = vadd.f32 0.0, %v1939
        %1941 = vmatmul.bf16.gmra.mxu0 %v946
        %v1942 = vpop.f32.mrf.mxu0
        %v1943 = vadd.f32 0.0, %v1942
        %v1944 = vpop.f32.mrf.mxu0
        %v1945 = vadd.f32 0.0, %v1944
        %1946 = vmatmul.bf16.gmra.mxu0 %v948
        %v1947 = vpop.f32.mrf.mxu0
        %v1948 = vadd.f32 0.0, %v1947
        %v1949 = vpop.f32.mrf.mxu0
        %v1950 = vadd.f32 0.0, %v1949
        %1951 = vmatmul.bf16.gmra.mxu0 %v950
        %v1952 = vpop.f32.mrf.mxu0
        %v1953 = vadd.f32 0.0, %v1952
        %v1954 = vpop.f32.mrf.mxu0
        %v1955 = vadd.f32 0.0, %v1954
        %1956 = vmatmul.bf16.gmra.mxu0 %v952
        %v1957 = vpop.f32.mrf.mxu0
        %v1958 = vadd.f32 0.0, %v1957
        %v1959 = vpop.f32.mrf.mxu0
        %v1960 = vadd.f32 0.0, %v1959
        %1961 = vmatmul.bf16.gmra.mxu0 %v954
        %v1962 = vpop.f32.mrf.mxu0
        %v1963 = vadd.f32 0.0, %v1962
        %v1964 = vpop.f32.mrf.mxu0
        %v1965 = vadd.f32 0.0, %v1964
        %1966 = vmatmul.bf16.gmra.mxu0 %v956
        %v1967 = vpop.f32.mrf.mxu0
        %v1968 = vadd.f32 0.0, %v1967
        %v1969 = vpop.f32.mrf.mxu0
        %v1970 = vadd.f32 0.0, %v1969
        %1971 = vmatmul.bf16.gmra.mxu0 %v958
        %v1972 = vpop.f32.mrf.mxu0
        %v1973 = vadd.f32 0.0, %v1972
        %v1974 = vpop.f32.mrf.mxu0
        %v1975 = vadd.f32 0.0, %v1974
        %1976 = vdwg.mxu0
        %1977 = vmatpush.bf16.msra.mxu0 %v1438
        %1978 = vmatpush.bf16.msra.mxu0 %v1432
        %1979 = vmatpush.bf16.msra.mxu0 %v1426
        %1980 = vmatpush.bf16.msra.mxu0 %v1420
        %1981 = vmatpush.bf16.msra.mxu0 %v1414
        %1982 = vmatpush.bf16.msra.mxu0 %v1408
        %1983 = vmatpush.bf16.msra.mxu0 %v1402
        %1984 = vmatpush.bf16.msra.mxu0 %v1396
        %1985 = vmatmul.bf16.gmra.mxu0 %v945
        %v1986 = vpop.f32.mrf.mxu0
        %v1987 = vadd.f32 %v1938, %v1986
        %v1988 = vpop.f32.mrf.mxu0
        %v1989 = vadd.f32 %v1940, %v1988
        %1990 = vmatmul.bf16.gmra.mxu0 %v947
        %v1991 = vpop.f32.mrf.mxu0
        %v1992 = vadd.f32 %v1943, %v1991
        %v1993 = vpop.f32.mrf.mxu0
        %v1994 = vadd.f32 %v1945, %v1993
        %1995 = vmatmul.bf16.gmra.mxu0 %v949
        %v1996 = vpop.f32.mrf.mxu0
        %v1997 = vadd.f32 %v1948, %v1996
        %v1998 = vpop.f32.mrf.mxu0
        %v1999 = vadd.f32 %v1950, %v1998
        %2000 = vmatmul.bf16.gmra.mxu0 %v951
        %v2001 = vpop.f32.mrf.mxu0
        %v2002 = vadd.f32 %v1953, %v2001
        %v2003 = vpop.f32.mrf.mxu0
        %v2004 = vadd.f32 %v1955, %v2003
        %2005 = vmatmul.bf16.gmra.mxu0 %v953
        %v2006 = vpop.f32.mrf.mxu0
        %v2007 = vadd.f32 %v1958, %v2006
        %v2008 = vpop.f32.mrf.mxu0
        %v2009 = vadd.f32 %v1960, %v2008
        %2010 = vmatmul.bf16.gmra.mxu0 %v955
        %v2011 = vpop.f32.mrf.mxu0
        %v2012 = vadd.f32 %v1963, %v2011
        %v2013 = vpop.f32.mrf.mxu0
        %v2014 = vadd.f32 %v1965, %v2013
        %2015 = vmatmul.bf16.gmra.mxu0 %v957
        %v2016 = vpop.f32.mrf.mxu0
        %v2017 = vadd.f32 %v1968, %v2016
        %v2018 = vpop.f32.mrf.mxu0
        %v2019 = vadd.f32 %v1970, %v2018
        %2020 = vmatmul.bf16.gmra.mxu0 %v959
        %v2021 = vpop.f32.mrf.mxu0
        %v2022 = vadd.f32 %v1973, %v2021
        %v2023 = vpop.f32.mrf.mxu0
        %v2024 = vadd.f32 %v1975, %v2023
        %2025 = vdwg.mxu0
        %2026 = vmatpush.bf16.msra.mxu0 %v1391
        %2027 = vmatpush.bf16.msra.mxu0 %v1385
        %2028 = vmatpush.bf16.msra.mxu0 %v1379
        %2029 = vmatpush.bf16.msra.mxu0 %v1373
        %2030 = vmatpush.bf16.msra.mxu0 %v1367
        %2031 = vmatpush.bf16.msra.mxu0 %v1361
        %2032 = vmatpush.bf16.msra.mxu0 %v1355
        %2033 = vmatpush.bf16.msra.mxu0 %v1349
        %2034 = vmatmul.bf16.gmra.mxu0 %v944
        %v2035 = vpop.f32.mrf.mxu0
        %v2036 = vadd.f32 0.0, %v2035
        %v2037 = vpop.f32.mrf.mxu0
        %v2038 = vadd.f32 0.0, %v2037
        %2039 = vmatmul.bf16.gmra.mxu0 %v946
        %v2040 = vpop.f32.mrf.mxu0
        %v2041 = vadd.f32 0.0, %v2040
        %v2042 = vpop.f32.mrf.mxu0
        %v2043 = vadd.f32 0.0, %v2042
        %2044 = vmatmul.bf16.gmra.mxu0 %v948
        %v2045 = vpop.f32.mrf.mxu0
        %v2046 = vadd.f32 0.0, %v2045
        %v2047 = vpop.f32.mrf.mxu0
        %v2048 = vadd.f32 0.0, %v2047
        %2049 = vmatmul.bf16.gmra.mxu0 %v950
        %v2050 = vpop.f32.mrf.mxu0
        %v2051 = vadd.f32 0.0, %v2050
        %v2052 = vpop.f32.mrf.mxu0
        %v2053 = vadd.f32 0.0, %v2052
        %2054 = vmatmul.bf16.gmra.mxu0 %v952
        %v2055 = vpop.f32.mrf.mxu0
        %v2056 = vadd.f32 0.0, %v2055
        %v2057 = vpop.f32.mrf.mxu0
        %v2058 = vadd.f32 0.0, %v2057
        %2059 = vmatmul.bf16.gmra.mxu0 %v954
        %v2060 = vpop.f32.mrf.mxu0
        %v2061 = vadd.f32 0.0, %v2060
        %v2062 = vpop.f32.mrf.mxu0
        %v2063 = vadd.f32 0.0, %v2062
        %2064 = vmatmul.bf16.gmra.mxu0 %v956
        %v2065 = vpop.f32.mrf.mxu0
        %v2066 = vadd.f32 0.0, %v2065
        %v2067 = vpop.f32.mrf.mxu0
        %v2068 = vadd.f32 0.0, %v2067
        %2069 = vmatmul.bf16.gmra.mxu0 %v958
        %v2070 = vpop.f32.mrf.mxu0
        %v2071 = vadd.f32 0.0, %v2070
        %v2072 = vpop.f32.mrf.mxu0
        %v2073 = vadd.f32 0.0, %v2072
        %2074 = vdwg.mxu0
        %2075 = vmatpush.bf16.msra.mxu0 %v1439
        %2076 = vmatpush.bf16.msra.mxu0 %v1433
        %2077 = vmatpush.bf16.msra.mxu0 %v1427
        %2078 = vmatpush.bf16.msra.mxu0 %v1421
        %2079 = vmatpush.bf16.msra.mxu0 %v1415
        %2080 = vmatpush.bf16.msra.mxu0 %v1409
        %2081 = vmatpush.bf16.msra.mxu0 %v1403
        %2082 = vmatpush.bf16.msra.mxu0 %v1397
        %2083 = vmatmul.bf16.gmra.mxu0 %v945
        %v2084 = vpop.f32.mrf.mxu0
        %v2085 = vadd.f32 %v2036, %v2084
        %v2086 = vpop.f32.mrf.mxu0
        %v2087 = vadd.f32 %v2038, %v2086
        %2088 = vmatmul.bf16.gmra.mxu0 %v947
        %v2089 = vpop.f32.mrf.mxu0
        %v2090 = vadd.f32 %v2041, %v2089
        %v2091 = vpop.f32.mrf.mxu0
        %v2092 = vadd.f32 %v2043, %v2091
        %2093 = vmatmul.bf16.gmra.mxu0 %v949
        %v2094 = vpop.f32.mrf.mxu0
        %v2095 = vadd.f32 %v2046, %v2094
        %v2096 = vpop.f32.mrf.mxu0
        %v2097 = vadd.f32 %v2048, %v2096
        %2098 = vmatmul.bf16.gmra.mxu0 %v951
        %v2099 = vpop.f32.mrf.mxu0
        %v2100 = vadd.f32 %v2051, %v2099
        %v2101 = vpop.f32.mrf.mxu0
        %v2102 = vadd.f32 %v2053, %v2101
        %2103 = vmatmul.bf16.gmra.mxu0 %v953
        %v2104 = vpop.f32.mrf.mxu0
        %v2105 = vadd.f32 %v2056, %v2104
        %v2106 = vpop.f32.mrf.mxu0
        %v2107 = vadd.f32 %v2058, %v2106
        %2108 = vmatmul.bf16.gmra.mxu0 %v955
        %v2109 = vpop.f32.mrf.mxu0
        %v2110 = vadd.f32 %v2061, %v2109
        %v2111 = vpop.f32.mrf.mxu0
        %v2112 = vadd.f32 %v2063, %v2111
        %2113 = vmatmul.bf16.gmra.mxu0 %v957
        %v2114 = vpop.f32.mrf.mxu0
        %v2115 = vadd.f32 %v2066, %v2114
        %v2116 = vpop.f32.mrf.mxu0
        %v2117 = vadd.f32 %v2068, %v2116
        %2118 = vmatmul.bf16.gmra.mxu0 %v959
        %v2119 = vpop.f32.mrf.mxu0
        %v2120 = vadd.f32 %v2071, %v2119
        %v2121 = vpop.f32.mrf.mxu0
        %v2122 = vadd.f32 %v2073, %v2121
        %2123 = vdwg.mxu0
        %v2124 = vpack.c.bf16 %v1693, %v1595
        %v2125 = vpack.c.bf16 %v1889, %v1791
        %v2126 = vpack.c.bf16 %v2085, %v1987
        %v2127 = vpack.c.bf16 %v1695, %v1597
        %v2128 = vpack.c.bf16 %v1891, %v1793
        %v2129 = vpack.c.bf16 %v2087, %v1989
        %v2130 = vpack.c.bf16 %v1698, %v1600
        %v2131 = vpack.c.bf16 %v1894, %v1796
        %v2132 = vpack.c.bf16 %v2090, %v1992
        %v2133 = vpack.c.bf16 %v1700, %v1602
        %v2134 = vpack.c.bf16 %v1896, %v1798
        %v2135 = vpack.c.bf16 %v2092, %v1994
        %v2136 = vpack.c.bf16 %v1703, %v1605
        %v2137 = vpack.c.bf16 %v1899, %v1801
        %v2138 = vpack.c.bf16 %v2095, %v1997
        %v2139 = vpack.c.bf16 %v1705, %v1607
        %v2140 = vpack.c.bf16 %v1901, %v1803
        %v2141 = vpack.c.bf16 %v2097, %v1999
        %v2142 = vpack.c.bf16 %v1708, %v1610
        %v2143 = vpack.c.bf16 %v1904, %v1806
        %v2144 = vpack.c.bf16 %v2100, %v2002
        %v2145 = vpack.c.bf16 %v1710, %v1612
        %v2146 = vpack.c.bf16 %v1906, %v1808
        %v2147 = vpack.c.bf16 %v2102, %v2004
        %v2148 = vpack.c.bf16 %v1713, %v1615
        %v2149 = vpack.c.bf16 %v1909, %v1811
        %v2150 = vpack.c.bf16 %v2105, %v2007
        %v2151 = vpack.c.bf16 %v1715, %v1617
        %v2152 = vpack.c.bf16 %v1911, %v1813
        %v2153 = vpack.c.bf16 %v2107, %v2009
        %v2154 = vpack.c.bf16 %v1718, %v1620
        %v2155 = vpack.c.bf16 %v1914, %v1816
        %v2156 = vpack.c.bf16 %v2110, %v2012
        %v2157 = vpack.c.bf16 %v1720, %v1622
        %v2158 = vpack.c.bf16 %v1916, %v1818
        %v2159 = vpack.c.bf16 %v2112, %v2014
        %v2160 = vpack.c.bf16 %v1723, %v1625
        %v2161 = vpack.c.bf16 %v1919, %v1821
        %v2162 = vpack.c.bf16 %v2115, %v2017
        %v2163 = vpack.c.bf16 %v1725, %v1627
        %v2164 = vpack.c.bf16 %v1921, %v1823
        %v2165 = vpack.c.bf16 %v2117, %v2019
        %v2166 = vpack.c.bf16 %v1728, %v1630
        %v2167 = vpack.c.bf16 %v1924, %v1826
        %v2168 = vpack.c.bf16 %v2120, %v2022
        %v2169 = vpack.c.bf16 %v1730, %v1632
        %v2170 = vpack.c.bf16 %v1926, %v1828
        %v2171 = vpack.c.bf16 %v2122, %v2024
        %2172 = vst [vmem:[#allocation4] sm:$0xff] %v2124
        %2173 = vst [vmem:[#allocation4 + $0x8] sm:$0xff] %v2125
        %2174 = vst [vmem:[#allocation4 + $0x10] sm:$0xff] %v2126
        %2175 = vst [vmem:[#allocation4 + $0x18] sm:$0xff] %v2127
        %2176 = vst [vmem:[#allocation4 + $0x20] sm:$0xff] %v2128
        %2177 = vst [vmem:[#allocation4 + $0x28] sm:$0xff] %v2129
        %2178 = vst [vmem:[#allocation4 + $0x30] sm:$0xff] %v2130
        %2179 = vst [vmem:[#allocation4 + $0x38] sm:$0xff] %v2131
        %2180 = vst [vmem:[#allocation4 + $0x40] sm:$0xff] %v2132
        %2181 = vst [vmem:[#allocation4 + $0x48] sm:$0xff] %v2133
        %2182 = vst [vmem:[#allocation4 + $0x50] sm:$0xff] %v2134
        %2183 = vst [vmem:[#allocation4 + $0x58] sm:$0xff] %v2135
        %2184 = vst [vmem:[#allocation4 + $0x60] sm:$0xff] %v2136
        %2185 = vst [vmem:[#allocation4 + $0x68] sm:$0xff] %v2137
        %2186 = vst [vmem:[#allocation4 + $0x70] sm:$0xff] %v2138
        %2187 = vst [vmem:[#allocation4 + $0x78] sm:$0xff] %v2139
        %2188 = vst [vmem:[#allocation4 + $0x80] sm:$0xff] %v2140
        %2189 = vst [vmem:[#allocation4 + $0x88] sm:$0xff] %v2141
        %2190 = vst [vmem:[#allocation4 + $0x90] sm:$0xff] %v2142
        %2191 = vst [vmem:[#allocation4 + $0x98] sm:$0xff] %v2143
        %2192 = vst [vmem:[#allocation4 + $0xa0] sm:$0xff] %v2144
        %2193 = vst [vmem:[#allocation4 + $0xa8] sm:$0xff] %v2145
        %2194 = vst [vmem:[#allocation4 + $0xb0] sm:$0xff] %v2146
        %2195 = vst [vmem:[#allocation4 + $0xb8] sm:$0xff] %v2147
        %2196 = vst [vmem:[#allocation4 + $0xc0] sm:$0xff] %v2148
        %2197 = vst [vmem:[#allocation4 + $0xc8] sm:$0xff] %v2149
        %2198 = vst [vmem:[#allocation4 + $0xd0] sm:$0xff] %v2150
        %2199 = vst [vmem:[#allocation4 + $0xd8] sm:$0xff] %v2151
        %2200 = vst [vmem:[#allocation4 + $0xe0] sm:$0xff] %v2152
        %2201 = vst [vmem:[#allocation4 + $0xe8] sm:$0xff] %v2153
        %2202 = vst [vmem:[#allocation4 + $0xf0] sm:$0xff] %v2154
        %2203 = vst [vmem:[#allocation4 + $0xf8] sm:$0xff] %v2155
        %2204 = vst [vmem:[#allocation4 + $0x100] sm:$0xff] %v2156
        %2205 = vst [vmem:[#allocation4 + $0x108] sm:$0xff] %v2157
        %2206 = vst [vmem:[#allocation4 + $0x110] sm:$0xff] %v2158
        %2207 = vst [vmem:[#allocation4 + $0x118] sm:$0xff] %v2159
        %2208 = vst [vmem:[#allocation4 + $0x120] sm:$0xff] %v2160
        %2209 = vst [vmem:[#allocation4 + $0x128] sm:$0xff] %v2161
        %2210 = vst [vmem:[#allocation4 + $0x130] sm:$0xff] %v2162
        %2211 = vst [vmem:[#allocation4 + $0x138] sm:$0xff] %v2163
        %2212 = vst [vmem:[#allocation4 + $0x140] sm:$0xff] %v2164
        %2213 = vst [vmem:[#allocation4 + $0x148] sm:$0xff] %v2165
        %2214 = vst [vmem:[#allocation4 + $0x150] sm:$0xff] %v2166
        %2215 = vst [vmem:[#allocation4 + $0x158] sm:$0xff] %v2167
        %2216 = vst [vmem:[#allocation4 + $0x160] sm:$0xff] %v2168
        %2217 = vst [vmem:[#allocation4 + $0x168] sm:$0xff] %v2169
        %2218 = vst [vmem:[#allocation4 + $0x170] sm:$0xff] %v2170
        %2219 = vst [vmem:[#allocation4 + $0x178] sm:$0xff] %v2171
        %v2220 = vld [vmem:[#allocation2] sm:$0xff]
        %v2221 = vld [vmem:[#allocation2 + $0x8] sm:$0xff]
        %v2222 = vld [vmem:[#allocation2 + $0x10] sm:$0xff]
        %v2223 = vld [vmem:[#allocation2 + $0x18] sm:$0xff]
        %v2224 = vld [vmem:[#allocation2 + $0x20] sm:$0xff]
        %v2225 = vld [vmem:[#allocation2 + $0x28] sm:$0xff]
        %v2226 = vld [vmem:[#allocation2 + $0x30] sm:$0xff]
        %v2227 = vld [vmem:[#allocation2 + $0x38] sm:$0xff]
        %v2228 = vld [vmem:[#allocation2 + $0x40] sm:$0xff]
        %v2229 = vld [vmem:[#allocation2 + $0x48] sm:$0xff]
        %v2230 = vld [vmem:[#allocation2 + $0x50] sm:$0xff]
        %v2231 = vld [vmem:[#allocation2 + $0x58] sm:$0xff]
        %v2232 = vld [vmem:[#allocation2 + $0x60] sm:$0xff]
        %v2233 = vld [vmem:[#allocation2 + $0x68] sm:$0xff]
        %v2234 = vld [vmem:[#allocation2 + $0x70] sm:$0xff]
        %v2235 = vld [vmem:[#allocation2 + $0x78] sm:$0xff]
        %v2236 = vld [vmem:[#allocation2 + $0x80] sm:$0xff]
        %v2237 = vld [vmem:[#allocation2 + $0x88] sm:$0xff]
        %v2238 = vld [vmem:[#allocation2 + $0x90] sm:$0xff]
        %v2239 = vld [vmem:[#allocation2 + $0x98] sm:$0xff]
        %v2240 = vld [vmem:[#allocation2 + $0xa0] sm:$0xff]
        %v2241 = vld [vmem:[#allocation2 + $0xa8] sm:$0xff]
        %v2242 = vld [vmem:[#allocation2 + $0xb0] sm:$0xff]
        %v2243 = vld [vmem:[#allocation2 + $0xb8] sm:$0xff]
        %v2244 = vld [vmem:[#allocation2 + $0xc0] sm:$0xff]
        %v2245 = vld [vmem:[#allocation2 + $0xc8] sm:$0xff]
        %v2246 = vld [vmem:[#allocation2 + $0xd0] sm:$0xff]
        %v2247 = vld [vmem:[#allocation2 + $0xd8] sm:$0xff]
        %v2248 = vld [vmem:[#allocation2 + $0xe0] sm:$0xff]
        %v2249 = vld [vmem:[#allocation2 + $0xe8] sm:$0xff]
        %v2250 = vld [vmem:[#allocation2 + $0xf0] sm:$0xff]
        %v2251 = vld [vmem:[#allocation2 + $0xf8] sm:$0xff]
        %v2252 = vld [vmem:[#allocation4] sm:$0xff]
        %v2253 = vld [vmem:[#allocation4 + $0x18] sm:$0xff]
        %v2254 = vld [vmem:[#allocation4 + $0x30] sm:$0xff]
        %v2255 = vld [vmem:[#allocation4 + $0x48] sm:$0xff]
        %v2256 = vld [vmem:[#allocation4 + $0x60] sm:$0xff]
        %v2257 = vld [vmem:[#allocation4 + $0x78] sm:$0xff]
        %v2258 = vld [vmem:[#allocation4 + $0x90] sm:$0xff]
        %v2259 = vld [vmem:[#allocation4 + $0xa8] sm:$0xff]
        %v2260 = vld [vmem:[#allocation4 + $0xc0] sm:$0xff]
        %v2261 = vld [vmem:[#allocation4 + $0xd8] sm:$0xff]
        %v2262 = vld [vmem:[#allocation4 + $0xf0] sm:$0xff]
        %v2263 = vld [vmem:[#allocation4 + $0x108] sm:$0xff]
        %v2264 = vld [vmem:[#allocation4 + $0x120] sm:$0xff]
        %v2265 = vld [vmem:[#allocation4 + $0x138] sm:$0xff]
        %v2266 = vld [vmem:[#allocation4 + $0x150] sm:$0xff]
        %v2267 = vld [vmem:[#allocation4 + $0x168] sm:$0xff]
        %v2268 = vld [vmem:[#allocation4 + $0x8] sm:$0xf]
        %v2269 = vld [vmem:[#allocation4 + $0x20] sm:$0xf]
        %v2270 = vld [vmem:[#allocation4 + $0x38] sm:$0xf]
        %v2271 = vld [vmem:[#allocation4 + $0x50] sm:$0xf]
        %v2272 = vld [vmem:[#allocation4 + $0x68] sm:$0xf]
        %v2273 = vld [vmem:[#allocation4 + $0x80] sm:$0xf]
        %v2274 = vld [vmem:[#allocation4 + $0x98] sm:$0xf]
        %v2275 = vld [vmem:[#allocation4 + $0xb0] sm:$0xf]
        %v2276 = vld [vmem:[#allocation4 + $0xc8] sm:$0xf]
        %v2277 = vld [vmem:[#allocation4 + $0xe0] sm:$0xf]
        %v2278 = vld [vmem:[#allocation4 + $0xf8] sm:$0xf]
        %v2279 = vld [vmem:[#allocation4 + $0x110] sm:$0xf]
        %v2280 = vld [vmem:[#allocation4 + $0x128] sm:$0xf]
        %v2281 = vld [vmem:[#allocation4 + $0x140] sm:$0xf]
        %v2282 = vld [vmem:[#allocation4 + $0x158] sm:$0xf]
        %v2283 = vld [vmem:[#allocation4 + $0x170] sm:$0xf]
        %v2284 = vld [vmem:[#allocation4 + $0x10] sm:$0xf]
        %v2285 = vld [vmem:[#allocation4 + $0x28] sm:$0xf]
        %v2286 = vld [vmem:[#allocation4 + $0x40] sm:$0xf]
        %v2287 = vld [vmem:[#allocation4 + $0x58] sm:$0xf]
        %v2288 = vld [vmem:[#allocation4 + $0x70] sm:$0xf]
        %v2289 = vld [vmem:[#allocation4 + $0x88] sm:$0xf]
        %v2290 = vld [vmem:[#allocation4 + $0xa0] sm:$0xf]
        %v2291 = vld [vmem:[#allocation4 + $0xb8] sm:$0xf]
        %v2292 = vld [vmem:[#allocation4 + $0xd0] sm:$0xf]
        %v2293 = vld [vmem:[#allocation4 + $0xe8] sm:$0xf]
        %v2294 = vld [vmem:[#allocation4 + $0x100] sm:$0xf]
        %v2295 = vld [vmem:[#allocation4 + $0x118] sm:$0xf]
        %v2296 = vld [vmem:[#allocation4 + $0x130] sm:$0xf]
        %v2297 = vld [vmem:[#allocation4 + $0x148] sm:$0xf]
        %v2298 = vld [vmem:[#allocation4 + $0x160] sm:$0xf]
        %v2299 = vld [vmem:[#allocation4 + $0x178] sm:$0xf]
        %v2300 = vld [vmem:[#allocation3] sm:$0xf]
        %v2301 = vld [vmem:[#allocation3 + $0x4] sm:$0xf]
        %v2302 = vld [vmem:[#allocation3 + $0x8] sm:$0xf]
        %v2303 = vld [vmem:[#allocation3 + $0xc] sm:$0xf]
        %v2304 = vld [vmem:[#allocation3 + $0x10] sm:$0xf]
        %v2305 = vld [vmem:[#allocation3 + $0x14] sm:$0xf]
        %v2306 = vld [vmem:[#allocation3 + $0x18] sm:$0xf]
        %v2307 = vld [vmem:[#allocation3 + $0x1c] sm:$0xf]
        %v2308 = vld [vmem:[#allocation3 + $0x20] sm:$0xf]
        %v2309 = vld [vmem:[#allocation3 + $0x24] sm:$0xf]
        %v2310 = vld [vmem:[#allocation3 + $0x28] sm:$0xf]
        %v2311 = vld [vmem:[#allocation3 + $0x2c] sm:$0xf]
        %v2312 = vld [vmem:[#allocation3 + $0x30] sm:$0xf]
        %v2313 = vld [vmem:[#allocation3 + $0x34] sm:$0xf]
        %v2314 = vld [vmem:[#allocation3 + $0x38] sm:$0xf]
        %v2315 = vld [vmem:[#allocation3 + $0x3c] sm:$0xf]
        %v2316 = vunpack.c.l.bf16 %v2300
        %v2317 = vunpack.c.l.bf16 %v2301
        %v2318 = vunpack.c.l.bf16 %v2302
        %v2319 = vunpack.c.l.bf16 %v2303
        %v2320 = vunpack.c.l.bf16 %v2304
        %v2321 = vunpack.c.l.bf16 %v2305
        %v2322 = vunpack.c.l.bf16 %v2306
        %v2323 = vunpack.c.l.bf16 %v2307
        %v2324 = vunpack.c.l.bf16 %v2308
        %v2325 = vunpack.c.l.bf16 %v2309
        %v2326 = vunpack.c.l.bf16 %v2310
        %v2327 = vunpack.c.l.bf16 %v2311
        %v2328 = vunpack.c.l.bf16 %v2312
        %v2329 = vunpack.c.l.bf16 %v2313
        %v2330 = vunpack.c.l.bf16 %v2314
        %v2331 = vunpack.c.l.bf16 %v2315
        %v2348 = vunpack.c.l.b16 %v2252
        %v2349 = vunpack.c.l.b16 %v2253
        %v2350 = vunpack.c.l.b16 %v2254
        %v2351 = vunpack.c.l.b16 %v2255
        %v2352 = vunpack.c.l.b16 %v2256
        %v2353 = vunpack.c.l.b16 %v2257
        %v2354 = vunpack.c.l.b16 %v2258
        %v2355 = vunpack.c.l.b16 %v2259
        %v2356 = vunpack.c.l.b16 %v2260
        %v2357 = vunpack.c.l.b16 %v2261
        %v2358 = vunpack.c.l.b16 %v2262
        %v2359 = vunpack.c.l.b16 %v2263
        %v2360 = vunpack.c.l.b16 %v2264
        %v2361 = vunpack.c.l.b16 %v2265
        %v2362 = vunpack.c.l.b16 %v2266
        %v2363 = vunpack.c.l.b16 %v2267
        %v2364 = vpack.c.b16 %v2349, %v2348
        %v2365 = vpack.c.b16 %v2351, %v2350
        %v2366 = vpack.c.b16 %v2353, %v2352
        %v2367 = vpack.c.b16 %v2355, %v2354
        %v2368 = vpack.c.b16 %v2357, %v2356
        %v2369 = vpack.c.b16 %v2359, %v2358
        %v2370 = vpack.c.b16 %v2361, %v2360
        %v2371 = vpack.c.b16 %v2363, %v2362
        %v2388 = vunpack.c.l.b16 %v2268
        %v2389 = vunpack.c.l.b16 %v2269
        %v2390 = vunpack.c.l.b16 %v2270
        %v2391 = vunpack.c.l.b16 %v2271
        %v2392 = vunpack.c.l.b16 %v2272
        %v2393 = vunpack.c.l.b16 %v2273
        %v2394 = vunpack.c.l.b16 %v2274
        %v2395 = vunpack.c.l.b16 %v2275
        %v2396 = vunpack.c.l.b16 %v2276
        %v2397 = vunpack.c.l.b16 %v2277
        %v2398 = vunpack.c.l.b16 %v2278
        %v2399 = vunpack.c.l.b16 %v2279
        %v2400 = vunpack.c.l.b16 %v2280
        %v2401 = vunpack.c.l.b16 %v2281
        %v2402 = vunpack.c.l.b16 %v2282
        %v2403 = vunpack.c.l.b16 %v2283
        %v2404 = vpack.c.b16 %v2389, %v2388
        %v2405 = vpack.c.b16 %v2391, %v2390
        %v2406 = vpack.c.b16 %v2393, %v2392
        %v2407 = vpack.c.b16 %v2395, %v2394
        %v2408 = vpack.c.b16 %v2397, %v2396
        %v2409 = vpack.c.b16 %v2399, %v2398
        %v2410 = vpack.c.b16 %v2401, %v2400
        %v2411 = vpack.c.b16 %v2403, %v2402
        %vm2412 = vcmask 523264
        %v2414 = vsel %vm2412, %v2364, 0
        %v2417 = vsel %vm2412, %v2365, 0
        %v2420 = vsel %vm2412, %v2366, 0
        %v2423 = vsel %vm2412, %v2367, 0
        %v2426 = vsel %vm2412, %v2368, 0
        %v2429 = vsel %vm2412, %v2369, 0
        %v2432 = vsel %vm2412, %v2370, 0
        %v2435 = vsel %vm2412, %v2371, 0
        %v2438 = vsel %vm2412, %v2404, 0
        %v2441 = vsel %vm2412, %v2405, 0
        %v2444 = vsel %vm2412, %v2406, 0
        %v2447 = vsel %vm2412, %v2407, 0
        %v2450 = vsel %vm2412, %v2408, 0
        %v2453 = vsel %vm2412, %v2409, 0
        %v2456 = vsel %vm2412, %v2410, 0
        %v2459 = vsel %vm2412, %v2411, 0
        %2461 = vmatpush.bf16.xpose.msra.mxu0 %v2459
        %2462 = vmatpush.bf16.xpose.msra.mxu0 %v2456
        %2463 = vmatpush.bf16.xpose.msra.mxu0 %v2453
        %2464 = vmatpush.bf16.xpose.msra.mxu0 %v2450
        %2465 = vmatpush.bf16.xpose.msra.mxu0 %v2447
        %2466 = vmatpush.bf16.xpose.msra.mxu0 %v2444
        %2467 = vmatpush.bf16.xpose.msra.mxu0 %v2441
        %2468 = vmatpush.bf16.xpose.msra.mxu0 %v2438
        %2469 = vmatmul.bf16.gmra.mxu0 %v2414
        %v2470 = vpop.f32.mrf.mxu0
        %v2471 = vadd.f32 %v2316, %v2470
        %v2472 = vpop.f32.mrf.mxu0
        %v2473 = vadd.f32 %v2317, %v2472
        %2474 = vmatmul.bf16.gmra.mxu0 %v2417
        %v2475 = vpop.f32.mrf.mxu0
        %v2476 = vadd.f32 %v2318, %v2475
        %v2477 = vpop.f32.mrf.mxu0
        %v2478 = vadd.f32 %v2319, %v2477
        %2479 = vmatmul.bf16.gmra.mxu0 %v2420
        %v2480 = vpop.f32.mrf.mxu0
        %v2481 = vadd.f32 %v2320, %v2480
        %v2482 = vpop.f32.mrf.mxu0
        %v2483 = vadd.f32 %v2321, %v2482
        %2484 = vmatmul.bf16.gmra.mxu0 %v2423
        %v2485 = vpop.f32.mrf.mxu0
        %v2486 = vadd.f32 %v2322, %v2485
        %v2487 = vpop.f32.mrf.mxu0
        %v2488 = vadd.f32 %v2323, %v2487
        %2489 = vmatmul.bf16.gmra.mxu0 %v2426
        %v2490 = vpop.f32.mrf.mxu0
        %v2491 = vadd.f32 %v2324, %v2490
        %v2492 = vpop.f32.mrf.mxu0
        %v2493 = vadd.f32 %v2325, %v2492
        %2494 = vmatmul.bf16.gmra.mxu0 %v2429
        %v2495 = vpop.f32.mrf.mxu0
        %v2496 = vadd.f32 %v2326, %v2495
        %v2497 = vpop.f32.mrf.mxu0
        %v2498 = vadd.f32 %v2327, %v2497
        %2499 = vmatmul.bf16.gmra.mxu0 %v2432
        %v2500 = vpop.f32.mrf.mxu0
        %v2501 = vadd.f32 %v2328, %v2500
        %v2502 = vpop.f32.mrf.mxu0
        %v2503 = vadd.f32 %v2329, %v2502
        %2504 = vmatmul.bf16.gmra.mxu0 %v2435
        %v2505 = vpop.f32.mrf.mxu0
        %v2506 = vadd.f32 %v2330, %v2505
        %v2507 = vpop.f32.mrf.mxu0
        %v2508 = vadd.f32 %v2331, %v2507
        %2509 = vdwg.mxu0
        %2510 = vmax.xlane.f32.xlu0 %v2471
        %v2511 = vpop.xlane.xlu0 %2510
        %2512 = vmax.xlane.f32.xlu0 %v2473
        %v2513 = vpop.xlane.xlu0 %2512
        %2514 = vmax.xlane.f32.xlu0 %v2476
        %v2515 = vpop.xlane.xlu0 %2514
        %2516 = vmax.xlane.f32.xlu0 %v2478
        %v2517 = vpop.xlane.xlu0 %2516
        %2518 = vmax.xlane.f32.xlu0 %v2481
        %v2519 = vpop.xlane.xlu0 %2518
        %2520 = vmax.xlane.f32.xlu0 %v2483
        %v2521 = vpop.xlane.xlu0 %2520
        %2522 = vmax.xlane.f32.xlu0 %v2486
        %v2523 = vpop.xlane.xlu0 %2522
        %2524 = vmax.xlane.f32.xlu0 %v2488
        %v2525 = vpop.xlane.xlu0 %2524
        %2526 = vmax.xlane.f32.xlu0 %v2491
        %v2527 = vpop.xlane.xlu0 %2526
        %2528 = vmax.xlane.f32.xlu0 %v2493
        %v2529 = vpop.xlane.xlu0 %2528
        %2530 = vmax.xlane.f32.xlu0 %v2496
        %v2531 = vpop.xlane.xlu0 %2530
        %2532 = vmax.xlane.f32.xlu0 %v2498
        %v2533 = vpop.xlane.xlu0 %2532
        %2534 = vmax.xlane.f32.xlu0 %v2501
        %v2535 = vpop.xlane.xlu0 %2534
        %2536 = vmax.xlane.f32.xlu0 %v2503
        %v2537 = vpop.xlane.xlu0 %2536
        %2538 = vmax.xlane.f32.xlu0 %v2506
        %v2539 = vpop.xlane.xlu0 %2538
        %2540 = vmax.xlane.f32.xlu0 %v2508
        %v2541 = vpop.xlane.xlu0 %2540
        %v2542 = vsub.f32 %v2471, %v2511
        %v2543 = vsub.f32 %v2473, %v2513
        %v2544 = vsub.f32 %v2476, %v2515
        %v2545 = vsub.f32 %v2478, %v2517
        %v2546 = vsub.f32 %v2481, %v2519
        %v2547 = vsub.f32 %v2483, %v2521
        %v2548 = vsub.f32 %v2486, %v2523
        %v2549 = vsub.f32 %v2488, %v2525
        %v2550 = vsub.f32 %v2491, %v2527
        %v2551 = vsub.f32 %v2493, %v2529
        %v2552 = vsub.f32 %v2496, %v2531
        %v2553 = vsub.f32 %v2498, %v2533
        %v2554 = vsub.f32 %v2501, %v2535
        %v2555 = vsub.f32 %v2503, %v2537
        %v2556 = vsub.f32 %v2506, %v2539
        %v2557 = vsub.f32 %v2508, %v2541
        %v2558 = vmul.f32 %v2542, 1.442695
        %v2559 = vpow.pop %v2558
        %v2560 = vmul.f32 %v2543, 1.442695
        %v2561 = vpow.pop %v2560
        %v2562 = vmul.f32 %v2544, 1.442695
        %v2563 = vpow.pop %v2562
        %v2564 = vmul.f32 %v2545, 1.442695
        %v2565 = vpow.pop %v2564
        %v2566 = vmul.f32 %v2546, 1.442695
        %v2567 = vpow.pop %v2566
        %v2568 = vmul.f32 %v2547, 1.442695
        %v2569 = vpow.pop %v2568
        %v2570 = vmul.f32 %v2548, 1.442695
        %v2571 = vpow.pop %v2570
        %v2572 = vmul.f32 %v2549, 1.442695
        %v2573 = vpow.pop %v2572
        %v2574 = vmul.f32 %v2550, 1.442695
        %v2575 = vpow.pop %v2574
        %v2576 = vmul.f32 %v2551, 1.442695
        %v2577 = vpow.pop %v2576
        %v2578 = vmul.f32 %v2552, 1.442695
        %v2579 = vpow.pop %v2578
        %v2580 = vmul.f32 %v2553, 1.442695
        %v2581 = vpow.pop %v2580
        %v2582 = vmul.f32 %v2554, 1.442695
        %v2583 = vpow.pop %v2582
        %v2584 = vmul.f32 %v2555, 1.442695
        %v2585 = vpow.pop %v2584
        %v2586 = vmul.f32 %v2556, 1.442695
        %v2587 = vpow.pop %v2586
        %v2588 = vmul.f32 %v2557, 1.442695
        %v2589 = vpow.pop %v2588
        %2590 = vadd.xlane.f32.xlu0 %v2559
        %v2591 = vpop.xlane.xlu0 %2590
        %2592 = vadd.xlane.f32.xlu0 %v2561
        %v2593 = vpop.xlane.xlu0 %2592
        %2594 = vadd.xlane.f32.xlu0 %v2563
        %v2595 = vpop.xlane.xlu0 %2594
        %2596 = vadd.xlane.f32.xlu0 %v2565
        %v2597 = vpop.xlane.xlu0 %2596
        %2598 = vadd.xlane.f32.xlu0 %v2567
        %v2599 = vpop.xlane.xlu0 %2598
        %2600 = vadd.xlane.f32.xlu0 %v2569
        %v2601 = vpop.xlane.xlu0 %2600
        %2602 = vadd.xlane.f32.xlu0 %v2571
        %v2603 = vpop.xlane.xlu0 %2602
        %2604 = vadd.xlane.f32.xlu0 %v2573
        %v2605 = vpop.xlane.xlu0 %2604
        %2606 = vadd.xlane.f32.xlu0 %v2575
        %v2607 = vpop.xlane.xlu0 %2606
        %2608 = vadd.xlane.f32.xlu0 %v2577
        %v2609 = vpop.xlane.xlu0 %2608
        %2610 = vadd.xlane.f32.xlu0 %v2579
        %v2611 = vpop.xlane.xlu0 %2610
        %2612 = vadd.xlane.f32.xlu0 %v2581
        %v2613 = vpop.xlane.xlu0 %2612
        %2614 = vadd.xlane.f32.xlu0 %v2583
        %v2615 = vpop.xlane.xlu0 %2614
        %2616 = vadd.xlane.f32.xlu0 %v2585
        %v2617 = vpop.xlane.xlu0 %2616
        %2618 = vadd.xlane.f32.xlu0 %v2587
        %v2619 = vpop.xlane.xlu0 %2618
        %2620 = vadd.xlane.f32.xlu0 %v2589
        %v2621 = vpop.xlane.xlu0 %2620
        %v2622 = vrcp.pop %v2591
        %v2623 = vrcp.pop %v2593
        %v2624 = vrcp.pop %v2595
        %v2625 = vrcp.pop %v2597
        %v2626 = vrcp.pop %v2599
        %v2627 = vrcp.pop %v2601
        %v2628 = vrcp.pop %v2603
        %v2629 = vrcp.pop %v2605
        %v2630 = vrcp.pop %v2607
        %v2631 = vrcp.pop %v2609
        %v2632 = vrcp.pop %v2611
        %v2633 = vrcp.pop %v2613
        %v2634 = vrcp.pop %v2615
        %v2635 = vrcp.pop %v2617
        %v2636 = vrcp.pop %v2619
        %v2637 = vrcp.pop %v2621
        %v2638 = vpack.c.bf16 %v2561, %v2559
        %v2639 = vpack.c.bf16 %v2565, %v2563
        %v2640 = vpack.c.bf16 %v2569, %v2567
        %v2641 = vpack.c.bf16 %v2573, %v2571
        %v2642 = vpack.c.bf16 %v2577, %v2575
        %v2643 = vpack.c.bf16 %v2581, %v2579
        %v2644 = vpack.c.bf16 %v2585, %v2583
        %v2645 = vpack.c.bf16 %v2589, %v2587
        %v2662 = vunpack.c.l.b16 %v2284
        %v2663 = vunpack.c.l.b16 %v2285
        %v2664 = vunpack.c.l.b16 %v2286
        %v2665 = vunpack.c.l.b16 %v2287
        %v2666 = vunpack.c.l.b16 %v2288
        %v2667 = vunpack.c.l.b16 %v2289
        %v2668 = vunpack.c.l.b16 %v2290
        %v2669 = vunpack.c.l.b16 %v2291
        %v2670 = vunpack.c.l.b16 %v2292
        %v2671 = vunpack.c.l.b16 %v2293
        %v2672 = vunpack.c.l.b16 %v2294
        %v2673 = vunpack.c.l.b16 %v2295
        %v2674 = vunpack.c.l.b16 %v2296
        %v2675 = vunpack.c.l.b16 %v2297
        %v2676 = vunpack.c.l.b16 %v2298
        %v2677 = vunpack.c.l.b16 %v2299
        %v2678 = vpack.c.b16 %v2663, %v2662
        %v2679 = vpack.c.b16 %v2665, %v2664
        %v2680 = vpack.c.b16 %v2667, %v2666
        %v2681 = vpack.c.b16 %v2669, %v2668
        %v2682 = vpack.c.b16 %v2671, %v2670
        %v2683 = vpack.c.b16 %v2673, %v2672
        %v2684 = vpack.c.b16 %v2675, %v2674
        %v2685 = vpack.c.b16 %v2677, %v2676
        %2694 = vmatpush.bf16.msra.mxu0 %v2685
        %2695 = vmatpush.bf16.msra.mxu0 %v2684
        %2696 = vmatpush.bf16.msra.mxu0 %v2683
        %2697 = vmatpush.bf16.msra.mxu0 %v2682
        %2698 = vmatpush.bf16.msra.mxu0 %v2681
        %2699 = vmatpush.bf16.msra.mxu0 %v2680
        %2700 = vmatpush.bf16.msra.mxu0 %v2679
        %2701 = vmatpush.bf16.msra.mxu0 %v2678
        %2702 = vmatmul.bf16.gmra.mxu0 %v2638
        %v2703 = vpop.f32.mrf.mxu0
        %v2704 = vadd.f32 0.0, %v2703
        %v2705 = vpop.f32.mrf.mxu0
        %v2706 = vadd.f32 0.0, %v2705
        %2707 = vmatmul.bf16.gmra.mxu0 %v2639
        %v2708 = vpop.f32.mrf.mxu0
        %v2709 = vadd.f32 0.0, %v2708
        %v2710 = vpop.f32.mrf.mxu0
        %v2711 = vadd.f32 0.0, %v2710
        %2712 = vmatmul.bf16.gmra.mxu0 %v2640
        %v2713 = vpop.f32.mrf.mxu0
        %v2714 = vadd.f32 0.0, %v2713
        %v2715 = vpop.f32.mrf.mxu0
        %v2716 = vadd.f32 0.0, %v2715
        %2717 = vmatmul.bf16.gmra.mxu0 %v2641
        %v2718 = vpop.f32.mrf.mxu0
        %v2719 = vadd.f32 0.0, %v2718
        %v2720 = vpop.f32.mrf.mxu0
        %v2721 = vadd.f32 0.0, %v2720
        %2722 = vmatmul.bf16.gmra.mxu0 %v2642
        %v2723 = vpop.f32.mrf.mxu0
        %v2724 = vadd.f32 0.0, %v2723
        %v2725 = vpop.f32.mrf.mxu0
        %v2726 = vadd.f32 0.0, %v2725
        %2727 = vmatmul.bf16.gmra.mxu0 %v2643
        %v2728 = vpop.f32.mrf.mxu0
        %v2729 = vadd.f32 0.0, %v2728
        %v2730 = vpop.f32.mrf.mxu0
        %v2731 = vadd.f32 0.0, %v2730
        %2732 = vmatmul.bf16.gmra.mxu0 %v2644
        %v2733 = vpop.f32.mrf.mxu0
        %v2734 = vadd.f32 0.0, %v2733
        %v2735 = vpop.f32.mrf.mxu0
        %v2736 = vadd.f32 0.0, %v2735
        %2737 = vmatmul.bf16.gmra.mxu0 %v2645
        %v2738 = vpop.f32.mrf.mxu0
        %v2739 = vadd.f32 0.0, %v2738
        %v2740 = vpop.f32.mrf.mxu0
        %v2741 = vadd.f32 0.0, %v2740
        %2742 = vdwg.mxu0
        %v2743 = vmul.f32 %v2704, %v2622
        %v2744 = vmul.f32 %v2706, %v2623
        %v2745 = vmul.f32 %v2709, %v2624
        %v2746 = vmul.f32 %v2711, %v2625
        %v2747 = vmul.f32 %v2714, %v2626
        %v2748 = vmul.f32 %v2716, %v2627
        %v2749 = vmul.f32 %v2719, %v2628
        %v2750 = vmul.f32 %v2721, %v2629
        %v2751 = vmul.f32 %v2724, %v2630
        %v2752 = vmul.f32 %v2726, %v2631
        %v2753 = vmul.f32 %v2729, %v2632
        %v2754 = vmul.f32 %v2731, %v2633
        %v2755 = vmul.f32 %v2734, %v2634
        %v2756 = vmul.f32 %v2736, %v2635
        %v2757 = vmul.f32 %v2739, %v2636
        %v2758 = vmul.f32 %v2741, %v2637
        %v2759 = vpack.c.bf16 %v2744, %v2743
        %v2760 = vpack.c.bf16 %v2746, %v2745
        %v2761 = vpack.c.bf16 %v2748, %v2747
        %v2762 = vpack.c.bf16 %v2750, %v2749
        %v2763 = vpack.c.bf16 %v2752, %v2751
        %v2764 = vpack.c.bf16 %v2754, %v2753
        %v2765 = vpack.c.bf16 %v2756, %v2755
        %v2766 = vpack.c.bf16 %v2758, %v2757
        %v2767 = vld [vmem:[%s370] sm:$0xff]
        %v2768 = vld [vmem:[%s370 + $0x8] sm:$0xff]
        %v2769 = vld [vmem:[%s370 + $0x10] sm:$0xff]
        %v2770 = vld [vmem:[%s370 + $0x18] sm:$0xff]
        %v2771 = vld [vmem:[%s370 + $0x20] sm:$0xff]
        %v2772 = vld [vmem:[%s370 + $0x28] sm:$0xff]
        %v2773 = vld [vmem:[%s370 + $0x30] sm:$0xff]
        %v2774 = vld [vmem:[%s370 + $0x38] sm:$0xff]
        %v2775 = vld [vmem:[#allocation4 + $0x8] sm:$0xf]
        %v2776 = vld [vmem:[#allocation4 + $0x20] sm:$0xf]
        %v2777 = vld [vmem:[#allocation4 + $0x38] sm:$0xf]
        %v2778 = vld [vmem:[#allocation4 + $0x50] sm:$0xf]
        %v2779 = vld [vmem:[#allocation4 + $0x68] sm:$0xf]
        %v2780 = vld [vmem:[#allocation4 + $0x80] sm:$0xf]
        %v2781 = vld [vmem:[#allocation4 + $0x98] sm:$0xf]
        %v2782 = vld [vmem:[#allocation4 + $0xb0] sm:$0xf]
        %v2783 = vld [vmem:[#allocation4 + $0xc8] sm:$0xf]
        %v2784 = vld [vmem:[#allocation4 + $0xe0] sm:$0xf]
        %v2785 = vld [vmem:[#allocation4 + $0xf8] sm:$0xf]
        %v2786 = vld [vmem:[#allocation4 + $0x110] sm:$0xf]
        %v2787 = vld [vmem:[#allocation4 + $0x128] sm:$0xf]
        %v2788 = vld [vmem:[#allocation4 + $0x140] sm:$0xf]
        %v2789 = vld [vmem:[#allocation4 + $0x158] sm:$0xf]
        %v2790 = vld [vmem:[#allocation4 + $0x170] sm:$0xf]
        %v2791 = vld [vmem:[#allocation4 + $0x10] sm:$0xf]
        %v2792 = vld [vmem:[#allocation4 + $0x28] sm:$0xf]
        %v2793 = vld [vmem:[#allocation4 + $0x40] sm:$0xf]
        %v2794 = vld [vmem:[#allocation4 + $0x58] sm:$0xf]
        %v2795 = vld [vmem:[#allocation4 + $0x70] sm:$0xf]
        %v2796 = vld [vmem:[#allocation4 + $0x88] sm:$0xf]
        %v2797 = vld [vmem:[#allocation4 + $0xa0] sm:$0xf]
        %v2798 = vld [vmem:[#allocation4 + $0xb8] sm:$0xf]
        %v2799 = vld [vmem:[#allocation4 + $0xd0] sm:$0xf]
        %v2800 = vld [vmem:[#allocation4 + $0xe8] sm:$0xf]
        %v2801 = vld [vmem:[#allocation4 + $0x100] sm:$0xf]
        %v2802 = vld [vmem:[#allocation4 + $0x118] sm:$0xf]
        %v2803 = vld [vmem:[#allocation4 + $0x130] sm:$0xf]
        %v2804 = vld [vmem:[#allocation4 + $0x148] sm:$0xf]
        %v2805 = vld [vmem:[#allocation4 + $0x160] sm:$0xf]
        %v2806 = vld [vmem:[#allocation4 + $0x178] sm:$0xf]
        %s2807 = scalar_lea.vmem [#allocation3], 64
        %v2808 = vld [vmem:[%s2807] sm:$0xf]
        %v2809 = vld [vmem:[%s2807 + $0x4] sm:$0xf]
        %v2810 = vld [vmem:[%s2807 + $0x8] sm:$0xf]
        %v2811 = vld [vmem:[%s2807 + $0xc] sm:$0xf]
        %v2812 = vld [vmem:[%s2807 + $0x10] sm:$0xf]
        %v2813 = vld [vmem:[%s2807 + $0x14] sm:$0xf]
        %v2814 = vld [vmem:[%s2807 + $0x18] sm:$0xf]
        %v2815 = vld [vmem:[%s2807 + $0x1c] sm:$0xf]
        %v2816 = vld [vmem:[%s2807 + $0x20] sm:$0xf]
        %v2817 = vld [vmem:[%s2807 + $0x24] sm:$0xf]
        %v2818 = vld [vmem:[%s2807 + $0x28] sm:$0xf]
        %v2819 = vld [vmem:[%s2807 + $0x2c] sm:$0xf]
        %v2820 = vld [vmem:[%s2807 + $0x30] sm:$0xf]
        %v2821 = vld [vmem:[%s2807 + $0x34] sm:$0xf]
        %v2822 = vld [vmem:[%s2807 + $0x38] sm:$0xf]
        %v2823 = vld [vmem:[%s2807 + $0x3c] sm:$0xf]
        %v2824 = vunpack.c.l.bf16 %v2808
        %v2825 = vunpack.c.l.bf16 %v2809
        %v2826 = vunpack.c.l.bf16 %v2810
        %v2827 = vunpack.c.l.bf16 %v2811
        %v2828 = vunpack.c.l.bf16 %v2812
        %v2829 = vunpack.c.l.bf16 %v2813
        %v2830 = vunpack.c.l.bf16 %v2814
        %v2831 = vunpack.c.l.bf16 %v2815
        %v2832 = vunpack.c.l.bf16 %v2816
        %v2833 = vunpack.c.l.bf16 %v2817
        %v2834 = vunpack.c.l.bf16 %v2818
        %v2835 = vunpack.c.l.bf16 %v2819
        %v2836 = vunpack.c.l.bf16 %v2820
        %v2837 = vunpack.c.l.bf16 %v2821
        %v2838 = vunpack.c.l.bf16 %v2822
        %v2839 = vunpack.c.l.bf16 %v2823
        %2840 = vrot.lane.b32.xlu0 %v2364, 64
        %v2841 = vpop.permute.xlu0 %2840
        %2842 = vrot.lane.b32.xlu0 %v2365, 64
        %v2843 = vpop.permute.xlu0 %2842
        %2844 = vrot.lane.b32.xlu0 %v2366, 64
        %v2845 = vpop.permute.xlu0 %2844
        %2846 = vrot.lane.b32.xlu0 %v2367, 64
        %v2847 = vpop.permute.xlu0 %2846
        %2848 = vrot.lane.b32.xlu0 %v2368, 64
        %v2849 = vpop.permute.xlu0 %2848
        %2850 = vrot.lane.b32.xlu0 %v2369, 64
        %v2851 = vpop.permute.xlu0 %2850
        %2852 = vrot.lane.b32.xlu0 %v2370, 64
        %v2853 = vpop.permute.xlu0 %2852
        %2854 = vrot.lane.b32.xlu0 %v2371, 64
        %v2855 = vpop.permute.xlu0 %2854
        %v2872 = vunpack.c.l.b16 %v2775
        %v2873 = vunpack.c.l.b16 %v2776
        %v2874 = vunpack.c.l.b16 %v2777
        %v2875 = vunpack.c.l.b16 %v2778
        %v2876 = vunpack.c.l.b16 %v2779
        %v2877 = vunpack.c.l.b16 %v2780
        %v2878 = vunpack.c.l.b16 %v2781
        %v2879 = vunpack.c.l.b16 %v2782
        %v2880 = vunpack.c.l.b16 %v2783
        %v2881 = vunpack.c.l.b16 %v2784
        %v2882 = vunpack.c.l.b16 %v2785
        %v2883 = vunpack.c.l.b16 %v2786
        %v2884 = vunpack.c.l.b16 %v2787
        %v2885 = vunpack.c.l.b16 %v2788
        %v2886 = vunpack.c.l.b16 %v2789
        %v2887 = vunpack.c.l.b16 %v2790
        %v2888 = vpack.c.b16 %v2873, %v2872
        %v2889 = vpack.c.b16 %v2875, %v2874
        %v2890 = vpack.c.b16 %v2877, %v2876
        %v2891 = vpack.c.b16 %v2879, %v2878
        %v2892 = vpack.c.b16 %v2881, %v2880
        %v2893 = vpack.c.b16 %v2883, %v2882
        %v2894 = vpack.c.b16 %v2885, %v2884
        %v2895 = vpack.c.b16 %v2887, %v2886
        %2896 = vrot.lane.b32.xlu0 %v2888, 64
        %v2897 = vpop.permute.xlu0 %2896
        %2898 = vrot.lane.b32.xlu0 %v2889, 64
        %v2899 = vpop.permute.xlu0 %2898
        %2900 = vrot.lane.b32.xlu0 %v2890, 64
        %v2901 = vpop.permute.xlu0 %2900
        %2902 = vrot.lane.b32.xlu0 %v2891, 64
        %v2903 = vpop.permute.xlu0 %2902
        %2904 = vrot.lane.b32.xlu0 %v2892, 64
        %v2905 = vpop.permute.xlu0 %2904
        %2906 = vrot.lane.b32.xlu0 %v2893, 64
        %v2907 = vpop.permute.xlu0 %2906
        %2908 = vrot.lane.b32.xlu0 %v2894, 64
        %v2909 = vpop.permute.xlu0 %2908
        %2910 = vrot.lane.b32.xlu0 %v2895, 64
        %v2911 = vpop.permute.xlu0 %2910
        %v2913 = vsel %vm2412, %v2841, 0
        %v2916 = vsel %vm2412, %v2843, 0
        %v2919 = vsel %vm2412, %v2845, 0
        %v2922 = vsel %vm2412, %v2847, 0
        %v2925 = vsel %vm2412, %v2849, 0
        %v2928 = vsel %vm2412, %v2851, 0
        %v2931 = vsel %vm2412, %v2853, 0
        %v2934 = vsel %vm2412, %v2855, 0
        %v2937 = vsel %vm2412, %v2897, 0
        %v2940 = vsel %vm2412, %v2899, 0
        %v2943 = vsel %vm2412, %v2901, 0
        %v2946 = vsel %vm2412, %v2903, 0
        %v2949 = vsel %vm2412, %v2905, 0
        %v2952 = vsel %vm2412, %v2907, 0
        %v2955 = vsel %vm2412, %v2909, 0
        %v2958 = vsel %vm2412, %v2911, 0
        %2960 = vmatpush.bf16.xpose.msra.mxu0 %v2958
        %2961 = vmatpush.bf16.xpose.msra.mxu0 %v2955
        %2962 = vmatpush.bf16.xpose.msra.mxu0 %v2952
        %2963 = vmatpush.bf16.xpose.msra.mxu0 %v2949
        %2964 = vmatpush.bf16.xpose.msra.mxu0 %v2946
        %2965 = vmatpush.bf16.xpose.msra.mxu0 %v2943
        %2966 = vmatpush.bf16.xpose.msra.mxu0 %v2940
        %2967 = vmatpush.bf16.xpose.msra.mxu0 %v2937
        %2968 = vmatmul.bf16.gmra.mxu0 %v2913
        %v2969 = vpop.f32.mrf.mxu0
        %v2970 = vadd.f32 %v2824, %v2969
        %v2971 = vpop.f32.mrf.mxu0
        %v2972 = vadd.f32 %v2825, %v2971
        %2973 = vmatmul.bf16.gmra.mxu0 %v2916
        %v2974 = vpop.f32.mrf.mxu0
        %v2975 = vadd.f32 %v2826, %v2974
        %v2976 = vpop.f32.mrf.mxu0
        %v2977 = vadd.f32 %v2827, %v2976
        %2978 = vmatmul.bf16.gmra.mxu0 %v2919
        %v2979 = vpop.f32.mrf.mxu0
        %v2980 = vadd.f32 %v2828, %v2979
        %v2981 = vpop.f32.mrf.mxu0
        %v2982 = vadd.f32 %v2829, %v2981
        %2983 = vmatmul.bf16.gmra.mxu0 %v2922
        %v2984 = vpop.f32.mrf.mxu0
        %v2985 = vadd.f32 %v2830, %v2984
        %v2986 = vpop.f32.mrf.mxu0
        %v2987 = vadd.f32 %v2831, %v2986
        %2988 = vmatmul.bf16.gmra.mxu0 %v2925
        %v2989 = vpop.f32.mrf.mxu0
        %v2990 = vadd.f32 %v2832, %v2989
        %v2991 = vpop.f32.mrf.mxu0
        %v2992 = vadd.f32 %v2833, %v2991
        %2993 = vmatmul.bf16.gmra.mxu0 %v2928
        %v2994 = vpop.f32.mrf.mxu0
        %v2995 = vadd.f32 %v2834, %v2994
        %v2996 = vpop.f32.mrf.mxu0
        %v2997 = vadd.f32 %v2835, %v2996
        %2998 = vmatmul.bf16.gmra.mxu0 %v2931
        %v2999 = vpop.f32.mrf.mxu0
        %v3000 = vadd.f32 %v2836, %v2999
        %v3001 = vpop.f32.mrf.mxu0
        %v3002 = vadd.f32 %v2837, %v3001
        %3003 = vmatmul.bf16.gmra.mxu0 %v2934
        %v3004 = vpop.f32.mrf.mxu0
        %v3005 = vadd.f32 %v2838, %v3004
        %v3006 = vpop.f32.mrf.mxu0
        %v3007 = vadd.f32 %v2839, %v3006
        %3008 = vdwg.mxu0
        %3009 = vmax.xlane.f32.xlu0 %v2970
        %v3010 = vpop.xlane.xlu0 %3009
        %3011 = vmax.xlane.f32.xlu0 %v2972
        %v3012 = vpop.xlane.xlu0 %3011
        %3013 = vmax.xlane.f32.xlu0 %v2975
        %v3014 = vpop.xlane.xlu0 %3013
        %3015 = vmax.xlane.f32.xlu0 %v2977
        %v3016 = vpop.xlane.xlu0 %3015
        %3017 = vmax.xlane.f32.xlu0 %v2980
        %v3018 = vpop.xlane.xlu0 %3017
        %3019 = vmax.xlane.f32.xlu0 %v2982
        %v3020 = vpop.xlane.xlu0 %3019
        %3021 = vmax.xlane.f32.xlu0 %v2985
        %v3022 = vpop.xlane.xlu0 %3021
        %3023 = vmax.xlane.f32.xlu0 %v2987
        %v3024 = vpop.xlane.xlu0 %3023
        %3025 = vmax.xlane.f32.xlu0 %v2990
        %v3026 = vpop.xlane.xlu0 %3025
        %3027 = vmax.xlane.f32.xlu0 %v2992
        %v3028 = vpop.xlane.xlu0 %3027
        %3029 = vmax.xlane.f32.xlu0 %v2995
        %v3030 = vpop.xlane.xlu0 %3029
        %3031 = vmax.xlane.f32.xlu0 %v2997
        %v3032 = vpop.xlane.xlu0 %3031
        %3033 = vmax.xlane.f32.xlu0 %v3000
        %v3034 = vpop.xlane.xlu0 %3033
        %3035 = vmax.xlane.f32.xlu0 %v3002
        %v3036 = vpop.xlane.xlu0 %3035
        %3037 = vmax.xlane.f32.xlu0 %v3005
        %v3038 = vpop.xlane.xlu0 %3037
        %3039 = vmax.xlane.f32.xlu0 %v3007
        %v3040 = vpop.xlane.xlu0 %3039
        %v3041 = vsub.f32 %v2970, %v3010
        %v3042 = vsub.f32 %v2972, %v3012
        %v3043 = vsub.f32 %v2975, %v3014
        %v3044 = vsub.f32 %v2977, %v3016
        %v3045 = vsub.f32 %v2980, %v3018
        %v3046 = vsub.f32 %v2982, %v3020
        %v3047 = vsub.f32 %v2985, %v3022
        %v3048 = vsub.f32 %v2987, %v3024
        %v3049 = vsub.f32 %v2990, %v3026
        %v3050 = vsub.f32 %v2992, %v3028
        %v3051 = vsub.f32 %v2995, %v3030
        %v3052 = vsub.f32 %v2997, %v3032
        %v3053 = vsub.f32 %v3000, %v3034
        %v3054 = vsub.f32 %v3002, %v3036
        %v3055 = vsub.f32 %v3005, %v3038
        %v3056 = vsub.f32 %v3007, %v3040
        %v3057 = vmul.f32 %v3041, 1.442695
        %v3058 = vpow.pop %v3057
        %v3059 = vmul.f32 %v3042, 1.442695
        %v3060 = vpow.pop %v3059
        %v3061 = vmul.f32 %v3043, 1.442695
        %v3062 = vpow.pop %v3061
        %v3063 = vmul.f32 %v3044, 1.442695
        %v3064 = vpow.pop %v3063
        %v3065 = vmul.f32 %v3045, 1.442695
        %v3066 = vpow.pop %v3065
        %v3067 = vmul.f32 %v3046, 1.442695
        %v3068 = vpow.pop %v3067
        %v3069 = vmul.f32 %v3047, 1.442695
        %v3070 = vpow.pop %v3069
        %v3071 = vmul.f32 %v3048, 1.442695
        %v3072 = vpow.pop %v3071
        %v3073 = vmul.f32 %v3049, 1.442695
        %v3074 = vpow.pop %v3073
        %v3075 = vmul.f32 %v3050, 1.442695
        %v3076 = vpow.pop %v3075
        %v3077 = vmul.f32 %v3051, 1.442695
        %v3078 = vpow.pop %v3077
        %v3079 = vmul.f32 %v3052, 1.442695
        %v3080 = vpow.pop %v3079
        %v3081 = vmul.f32 %v3053, 1.442695
        %v3082 = vpow.pop %v3081
        %v3083 = vmul.f32 %v3054, 1.442695
        %v3084 = vpow.pop %v3083
        %v3085 = vmul.f32 %v3055, 1.442695
        %v3086 = vpow.pop %v3085
        %v3087 = vmul.f32 %v3056, 1.442695
        %v3088 = vpow.pop %v3087
        %3089 = vadd.xlane.f32.xlu0 %v3058
        %v3090 = vpop.xlane.xlu0 %3089
        %3091 = vadd.xlane.f32.xlu0 %v3060
        %v3092 = vpop.xlane.xlu0 %3091
        %3093 = vadd.xlane.f32.xlu0 %v3062
        %v3094 = vpop.xlane.xlu0 %3093
        %3095 = vadd.xlane.f32.xlu0 %v3064
        %v3096 = vpop.xlane.xlu0 %3095
        %3097 = vadd.xlane.f32.xlu0 %v3066
        %v3098 = vpop.xlane.xlu0 %3097
        %3099 = vadd.xlane.f32.xlu0 %v3068
        %v3100 = vpop.xlane.xlu0 %3099
        %3101 = vadd.xlane.f32.xlu0 %v3070
        %v3102 = vpop.xlane.xlu0 %3101
        %3103 = vadd.xlane.f32.xlu0 %v3072
        %v3104 = vpop.xlane.xlu0 %3103
        %3105 = vadd.xlane.f32.xlu0 %v3074
        %v3106 = vpop.xlane.xlu0 %3105
        %3107 = vadd.xlane.f32.xlu0 %v3076
        %v3108 = vpop.xlane.xlu0 %3107
        %3109 = vadd.xlane.f32.xlu0 %v3078
        %v3110 = vpop.xlane.xlu0 %3109
        %3111 = vadd.xlane.f32.xlu0 %v3080
        %v3112 = vpop.xlane.xlu0 %3111
        %3113 = vadd.xlane.f32.xlu0 %v3082
        %v3114 = vpop.xlane.xlu0 %3113
        %3115 = vadd.xlane.f32.xlu0 %v3084
        %v3116 = vpop.xlane.xlu0 %3115
        %3117 = vadd.xlane.f32.xlu0 %v3086
        %v3118 = vpop.xlane.xlu0 %3117
        %3119 = vadd.xlane.f32.xlu0 %v3088
        %v3120 = vpop.xlane.xlu0 %3119
        %v3121 = vrcp.pop %v3090
        %v3122 = vrcp.pop %v3092
        %v3123 = vrcp.pop %v3094
        %v3124 = vrcp.pop %v3096
        %v3125 = vrcp.pop %v3098
        %v3126 = vrcp.pop %v3100
        %v3127 = vrcp.pop %v3102
        %v3128 = vrcp.pop %v3104
        %v3129 = vrcp.pop %v3106
        %v3130 = vrcp.pop %v3108
        %v3131 = vrcp.pop %v3110
        %v3132 = vrcp.pop %v3112
        %v3133 = vrcp.pop %v3114
        %v3134 = vrcp.pop %v3116
        %v3135 = vrcp.pop %v3118
        %v3136 = vrcp.pop %v3120
        %v3137 = vpack.c.bf16 %v3060, %v3058
        %v3138 = vpack.c.bf16 %v3064, %v3062
        %v3139 = vpack.c.bf16 %v3068, %v3066
        %v3140 = vpack.c.bf16 %v3072, %v3070
        %v3141 = vpack.c.bf16 %v3076, %v3074
        %v3142 = vpack.c.bf16 %v3080, %v3078
        %v3143 = vpack.c.bf16 %v3084, %v3082
        %v3144 = vpack.c.bf16 %v3088, %v3086
        %v3161 = vunpack.c.l.b16 %v2791
        %v3162 = vunpack.c.l.b16 %v2792
        %v3163 = vunpack.c.l.b16 %v2793
        %v3164 = vunpack.c.l.b16 %v2794
        %v3165 = vunpack.c.l.b16 %v2795
        %v3166 = vunpack.c.l.b16 %v2796
        %v3167 = vunpack.c.l.b16 %v2797
        %v3168 = vunpack.c.l.b16 %v2798
        %v3169 = vunpack.c.l.b16 %v2799
        %v3170 = vunpack.c.l.b16 %v2800
        %v3171 = vunpack.c.l.b16 %v2801
        %v3172 = vunpack.c.l.b16 %v2802
        %v3173 = vunpack.c.l.b16 %v2803
        %v3174 = vunpack.c.l.b16 %v2804
        %v3175 = vunpack.c.l.b16 %v2805
        %v3176 = vunpack.c.l.b16 %v2806
        %v3177 = vpack.c.b16 %v3162, %v3161
        %v3178 = vpack.c.b16 %v3164, %v3163
        %v3179 = vpack.c.b16 %v3166, %v3165
        %v3180 = vpack.c.b16 %v3168, %v3167
        %v3181 = vpack.c.b16 %v3170, %v3169
        %v3182 = vpack.c.b16 %v3172, %v3171
        %v3183 = vpack.c.b16 %v3174, %v3173
        %v3184 = vpack.c.b16 %v3176, %v3175
        %3185 = vrot.lane.b32.xlu0 %v3177, 64
        %v3186 = vpop.permute.xlu0 %3185
        %3187 = vrot.lane.b32.xlu0 %v3178, 64
        %v3188 = vpop.permute.xlu0 %3187
        %3189 = vrot.lane.b32.xlu0 %v3179, 64
        %v3190 = vpop.permute.xlu0 %3189
        %3191 = vrot.lane.b32.xlu0 %v3180, 64
        %v3192 = vpop.permute.xlu0 %3191
        %3193 = vrot.lane.b32.xlu0 %v3181, 64
        %v3194 = vpop.permute.xlu0 %3193
        %3195 = vrot.lane.b32.xlu0 %v3182, 64
        %v3196 = vpop.permute.xlu0 %3195
        %3197 = vrot.lane.b32.xlu0 %v3183, 64
        %v3198 = vpop.permute.xlu0 %3197
        %3199 = vrot.lane.b32.xlu0 %v3184, 64
        %v3200 = vpop.permute.xlu0 %3199
        %3209 = vmatpush.bf16.msra.mxu0 %v3200
        %3210 = vmatpush.bf16.msra.mxu0 %v3198
        %3211 = vmatpush.bf16.msra.mxu0 %v3196
        %3212 = vmatpush.bf16.msra.mxu0 %v3194
        %3213 = vmatpush.bf16.msra.mxu0 %v3192
        %3214 = vmatpush.bf16.msra.mxu0 %v3190
        %3215 = vmatpush.bf16.msra.mxu0 %v3188
        %3216 = vmatpush.bf16.msra.mxu0 %v3186
        %3217 = vmatmul.bf16.gmra.mxu0 %v3137
        %v3218 = vpop.f32.mrf.mxu0
        %v3219 = vadd.f32 0.0, %v3218
        %v3220 = vpop.f32.mrf.mxu0
        %v3221 = vadd.f32 0.0, %v3220
        %3222 = vmatmul.bf16.gmra.mxu0 %v3138
        %v3223 = vpop.f32.mrf.mxu0
        %v3224 = vadd.f32 0.0, %v3223
        %v3225 = vpop.f32.mrf.mxu0
        %v3226 = vadd.f32 0.0, %v3225
        %3227 = vmatmul.bf16.gmra.mxu0 %v3139
        %v3228 = vpop.f32.mrf.mxu0
        %v3229 = vadd.f32 0.0, %v3228
        %v3230 = vpop.f32.mrf.mxu0
        %v3231 = vadd.f32 0.0, %v3230
        %3232 = vmatmul.bf16.gmra.mxu0 %v3140
        %v3233 = vpop.f32.mrf.mxu0
        %v3234 = vadd.f32 0.0, %v3233
        %v3235 = vpop.f32.mrf.mxu0
        %v3236 = vadd.f32 0.0, %v3235
        %3237 = vmatmul.bf16.gmra.mxu0 %v3141
        %v3238 = vpop.f32.mrf.mxu0
        %v3239 = vadd.f32 0.0, %v3238
        %v3240 = vpop.f32.mrf.mxu0
        %v3241 = vadd.f32 0.0, %v3240
        %3242 = vmatmul.bf16.gmra.mxu0 %v3142
        %v3243 = vpop.f32.mrf.mxu0
        %v3244 = vadd.f32 0.0, %v3243
        %v3245 = vpop.f32.mrf.mxu0
        %v3246 = vadd.f32 0.0, %v3245
        %3247 = vmatmul.bf16.gmra.mxu0 %v3143
        %v3248 = vpop.f32.mrf.mxu0
        %v3249 = vadd.f32 0.0, %v3248
        %v3250 = vpop.f32.mrf.mxu0
        %v3251 = vadd.f32 0.0, %v3250
        %3252 = vmatmul.bf16.gmra.mxu0 %v3144
        %v3253 = vpop.f32.mrf.mxu0
        %v3254 = vadd.f32 0.0, %v3253
        %v3255 = vpop.f32.mrf.mxu0
        %v3256 = vadd.f32 0.0, %v3255
        %3257 = vdwg.mxu0
        %v3258 = vmul.f32 %v3219, %v3121
        %v3259 = vmul.f32 %v3221, %v3122
        %v3260 = vmul.f32 %v3224, %v3123
        %v3261 = vmul.f32 %v3226, %v3124
        %v3262 = vmul.f32 %v3229, %v3125
        %v3263 = vmul.f32 %v3231, %v3126
        %v3264 = vmul.f32 %v3234, %v3127
        %v3265 = vmul.f32 %v3236, %v3128
        %v3266 = vmul.f32 %v3239, %v3129
        %v3267 = vmul.f32 %v3241, %v3130
        %v3268 = vmul.f32 %v3244, %v3131
        %v3269 = vmul.f32 %v3246, %v3132
        %v3270 = vmul.f32 %v3249, %v3133
        %v3271 = vmul.f32 %v3251, %v3134
        %v3272 = vmul.f32 %v3254, %v3135
        %v3273 = vmul.f32 %v3256, %v3136
        %v3274 = vpack.c.bf16 %v3259, %v3258
        %v3275 = vpack.c.bf16 %v3261, %v3260
        %v3276 = vpack.c.bf16 %v3263, %v3262
        %v3277 = vpack.c.bf16 %v3265, %v3264
        %v3278 = vpack.c.bf16 %v3267, %v3266
        %v3279 = vpack.c.bf16 %v3269, %v3268
        %v3280 = vpack.c.bf16 %v3271, %v3270
        %v3281 = vpack.c.bf16 %v3273, %v3272
        %v3282 = vld [vmem:[%s370 + $0x40] sm:$0xff]
        %v3283 = vld [vmem:[%s370 + $0x48] sm:$0xff]
        %v3284 = vld [vmem:[%s370 + $0x50] sm:$0xff]
        %v3285 = vld [vmem:[%s370 + $0x58] sm:$0xff]
        %v3286 = vld [vmem:[%s370 + $0x60] sm:$0xff]
        %v3287 = vld [vmem:[%s370 + $0x68] sm:$0xff]
        %v3288 = vld [vmem:[%s370 + $0x70] sm:$0xff]
        %v3289 = vld [vmem:[%s370 + $0x78] sm:$0xff]
        %v3298 = vunpack.c.l.b16 %v3282
        %v3299 = vunpack.c.h.b16 %v3282
        %v3300 = vunpack.c.l.b16 %v3283
        %v3301 = vunpack.c.h.b16 %v3283
        %v3302 = vunpack.c.l.b16 %v3284
        %v3303 = vunpack.c.h.b16 %v3284
        %v3304 = vunpack.c.l.b16 %v3285
        %v3305 = vunpack.c.h.b16 %v3285
        %v3306 = vunpack.c.l.b16 %v3286
        %v3307 = vunpack.c.h.b16 %v3286
        %v3308 = vunpack.c.l.b16 %v3287
        %v3309 = vunpack.c.h.b16 %v3287
        %v3310 = vunpack.c.l.b16 %v3288
        %v3311 = vunpack.c.h.b16 %v3288
        %v3312 = vunpack.c.l.b16 %v3289
        %v3313 = vunpack.c.h.b16 %v3289
        %v3314 = vpack.c.b16 %v3300, %v3298
        %v3315 = vpack.c.b16 %v3301, %v3299
        %v3316 = vpack.c.b16 %v3304, %v3302
        %v3317 = vpack.c.b16 %v3305, %v3303
        %v3318 = vpack.c.b16 %v3308, %v3306
        %v3319 = vpack.c.b16 %v3309, %v3307
        %v3320 = vpack.c.b16 %v3312, %v3310
        %v3321 = vpack.c.b16 %v3313, %v3311
        %v3331 = vsel %vm2412, %v3274, 0
        %v3334 = vsel %vm2412, %v3275, 0
        %v3337 = vsel %vm2412, %v3276, 0
        %v3340 = vsel %vm2412, %v3277, 0
        %v3343 = vsel %vm2412, %v3278, 0
        %v3346 = vsel %vm2412, %v3279, 0
        %v3349 = vsel %vm2412, %v3280, 0
        %v3352 = vsel %vm2412, %v3281, 0
        %3354 = vmatpush.bf16.msra.mxu0 0
        %3355 = vmatpush.bf16.msra.mxu0 0
        %3356 = vmatpush.bf16.msra.mxu0 0
        %3357 = vmatpush.bf16.msra.mxu0 0
        %3358 = vmatpush.bf16.msra.mxu0 %v3320
        %3359 = vmatpush.bf16.msra.mxu0 %v3318
        %3360 = vmatpush.bf16.msra.mxu0 %v3316
        %3361 = vmatpush.bf16.msra.mxu0 %v3314
        %3362 = vmatmul.bf16.gmra.mxu0 %v3331
        %v3363 = vpop.f32.mrf.mxu0
        %v3364 = vadd.f32 0.0, %v3363
        %v3365 = vpop.f32.mrf.mxu0
        %v3366 = vadd.f32 0.0, %v3365
        %3367 = vmatmul.bf16.gmra.mxu0 %v3334
        %v3368 = vpop.f32.mrf.mxu0
        %v3369 = vadd.f32 0.0, %v3368
        %v3370 = vpop.f32.mrf.mxu0
        %v3371 = vadd.f32 0.0, %v3370
        %3372 = vmatmul.bf16.gmra.mxu0 %v3337
        %v3373 = vpop.f32.mrf.mxu0
        %v3374 = vadd.f32 0.0, %v3373
        %v3375 = vpop.f32.mrf.mxu0
        %v3376 = vadd.f32 0.0, %v3375
        %3377 = vmatmul.bf16.gmra.mxu0 %v3340
        %v3378 = vpop.f32.mrf.mxu0
        %v3379 = vadd.f32 0.0, %v3378
        %v3380 = vpop.f32.mrf.mxu0
        %v3381 = vadd.f32 0.0, %v3380
        %3382 = vmatmul.bf16.gmra.mxu0 %v3343
        %v3383 = vpop.f32.mrf.mxu0
        %v3384 = vadd.f32 0.0, %v3383
        %v3385 = vpop.f32.mrf.mxu0
        %v3386 = vadd.f32 0.0, %v3385
        %3387 = vmatmul.bf16.gmra.mxu0 %v3346
        %v3388 = vpop.f32.mrf.mxu0
        %v3389 = vadd.f32 0.0, %v3388
        %v3390 = vpop.f32.mrf.mxu0
        %v3391 = vadd.f32 0.0, %v3390
        %3392 = vmatmul.bf16.gmra.mxu0 %v3349
        %v3393 = vpop.f32.mrf.mxu0
        %v3394 = vadd.f32 0.0, %v3393
        %v3395 = vpop.f32.mrf.mxu0
        %v3396 = vadd.f32 0.0, %v3395
        %3397 = vmatmul.bf16.gmra.mxu0 %v3352
        %v3398 = vpop.f32.mrf.mxu0
        %v3399 = vadd.f32 0.0, %v3398
        %v3400 = vpop.f32.mrf.mxu0
        %v3401 = vadd.f32 0.0, %v3400
        %3402 = vdwg.mxu0
        %3403 = vmatpush.bf16.msra.mxu0 0
        %3404 = vmatpush.bf16.msra.mxu0 0
        %3405 = vmatpush.bf16.msra.mxu0 0
        %3406 = vmatpush.bf16.msra.mxu0 0
        %3407 = vmatpush.bf16.msra.mxu0 %v3321
        %3408 = vmatpush.bf16.msra.mxu0 %v3319
        %3409 = vmatpush.bf16.msra.mxu0 %v3317
        %3410 = vmatpush.bf16.msra.mxu0 %v3315
        %3411 = vmatmul.bf16.gmra.mxu0 %v3331
        %v3412 = vpop.f32.mrf.mxu0
        %v3413 = vadd.f32 0.0, %v3412
        %v3414 = vpop.f32.mrf.mxu0
        %v3415 = vadd.f32 0.0, %v3414
        %3416 = vmatmul.bf16.gmra.mxu0 %v3334
        %v3417 = vpop.f32.mrf.mxu0
        %v3418 = vadd.f32 0.0, %v3417
        %v3419 = vpop.f32.mrf.mxu0
        %v3420 = vadd.f32 0.0, %v3419
        %3421 = vmatmul.bf16.gmra.mxu0 %v3337
        %v3422 = vpop.f32.mrf.mxu0
        %v3423 = vadd.f32 0.0, %v3422
        %v3424 = vpop.f32.mrf.mxu0
        %v3425 = vadd.f32 0.0, %v3424
        %3426 = vmatmul.bf16.gmra.mxu0 %v3340
        %v3427 = vpop.f32.mrf.mxu0
        %v3428 = vadd.f32 0.0, %v3427
        %v3429 = vpop.f32.mrf.mxu0
        %v3430 = vadd.f32 0.0, %v3429
        %3431 = vmatmul.bf16.gmra.mxu0 %v3343
        %v3432 = vpop.f32.mrf.mxu0
        %v3433 = vadd.f32 0.0, %v3432
        %v3434 = vpop.f32.mrf.mxu0
        %v3435 = vadd.f32 0.0, %v3434
        %3436 = vmatmul.bf16.gmra.mxu0 %v3346
        %v3437 = vpop.f32.mrf.mxu0
        %v3438 = vadd.f32 0.0, %v3437
        %v3439 = vpop.f32.mrf.mxu0
        %v3440 = vadd.f32 0.0, %v3439
        %3441 = vmatmul.bf16.gmra.mxu0 %v3349
        %v3442 = vpop.f32.mrf.mxu0
        %v3443 = vadd.f32 0.0, %v3442
        %v3444 = vpop.f32.mrf.mxu0
        %v3445 = vadd.f32 0.0, %v3444
        %3446 = vmatmul.bf16.gmra.mxu0 %v3352
        %v3447 = vpop.f32.mrf.mxu0
        %v3448 = vadd.f32 0.0, %v3447
        %v3449 = vpop.f32.mrf.mxu0
        %v3450 = vadd.f32 0.0, %v3449
        %3451 = vdwg.mxu0
        %v3460 = vunpack.c.l.b16 %v2767
        %v3461 = vunpack.c.h.b16 %v2767
        %v3462 = vunpack.c.l.b16 %v2768
        %v3463 = vunpack.c.h.b16 %v2768
        %v3464 = vunpack.c.l.b16 %v2769
        %v3465 = vunpack.c.h.b16 %v2769
        %v3466 = vunpack.c.l.b16 %v2770
        %v3467 = vunpack.c.h.b16 %v2770
        %v3468 = vunpack.c.l.b16 %v2771
        %v3469 = vunpack.c.h.b16 %v2771
        %v3470 = vunpack.c.l.b16 %v2772
        %v3471 = vunpack.c.h.b16 %v2772
        %v3472 = vunpack.c.l.b16 %v2773
        %v3473 = vunpack.c.h.b16 %v2773
        %v3474 = vunpack.c.l.b16 %v2774
        %v3475 = vunpack.c.h.b16 %v2774
        %v3476 = vpack.c.b16 %v3462, %v3460
        %v3477 = vpack.c.b16 %v3463, %v3461
        %v3478 = vpack.c.b16 %v3466, %v3464
        %v3479 = vpack.c.b16 %v3467, %v3465
        %v3480 = vpack.c.b16 %v3470, %v3468
        %v3481 = vpack.c.b16 %v3471, %v3469
        %v3482 = vpack.c.b16 %v3474, %v3472
        %v3483 = vpack.c.b16 %v3475, %v3473
        %v3493 = vsel %vm2412, %v2759, 0
        %v3496 = vsel %vm2412, %v2760, 0
        %v3499 = vsel %vm2412, %v2761, 0
        %v3502 = vsel %vm2412, %v2762, 0
        %v3505 = vsel %vm2412, %v2763, 0
        %v3508 = vsel %vm2412, %v2764, 0
        %v3511 = vsel %vm2412, %v2765, 0
        %v3514 = vsel %vm2412, %v2766, 0
        %3516 = vmatpush.bf16.msra.mxu0 0
        %3517 = vmatpush.bf16.msra.mxu0 0
        %3518 = vmatpush.bf16.msra.mxu0 0
        %3519 = vmatpush.bf16.msra.mxu0 0
        %3520 = vmatpush.bf16.msra.mxu0 %v3482
        %3521 = vmatpush.bf16.msra.mxu0 %v3480
        %3522 = vmatpush.bf16.msra.mxu0 %v3478
        %3523 = vmatpush.bf16.msra.mxu0 %v3476
        %3524 = vmatmul.bf16.gmra.mxu0 %v3493
        %v3525 = vpop.f32.mrf.mxu0
        %v3526 = vadd.f32 %v3364, %v3525
        %v3527 = vpop.f32.mrf.mxu0
        %v3528 = vadd.f32 %v3366, %v3527
        %3529 = vmatmul.bf16.gmra.mxu0 %v3496
        %v3530 = vpop.f32.mrf.mxu0
        %v3531 = vadd.f32 %v3369, %v3530
        %v3532 = vpop.f32.mrf.mxu0
        %v3533 = vadd.f32 %v3371, %v3532
        %3534 = vmatmul.bf16.gmra.mxu0 %v3499
        %v3535 = vpop.f32.mrf.mxu0
        %v3536 = vadd.f32 %v3374, %v3535
        %v3537 = vpop.f32.mrf.mxu0
        %v3538 = vadd.f32 %v3376, %v3537
        %3539 = vmatmul.bf16.gmra.mxu0 %v3502
        %v3540 = vpop.f32.mrf.mxu0
        %v3541 = vadd.f32 %v3379, %v3540
        %v3542 = vpop.f32.mrf.mxu0
        %v3543 = vadd.f32 %v3381, %v3542
        %3544 = vmatmul.bf16.gmra.mxu0 %v3505
        %v3545 = vpop.f32.mrf.mxu0
        %v3546 = vadd.f32 %v3384, %v3545
        %v3547 = vpop.f32.mrf.mxu0
        %v3548 = vadd.f32 %v3386, %v3547
        %3549 = vmatmul.bf16.gmra.mxu0 %v3508
        %v3550 = vpop.f32.mrf.mxu0
        %v3551 = vadd.f32 %v3389, %v3550
        %v3552 = vpop.f32.mrf.mxu0
        %v3553 = vadd.f32 %v3391, %v3552
        %3554 = vmatmul.bf16.gmra.mxu0 %v3511
        %v3555 = vpop.f32.mrf.mxu0
        %v3556 = vadd.f32 %v3394, %v3555
        %v3557 = vpop.f32.mrf.mxu0
        %v3558 = vadd.f32 %v3396, %v3557
        %3559 = vmatmul.bf16.gmra.mxu0 %v3514
        %v3560 = vpop.f32.mrf.mxu0
        %v3561 = vadd.f32 %v3399, %v3560
        %v3562 = vpop.f32.mrf.mxu0
        %v3563 = vadd.f32 %v3401, %v3562
        %3564 = vdwg.mxu0
        %3565 = vmatpush.bf16.msra.mxu0 0
        %3566 = vmatpush.bf16.msra.mxu0 0
        %3567 = vmatpush.bf16.msra.mxu0 0
        %3568 = vmatpush.bf16.msra.mxu0 0
        %3569 = vmatpush.bf16.msra.mxu0 %v3483
        %3570 = vmatpush.bf16.msra.mxu0 %v3481
        %3571 = vmatpush.bf16.msra.mxu0 %v3479
        %3572 = vmatpush.bf16.msra.mxu0 %v3477
        %3573 = vmatmul.bf16.gmra.mxu0 %v3493
        %v3574 = vpop.f32.mrf.mxu0
        %v3575 = vadd.f32 %v3413, %v3574
        %v3576 = vpop.f32.mrf.mxu0
        %v3577 = vadd.f32 %v3415, %v3576
        %3578 = vmatmul.bf16.gmra.mxu0 %v3496
        %v3579 = vpop.f32.mrf.mxu0
        %v3580 = vadd.f32 %v3418, %v3579
        %v3581 = vpop.f32.mrf.mxu0
        %v3582 = vadd.f32 %v3420, %v3581
        %3583 = vmatmul.bf16.gmra.mxu0 %v3499
        %v3584 = vpop.f32.mrf.mxu0
        %v3585 = vadd.f32 %v3423, %v3584
        %v3586 = vpop.f32.mrf.mxu0
        %v3587 = vadd.f32 %v3425, %v3586
        %3588 = vmatmul.bf16.gmra.mxu0 %v3502
        %v3589 = vpop.f32.mrf.mxu0
        %v3590 = vadd.f32 %v3428, %v3589
        %v3591 = vpop.f32.mrf.mxu0
        %v3592 = vadd.f32 %v3430, %v3591
        %3593 = vmatmul.bf16.gmra.mxu0 %v3505
        %v3594 = vpop.f32.mrf.mxu0
        %v3595 = vadd.f32 %v3433, %v3594
        %v3596 = vpop.f32.mrf.mxu0
        %v3597 = vadd.f32 %v3435, %v3596
        %3598 = vmatmul.bf16.gmra.mxu0 %v3508
        %v3599 = vpop.f32.mrf.mxu0
        %v3600 = vadd.f32 %v3438, %v3599
        %v3601 = vpop.f32.mrf.mxu0
        %v3602 = vadd.f32 %v3440, %v3601
        %3603 = vmatmul.bf16.gmra.mxu0 %v3511
        %v3604 = vpop.f32.mrf.mxu0
        %v3605 = vadd.f32 %v3443, %v3604
        %v3606 = vpop.f32.mrf.mxu0
        %v3607 = vadd.f32 %v3445, %v3606
        %3608 = vmatmul.bf16.gmra.mxu0 %v3514
        %v3609 = vpop.f32.mrf.mxu0
        %v3610 = vadd.f32 %v3448, %v3609
        %v3611 = vpop.f32.mrf.mxu0
        %v3612 = vadd.f32 %v3450, %v3611
        %3613 = vdwg.mxu0
        %v3614 = vld [vmem:[#allocation4 + $0xc] sm:$0xf]
        %v3615 = vld [vmem:[#allocation4 + $0x24] sm:$0xf]
        %v3616 = vld [vmem:[#allocation4 + $0x3c] sm:$0xf]
        %v3617 = vld [vmem:[#allocation4 + $0x54] sm:$0xf]
        %v3618 = vld [vmem:[#allocation4 + $0x6c] sm:$0xf]
        %v3619 = vld [vmem:[#allocation4 + $0x84] sm:$0xf]
        %v3620 = vld [vmem:[#allocation4 + $0x9c] sm:$0xf]
        %v3621 = vld [vmem:[#allocation4 + $0xb4] sm:$0xf]
        %v3622 = vld [vmem:[#allocation4 + $0xcc] sm:$0xf]
        %v3623 = vld [vmem:[#allocation4 + $0xe4] sm:$0xf]
        %v3624 = vld [vmem:[#allocation4 + $0xfc] sm:$0xf]
        %v3625 = vld [vmem:[#allocation4 + $0x114] sm:$0xf]
        %v3626 = vld [vmem:[#allocation4 + $0x12c] sm:$0xf]
        %v3627 = vld [vmem:[#allocation4 + $0x144] sm:$0xf]
        %v3628 = vld [vmem:[#allocation4 + $0x15c] sm:$0xf]
        %v3629 = vld [vmem:[#allocation4 + $0x174] sm:$0xf]
        %v3630 = vld [vmem:[#allocation4 + $0x14] sm:$0xf]
        %v3631 = vld [vmem:[#allocation4 + $0x2c] sm:$0xf]
        %v3632 = vld [vmem:[#allocation4 + $0x44] sm:$0xf]
        %v3633 = vld [vmem:[#allocation4 + $0x5c] sm:$0xf]
        %v3634 = vld [vmem:[#allocation4 + $0x74] sm:$0xf]
        %v3635 = vld [vmem:[#allocation4 + $0x8c] sm:$0xf]
        %v3636 = vld [vmem:[#allocation4 + $0xa4] sm:$0xf]
        %v3637 = vld [vmem:[#allocation4 + $0xbc] sm:$0xf]
        %v3638 = vld [vmem:[#allocation4 + $0xd4] sm:$0xf]
        %v3639 = vld [vmem:[#allocation4 + $0xec] sm:$0xf]
        %v3640 = vld [vmem:[#allocation4 + $0x104] sm:$0xf]
        %v3641 = vld [vmem:[#allocation4 + $0x11c] sm:$0xf]
        %v3642 = vld [vmem:[#allocation4 + $0x134] sm:$0xf]
        %v3643 = vld [vmem:[#allocation4 + $0x14c] sm:$0xf]
        %v3644 = vld [vmem:[#allocation4 + $0x164] sm:$0xf]
        %v3645 = vld [vmem:[#allocation4 + $0x17c] sm:$0xf]
        %s3646 = scalar_lea.vmem [#allocation3], 128
        %v3647 = vld [vmem:[%s3646] sm:$0xf]
        %v3648 = vld [vmem:[%s3646 + $0x4] sm:$0xf]
        %v3649 = vld [vmem:[%s3646 + $0x8] sm:$0xf]
        %v3650 = vld [vmem:[%s3646 + $0xc] sm:$0xf]
        %v3651 = vld [vmem:[%s3646 + $0x10] sm:$0xf]
        %v3652 = vld [vmem:[%s3646 + $0x14] sm:$0xf]
        %v3653 = vld [vmem:[%s3646 + $0x18] sm:$0xf]
        %v3654 = vld [vmem:[%s3646 + $0x1c] sm:$0xf]
        %v3655 = vld [vmem:[%s3646 + $0x20] sm:$0xf]
        %v3656 = vld [vmem:[%s3646 + $0x24] sm:$0xf]
        %v3657 = vld [vmem:[%s3646 + $0x28] sm:$0xf]
        %v3658 = vld [vmem:[%s3646 + $0x2c] sm:$0xf]
        %v3659 = vld [vmem:[%s3646 + $0x30] sm:$0xf]
        %v3660 = vld [vmem:[%s3646 + $0x34] sm:$0xf]
        %v3661 = vld [vmem:[%s3646 + $0x38] sm:$0xf]
        %v3662 = vld [vmem:[%s3646 + $0x3c] sm:$0xf]
        %v3663 = vunpack.c.l.bf16 %v3647
        %v3664 = vunpack.c.l.bf16 %v3648
        %v3665 = vunpack.c.l.bf16 %v3649
        %v3666 = vunpack.c.l.bf16 %v3650
        %v3667 = vunpack.c.l.bf16 %v3651
        %v3668 = vunpack.c.l.bf16 %v3652
        %v3669 = vunpack.c.l.bf16 %v3653
        %v3670 = vunpack.c.l.bf16 %v3654
        %v3671 = vunpack.c.l.bf16 %v3655
        %v3672 = vunpack.c.l.bf16 %v3656
        %v3673 = vunpack.c.l.bf16 %v3657
        %v3674 = vunpack.c.l.bf16 %v3658
        %v3675 = vunpack.c.l.bf16 %v3659
        %v3676 = vunpack.c.l.bf16 %v3660
        %v3677 = vunpack.c.l.bf16 %v3661
        %v3678 = vunpack.c.l.bf16 %v3662
        %v3679 = vunpack.c.h.b16 %v2252
        %v3680 = vunpack.c.h.b16 %v2253
        %v3681 = vunpack.c.h.b16 %v2254
        %v3682 = vunpack.c.h.b16 %v2255
        %v3683 = vunpack.c.h.b16 %v2256
        %v3684 = vunpack.c.h.b16 %v2257
        %v3685 = vunpack.c.h.b16 %v2258
        %v3686 = vunpack.c.h.b16 %v2259
        %v3687 = vunpack.c.h.b16 %v2260
        %v3688 = vunpack.c.h.b16 %v2261
        %v3689 = vunpack.c.h.b16 %v2262
        %v3690 = vunpack.c.h.b16 %v2263
        %v3691 = vunpack.c.h.b16 %v2264
        %v3692 = vunpack.c.h.b16 %v2265
        %v3693 = vunpack.c.h.b16 %v2266
        %v3694 = vunpack.c.h.b16 %v2267
        %v3695 = vpack.c.b16 %v3680, %v3679
        %v3696 = vpack.c.b16 %v3682, %v3681
        %v3697 = vpack.c.b16 %v3684, %v3683
        %v3698 = vpack.c.b16 %v3686, %v3685
        %v3699 = vpack.c.b16 %v3688, %v3687
        %v3700 = vpack.c.b16 %v3690, %v3689
        %v3701 = vpack.c.b16 %v3692, %v3691
        %v3702 = vpack.c.b16 %v3694, %v3693
        %v3719 = vunpack.c.l.b16 %v3614
        %v3720 = vunpack.c.l.b16 %v3615
        %v3721 = vunpack.c.l.b16 %v3616
        %v3722 = vunpack.c.l.b16 %v3617
        %v3723 = vunpack.c.l.b16 %v3618
        %v3724 = vunpack.c.l.b16 %v3619
        %v3725 = vunpack.c.l.b16 %v3620
        %v3726 = vunpack.c.l.b16 %v3621
        %v3727 = vunpack.c.l.b16 %v3622
        %v3728 = vunpack.c.l.b16 %v3623
        %v3729 = vunpack.c.l.b16 %v3624
        %v3730 = vunpack.c.l.b16 %v3625
        %v3731 = vunpack.c.l.b16 %v3626
        %v3732 = vunpack.c.l.b16 %v3627
        %v3733 = vunpack.c.l.b16 %v3628
        %v3734 = vunpack.c.l.b16 %v3629
        %v3735 = vpack.c.b16 %v3720, %v3719
        %v3736 = vpack.c.b16 %v3722, %v3721
        %v3737 = vpack.c.b16 %v3724, %v3723
        %v3738 = vpack.c.b16 %v3726, %v3725
        %v3739 = vpack.c.b16 %v3728, %v3727
        %v3740 = vpack.c.b16 %v3730, %v3729
        %v3741 = vpack.c.b16 %v3732, %v3731
        %v3742 = vpack.c.b16 %v3734, %v3733
        %v3744 = vsel %vm2412, %v3695, 0
        %v3747 = vsel %vm2412, %v3696, 0
        %v3750 = vsel %vm2412, %v3697, 0
        %v3753 = vsel %vm2412, %v3698, 0
        %v3756 = vsel %vm2412, %v3699, 0
        %v3759 = vsel %vm2412, %v3700, 0
        %v3762 = vsel %vm2412, %v3701, 0
        %v3765 = vsel %vm2412, %v3702, 0
        %v3768 = vsel %vm2412, %v3735, 0
        %v3771 = vsel %vm2412, %v3736, 0
        %v3774 = vsel %vm2412, %v3737, 0
        %v3777 = vsel %vm2412, %v3738, 0
        %v3780 = vsel %vm2412, %v3739, 0
        %v3783 = vsel %vm2412, %v3740, 0
        %v3786 = vsel %vm2412, %v3741, 0
        %v3789 = vsel %vm2412, %v3742, 0
        %3791 = vmatpush.bf16.xpose.msra.mxu0 %v3789
        %3792 = vmatpush.bf16.xpose.msra.mxu0 %v3786
        %3793 = vmatpush.bf16.xpose.msra.mxu0 %v3783
        %3794 = vmatpush.bf16.xpose.msra.mxu0 %v3780
        %3795 = vmatpush.bf16.xpose.msra.mxu0 %v3777
        %3796 = vmatpush.bf16.xpose.msra.mxu0 %v3774
        %3797 = vmatpush.bf16.xpose.msra.mxu0 %v3771
        %3798 = vmatpush.bf16.xpose.msra.mxu0 %v3768
        %3799 = vmatmul.bf16.gmra.mxu0 %v3744
        %v3800 = vpop.f32.mrf.mxu0
        %v3801 = vadd.f32 %v3663, %v3800
        %v3802 = vpop.f32.mrf.mxu0
        %v3803 = vadd.f32 %v3664, %v3802
        %3804 = vmatmul.bf16.gmra.mxu0 %v3747
        %v3805 = vpop.f32.mrf.mxu0
        %v3806 = vadd.f32 %v3665, %v3805
        %v3807 = vpop.f32.mrf.mxu0
        %v3808 = vadd.f32 %v3666, %v3807
        %3809 = vmatmul.bf16.gmra.mxu0 %v3750
        %v3810 = vpop.f32.mrf.mxu0
        %v3811 = vadd.f32 %v3667, %v3810
        %v3812 = vpop.f32.mrf.mxu0
        %v3813 = vadd.f32 %v3668, %v3812
        %3814 = vmatmul.bf16.gmra.mxu0 %v3753
        %v3815 = vpop.f32.mrf.mxu0
        %v3816 = vadd.f32 %v3669, %v3815
        %v3817 = vpop.f32.mrf.mxu0
        %v3818 = vadd.f32 %v3670, %v3817
        %3819 = vmatmul.bf16.gmra.mxu0 %v3756
        %v3820 = vpop.f32.mrf.mxu0
        %v3821 = vadd.f32 %v3671, %v3820
        %v3822 = vpop.f32.mrf.mxu0
        %v3823 = vadd.f32 %v3672, %v3822
        %3824 = vmatmul.bf16.gmra.mxu0 %v3759
        %v3825 = vpop.f32.mrf.mxu0
        %v3826 = vadd.f32 %v3673, %v3825
        %v3827 = vpop.f32.mrf.mxu0
        %v3828 = vadd.f32 %v3674, %v3827
        %3829 = vmatmul.bf16.gmra.mxu0 %v3762
        %v3830 = vpop.f32.mrf.mxu0
        %v3831 = vadd.f32 %v3675, %v3830
        %v3832 = vpop.f32.mrf.mxu0
        %v3833 = vadd.f32 %v3676, %v3832
        %3834 = vmatmul.bf16.gmra.mxu0 %v3765
        %v3835 = vpop.f32.mrf.mxu0
        %v3836 = vadd.f32 %v3677, %v3835
        %v3837 = vpop.f32.mrf.mxu0
        %v3838 = vadd.f32 %v3678, %v3837
        %3839 = vdwg.mxu0
        %3840 = vmax.xlane.f32.xlu0 %v3801
        %v3841 = vpop.xlane.xlu0 %3840
        %3842 = vmax.xlane.f32.xlu0 %v3803
        %v3843 = vpop.xlane.xlu0 %3842
        %3844 = vmax.xlane.f32.xlu0 %v3806
        %v3845 = vpop.xlane.xlu0 %3844
        %3846 = vmax.xlane.f32.xlu0 %v3808
        %v3847 = vpop.xlane.xlu0 %3846
        %3848 = vmax.xlane.f32.xlu0 %v3811
        %v3849 = vpop.xlane.xlu0 %3848
        %3850 = vmax.xlane.f32.xlu0 %v3813
        %v3851 = vpop.xlane.xlu0 %3850
        %3852 = vmax.xlane.f32.xlu0 %v3816
        %v3853 = vpop.xlane.xlu0 %3852
        %3854 = vmax.xlane.f32.xlu0 %v3818
        %v3855 = vpop.xlane.xlu0 %3854
        %3856 = vmax.xlane.f32.xlu0 %v3821
        %v3857 = vpop.xlane.xlu0 %3856
        %3858 = vmax.xlane.f32.xlu0 %v3823
        %v3859 = vpop.xlane.xlu0 %3858
        %3860 = vmax.xlane.f32.xlu0 %v3826
        %v3861 = vpop.xlane.xlu0 %3860
        %3862 = vmax.xlane.f32.xlu0 %v3828
        %v3863 = vpop.xlane.xlu0 %3862
        %3864 = vmax.xlane.f32.xlu0 %v3831
        %v3865 = vpop.xlane.xlu0 %3864
        %3866 = vmax.xlane.f32.xlu0 %v3833
        %v3867 = vpop.xlane.xlu0 %3866
        %3868 = vmax.xlane.f32.xlu0 %v3836
        %v3869 = vpop.xlane.xlu0 %3868
        %3870 = vmax.xlane.f32.xlu0 %v3838
        %v3871 = vpop.xlane.xlu0 %3870
        %v3872 = vsub.f32 %v3801, %v3841
        %v3873 = vsub.f32 %v3803, %v3843
        %v3874 = vsub.f32 %v3806, %v3845
        %v3875 = vsub.f32 %v3808, %v3847
        %v3876 = vsub.f32 %v3811, %v3849
        %v3877 = vsub.f32 %v3813, %v3851
        %v3878 = vsub.f32 %v3816, %v3853
        %v3879 = vsub.f32 %v3818, %v3855
        %v3880 = vsub.f32 %v3821, %v3857
        %v3881 = vsub.f32 %v3823, %v3859
        %v3882 = vsub.f32 %v3826, %v3861
        %v3883 = vsub.f32 %v3828, %v3863
        %v3884 = vsub.f32 %v3831, %v3865
        %v3885 = vsub.f32 %v3833, %v3867
        %v3886 = vsub.f32 %v3836, %v3869
        %v3887 = vsub.f32 %v3838, %v3871
        %v3888 = vmul.f32 %v3872, 1.442695
        %v3889 = vpow.pop %v3888
        %v3890 = vmul.f32 %v3873, 1.442695
        %v3891 = vpow.pop %v3890
        %v3892 = vmul.f32 %v3874, 1.442695
        %v3893 = vpow.pop %v3892
        %v3894 = vmul.f32 %v3875, 1.442695
        %v3895 = vpow.pop %v3894
        %v3896 = vmul.f32 %v3876, 1.442695
        %v3897 = vpow.pop %v3896
        %v3898 = vmul.f32 %v3877, 1.442695
        %v3899 = vpow.pop %v3898
        %v3900 = vmul.f32 %v3878, 1.442695
        %v3901 = vpow.pop %v3900
        %v3902 = vmul.f32 %v3879, 1.442695
        %v3903 = vpow.pop %v3902
        %v3904 = vmul.f32 %v3880, 1.442695
        %v3905 = vpow.pop %v3904
        %v3906 = vmul.f32 %v3881, 1.442695
        %v3907 = vpow.pop %v3906
        %v3908 = vmul.f32 %v3882, 1.442695
        %v3909 = vpow.pop %v3908
        %v3910 = vmul.f32 %v3883, 1.442695
        %v3911 = vpow.pop %v3910
        %v3912 = vmul.f32 %v3884, 1.442695
        %v3913 = vpow.pop %v3912
        %v3914 = vmul.f32 %v3885, 1.442695
        %v3915 = vpow.pop %v3914
        %v3916 = vmul.f32 %v3886, 1.442695
        %v3917 = vpow.pop %v3916
        %v3918 = vmul.f32 %v3887, 1.442695
        %v3919 = vpow.pop %v3918
        %3920 = vadd.xlane.f32.xlu0 %v3889
        %v3921 = vpop.xlane.xlu0 %3920
        %3922 = vadd.xlane.f32.xlu0 %v3891
        %v3923 = vpop.xlane.xlu0 %3922
        %3924 = vadd.xlane.f32.xlu0 %v3893
        %v3925 = vpop.xlane.xlu0 %3924
        %3926 = vadd.xlane.f32.xlu0 %v3895
        %v3927 = vpop.xlane.xlu0 %3926
        %3928 = vadd.xlane.f32.xlu0 %v3897
        %v3929 = vpop.xlane.xlu0 %3928
        %3930 = vadd.xlane.f32.xlu0 %v3899
        %v3931 = vpop.xlane.xlu0 %3930
        %3932 = vadd.xlane.f32.xlu0 %v3901
        %v3933 = vpop.xlane.xlu0 %3932
        %3934 = vadd.xlane.f32.xlu0 %v3903
        %v3935 = vpop.xlane.xlu0 %3934
        %3936 = vadd.xlane.f32.xlu0 %v3905
        %v3937 = vpop.xlane.xlu0 %3936
        %3938 = vadd.xlane.f32.xlu0 %v3907
        %v3939 = vpop.xlane.xlu0 %3938
        %3940 = vadd.xlane.f32.xlu0 %v3909
        %v3941 = vpop.xlane.xlu0 %3940
        %3942 = vadd.xlane.f32.xlu0 %v3911
        %v3943 = vpop.xlane.xlu0 %3942
        %3944 = vadd.xlane.f32.xlu0 %v3913
        %v3945 = vpop.xlane.xlu0 %3944
        %3946 = vadd.xlane.f32.xlu0 %v3915
        %v3947 = vpop.xlane.xlu0 %3946
        %3948 = vadd.xlane.f32.xlu0 %v3917
        %v3949 = vpop.xlane.xlu0 %3948
        %3950 = vadd.xlane.f32.xlu0 %v3919
        %v3951 = vpop.xlane.xlu0 %3950
        %v3952 = vrcp.pop %v3921
        %v3953 = vrcp.pop %v3923
        %v3954 = vrcp.pop %v3925
        %v3955 = vrcp.pop %v3927
        %v3956 = vrcp.pop %v3929
        %v3957 = vrcp.pop %v3931
        %v3958 = vrcp.pop %v3933
        %v3959 = vrcp.pop %v3935
        %v3960 = vrcp.pop %v3937
        %v3961 = vrcp.pop %v3939
        %v3962 = vrcp.pop %v3941
        %v3963 = vrcp.pop %v3943
        %v3964 = vrcp.pop %v3945
        %v3965 = vrcp.pop %v3947
        %v3966 = vrcp.pop %v3949
        %v3967 = vrcp.pop %v3951
        %v3968 = vpack.c.bf16 %v3891, %v3889
        %v3969 = vpack.c.bf16 %v3895, %v3893
        %v3970 = vpack.c.bf16 %v3899, %v3897
        %v3971 = vpack.c.bf16 %v3903, %v3901
        %v3972 = vpack.c.bf16 %v3907, %v3905
        %v3973 = vpack.c.bf16 %v3911, %v3909
        %v3974 = vpack.c.bf16 %v3915, %v3913
        %v3975 = vpack.c.bf16 %v3919, %v3917
        %v3992 = vunpack.c.l.b16 %v3630
        %v3993 = vunpack.c.l.b16 %v3631
        %v3994 = vunpack.c.l.b16 %v3632
        %v3995 = vunpack.c.l.b16 %v3633
        %v3996 = vunpack.c.l.b16 %v3634
        %v3997 = vunpack.c.l.b16 %v3635
        %v3998 = vunpack.c.l.b16 %v3636
        %v3999 = vunpack.c.l.b16 %v3637
        %v4000 = vunpack.c.l.b16 %v3638
        %v4001 = vunpack.c.l.b16 %v3639
        %v4002 = vunpack.c.l.b16 %v3640
        %v4003 = vunpack.c.l.b16 %v3641
        %v4004 = vunpack.c.l.b16 %v3642
        %v4005 = vunpack.c.l.b16 %v3643
        %v4006 = vunpack.c.l.b16 %v3644
        %v4007 = vunpack.c.l.b16 %v3645
        %v4008 = vpack.c.b16 %v3993, %v3992
        %v4009 = vpack.c.b16 %v3995, %v3994
        %v4010 = vpack.c.b16 %v3997, %v3996
        %v4011 = vpack.c.b16 %v3999, %v3998
        %v4012 = vpack.c.b16 %v4001, %v4000
        %v4013 = vpack.c.b16 %v4003, %v4002
        %v4014 = vpack.c.b16 %v4005, %v4004
        %v4015 = vpack.c.b16 %v4007, %v4006
        %4024 = vmatpush.bf16.msra.mxu0 %v4015
        %4025 = vmatpush.bf16.msra.mxu0 %v4014
        %4026 = vmatpush.bf16.msra.mxu0 %v4013
        %4027 = vmatpush.bf16.msra.mxu0 %v4012
        %4028 = vmatpush.bf16.msra.mxu0 %v4011
        %4029 = vmatpush.bf16.msra.mxu0 %v4010
        %4030 = vmatpush.bf16.msra.mxu0 %v4009
        %4031 = vmatpush.bf16.msra.mxu0 %v4008
        %4032 = vmatmul.bf16.gmra.mxu0 %v3968
        %v4033 = vpop.f32.mrf.mxu0
        %v4034 = vadd.f32 0.0, %v4033
        %v4035 = vpop.f32.mrf.mxu0
        %v4036 = vadd.f32 0.0, %v4035
        %4037 = vmatmul.bf16.gmra.mxu0 %v3969
        %v4038 = vpop.f32.mrf.mxu0
        %v4039 = vadd.f32 0.0, %v4038
        %v4040 = vpop.f32.mrf.mxu0
        %v4041 = vadd.f32 0.0, %v4040
        %4042 = vmatmul.bf16.gmra.mxu0 %v3970
        %v4043 = vpop.f32.mrf.mxu0
        %v4044 = vadd.f32 0.0, %v4043
        %v4045 = vpop.f32.mrf.mxu0
        %v4046 = vadd.f32 0.0, %v4045
        %4047 = vmatmul.bf16.gmra.mxu0 %v3971
        %v4048 = vpop.f32.mrf.mxu0
        %v4049 = vadd.f32 0.0, %v4048
        %v4050 = vpop.f32.mrf.mxu0
        %v4051 = vadd.f32 0.0, %v4050
        %4052 = vmatmul.bf16.gmra.mxu0 %v3972
        %v4053 = vpop.f32.mrf.mxu0
        %v4054 = vadd.f32 0.0, %v4053
        %v4055 = vpop.f32.mrf.mxu0
        %v4056 = vadd.f32 0.0, %v4055
        %4057 = vmatmul.bf16.gmra.mxu0 %v3973
        %v4058 = vpop.f32.mrf.mxu0
        %v4059 = vadd.f32 0.0, %v4058
        %v4060 = vpop.f32.mrf.mxu0
        %v4061 = vadd.f32 0.0, %v4060
        %4062 = vmatmul.bf16.gmra.mxu0 %v3974
        %v4063 = vpop.f32.mrf.mxu0
        %v4064 = vadd.f32 0.0, %v4063
        %v4065 = vpop.f32.mrf.mxu0
        %v4066 = vadd.f32 0.0, %v4065
        %4067 = vmatmul.bf16.gmra.mxu0 %v3975
        %v4068 = vpop.f32.mrf.mxu0
        %v4069 = vadd.f32 0.0, %v4068
        %v4070 = vpop.f32.mrf.mxu0
        %v4071 = vadd.f32 0.0, %v4070
        %4072 = vdwg.mxu0
        %v4073 = vmul.f32 %v4034, %v3952
        %v4074 = vmul.f32 %v4036, %v3953
        %v4075 = vmul.f32 %v4039, %v3954
        %v4076 = vmul.f32 %v4041, %v3955
        %v4077 = vmul.f32 %v4044, %v3956
        %v4078 = vmul.f32 %v4046, %v3957
        %v4079 = vmul.f32 %v4049, %v3958
        %v4080 = vmul.f32 %v4051, %v3959
        %v4081 = vmul.f32 %v4054, %v3960
        %v4082 = vmul.f32 %v4056, %v3961
        %v4083 = vmul.f32 %v4059, %v3962
        %v4084 = vmul.f32 %v4061, %v3963
        %v4085 = vmul.f32 %v4064, %v3964
        %v4086 = vmul.f32 %v4066, %v3965
        %v4087 = vmul.f32 %v4069, %v3966
        %v4088 = vmul.f32 %v4071, %v3967
        %v4089 = vpack.c.bf16 %v4074, %v4073
        %v4090 = vpack.c.bf16 %v4076, %v4075
        %v4091 = vpack.c.bf16 %v4078, %v4077
        %v4092 = vpack.c.bf16 %v4080, %v4079
        %v4093 = vpack.c.bf16 %v4082, %v4081
        %v4094 = vpack.c.bf16 %v4084, %v4083
        %v4095 = vpack.c.bf16 %v4086, %v4085
        %v4096 = vpack.c.bf16 %v4088, %v4087
        %v4097 = vld [vmem:[%s370 + $0x80] sm:$0xff]
        %v4098 = vld [vmem:[%s370 + $0x88] sm:$0xff]
        %v4099 = vld [vmem:[%s370 + $0x90] sm:$0xff]
        %v4100 = vld [vmem:[%s370 + $0x98] sm:$0xff]
        %v4101 = vld [vmem:[%s370 + $0xa0] sm:$0xff]
        %v4102 = vld [vmem:[%s370 + $0xa8] sm:$0xff]
        %v4103 = vld [vmem:[%s370 + $0xb0] sm:$0xff]
        %v4104 = vld [vmem:[%s370 + $0xb8] sm:$0xff]
        %v4113 = vunpack.c.l.b16 %v4097
        %v4114 = vunpack.c.h.b16 %v4097
        %v4115 = vunpack.c.l.b16 %v4098
        %v4116 = vunpack.c.h.b16 %v4098
        %v4117 = vunpack.c.l.b16 %v4099
        %v4118 = vunpack.c.h.b16 %v4099
        %v4119 = vunpack.c.l.b16 %v4100
        %v4120 = vunpack.c.h.b16 %v4100
        %v4121 = vunpack.c.l.b16 %v4101
        %v4122 = vunpack.c.h.b16 %v4101
        %v4123 = vunpack.c.l.b16 %v4102
        %v4124 = vunpack.c.h.b16 %v4102
        %v4125 = vunpack.c.l.b16 %v4103
        %v4126 = vunpack.c.h.b16 %v4103
        %v4127 = vunpack.c.l.b16 %v4104
        %v4128 = vunpack.c.h.b16 %v4104
        %v4129 = vpack.c.b16 %v4115, %v4113
        %v4130 = vpack.c.b16 %v4116, %v4114
        %v4131 = vpack.c.b16 %v4119, %v4117
        %v4132 = vpack.c.b16 %v4120, %v4118
        %v4133 = vpack.c.b16 %v4123, %v4121
        %v4134 = vpack.c.b16 %v4124, %v4122
        %v4135 = vpack.c.b16 %v4127, %v4125
        %v4136 = vpack.c.b16 %v4128, %v4126
        %v4146 = vsel %vm2412, %v4089, 0
        %v4149 = vsel %vm2412, %v4090, 0
        %v4152 = vsel %vm2412, %v4091, 0
        %v4155 = vsel %vm2412, %v4092, 0
        %v4158 = vsel %vm2412, %v4093, 0
        %v4161 = vsel %vm2412, %v4094, 0
        %v4164 = vsel %vm2412, %v4095, 0
        %v4167 = vsel %vm2412, %v4096, 0
        %4169 = vmatpush.bf16.msra.mxu0 0
        %4170 = vmatpush.bf16.msra.mxu0 0
        %4171 = vmatpush.bf16.msra.mxu0 0
        %4172 = vmatpush.bf16.msra.mxu0 0
        %4173 = vmatpush.bf16.msra.mxu0 %v4135
        %4174 = vmatpush.bf16.msra.mxu0 %v4133
        %4175 = vmatpush.bf16.msra.mxu0 %v4131
        %4176 = vmatpush.bf16.msra.mxu0 %v4129
        %4177 = vmatmul.bf16.gmra.mxu0 %v4146
        %v4178 = vpop.f32.mrf.mxu0
        %v4179 = vadd.f32 0.0, %v4178
        %v4180 = vpop.f32.mrf.mxu0
        %v4181 = vadd.f32 0.0, %v4180
        %4182 = vmatmul.bf16.gmra.mxu0 %v4149
        %v4183 = vpop.f32.mrf.mxu0
        %v4184 = vadd.f32 0.0, %v4183
        %v4185 = vpop.f32.mrf.mxu0
        %v4186 = vadd.f32 0.0, %v4185
        %4187 = vmatmul.bf16.gmra.mxu0 %v4152
        %v4188 = vpop.f32.mrf.mxu0
        %v4189 = vadd.f32 0.0, %v4188
        %v4190 = vpop.f32.mrf.mxu0
        %v4191 = vadd.f32 0.0, %v4190
        %4192 = vmatmul.bf16.gmra.mxu0 %v4155
        %v4193 = vpop.f32.mrf.mxu0
        %v4194 = vadd.f32 0.0, %v4193
        %v4195 = vpop.f32.mrf.mxu0
        %v4196 = vadd.f32 0.0, %v4195
        %4197 = vmatmul.bf16.gmra.mxu0 %v4158
        %v4198 = vpop.f32.mrf.mxu0
        %v4199 = vadd.f32 0.0, %v4198
        %v4200 = vpop.f32.mrf.mxu0
        %v4201 = vadd.f32 0.0, %v4200
        %4202 = vmatmul.bf16.gmra.mxu0 %v4161
        %v4203 = vpop.f32.mrf.mxu0
        %v4204 = vadd.f32 0.0, %v4203
        %v4205 = vpop.f32.mrf.mxu0
        %v4206 = vadd.f32 0.0, %v4205
        %4207 = vmatmul.bf16.gmra.mxu0 %v4164
        %v4208 = vpop.f32.mrf.mxu0
        %v4209 = vadd.f32 0.0, %v4208
        %v4210 = vpop.f32.mrf.mxu0
        %v4211 = vadd.f32 0.0, %v4210
        %4212 = vmatmul.bf16.gmra.mxu0 %v4167
        %v4213 = vpop.f32.mrf.mxu0
        %v4214 = vadd.f32 0.0, %v4213
        %v4215 = vpop.f32.mrf.mxu0
        %v4216 = vadd.f32 0.0, %v4215
        %4217 = vdwg.mxu0
        %4218 = vmatpush.bf16.msra.mxu0 0
        %4219 = vmatpush.bf16.msra.mxu0 0
        %4220 = vmatpush.bf16.msra.mxu0 0
        %4221 = vmatpush.bf16.msra.mxu0 0
        %4222 = vmatpush.bf16.msra.mxu0 %v4136
        %4223 = vmatpush.bf16.msra.mxu0 %v4134
        %4224 = vmatpush.bf16.msra.mxu0 %v4132
        %4225 = vmatpush.bf16.msra.mxu0 %v4130
        %4226 = vmatmul.bf16.gmra.mxu0 %v4146
        %v4227 = vpop.f32.mrf.mxu0
        %v4228 = vadd.f32 0.0, %v4227
        %v4229 = vpop.f32.mrf.mxu0
        %v4230 = vadd.f32 0.0, %v4229
        %4231 = vmatmul.bf16.gmra.mxu0 %v4149
        %v4232 = vpop.f32.mrf.mxu0
        %v4233 = vadd.f32 0.0, %v4232
        %v4234 = vpop.f32.mrf.mxu0
        %v4235 = vadd.f32 0.0, %v4234
        %4236 = vmatmul.bf16.gmra.mxu0 %v4152
        %v4237 = vpop.f32.mrf.mxu0
        %v4238 = vadd.f32 0.0, %v4237
        %v4239 = vpop.f32.mrf.mxu0
        %v4240 = vadd.f32 0.0, %v4239
        %4241 = vmatmul.bf16.gmra.mxu0 %v4155
        %v4242 = vpop.f32.mrf.mxu0
        %v4243 = vadd.f32 0.0, %v4242
        %v4244 = vpop.f32.mrf.mxu0
        %v4245 = vadd.f32 0.0, %v4244
        %4246 = vmatmul.bf16.gmra.mxu0 %v4158
        %v4247 = vpop.f32.mrf.mxu0
        %v4248 = vadd.f32 0.0, %v4247
        %v4249 = vpop.f32.mrf.mxu0
        %v4250 = vadd.f32 0.0, %v4249
        %4251 = vmatmul.bf16.gmra.mxu0 %v4161
        %v4252 = vpop.f32.mrf.mxu0
        %v4253 = vadd.f32 0.0, %v4252
        %v4254 = vpop.f32.mrf.mxu0
        %v4255 = vadd.f32 0.0, %v4254
        %4256 = vmatmul.bf16.gmra.mxu0 %v4164
        %v4257 = vpop.f32.mrf.mxu0
        %v4258 = vadd.f32 0.0, %v4257
        %v4259 = vpop.f32.mrf.mxu0
        %v4260 = vadd.f32 0.0, %v4259
        %4261 = vmatmul.bf16.gmra.mxu0 %v4167
        %v4262 = vpop.f32.mrf.mxu0
        %v4263 = vadd.f32 0.0, %v4262
        %v4264 = vpop.f32.mrf.mxu0
        %v4265 = vadd.f32 0.0, %v4264
        %4266 = vdwg.mxu0
        %v4267 = vadd.f32 %v3526, %v4179
        %v4268 = vadd.f32 %v3575, %v4228
        %v4269 = vadd.f32 %v3528, %v4181
        %v4270 = vadd.f32 %v3577, %v4230
        %v4271 = vadd.f32 %v3531, %v4184
        %v4272 = vadd.f32 %v3580, %v4233
        %v4273 = vadd.f32 %v3533, %v4186
        %v4274 = vadd.f32 %v3582, %v4235
        %v4275 = vadd.f32 %v3536, %v4189
        %v4276 = vadd.f32 %v3585, %v4238
        %v4277 = vadd.f32 %v3538, %v4191
        %v4278 = vadd.f32 %v3587, %v4240
        %v4279 = vadd.f32 %v3541, %v4194
        %v4280 = vadd.f32 %v3590, %v4243
        %v4281 = vadd.f32 %v3543, %v4196
        %v4282 = vadd.f32 %v3592, %v4245
        %v4283 = vadd.f32 %v3546, %v4199
        %v4284 = vadd.f32 %v3595, %v4248
        %v4285 = vadd.f32 %v3548, %v4201
        %v4286 = vadd.f32 %v3597, %v4250
        %v4287 = vadd.f32 %v3551, %v4204
        %v4288 = vadd.f32 %v3600, %v4253
        %v4289 = vadd.f32 %v3553, %v4206
        %v4290 = vadd.f32 %v3602, %v4255
        %v4291 = vadd.f32 %v3556, %v4209
        %v4292 = vadd.f32 %v3605, %v4258
        %v4293 = vadd.f32 %v3558, %v4211
        %v4294 = vadd.f32 %v3607, %v4260
        %v4295 = vadd.f32 %v3561, %v4214
        %v4296 = vadd.f32 %v3610, %v4263
        %v4297 = vadd.f32 %v3563, %v4216
        %v4298 = vadd.f32 %v3612, %v4265
        %v4299 = vld [vmem:[#allocation4 + $0xc] sm:$0xf]
        %v4300 = vld [vmem:[#allocation4 + $0x24] sm:$0xf]
        %v4301 = vld [vmem:[#allocation4 + $0x3c] sm:$0xf]
        %v4302 = vld [vmem:[#allocation4 + $0x54] sm:$0xf]
        %v4303 = vld [vmem:[#allocation4 + $0x6c] sm:$0xf]
        %v4304 = vld [vmem:[#allocation4 + $0x84] sm:$0xf]
        %v4305 = vld [vmem:[#allocation4 + $0x9c] sm:$0xf]
        %v4306 = vld [vmem:[#allocation4 + $0xb4] sm:$0xf]
        %v4307 = vld [vmem:[#allocation4 + $0xcc] sm:$0xf]
        %v4308 = vld [vmem:[#allocation4 + $0xe4] sm:$0xf]
        %v4309 = vld [vmem:[#allocation4 + $0xfc] sm:$0xf]
        %v4310 = vld [vmem:[#allocation4 + $0x114] sm:$0xf]
        %v4311 = vld [vmem:[#allocation4 + $0x12c] sm:$0xf]
        %v4312 = vld [vmem:[#allocation4 + $0x144] sm:$0xf]
        %v4313 = vld [vmem:[#allocation4 + $0x15c] sm:$0xf]
        %v4314 = vld [vmem:[#allocation4 + $0x174] sm:$0xf]
        %v4315 = vld [vmem:[#allocation4 + $0x14] sm:$0xf]
        %v4316 = vld [vmem:[#allocation4 + $0x2c] sm:$0xf]
        %v4317 = vld [vmem:[#allocation4 + $0x44] sm:$0xf]
        %v4318 = vld [vmem:[#allocation4 + $0x5c] sm:$0xf]
        %v4319 = vld [vmem:[#allocation4 + $0x74] sm:$0xf]
        %v4320 = vld [vmem:[#allocation4 + $0x8c] sm:$0xf]
        %v4321 = vld [vmem:[#allocation4 + $0xa4] sm:$0xf]
        %v4322 = vld [vmem:[#allocation4 + $0xbc] sm:$0xf]
        %v4323 = vld [vmem:[#allocation4 + $0xd4] sm:$0xf]
        %v4324 = vld [vmem:[#allocation4 + $0xec] sm:$0xf]
        %v4325 = vld [vmem:[#allocation4 + $0x104] sm:$0xf]
        %v4326 = vld [vmem:[#allocation4 + $0x11c] sm:$0xf]
        %v4327 = vld [vmem:[#allocation4 + $0x134] sm:$0xf]
        %v4328 = vld [vmem:[#allocation4 + $0x14c] sm:$0xf]
        %v4329 = vld [vmem:[#allocation4 + $0x164] sm:$0xf]
        %v4330 = vld [vmem:[#allocation4 + $0x17c] sm:$0xf]
        %s4331 = scalar_lea.vmem [#allocation3], 192
        %v4332 = vld [vmem:[%s4331] sm:$0xf]
        %v4333 = vld [vmem:[%s4331 + $0x4] sm:$0xf]
        %v4334 = vld [vmem:[%s4331 + $0x8] sm:$0xf]
        %v4335 = vld [vmem:[%s4331 + $0xc] sm:$0xf]
        %v4336 = vld [vmem:[%s4331 + $0x10] sm:$0xf]
        %v4337 = vld [vmem:[%s4331 + $0x14] sm:$0xf]
        %v4338 = vld [vmem:[%s4331 + $0x18] sm:$0xf]
        %v4339 = vld [vmem:[%s4331 + $0x1c] sm:$0xf]
        %v4340 = vld [vmem:[%s4331 + $0x20] sm:$0xf]
        %v4341 = vld [vmem:[%s4331 + $0x24] sm:$0xf]
        %v4342 = vld [vmem:[%s4331 + $0x28] sm:$0xf]
        %v4343 = vld [vmem:[%s4331 + $0x2c] sm:$0xf]
        %v4344 = vld [vmem:[%s4331 + $0x30] sm:$0xf]
        %v4345 = vld [vmem:[%s4331 + $0x34] sm:$0xf]
        %v4346 = vld [vmem:[%s4331 + $0x38] sm:$0xf]
        %v4347 = vld [vmem:[%s4331 + $0x3c] sm:$0xf]
        %v4348 = vunpack.c.l.bf16 %v4332
        %v4349 = vunpack.c.l.bf16 %v4333
        %v4350 = vunpack.c.l.bf16 %v4334
        %v4351 = vunpack.c.l.bf16 %v4335
        %v4352 = vunpack.c.l.bf16 %v4336
        %v4353 = vunpack.c.l.bf16 %v4337
        %v4354 = vunpack.c.l.bf16 %v4338
        %v4355 = vunpack.c.l.bf16 %v4339
        %v4356 = vunpack.c.l.bf16 %v4340
        %v4357 = vunpack.c.l.bf16 %v4341
        %v4358 = vunpack.c.l.bf16 %v4342
        %v4359 = vunpack.c.l.bf16 %v4343
        %v4360 = vunpack.c.l.bf16 %v4344
        %v4361 = vunpack.c.l.bf16 %v4345
        %v4362 = vunpack.c.l.bf16 %v4346
        %v4363 = vunpack.c.l.bf16 %v4347
        %4364 = vrot.lane.b32.xlu0 %v3695, 64
        %v4365 = vpop.permute.xlu0 %4364
        %4366 = vrot.lane.b32.xlu0 %v3696, 64
        %v4367 = vpop.permute.xlu0 %4366
        %4368 = vrot.lane.b32.xlu0 %v3697, 64
        %v4369 = vpop.permute.xlu0 %4368
        %4370 = vrot.lane.b32.xlu0 %v3698, 64
        %v4371 = vpop.permute.xlu0 %4370
        %4372 = vrot.lane.b32.xlu0 %v3699, 64
        %v4373 = vpop.permute.xlu0 %4372
        %4374 = vrot.lane.b32.xlu0 %v3700, 64
        %v4375 = vpop.permute.xlu0 %4374
        %4376 = vrot.lane.b32.xlu0 %v3701, 64
        %v4377 = vpop.permute.xlu0 %4376
        %4378 = vrot.lane.b32.xlu0 %v3702, 64
        %v4379 = vpop.permute.xlu0 %4378
        %v4396 = vunpack.c.l.b16 %v4299
        %v4397 = vunpack.c.l.b16 %v4300
        %v4398 = vunpack.c.l.b16 %v4301
        %v4399 = vunpack.c.l.b16 %v4302
        %v4400 = vunpack.c.l.b16 %v4303
        %v4401 = vunpack.c.l.b16 %v4304
        %v4402 = vunpack.c.l.b16 %v4305
        %v4403 = vunpack.c.l.b16 %v4306
        %v4404 = vunpack.c.l.b16 %v4307
        %v4405 = vunpack.c.l.b16 %v4308
        %v4406 = vunpack.c.l.b16 %v4309
        %v4407 = vunpack.c.l.b16 %v4310
        %v4408 = vunpack.c.l.b16 %v4311
        %v4409 = vunpack.c.l.b16 %v4312
        %v4410 = vunpack.c.l.b16 %v4313
        %v4411 = vunpack.c.l.b16 %v4314
        %v4412 = vpack.c.b16 %v4397, %v4396
        %v4413 = vpack.c.b16 %v4399, %v4398
        %v4414 = vpack.c.b16 %v4401, %v4400
        %v4415 = vpack.c.b16 %v4403, %v4402
        %v4416 = vpack.c.b16 %v4405, %v4404
        %v4417 = vpack.c.b16 %v4407, %v4406
        %v4418 = vpack.c.b16 %v4409, %v4408
        %v4419 = vpack.c.b16 %v4411, %v4410
        %4420 = vrot.lane.b32.xlu0 %v4412, 64
        %v4421 = vpop.permute.xlu0 %4420
        %4422 = vrot.lane.b32.xlu0 %v4413, 64
        %v4423 = vpop.permute.xlu0 %4422
        %4424 = vrot.lane.b32.xlu0 %v4414, 64
        %v4425 = vpop.permute.xlu0 %4424
        %4426 = vrot.lane.b32.xlu0 %v4415, 64
        %v4427 = vpop.permute.xlu0 %4426
        %4428 = vrot.lane.b32.xlu0 %v4416, 64
        %v4429 = vpop.permute.xlu0 %4428
        %4430 = vrot.lane.b32.xlu0 %v4417, 64
        %v4431 = vpop.permute.xlu0 %4430
        %4432 = vrot.lane.b32.xlu0 %v4418, 64
        %v4433 = vpop.permute.xlu0 %4432
        %4434 = vrot.lane.b32.xlu0 %v4419, 64
        %v4435 = vpop.permute.xlu0 %4434
        %v4437 = vsel %vm2412, %v4365, 0
        %v4440 = vsel %vm2412, %v4367, 0
        %v4443 = vsel %vm2412, %v4369, 0
        %v4446 = vsel %vm2412, %v4371, 0
        %v4449 = vsel %vm2412, %v4373, 0
        %v4452 = vsel %vm2412, %v4375, 0
        %v4455 = vsel %vm2412, %v4377, 0
        %v4458 = vsel %vm2412, %v4379, 0
        %v4461 = vsel %vm2412, %v4421, 0
        %v4464 = vsel %vm2412, %v4423, 0
        %v4467 = vsel %vm2412, %v4425, 0
        %v4470 = vsel %vm2412, %v4427, 0
        %v4473 = vsel %vm2412, %v4429, 0
        %v4476 = vsel %vm2412, %v4431, 0
        %v4479 = vsel %vm2412, %v4433, 0
        %v4482 = vsel %vm2412, %v4435, 0
        %4484 = vmatpush.bf16.xpose.msra.mxu0 %v4482
        %4485 = vmatpush.bf16.xpose.msra.mxu0 %v4479
        %4486 = vmatpush.bf16.xpose.msra.mxu0 %v4476
        %4487 = vmatpush.bf16.xpose.msra.mxu0 %v4473
        %4488 = vmatpush.bf16.xpose.msra.mxu0 %v4470
        %4489 = vmatpush.bf16.xpose.msra.mxu0 %v4467
        %4490 = vmatpush.bf16.xpose.msra.mxu0 %v4464
        %4491 = vmatpush.bf16.xpose.msra.mxu0 %v4461
        %4492 = vmatmul.bf16.gmra.mxu0 %v4437
        %v4493 = vpop.f32.mrf.mxu0
        %v4494 = vadd.f32 %v4348, %v4493
        %v4495 = vpop.f32.mrf.mxu0
        %v4496 = vadd.f32 %v4349, %v4495
        %4497 = vmatmul.bf16.gmra.mxu0 %v4440
        %v4498 = vpop.f32.mrf.mxu0
        %v4499 = vadd.f32 %v4350, %v4498
        %v4500 = vpop.f32.mrf.mxu0
        %v4501 = vadd.f32 %v4351, %v4500
        %4502 = vmatmul.bf16.gmra.mxu0 %v4443
        %v4503 = vpop.f32.mrf.mxu0
        %v4504 = vadd.f32 %v4352, %v4503
        %v4505 = vpop.f32.mrf.mxu0
        %v4506 = vadd.f32 %v4353, %v4505
        %4507 = vmatmul.bf16.gmra.mxu0 %v4446
        %v4508 = vpop.f32.mrf.mxu0
        %v4509 = vadd.f32 %v4354, %v4508
        %v4510 = vpop.f32.mrf.mxu0
        %v4511 = vadd.f32 %v4355, %v4510
        %4512 = vmatmul.bf16.gmra.mxu0 %v4449
        %v4513 = vpop.f32.mrf.mxu0
        %v4514 = vadd.f32 %v4356, %v4513
        %v4515 = vpop.f32.mrf.mxu0
        %v4516 = vadd.f32 %v4357, %v4515
        %4517 = vmatmul.bf16.gmra.mxu0 %v4452
        %v4518 = vpop.f32.mrf.mxu0
        %v4519 = vadd.f32 %v4358, %v4518
        %v4520 = vpop.f32.mrf.mxu0
        %v4521 = vadd.f32 %v4359, %v4520
        %4522 = vmatmul.bf16.gmra.mxu0 %v4455
        %v4523 = vpop.f32.mrf.mxu0
        %v4524 = vadd.f32 %v4360, %v4523
        %v4525 = vpop.f32.mrf.mxu0
        %v4526 = vadd.f32 %v4361, %v4525
        %4527 = vmatmul.bf16.gmra.mxu0 %v4458
        %v4528 = vpop.f32.mrf.mxu0
        %v4529 = vadd.f32 %v4362, %v4528
        %v4530 = vpop.f32.mrf.mxu0
        %v4531 = vadd.f32 %v4363, %v4530
        %4532 = vdwg.mxu0
        %4533 = vmax.xlane.f32.xlu0 %v4494
        %v4534 = vpop.xlane.xlu0 %4533
        %4535 = vmax.xlane.f32.xlu0 %v4496
        %v4536 = vpop.xlane.xlu0 %4535
        %4537 = vmax.xlane.f32.xlu0 %v4499
        %v4538 = vpop.xlane.xlu0 %4537
        %4539 = vmax.xlane.f32.xlu0 %v4501
        %v4540 = vpop.xlane.xlu0 %4539
        %4541 = vmax.xlane.f32.xlu0 %v4504
        %v4542 = vpop.xlane.xlu0 %4541
        %4543 = vmax.xlane.f32.xlu0 %v4506
        %v4544 = vpop.xlane.xlu0 %4543
        %4545 = vmax.xlane.f32.xlu0 %v4509
        %v4546 = vpop.xlane.xlu0 %4545
        %4547 = vmax.xlane.f32.xlu0 %v4511
        %v4548 = vpop.xlane.xlu0 %4547
        %4549 = vmax.xlane.f32.xlu0 %v4514
        %v4550 = vpop.xlane.xlu0 %4549
        %4551 = vmax.xlane.f32.xlu0 %v4516
        %v4552 = vpop.xlane.xlu0 %4551
        %4553 = vmax.xlane.f32.xlu0 %v4519
        %v4554 = vpop.xlane.xlu0 %4553
        %4555 = vmax.xlane.f32.xlu0 %v4521
        %v4556 = vpop.xlane.xlu0 %4555
        %4557 = vmax.xlane.f32.xlu0 %v4524
        %v4558 = vpop.xlane.xlu0 %4557
        %4559 = vmax.xlane.f32.xlu0 %v4526
        %v4560 = vpop.xlane.xlu0 %4559
        %4561 = vmax.xlane.f32.xlu0 %v4529
        %v4562 = vpop.xlane.xlu0 %4561
        %4563 = vmax.xlane.f32.xlu0 %v4531
        %v4564 = vpop.xlane.xlu0 %4563
        %v4565 = vsub.f32 %v4494, %v4534
        %v4566 = vsub.f32 %v4496, %v4536
        %v4567 = vsub.f32 %v4499, %v4538
        %v4568 = vsub.f32 %v4501, %v4540
        %v4569 = vsub.f32 %v4504, %v4542
        %v4570 = vsub.f32 %v4506, %v4544
        %v4571 = vsub.f32 %v4509, %v4546
        %v4572 = vsub.f32 %v4511, %v4548
        %v4573 = vsub.f32 %v4514, %v4550
        %v4574 = vsub.f32 %v4516, %v4552
        %v4575 = vsub.f32 %v4519, %v4554
        %v4576 = vsub.f32 %v4521, %v4556
        %v4577 = vsub.f32 %v4524, %v4558
        %v4578 = vsub.f32 %v4526, %v4560
        %v4579 = vsub.f32 %v4529, %v4562
        %v4580 = vsub.f32 %v4531, %v4564
        %v4581 = vmul.f32 %v4565, 1.442695
        %v4582 = vpow.pop %v4581
        %v4583 = vmul.f32 %v4566, 1.442695
        %v4584 = vpow.pop %v4583
        %v4585 = vmul.f32 %v4567, 1.442695
        %v4586 = vpow.pop %v4585
        %v4587 = vmul.f32 %v4568, 1.442695
        %v4588 = vpow.pop %v4587
        %v4589 = vmul.f32 %v4569, 1.442695
        %v4590 = vpow.pop %v4589
        %v4591 = vmul.f32 %v4570, 1.442695
        %v4592 = vpow.pop %v4591
        %v4593 = vmul.f32 %v4571, 1.442695
        %v4594 = vpow.pop %v4593
        %v4595 = vmul.f32 %v4572, 1.442695
        %v4596 = vpow.pop %v4595
        %v4597 = vmul.f32 %v4573, 1.442695
        %v4598 = vpow.pop %v4597
        %v4599 = vmul.f32 %v4574, 1.442695
        %v4600 = vpow.pop %v4599
        %v4601 = vmul.f32 %v4575, 1.442695
        %v4602 = vpow.pop %v4601
        %v4603 = vmul.f32 %v4576, 1.442695
        %v4604 = vpow.pop %v4603
        %v4605 = vmul.f32 %v4577, 1.442695
        %v4606 = vpow.pop %v4605
        %v4607 = vmul.f32 %v4578, 1.442695
        %v4608 = vpow.pop %v4607
        %v4609 = vmul.f32 %v4579, 1.442695
        %v4610 = vpow.pop %v4609
        %v4611 = vmul.f32 %v4580, 1.442695
        %v4612 = vpow.pop %v4611
        %4613 = vadd.xlane.f32.xlu0 %v4582
        %v4614 = vpop.xlane.xlu0 %4613
        %4615 = vadd.xlane.f32.xlu0 %v4584
        %v4616 = vpop.xlane.xlu0 %4615
        %4617 = vadd.xlane.f32.xlu0 %v4586
        %v4618 = vpop.xlane.xlu0 %4617
        %4619 = vadd.xlane.f32.xlu0 %v4588
        %v4620 = vpop.xlane.xlu0 %4619
        %4621 = vadd.xlane.f32.xlu0 %v4590
        %v4622 = vpop.xlane.xlu0 %4621
        %4623 = vadd.xlane.f32.xlu0 %v4592
        %v4624 = vpop.xlane.xlu0 %4623
        %4625 = vadd.xlane.f32.xlu0 %v4594
        %v4626 = vpop.xlane.xlu0 %4625
        %4627 = vadd.xlane.f32.xlu0 %v4596
        %v4628 = vpop.xlane.xlu0 %4627
        %4629 = vadd.xlane.f32.xlu0 %v4598
        %v4630 = vpop.xlane.xlu0 %4629
        %4631 = vadd.xlane.f32.xlu0 %v4600
        %v4632 = vpop.xlane.xlu0 %4631
        %4633 = vadd.xlane.f32.xlu0 %v4602
        %v4634 = vpop.xlane.xlu0 %4633
        %4635 = vadd.xlane.f32.xlu0 %v4604
        %v4636 = vpop.xlane.xlu0 %4635
        %4637 = vadd.xlane.f32.xlu0 %v4606
        %v4638 = vpop.xlane.xlu0 %4637
        %4639 = vadd.xlane.f32.xlu0 %v4608
        %v4640 = vpop.xlane.xlu0 %4639
        %4641 = vadd.xlane.f32.xlu0 %v4610
        %v4642 = vpop.xlane.xlu0 %4641
        %4643 = vadd.xlane.f32.xlu0 %v4612
        %v4644 = vpop.xlane.xlu0 %4643
        %v4645 = vrcp.pop %v4614
        %v4646 = vrcp.pop %v4616
        %v4647 = vrcp.pop %v4618
        %v4648 = vrcp.pop %v4620
        %v4649 = vrcp.pop %v4622
        %v4650 = vrcp.pop %v4624
        %v4651 = vrcp.pop %v4626
        %v4652 = vrcp.pop %v4628
        %v4653 = vrcp.pop %v4630
        %v4654 = vrcp.pop %v4632
        %v4655 = vrcp.pop %v4634
        %v4656 = vrcp.pop %v4636
        %v4657 = vrcp.pop %v4638
        %v4658 = vrcp.pop %v4640
        %v4659 = vrcp.pop %v4642
        %v4660 = vrcp.pop %v4644
        %v4661 = vpack.c.bf16 %v4584, %v4582
        %v4662 = vpack.c.bf16 %v4588, %v4586
        %v4663 = vpack.c.bf16 %v4592, %v4590
        %v4664 = vpack.c.bf16 %v4596, %v4594
        %v4665 = vpack.c.bf16 %v4600, %v4598
        %v4666 = vpack.c.bf16 %v4604, %v4602
        %v4667 = vpack.c.bf16 %v4608, %v4606
        %v4668 = vpack.c.bf16 %v4612, %v4610
        %v4685 = vunpack.c.l.b16 %v4315
        %v4686 = vunpack.c.l.b16 %v4316
        %v4687 = vunpack.c.l.b16 %v4317
        %v4688 = vunpack.c.l.b16 %v4318
        %v4689 = vunpack.c.l.b16 %v4319
        %v4690 = vunpack.c.l.b16 %v4320
        %v4691 = vunpack.c.l.b16 %v4321
        %v4692 = vunpack.c.l.b16 %v4322
        %v4693 = vunpack.c.l.b16 %v4323
        %v4694 = vunpack.c.l.b16 %v4324
        %v4695 = vunpack.c.l.b16 %v4325
        %v4696 = vunpack.c.l.b16 %v4326
        %v4697 = vunpack.c.l.b16 %v4327
        %v4698 = vunpack.c.l.b16 %v4328
        %v4699 = vunpack.c.l.b16 %v4329
        %v4700 = vunpack.c.l.b16 %v4330
        %v4701 = vpack.c.b16 %v4686, %v4685
        %v4702 = vpack.c.b16 %v4688, %v4687
        %v4703 = vpack.c.b16 %v4690, %v4689
        %v4704 = vpack.c.b16 %v4692, %v4691
        %v4705 = vpack.c.b16 %v4694, %v4693
        %v4706 = vpack.c.b16 %v4696, %v4695
        %v4707 = vpack.c.b16 %v4698, %v4697
        %v4708 = vpack.c.b16 %v4700, %v4699
        %4709 = vrot.lane.b32.xlu0 %v4701, 64
        %v4710 = vpop.permute.xlu0 %4709
        %4711 = vrot.lane.b32.xlu0 %v4702, 64
        %v4712 = vpop.permute.xlu0 %4711
        %4713 = vrot.lane.b32.xlu0 %v4703, 64
        %v4714 = vpop.permute.xlu0 %4713
        %4715 = vrot.lane.b32.xlu0 %v4704, 64
        %v4716 = vpop.permute.xlu0 %4715
        %4717 = vrot.lane.b32.xlu0 %v4705, 64
        %v4718 = vpop.permute.xlu0 %4717
        %4719 = vrot.lane.b32.xlu0 %v4706, 64
        %v4720 = vpop.permute.xlu0 %4719
        %4721 = vrot.lane.b32.xlu0 %v4707, 64
        %v4722 = vpop.permute.xlu0 %4721
        %4723 = vrot.lane.b32.xlu0 %v4708, 64
        %v4724 = vpop.permute.xlu0 %4723
        %4733 = vmatpush.bf16.msra.mxu0 %v4724
        %4734 = vmatpush.bf16.msra.mxu0 %v4722
        %4735 = vmatpush.bf16.msra.mxu0 %v4720
        %4736 = vmatpush.bf16.msra.mxu0 %v4718
        %4737 = vmatpush.bf16.msra.mxu0 %v4716
        %4738 = vmatpush.bf16.msra.mxu0 %v4714
        %4739 = vmatpush.bf16.msra.mxu0 %v4712
        %4740 = vmatpush.bf16.msra.mxu0 %v4710
        %4741 = vmatmul.bf16.gmra.mxu0 %v4661
        %v4742 = vpop.f32.mrf.mxu0
        %v4743 = vadd.f32 0.0, %v4742
        %v4744 = vpop.f32.mrf.mxu0
        %v4745 = vadd.f32 0.0, %v4744
        %4746 = vmatmul.bf16.gmra.mxu0 %v4662
        %v4747 = vpop.f32.mrf.mxu0
        %v4748 = vadd.f32 0.0, %v4747
        %v4749 = vpop.f32.mrf.mxu0
        %v4750 = vadd.f32 0.0, %v4749
        %4751 = vmatmul.bf16.gmra.mxu0 %v4663
        %v4752 = vpop.f32.mrf.mxu0
        %v4753 = vadd.f32 0.0, %v4752
        %v4754 = vpop.f32.mrf.mxu0
        %v4755 = vadd.f32 0.0, %v4754
        %4756 = vmatmul.bf16.gmra.mxu0 %v4664
        %v4757 = vpop.f32.mrf.mxu0
        %v4758 = vadd.f32 0.0, %v4757
        %v4759 = vpop.f32.mrf.mxu0
        %v4760 = vadd.f32 0.0, %v4759
        %4761 = vmatmul.bf16.gmra.mxu0 %v4665
        %v4762 = vpop.f32.mrf.mxu0
        %v4763 = vadd.f32 0.0, %v4762
        %v4764 = vpop.f32.mrf.mxu0
        %v4765 = vadd.f32 0.0, %v4764
        %4766 = vmatmul.bf16.gmra.mxu0 %v4666
        %v4767 = vpop.f32.mrf.mxu0
        %v4768 = vadd.f32 0.0, %v4767
        %v4769 = vpop.f32.mrf.mxu0
        %v4770 = vadd.f32 0.0, %v4769
        %4771 = vmatmul.bf16.gmra.mxu0 %v4667
        %v4772 = vpop.f32.mrf.mxu0
        %v4773 = vadd.f32 0.0, %v4772
        %v4774 = vpop.f32.mrf.mxu0
        %v4775 = vadd.f32 0.0, %v4774
        %4776 = vmatmul.bf16.gmra.mxu0 %v4668
        %v4777 = vpop.f32.mrf.mxu0
        %v4778 = vadd.f32 0.0, %v4777
        %v4779 = vpop.f32.mrf.mxu0
        %v4780 = vadd.f32 0.0, %v4779
        %4781 = vdwg.mxu0
        %v4782 = vmul.f32 %v4743, %v4645
        %v4783 = vmul.f32 %v4745, %v4646
        %v4784 = vmul.f32 %v4748, %v4647
        %v4785 = vmul.f32 %v4750, %v4648
        %v4786 = vmul.f32 %v4753, %v4649
        %v4787 = vmul.f32 %v4755, %v4650
        %v4788 = vmul.f32 %v4758, %v4651
        %v4789 = vmul.f32 %v4760, %v4652
        %v4790 = vmul.f32 %v4763, %v4653
        %v4791 = vmul.f32 %v4765, %v4654
        %v4792 = vmul.f32 %v4768, %v4655
        %v4793 = vmul.f32 %v4770, %v4656
        %v4794 = vmul.f32 %v4773, %v4657
        %v4795 = vmul.f32 %v4775, %v4658
        %v4796 = vmul.f32 %v4778, %v4659
        %v4797 = vmul.f32 %v4780, %v4660
        %v4798 = vpack.c.bf16 %v4783, %v4782
        %v4799 = vpack.c.bf16 %v4785, %v4784
        %v4800 = vpack.c.bf16 %v4787, %v4786
        %v4801 = vpack.c.bf16 %v4789, %v4788
        %v4802 = vpack.c.bf16 %v4791, %v4790
        %v4803 = vpack.c.bf16 %v4793, %v4792
        %v4804 = vpack.c.bf16 %v4795, %v4794
        %v4805 = vpack.c.bf16 %v4797, %v4796
        %v4806 = vld [vmem:[%s370 + $0xc0] sm:$0xff]
        %v4807 = vld [vmem:[%s370 + $0xc8] sm:$0xff]
        %v4808 = vld [vmem:[%s370 + $0xd0] sm:$0xff]
        %v4809 = vld [vmem:[%s370 + $0xd8] sm:$0xff]
        %v4810 = vld [vmem:[%s370 + $0xe0] sm:$0xff]
        %v4811 = vld [vmem:[%s370 + $0xe8] sm:$0xff]
        %v4812 = vld [vmem:[%s370 + $0xf0] sm:$0xff]
        %v4813 = vld [vmem:[%s370 + $0xf8] sm:$0xff]
        %v4822 = vunpack.c.l.b16 %v4806
        %v4823 = vunpack.c.h.b16 %v4806
        %v4824 = vunpack.c.l.b16 %v4807
        %v4825 = vunpack.c.h.b16 %v4807
        %v4826 = vunpack.c.l.b16 %v4808
        %v4827 = vunpack.c.h.b16 %v4808
        %v4828 = vunpack.c.l.b16 %v4809
        %v4829 = vunpack.c.h.b16 %v4809
        %v4830 = vunpack.c.l.b16 %v4810
        %v4831 = vunpack.c.h.b16 %v4810
        %v4832 = vunpack.c.l.b16 %v4811
        %v4833 = vunpack.c.h.b16 %v4811
        %v4834 = vunpack.c.l.b16 %v4812
        %v4835 = vunpack.c.h.b16 %v4812
        %v4836 = vunpack.c.l.b16 %v4813
        %v4837 = vunpack.c.h.b16 %v4813
        %v4838 = vpack.c.b16 %v4824, %v4822
        %v4839 = vpack.c.b16 %v4825, %v4823
        %v4840 = vpack.c.b16 %v4828, %v4826
        %v4841 = vpack.c.b16 %v4829, %v4827
        %v4842 = vpack.c.b16 %v4832, %v4830
        %v4843 = vpack.c.b16 %v4833, %v4831
        %v4844 = vpack.c.b16 %v4836, %v4834
        %v4845 = vpack.c.b16 %v4837, %v4835
        %v4855 = vsel %vm2412, %v4798, 0
        %v4858 = vsel %vm2412, %v4799, 0
        %v4861 = vsel %vm2412, %v4800, 0
        %v4864 = vsel %vm2412, %v4801, 0
        %v4867 = vsel %vm2412, %v4802, 0
        %v4870 = vsel %vm2412, %v4803, 0
        %v4873 = vsel %vm2412, %v4804, 0
        %v4876 = vsel %vm2412, %v4805, 0
        %4878 = vmatpush.bf16.msra.mxu0 0
        %4879 = vmatpush.bf16.msra.mxu0 0
        %4880 = vmatpush.bf16.msra.mxu0 0
        %4881 = vmatpush.bf16.msra.mxu0 0
        %4882 = vmatpush.bf16.msra.mxu0 %v4844
        %4883 = vmatpush.bf16.msra.mxu0 %v4842
        %4884 = vmatpush.bf16.msra.mxu0 %v4840
        %4885 = vmatpush.bf16.msra.mxu0 %v4838
        %4886 = vmatmul.bf16.gmra.mxu0 %v4855
        %v4887 = vpop.f32.mrf.mxu0
        %v4888 = vadd.f32 0.0, %v4887
        %v4889 = vpop.f32.mrf.mxu0
        %v4890 = vadd.f32 0.0, %v4889
        %4891 = vmatmul.bf16.gmra.mxu0 %v4858
        %v4892 = vpop.f32.mrf.mxu0
        %v4893 = vadd.f32 0.0, %v4892
        %v4894 = vpop.f32.mrf.mxu0
        %v4895 = vadd.f32 0.0, %v4894
        %4896 = vmatmul.bf16.gmra.mxu0 %v4861
        %v4897 = vpop.f32.mrf.mxu0
        %v4898 = vadd.f32 0.0, %v4897
        %v4899 = vpop.f32.mrf.mxu0
        %v4900 = vadd.f32 0.0, %v4899
        %4901 = vmatmul.bf16.gmra.mxu0 %v4864
        %v4902 = vpop.f32.mrf.mxu0
        %v4903 = vadd.f32 0.0, %v4902
        %v4904 = vpop.f32.mrf.mxu0
        %v4905 = vadd.f32 0.0, %v4904
        %4906 = vmatmul.bf16.gmra.mxu0 %v4867
        %v4907 = vpop.f32.mrf.mxu0
        %v4908 = vadd.f32 0.0, %v4907
        %v4909 = vpop.f32.mrf.mxu0
        %v4910 = vadd.f32 0.0, %v4909
        %4911 = vmatmul.bf16.gmra.mxu0 %v4870
        %v4912 = vpop.f32.mrf.mxu0
        %v4913 = vadd.f32 0.0, %v4912
        %v4914 = vpop.f32.mrf.mxu0
        %v4915 = vadd.f32 0.0, %v4914
        %4916 = vmatmul.bf16.gmra.mxu0 %v4873
        %v4917 = vpop.f32.mrf.mxu0
        %v4918 = vadd.f32 0.0, %v4917
        %v4919 = vpop.f32.mrf.mxu0
        %v4920 = vadd.f32 0.0, %v4919
        %4921 = vmatmul.bf16.gmra.mxu0 %v4876
        %v4922 = vpop.f32.mrf.mxu0
        %v4923 = vadd.f32 0.0, %v4922
        %v4924 = vpop.f32.mrf.mxu0
        %v4925 = vadd.f32 0.0, %v4924
        %4926 = vdwg.mxu0
        %4927 = vmatpush.bf16.msra.mxu0 0
        %4928 = vmatpush.bf16.msra.mxu0 0
        %4929 = vmatpush.bf16.msra.mxu0 0
        %4930 = vmatpush.bf16.msra.mxu0 0
        %4931 = vmatpush.bf16.msra.mxu0 %v4845
        %4932 = vmatpush.bf16.msra.mxu0 %v4843
        %4933 = vmatpush.bf16.msra.mxu0 %v4841
        %4934 = vmatpush.bf16.msra.mxu0 %v4839
        %4935 = vmatmul.bf16.gmra.mxu0 %v4855
        %v4936 = vpop.f32.mrf.mxu0
        %v4937 = vadd.f32 0.0, %v4936
        %v4938 = vpop.f32.mrf.mxu0
        %v4939 = vadd.f32 0.0, %v4938
        %4940 = vmatmul.bf16.gmra.mxu0 %v4858
        %v4941 = vpop.f32.mrf.mxu0
        %v4942 = vadd.f32 0.0, %v4941
        %v4943 = vpop.f32.mrf.mxu0
        %v4944 = vadd.f32 0.0, %v4943
        %4945 = vmatmul.bf16.gmra.mxu0 %v4861
        %v4946 = vpop.f32.mrf.mxu0
        %v4947 = vadd.f32 0.0, %v4946
        %v4948 = vpop.f32.mrf.mxu0
        %v4949 = vadd.f32 0.0, %v4948
        %4950 = vmatmul.bf16.gmra.mxu0 %v4864
        %v4951 = vpop.f32.mrf.mxu0
        %v4952 = vadd.f32 0.0, %v4951
        %v4953 = vpop.f32.mrf.mxu0
        %v4954 = vadd.f32 0.0, %v4953
        %4955 = vmatmul.bf16.gmra.mxu0 %v4867
        %v4956 = vpop.f32.mrf.mxu0
        %v4957 = vadd.f32 0.0, %v4956
        %v4958 = vpop.f32.mrf.mxu0
        %v4959 = vadd.f32 0.0, %v4958
        %4960 = vmatmul.bf16.gmra.mxu0 %v4870
        %v4961 = vpop.f32.mrf.mxu0
        %v4962 = vadd.f32 0.0, %v4961
        %v4963 = vpop.f32.mrf.mxu0
        %v4964 = vadd.f32 0.0, %v4963
        %4965 = vmatmul.bf16.gmra.mxu0 %v4873
        %v4966 = vpop.f32.mrf.mxu0
        %v4967 = vadd.f32 0.0, %v4966
        %v4968 = vpop.f32.mrf.mxu0
        %v4969 = vadd.f32 0.0, %v4968
        %4970 = vmatmul.bf16.gmra.mxu0 %v4876
        %v4971 = vpop.f32.mrf.mxu0
        %v4972 = vadd.f32 0.0, %v4971
        %v4973 = vpop.f32.mrf.mxu0
        %v4974 = vadd.f32 0.0, %v4973
        %4975 = vdwg.mxu0
        %v4976 = vadd.f32 %v4267, %v4888
        %v4977 = vadd.f32 %v4268, %v4937
        %v4978 = vadd.f32 %v4269, %v4890
        %v4979 = vadd.f32 %v4270, %v4939
        %v4980 = vadd.f32 %v4271, %v4893
        %v4981 = vadd.f32 %v4272, %v4942
        %v4982 = vadd.f32 %v4273, %v4895
        %v4983 = vadd.f32 %v4274, %v4944
        %v4984 = vadd.f32 %v4275, %v4898
        %v4985 = vadd.f32 %v4276, %v4947
        %v4986 = vadd.f32 %v4277, %v4900
        %v4987 = vadd.f32 %v4278, %v4949
        %v4988 = vadd.f32 %v4279, %v4903
        %v4989 = vadd.f32 %v4280, %v4952
        %v4990 = vadd.f32 %v4281, %v4905
        %v4991 = vadd.f32 %v4282, %v4954
        %v4992 = vadd.f32 %v4283, %v4908
        %v4993 = vadd.f32 %v4284, %v4957
        %v4994 = vadd.f32 %v4285, %v4910
        %v4995 = vadd.f32 %v4286, %v4959
        %v4996 = vadd.f32 %v4287, %v4913
        %v4997 = vadd.f32 %v4288, %v4962
        %v4998 = vadd.f32 %v4289, %v4915
        %v4999 = vadd.f32 %v4290, %v4964
        %v5000 = vadd.f32 %v4291, %v4918
        %v5001 = vadd.f32 %v4292, %v4967
        %v5002 = vadd.f32 %v4293, %v4920
        %v5003 = vadd.f32 %v4294, %v4969
        %v5004 = vadd.f32 %v4295, %v4923
        %v5005 = vadd.f32 %v4296, %v4972
        %v5006 = vadd.f32 %v4297, %v4925
        %v5007 = vadd.f32 %v4298, %v4974
        %v5008 = vadd.f32 %v2220, %v4976
        %v5009 = vadd.f32 %v2221, %v4977
        %v5010 = vadd.f32 %v2222, %v4978
        %v5011 = vadd.f32 %v2223, %v4979
        %v5012 = vadd.f32 %v2224, %v4980
        %v5013 = vadd.f32 %v2225, %v4981
        %v5014 = vadd.f32 %v2226, %v4982
        %v5015 = vadd.f32 %v2227, %v4983
        %v5016 = vadd.f32 %v2228, %v4984
        %v5017 = vadd.f32 %v2229, %v4985
        %v5018 = vadd.f32 %v2230, %v4986
        %v5019 = vadd.f32 %v2231, %v4987
        %v5020 = vadd.f32 %v2232, %v4988
        %v5021 = vadd.f32 %v2233, %v4989
        %v5022 = vadd.f32 %v2234, %v4990
        %v5023 = vadd.f32 %v2235, %v4991
        %v5024 = vadd.f32 %v2236, %v4992
        %v5025 = vadd.f32 %v2237, %v4993
        %v5026 = vadd.f32 %v2238, %v4994
        %v5027 = vadd.f32 %v2239, %v4995
        %v5028 = vadd.f32 %v2240, %v4996
        %v5029 = vadd.f32 %v2241, %v4997
        %v5030 = vadd.f32 %v2242, %v4998
        %v5031 = vadd.f32 %v2243, %v4999
        %v5032 = vadd.f32 %v2244, %v5000
        %v5033 = vadd.f32 %v2245, %v5001
        %v5034 = vadd.f32 %v2246, %v5002
        %v5035 = vadd.f32 %v2247, %v5003
        %v5036 = vadd.f32 %v2248, %v5004
        %v5037 = vadd.f32 %v2249, %v5005
        %v5038 = vadd.f32 %v2250, %v5006
        %v5039 = vadd.f32 %v2251, %v5007
        %v5040 = vld [vmem:[%s374] sm:$0x3]
        %v5041 = vmul.f32 %v5008, %v5008
        %v5042 = vmul.f32 %v5009, %v5009
        %v5043 = vmul.f32 %v5010, %v5010
        %v5044 = vmul.f32 %v5011, %v5011
        %v5045 = vmul.f32 %v5012, %v5012
        %v5046 = vmul.f32 %v5013, %v5013
        %v5047 = vmul.f32 %v5014, %v5014
        %v5048 = vmul.f32 %v5015, %v5015
        %v5049 = vmul.f32 %v5016, %v5016
        %v5050 = vmul.f32 %v5017, %v5017
        %v5051 = vmul.f32 %v5018, %v5018
        %v5052 = vmul.f32 %v5019, %v5019
        %v5053 = vmul.f32 %v5020, %v5020
        %v5054 = vmul.f32 %v5021, %v5021
        %v5055 = vmul.f32 %v5022, %v5022
        %v5056 = vmul.f32 %v5023, %v5023
        %v5057 = vmul.f32 %v5024, %v5024
        %v5058 = vmul.f32 %v5025, %v5025
        %v5059 = vmul.f32 %v5026, %v5026
        %v5060 = vmul.f32 %v5027, %v5027
        %v5061 = vmul.f32 %v5028, %v5028
        %v5062 = vmul.f32 %v5029, %v5029
        %v5063 = vmul.f32 %v5030, %v5030
        %v5064 = vmul.f32 %v5031, %v5031
        %v5065 = vmul.f32 %v5032, %v5032
        %v5066 = vmul.f32 %v5033, %v5033
        %v5067 = vmul.f32 %v5034, %v5034
        %v5068 = vmul.f32 %v5035, %v5035
        %v5069 = vmul.f32 %v5036, %v5036
        %v5070 = vmul.f32 %v5037, %v5037
        %v5071 = vmul.f32 %v5038, %v5038
        %v5072 = vmul.f32 %v5039, %v5039
        %v5073 = vadd.f32 %v5041, %v5042
        %5074 = vadd.xlane.f32.xlu0 %v5073
        %v5075 = vpop.xlane.xlu0 %5074
        %v5076 = vadd.f32 %v5043, %v5044
        %5077 = vadd.xlane.f32.xlu0 %v5076
        %v5078 = vpop.xlane.xlu0 %5077
        %v5079 = vadd.f32 %v5045, %v5046
        %5080 = vadd.xlane.f32.xlu0 %v5079
        %v5081 = vpop.xlane.xlu0 %5080
        %v5082 = vadd.f32 %v5047, %v5048
        %5083 = vadd.xlane.f32.xlu0 %v5082
        %v5084 = vpop.xlane.xlu0 %5083
        %v5085 = vadd.f32 %v5049, %v5050
        %5086 = vadd.xlane.f32.xlu0 %v5085
        %v5087 = vpop.xlane.xlu0 %5086
        %v5088 = vadd.f32 %v5051, %v5052
        %5089 = vadd.xlane.f32.xlu0 %v5088
        %v5090 = vpop.xlane.xlu0 %5089
        %v5091 = vadd.f32 %v5053, %v5054
        %5092 = vadd.xlane.f32.xlu0 %v5091
        %v5093 = vpop.xlane.xlu0 %5092
        %v5094 = vadd.f32 %v5055, %v5056
        %5095 = vadd.xlane.f32.xlu0 %v5094
        %v5096 = vpop.xlane.xlu0 %5095
        %v5097 = vadd.f32 %v5057, %v5058
        %5098 = vadd.xlane.f32.xlu0 %v5097
        %v5099 = vpop.xlane.xlu0 %5098
        %v5100 = vadd.f32 %v5059, %v5060
        %5101 = vadd.xlane.f32.xlu0 %v5100
        %v5102 = vpop.xlane.xlu0 %5101
        %v5103 = vadd.f32 %v5061, %v5062
        %5104 = vadd.xlane.f32.xlu0 %v5103
        %v5105 = vpop.xlane.xlu0 %5104
        %v5106 = vadd.f32 %v5063, %v5064
        %5107 = vadd.xlane.f32.xlu0 %v5106
        %v5108 = vpop.xlane.xlu0 %5107
        %v5109 = vadd.f32 %v5065, %v5066
        %5110 = vadd.xlane.f32.xlu0 %v5109
        %v5111 = vpop.xlane.xlu0 %5110
        %v5112 = vadd.f32 %v5067, %v5068
        %5113 = vadd.xlane.f32.xlu0 %v5112
        %v5114 = vpop.xlane.xlu0 %5113
        %v5115 = vadd.f32 %v5069, %v5070
        %5116 = vadd.xlane.f32.xlu0 %v5115
        %v5117 = vpop.xlane.xlu0 %5116
        %v5118 = vadd.f32 %v5071, %v5072
        %5119 = vadd.xlane.f32.xlu0 %v5118
        %v5120 = vpop.xlane.xlu0 %5119
        %v5121 = vmul.f32 %v5075, %v682
        %v5122 = vmul.f32 %v5078, %v682
        %v5123 = vmul.f32 %v5081, %v682
        %v5124 = vmul.f32 %v5084, %v682
        %v5125 = vmul.f32 %v5087, %v682
        %v5126 = vmul.f32 %v5090, %v682
        %v5127 = vmul.f32 %v5093, %v682
        %v5128 = vmul.f32 %v5096, %v682
        %v5129 = vmul.f32 %v5099, %v682
        %v5130 = vmul.f32 %v5102, %v682
        %v5131 = vmul.f32 %v5105, %v682
        %v5132 = vmul.f32 %v5108, %v682
        %v5133 = vmul.f32 %v5111, %v682
        %v5134 = vmul.f32 %v5114, %v682
        %v5135 = vmul.f32 %v5117, %v682
        %v5136 = vmul.f32 %v5120, %v682
        %v5137 = vadd.f32 %v5121, 1e-06
        %v5138 = vadd.f32 %v5122, 1e-06
        %v5139 = vadd.f32 %v5123, 1e-06
        %v5140 = vadd.f32 %v5124, 1e-06
        %v5141 = vadd.f32 %v5125, 1e-06
        %v5142 = vadd.f32 %v5126, 1e-06
        %v5143 = vadd.f32 %v5127, 1e-06
        %v5144 = vadd.f32 %v5128, 1e-06
        %v5145 = vadd.f32 %v5129, 1e-06
        %v5146 = vadd.f32 %v5130, 1e-06
        %v5147 = vadd.f32 %v5131, 1e-06
        %v5148 = vadd.f32 %v5132, 1e-06
        %v5149 = vadd.f32 %v5133, 1e-06
        %v5150 = vadd.f32 %v5134, 1e-06
        %v5151 = vadd.f32 %v5135, 1e-06
        %v5152 = vadd.f32 %v5136, 1e-06
        %v5153 = vrsqrt.pop %v5137
        %v5154 = vmul.f32 %v5153, %v5137
        %v5155 = vmul.f32 %v5154, %v5153
        %v5156 = vmul.f32 0.5, %v5155
        %v5157 = vsub.f32 1.5, %v5156
        %v5158 = vmul.f32 %v5153, %v5157
        %vm5159 = vweird.f32 %v5137
        %vm5160 = vweird.f32 %v5153
        %vm5161 = vmor %vm5159, %vm5160
        %v5162 = vsel %vm5161, %v5153, %v5158
        %v5163 = vrsqrt.pop %v5138
        %v5164 = vmul.f32 %v5163, %v5138
        %v5165 = vmul.f32 %v5164, %v5163
        %v5166 = vmul.f32 0.5, %v5165
        %v5167 = vsub.f32 1.5, %v5166
        %v5168 = vmul.f32 %v5163, %v5167
        %vm5169 = vweird.f32 %v5138
        %vm5170 = vweird.f32 %v5163
        %vm5171 = vmor %vm5169, %vm5170
        %v5172 = vsel %vm5171, %v5163, %v5168
        %v5173 = vrsqrt.pop %v5139
        %v5174 = vmul.f32 %v5173, %v5139
        %v5175 = vmul.f32 %v5174, %v5173
        %v5176 = vmul.f32 0.5, %v5175
        %v5177 = vsub.f32 1.5, %v5176
        %v5178 = vmul.f32 %v5173, %v5177
        %vm5179 = vweird.f32 %v5139
        %vm5180 = vweird.f32 %v5173
        %vm5181 = vmor %vm5179, %vm5180
        %v5182 = vsel %vm5181, %v5173, %v5178
        %v5183 = vrsqrt.pop %v5140
        %v5184 = vmul.f32 %v5183, %v5140
        %v5185 = vmul.f32 %v5184, %v5183
        %v5186 = vmul.f32 0.5, %v5185
        %v5187 = vsub.f32 1.5, %v5186
        %v5188 = vmul.f32 %v5183, %v5187
        %vm5189 = vweird.f32 %v5140
        %vm5190 = vweird.f32 %v5183
        %vm5191 = vmor %vm5189, %vm5190
        %v5192 = vsel %vm5191, %v5183, %v5188
        %v5193 = vrsqrt.pop %v5141
        %v5194 = vmul.f32 %v5193, %v5141
        %v5195 = vmul.f32 %v5194, %v5193
        %v5196 = vmul.f32 0.5, %v5195
        %v5197 = vsub.f32 1.5, %v5196
        %v5198 = vmul.f32 %v5193, %v5197
        %vm5199 = vweird.f32 %v5141
        %vm5200 = vweird.f32 %v5193
        %vm5201 = vmor %vm5199, %vm5200
        %v5202 = vsel %vm5201, %v5193, %v5198
        %v5203 = vrsqrt.pop %v5142
        %v5204 = vmul.f32 %v5203, %v5142
        %v5205 = vmul.f32 %v5204, %v5203
        %v5206 = vmul.f32 0.5, %v5205
        %v5207 = vsub.f32 1.5, %v5206
        %v5208 = vmul.f32 %v5203, %v5207
        %vm5209 = vweird.f32 %v5142
        %vm5210 = vweird.f32 %v5203
        %vm5211 = vmor %vm5209, %vm5210
        %v5212 = vsel %vm5211, %v5203, %v5208
        %v5213 = vrsqrt.pop %v5143
        %v5214 = vmul.f32 %v5213, %v5143
        %v5215 = vmul.f32 %v5214, %v5213
        %v5216 = vmul.f32 0.5, %v5215
        %v5217 = vsub.f32 1.5, %v5216
        %v5218 = vmul.f32 %v5213, %v5217
        %vm5219 = vweird.f32 %v5143
        %vm5220 = vweird.f32 %v5213
        %vm5221 = vmor %vm5219, %vm5220
        %v5222 = vsel %vm5221, %v5213, %v5218
        %v5223 = vrsqrt.pop %v5144
        %v5224 = vmul.f32 %v5223, %v5144
        %v5225 = vmul.f32 %v5224, %v5223
        %v5226 = vmul.f32 0.5, %v5225
        %v5227 = vsub.f32 1.5, %v5226
        %v5228 = vmul.f32 %v5223, %v5227
        %vm5229 = vweird.f32 %v5144
        %vm5230 = vweird.f32 %v5223
        %vm5231 = vmor %vm5229, %vm5230
        %v5232 = vsel %vm5231, %v5223, %v5228
        %v5233 = vrsqrt.pop %v5145
        %v5234 = vmul.f32 %v5233, %v5145
        %v5235 = vmul.f32 %v5234, %v5233
        %v5236 = vmul.f32 0.5, %v5235
        %v5237 = vsub.f32 1.5, %v5236
        %v5238 = vmul.f32 %v5233, %v5237
        %vm5239 = vweird.f32 %v5145
        %vm5240 = vweird.f32 %v5233
        %vm5241 = vmor %vm5239, %vm5240
        %v5242 = vsel %vm5241, %v5233, %v5238
        %v5243 = vrsqrt.pop %v5146
        %v5244 = vmul.f32 %v5243, %v5146
        %v5245 = vmul.f32 %v5244, %v5243
        %v5246 = vmul.f32 0.5, %v5245
        %v5247 = vsub.f32 1.5, %v5246
        %v5248 = vmul.f32 %v5243, %v5247
        %vm5249 = vweird.f32 %v5146
        %vm5250 = vweird.f32 %v5243
        %vm5251 = vmor %vm5249, %vm5250
        %v5252 = vsel %vm5251, %v5243, %v5248
        %v5253 = vrsqrt.pop %v5147
        %v5254 = vmul.f32 %v5253, %v5147
        %v5255 = vmul.f32 %v5254, %v5253
        %v5256 = vmul.f32 0.5, %v5255
        %v5257 = vsub.f32 1.5, %v5256
        %v5258 = vmul.f32 %v5253, %v5257
        %vm5259 = vweird.f32 %v5147
        %vm5260 = vweird.f32 %v5253
        %vm5261 = vmor %vm5259, %vm5260
        %v5262 = vsel %vm5261, %v5253, %v5258
        %v5263 = vrsqrt.pop %v5148
        %v5264 = vmul.f32 %v5263, %v5148
        %v5265 = vmul.f32 %v5264, %v5263
        %v5266 = vmul.f32 0.5, %v5265
        %v5267 = vsub.f32 1.5, %v5266
        %v5268 = vmul.f32 %v5263, %v5267
        %vm5269 = vweird.f32 %v5148
        %vm5270 = vweird.f32 %v5263
        %vm5271 = vmor %vm5269, %vm5270
        %v5272 = vsel %vm5271, %v5263, %v5268
        %v5273 = vrsqrt.pop %v5149
        %v5274 = vmul.f32 %v5273, %v5149
        %v5275 = vmul.f32 %v5274, %v5273
        %v5276 = vmul.f32 0.5, %v5275
        %v5277 = vsub.f32 1.5, %v5276
        %v5278 = vmul.f32 %v5273, %v5277
        %vm5279 = vweird.f32 %v5149
        %vm5280 = vweird.f32 %v5273
        %vm5281 = vmor %vm5279, %vm5280
        %v5282 = vsel %vm5281, %v5273, %v5278
        %v5283 = vrsqrt.pop %v5150
        %v5284 = vmul.f32 %v5283, %v5150
        %v5285 = vmul.f32 %v5284, %v5283
        %v5286 = vmul.f32 0.5, %v5285
        %v5287 = vsub.f32 1.5, %v5286
        %v5288 = vmul.f32 %v5283, %v5287
        %vm5289 = vweird.f32 %v5150
        %vm5290 = vweird.f32 %v5283
        %vm5291 = vmor %vm5289, %vm5290
        %v5292 = vsel %vm5291, %v5283, %v5288
        %v5293 = vrsqrt.pop %v5151
        %v5294 = vmul.f32 %v5293, %v5151
        %v5295 = vmul.f32 %v5294, %v5293
        %v5296 = vmul.f32 0.5, %v5295
        %v5297 = vsub.f32 1.5, %v5296
        %v5298 = vmul.f32 %v5293, %v5297
        %vm5299 = vweird.f32 %v5151
        %vm5300 = vweird.f32 %v5293
        %vm5301 = vmor %vm5299, %vm5300
        %v5302 = vsel %vm5301, %v5293, %v5298
        %v5303 = vrsqrt.pop %v5152
        %v5304 = vmul.f32 %v5303, %v5152
        %v5305 = vmul.f32 %v5304, %v5303
        %v5306 = vmul.f32 0.5, %v5305
        %v5307 = vsub.f32 1.5, %v5306
        %v5308 = vmul.f32 %v5303, %v5307
        %vm5309 = vweird.f32 %v5152
        %vm5310 = vweird.f32 %v5303
        %vm5311 = vmor %vm5309, %vm5310
        %v5312 = vsel %vm5311, %v5303, %v5308
        %v5313 = vmul.f32 %v5008, %v5162
        %v5314 = vmul.f32 %v5009, %v5162
        %v5315 = vmul.f32 %v5010, %v5172
        %v5316 = vmul.f32 %v5011, %v5172
        %v5317 = vmul.f32 %v5012, %v5182
        %v5318 = vmul.f32 %v5013, %v5182
        %v5319 = vmul.f32 %v5014, %v5192
        %v5320 = vmul.f32 %v5015, %v5192
        %v5321 = vmul.f32 %v5016, %v5202
        %v5322 = vmul.f32 %v5017, %v5202
        %v5323 = vmul.f32 %v5018, %v5212
        %v5324 = vmul.f32 %v5019, %v5212
        %v5325 = vmul.f32 %v5020, %v5222
        %v5326 = vmul.f32 %v5021, %v5222
        %v5327 = vmul.f32 %v5022, %v5232
        %v5328 = vmul.f32 %v5023, %v5232
        %v5329 = vmul.f32 %v5024, %v5242
        %v5330 = vmul.f32 %v5025, %v5242
        %v5331 = vmul.f32 %v5026, %v5252
        %v5332 = vmul.f32 %v5027, %v5252
        %v5333 = vmul.f32 %v5028, %v5262
        %v5334 = vmul.f32 %v5029, %v5262
        %v5335 = vmul.f32 %v5030, %v5272
        %v5336 = vmul.f32 %v5031, %v5272
        %v5337 = vmul.f32 %v5032, %v5282
        %v5338 = vmul.f32 %v5033, %v5282
        %v5339 = vmul.f32 %v5034, %v5292
        %v5340 = vmul.f32 %v5035, %v5292
        %v5341 = vmul.f32 %v5036, %v5302
        %v5342 = vmul.f32 %v5037, %v5302
        %v5343 = vmul.f32 %v5038, %v5312
        %v5344 = vmul.f32 %v5039, %v5312
        %v5346 = vperm.slane %v5040, 0
        %v5347 = vperm.slane %v5040, 1
        %v5350 = vmul.f32 %v5313, %v5346
        %v5351 = vmul.f32 %v5314, %v5347
        %v5352 = vmul.f32 %v5315, %v5346
        %v5353 = vmul.f32 %v5316, %v5347
        %v5354 = vmul.f32 %v5317, %v5346
        %v5355 = vmul.f32 %v5318, %v5347
        %v5356 = vmul.f32 %v5319, %v5346
        %v5357 = vmul.f32 %v5320, %v5347
        %v5358 = vmul.f32 %v5321, %v5346
        %v5359 = vmul.f32 %v5322, %v5347
        %v5360 = vmul.f32 %v5323, %v5346
        %v5361 = vmul.f32 %v5324, %v5347
        %v5362 = vmul.f32 %v5325, %v5346
        %v5363 = vmul.f32 %v5326, %v5347
        %v5364 = vmul.f32 %v5327, %v5346
        %v5365 = vmul.f32 %v5328, %v5347
        %v5366 = vmul.f32 %v5329, %v5346
        %v5367 = vmul.f32 %v5330, %v5347
        %v5368 = vmul.f32 %v5331, %v5346
        %v5369 = vmul.f32 %v5332, %v5347
        %v5370 = vmul.f32 %v5333, %v5346
        %v5371 = vmul.f32 %v5334, %v5347
        %v5372 = vmul.f32 %v5335, %v5346
        %v5373 = vmul.f32 %v5336, %v5347
        %v5374 = vmul.f32 %v5337, %v5346
        %v5375 = vmul.f32 %v5338, %v5347
        %v5376 = vmul.f32 %v5339, %v5346
        %v5377 = vmul.f32 %v5340, %v5347
        %v5378 = vmul.f32 %v5341, %v5346
        %v5379 = vmul.f32 %v5342, %v5347
        %v5380 = vmul.f32 %v5343, %v5346
        %v5381 = vmul.f32 %v5344, %v5347
        %v5382 = vpack.c.bf16 %v5352, %v5350
        %v5383 = vpack.c.bf16 %v5353, %v5351
        %v5384 = vpack.c.bf16 %v5356, %v5354
        %v5385 = vpack.c.bf16 %v5357, %v5355
        %v5386 = vpack.c.bf16 %v5360, %v5358
        %v5387 = vpack.c.bf16 %v5361, %v5359
        %v5388 = vpack.c.bf16 %v5364, %v5362
        %v5389 = vpack.c.bf16 %v5365, %v5363
        %v5390 = vpack.c.bf16 %v5368, %v5366
        %v5391 = vpack.c.bf16 %v5369, %v5367
        %v5392 = vpack.c.bf16 %v5372, %v5370
        %v5393 = vpack.c.bf16 %v5373, %v5371
        %v5394 = vpack.c.bf16 %v5376, %v5374
        %v5395 = vpack.c.bf16 %v5377, %v5375
        %v5396 = vpack.c.bf16 %v5380, %v5378
        %v5397 = vpack.c.bf16 %v5381, %v5379
        %v5398 = vld [vmem:[%s379] sm:$0xff]
        %v5399 = vld [vmem:[%s379 + $0x8] sm:$0xff]
        %v5400 = vld [vmem:[%s379 + $0x10] sm:$0xff]
        %v5401 = vld [vmem:[%s379 + $0x18] sm:$0xff]
        %v5402 = vld [vmem:[%s379 + $0x20] sm:$0xff]
        %v5403 = vld [vmem:[%s379 + $0x28] sm:$0xff]
        %v5404 = vld [vmem:[%s379 + $0x30] sm:$0xff]
        %v5405 = vld [vmem:[%s379 + $0x38] sm:$0xff]
        %v5406 = vld [vmem:[%s379 + $0x40] sm:$0xff]
        %v5407 = vld [vmem:[%s379 + $0x48] sm:$0xff]
        %v5408 = vld [vmem:[%s379 + $0x50] sm:$0xff]
        %v5409 = vld [vmem:[%s379 + $0x58] sm:$0xff]
        %v5410 = vld [vmem:[%s379 + $0x60] sm:$0xff]
        %v5411 = vld [vmem:[%s379 + $0x68] sm:$0xff]
        %v5412 = vld [vmem:[%s379 + $0x70] sm:$0xff]
        %v5413 = vld [vmem:[%s379 + $0x78] sm:$0xff]
        %v5414 = vld [vmem:[%s379 + $0x80] sm:$0xff]
        %v5415 = vld [vmem:[%s379 + $0x88] sm:$0xff]
        %v5416 = vld [vmem:[%s379 + $0x90] sm:$0xff]
        %v5417 = vld [vmem:[%s379 + $0x98] sm:$0xff]
        %v5418 = vld [vmem:[%s379 + $0xa0] sm:$0xff]
        %v5419 = vld [vmem:[%s379 + $0xa8] sm:$0xff]
        %v5420 = vld [vmem:[%s379 + $0xb0] sm:$0xff]
        %v5421 = vld [vmem:[%s379 + $0xb8] sm:$0xff]
        %v5422 = vld [vmem:[%s379 + $0xc0] sm:$0xff]
        %v5423 = vld [vmem:[%s379 + $0xc8] sm:$0xff]
        %v5424 = vld [vmem:[%s379 + $0xd0] sm:$0xff]
        %v5425 = vld [vmem:[%s379 + $0xd8] sm:$0xff]
        %v5426 = vld [vmem:[%s379 + $0xe0] sm:$0xff]
        %v5427 = vld [vmem:[%s379 + $0xe8] sm:$0xff]
        %v5428 = vld [vmem:[%s379 + $0xf0] sm:$0xff]
        %v5429 = vld [vmem:[%s379 + $0xf8] sm:$0xff]
        %v5430 = vld [vmem:[%s379 + $0x100] sm:$0xff]
        %v5431 = vld [vmem:[%s379 + $0x108] sm:$0xff]
        %v5432 = vld [vmem:[%s379 + $0x110] sm:$0xff]
        %v5433 = vld [vmem:[%s379 + $0x118] sm:$0xff]
        %v5434 = vld [vmem:[%s379 + $0x120] sm:$0xff]
        %v5435 = vld [vmem:[%s379 + $0x128] sm:$0xff]
        %v5436 = vld [vmem:[%s379 + $0x130] sm:$0xff]
        %v5437 = vld [vmem:[%s379 + $0x138] sm:$0xff]
        %v5438 = vld [vmem:[%s379 + $0x140] sm:$0xff]
        %v5439 = vld [vmem:[%s379 + $0x148] sm:$0xff]
        %v5440 = vld [vmem:[%s379 + $0x150] sm:$0xff]
        %v5441 = vld [vmem:[%s379 + $0x158] sm:$0xff]
        %v5442 = vld [vmem:[%s379 + $0x160] sm:$0xff]
        %v5443 = vld [vmem:[%s379 + $0x168] sm:$0xff]
        %v5444 = vld [vmem:[%s379 + $0x170] sm:$0xff]
        %v5445 = vld [vmem:[%s379 + $0x178] sm:$0xff]
        %v5446 = vld [vmem:[%s379 + $0x180] sm:$0xff]
        %v5447 = vld [vmem:[%s379 + $0x188] sm:$0xff]
        %v5448 = vld [vmem:[%s379 + $0x190] sm:$0xff]
        %v5449 = vld [vmem:[%s379 + $0x198] sm:$0xff]
        %v5450 = vld [vmem:[%s379 + $0x1a0] sm:$0xff]
        %v5451 = vld [vmem:[%s379 + $0x1a8] sm:$0xff]
        %v5452 = vld [vmem:[%s379 + $0x1b0] sm:$0xff]
        %v5453 = vld [vmem:[%s379 + $0x1b8] sm:$0xff]
        %v5454 = vld [vmem:[%s379 + $0x1c0] sm:$0xff]
        %v5455 = vld [vmem:[%s379 + $0x1c8] sm:$0xff]
        %v5456 = vld [vmem:[%s379 + $0x1d0] sm:$0xff]
        %v5457 = vld [vmem:[%s379 + $0x1d8] sm:$0xff]
        %v5458 = vld [vmem:[%s379 + $0x1e0] sm:$0xff]
        %v5459 = vld [vmem:[%s379 + $0x1e8] sm:$0xff]
        %v5460 = vld [vmem:[%s379 + $0x1f0] sm:$0xff]
        %v5461 = vld [vmem:[%s379 + $0x1f8] sm:$0xff]
        %v5526 = vunpack.c.l.b16 %v5398
        %v5527 = vunpack.c.h.b16 %v5398
        %v5528 = vunpack.c.l.b16 %v5399
        %v5529 = vunpack.c.h.b16 %v5399
        %v5530 = vunpack.c.l.b16 %v5400
        %v5531 = vunpack.c.h.b16 %v5400
        %v5532 = vunpack.c.l.b16 %v5401
        %v5533 = vunpack.c.h.b16 %v5401
        %v5534 = vunpack.c.l.b16 %v5402
        %v5535 = vunpack.c.h.b16 %v5402
        %v5536 = vunpack.c.l.b16 %v5403
        %v5537 = vunpack.c.h.b16 %v5403
        %v5538 = vunpack.c.l.b16 %v5404
        %v5539 = vunpack.c.h.b16 %v5404
        %v5540 = vunpack.c.l.b16 %v5405
        %v5541 = vunpack.c.h.b16 %v5405
        %v5542 = vunpack.c.l.b16 %v5406
        %v5543 = vunpack.c.h.b16 %v5406
        %v5544 = vunpack.c.l.b16 %v5407
        %v5545 = vunpack.c.h.b16 %v5407
        %v5546 = vunpack.c.l.b16 %v5408
        %v5547 = vunpack.c.h.b16 %v5408
        %v5548 = vunpack.c.l.b16 %v5409
        %v5549 = vunpack.c.h.b16 %v5409
        %v5550 = vunpack.c.l.b16 %v5410
        %v5551 = vunpack.c.h.b16 %v5410
        %v5552 = vunpack.c.l.b16 %v5411
        %v5553 = vunpack.c.h.b16 %v5411
        %v5554 = vunpack.c.l.b16 %v5412
        %v5555 = vunpack.c.h.b16 %v5412
        %v5556 = vunpack.c.l.b16 %v5413
        %v5557 = vunpack.c.h.b16 %v5413
        %v5558 = vunpack.c.l.b16 %v5414
        %v5559 = vunpack.c.h.b16 %v5414
        %v5560 = vunpack.c.l.b16 %v5415
        %v5561 = vunpack.c.h.b16 %v5415
        %v5562 = vunpack.c.l.b16 %v5416
        %v5563 = vunpack.c.h.b16 %v5416
        %v5564 = vunpack.c.l.b16 %v5417
        %v5565 = vunpack.c.h.b16 %v5417
        %v5566 = vunpack.c.l.b16 %v5418
        %v5567 = vunpack.c.h.b16 %v5418
        %v5568 = vunpack.c.l.b16 %v5419
        %v5569 = vunpack.c.h.b16 %v5419
        %v5570 = vunpack.c.l.b16 %v5420
        %v5571 = vunpack.c.h.b16 %v5420
        %v5572 = vunpack.c.l.b16 %v5421
        %v5573 = vunpack.c.h.b16 %v5421
        %v5574 = vunpack.c.l.b16 %v5422
        %v5575 = vunpack.c.h.b16 %v5422
        %v5576 = vunpack.c.l.b16 %v5423
        %v5577 = vunpack.c.h.b16 %v5423
        %v5578 = vunpack.c.l.b16 %v5424
        %v5579 = vunpack.c.h.b16 %v5424
        %v5580 = vunpack.c.l.b16 %v5425
        %v5581 = vunpack.c.h.b16 %v5425
        %v5582 = vunpack.c.l.b16 %v5426
        %v5583 = vunpack.c.h.b16 %v5426
        %v5584 = vunpack.c.l.b16 %v5427
        %v5585 = vunpack.c.h.b16 %v5427
        %v5586 = vunpack.c.l.b16 %v5428
        %v5587 = vunpack.c.h.b16 %v5428
        %v5588 = vunpack.c.l.b16 %v5429
        %v5589 = vunpack.c.h.b16 %v5429
        %v5590 = vunpack.c.l.b16 %v5430
        %v5591 = vunpack.c.h.b16 %v5430
        %v5592 = vunpack.c.l.b16 %v5431
        %v5593 = vunpack.c.h.b16 %v5431
        %v5594 = vunpack.c.l.b16 %v5432
        %v5595 = vunpack.c.h.b16 %v5432
        %v5596 = vunpack.c.l.b16 %v5433
        %v5597 = vunpack.c.h.b16 %v5433
        %v5598 = vunpack.c.l.b16 %v5434
        %v5599 = vunpack.c.h.b16 %v5434
        %v5600 = vunpack.c.l.b16 %v5435
        %v5601 = vunpack.c.h.b16 %v5435
        %v5602 = vunpack.c.l.b16 %v5436
        %v5603 = vunpack.c.h.b16 %v5436
        %v5604 = vunpack.c.l.b16 %v5437
        %v5605 = vunpack.c.h.b16 %v5437
        %v5606 = vunpack.c.l.b16 %v5438
        %v5607 = vunpack.c.h.b16 %v5438
        %v5608 = vunpack.c.l.b16 %v5439
        %v5609 = vunpack.c.h.b16 %v5439
        %v5610 = vunpack.c.l.b16 %v5440
        %v5611 = vunpack.c.h.b16 %v5440
        %v5612 = vunpack.c.l.b16 %v5441
        %v5613 = vunpack.c.h.b16 %v5441
        %v5614 = vunpack.c.l.b16 %v5442
        %v5615 = vunpack.c.h.b16 %v5442
        %v5616 = vunpack.c.l.b16 %v5443
        %v5617 = vunpack.c.h.b16 %v5443
        %v5618 = vunpack.c.l.b16 %v5444
        %v5619 = vunpack.c.h.b16 %v5444
        %v5620 = vunpack.c.l.b16 %v5445
        %v5621 = vunpack.c.h.b16 %v5445
        %v5622 = vunpack.c.l.b16 %v5446
        %v5623 = vunpack.c.h.b16 %v5446
        %v5624 = vunpack.c.l.b16 %v5447
        %v5625 = vunpack.c.h.b16 %v5447
        %v5626 = vunpack.c.l.b16 %v5448
        %v5627 = vunpack.c.h.b16 %v5448
        %v5628 = vunpack.c.l.b16 %v5449
        %v5629 = vunpack.c.h.b16 %v5449
        %v5630 = vunpack.c.l.b16 %v5450
        %v5631 = vunpack.c.h.b16 %v5450
        %v5632 = vunpack.c.l.b16 %v5451
        %v5633 = vunpack.c.h.b16 %v5451
        %v5634 = vunpack.c.l.b16 %v5452
        %v5635 = vunpack.c.h.b16 %v5452
        %v5636 = vunpack.c.l.b16 %v5453
        %v5637 = vunpack.c.h.b16 %v5453
        %v5638 = vunpack.c.l.b16 %v5454
        %v5639 = vunpack.c.h.b16 %v5454
        %v5640 = vunpack.c.l.b16 %v5455
        %v5641 = vunpack.c.h.b16 %v5455
        %v5642 = vunpack.c.l.b16 %v5456
        %v5643 = vunpack.c.h.b16 %v5456
        %v5644 = vunpack.c.l.b16 %v5457
        %v5645 = vunpack.c.h.b16 %v5457
        %v5646 = vunpack.c.l.b16 %v5458
        %v5647 = vunpack.c.h.b16 %v5458
        %v5648 = vunpack.c.l.b16 %v5459
        %v5649 = vunpack.c.h.b16 %v5459
        %v5650 = vunpack.c.l.b16 %v5460
        %v5651 = vunpack.c.h.b16 %v5460
        %v5652 = vunpack.c.l.b16 %v5461
        %v5653 = vunpack.c.h.b16 %v5461
        %v5654 = vpack.c.b16 %v5530, %v5526
        %v5655 = vpack.c.b16 %v5531, %v5527
        %v5656 = vpack.c.b16 %v5532, %v5528
        %v5657 = vpack.c.b16 %v5533, %v5529
        %v5658 = vpack.c.b16 %v5538, %v5534
        %v5659 = vpack.c.b16 %v5539, %v5535
        %v5660 = vpack.c.b16 %v5540, %v5536
        %v5661 = vpack.c.b16 %v5541, %v5537
        %v5662 = vpack.c.b16 %v5546, %v5542
        %v5663 = vpack.c.b16 %v5547, %v5543
        %v5664 = vpack.c.b16 %v5548, %v5544
        %v5665 = vpack.c.b16 %v5549, %v5545
        %v5666 = vpack.c.b16 %v5554, %v5550
        %v5667 = vpack.c.b16 %v5555, %v5551
        %v5668 = vpack.c.b16 %v5556, %v5552
        %v5669 = vpack.c.b16 %v5557, %v5553
        %v5670 = vpack.c.b16 %v5562, %v5558
        %v5671 = vpack.c.b16 %v5563, %v5559
        %v5672 = vpack.c.b16 %v5564, %v5560
        %v5673 = vpack.c.b16 %v5565, %v5561
        %v5674 = vpack.c.b16 %v5570, %v5566
        %v5675 = vpack.c.b16 %v5571, %v5567
        %v5676 = vpack.c.b16 %v5572, %v5568
        %v5677 = vpack.c.b16 %v5573, %v5569
        %v5678 = vpack.c.b16 %v5578, %v5574
        %v5679 = vpack.c.b16 %v5579, %v5575
        %v5680 = vpack.c.b16 %v5580, %v5576
        %v5681 = vpack.c.b16 %v5581, %v5577
        %v5682 = vpack.c.b16 %v5586, %v5582
        %v5683 = vpack.c.b16 %v5587, %v5583
        %v5684 = vpack.c.b16 %v5588, %v5584
        %v5685 = vpack.c.b16 %v5589, %v5585
        %v5686 = vpack.c.b16 %v5594, %v5590
        %v5687 = vpack.c.b16 %v5595, %v5591
        %v5688 = vpack.c.b16 %v5596, %v5592
        %v5689 = vpack.c.b16 %v5597, %v5593
        %v5690 = vpack.c.b16 %v5602, %v5598
        %v5691 = vpack.c.b16 %v5603, %v5599
        %v5692 = vpack.c.b16 %v5604, %v5600
        %v5693 = vpack.c.b16 %v5605, %v5601
        %v5694 = vpack.c.b16 %v5610, %v5606
        %v5695 = vpack.c.b16 %v5611, %v5607
        %v5696 = vpack.c.b16 %v5612, %v5608
        %v5697 = vpack.c.b16 %v5613, %v5609
        %v5698 = vpack.c.b16 %v5618, %v5614
        %v5699 = vpack.c.b16 %v5619, %v5615
        %v5700 = vpack.c.b16 %v5620, %v5616
        %v5701 = vpack.c.b16 %v5621, %v5617
        %v5702 = vpack.c.b16 %v5626, %v5622
        %v5703 = vpack.c.b16 %v5627, %v5623
        %v5704 = vpack.c.b16 %v5628, %v5624
        %v5705 = vpack.c.b16 %v5629, %v5625
        %v5706 = vpack.c.b16 %v5634, %v5630
        %v5707 = vpack.c.b16 %v5635, %v5631
        %v5708 = vpack.c.b16 %v5636, %v5632
        %v5709 = vpack.c.b16 %v5637, %v5633
        %v5710 = vpack.c.b16 %v5642, %v5638
        %v5711 = vpack.c.b16 %v5643, %v5639
        %v5712 = vpack.c.b16 %v5644, %v5640
        %v5713 = vpack.c.b16 %v5645, %v5641
        %v5714 = vpack.c.b16 %v5650, %v5646
        %v5715 = vpack.c.b16 %v5651, %v5647
        %v5716 = vpack.c.b16 %v5652, %v5648
        %v5717 = vpack.c.b16 %v5653, %v5649
        %5782 = vmatpush.bf16.msra.mxu0 %v5682
        %5783 = vmatpush.bf16.msra.mxu0 %v5678
        %5784 = vmatpush.bf16.msra.mxu0 %v5674
        %5785 = vmatpush.bf16.msra.mxu0 %v5670
        %5786 = vmatpush.bf16.msra.mxu0 %v5666
        %5787 = vmatpush.bf16.msra.mxu0 %v5662
        %5788 = vmatpush.bf16.msra.mxu0 %v5658
        %5789 = vmatpush.bf16.msra.mxu0 %v5654
        %5790 = vmatmul.bf16.gmra.mxu0 %v5382
        %v5791 = vpop.f32.mrf.mxu0
        %v5792 = vadd.f32 0.0, %v5791
        %v5793 = vpop.f32.mrf.mxu0
        %v5794 = vadd.f32 0.0, %v5793
        %5795 = vmatmul.bf16.gmra.mxu0 %v5384
        %v5796 = vpop.f32.mrf.mxu0
        %v5797 = vadd.f32 0.0, %v5796
        %v5798 = vpop.f32.mrf.mxu0
        %v5799 = vadd.f32 0.0, %v5798
        %5800 = vmatmul.bf16.gmra.mxu0 %v5386
        %v5801 = vpop.f32.mrf.mxu0
        %v5802 = vadd.f32 0.0, %v5801
        %v5803 = vpop.f32.mrf.mxu0
        %v5804 = vadd.f32 0.0, %v5803
        %5805 = vmatmul.bf16.gmra.mxu0 %v5388
        %v5806 = vpop.f32.mrf.mxu0
        %v5807 = vadd.f32 0.0, %v5806
        %v5808 = vpop.f32.mrf.mxu0
        %v5809 = vadd.f32 0.0, %v5808
        %5810 = vmatmul.bf16.gmra.mxu0 %v5390
        %v5811 = vpop.f32.mrf.mxu0
        %v5812 = vadd.f32 0.0, %v5811
        %v5813 = vpop.f32.mrf.mxu0
        %v5814 = vadd.f32 0.0, %v5813
        %5815 = vmatmul.bf16.gmra.mxu0 %v5392
        %v5816 = vpop.f32.mrf.mxu0
        %v5817 = vadd.f32 0.0, %v5816
        %v5818 = vpop.f32.mrf.mxu0
        %v5819 = vadd.f32 0.0, %v5818
        %5820 = vmatmul.bf16.gmra.mxu0 %v5394
        %v5821 = vpop.f32.mrf.mxu0
        %v5822 = vadd.f32 0.0, %v5821
        %v5823 = vpop.f32.mrf.mxu0
        %v5824 = vadd.f32 0.0, %v5823
        %5825 = vmatmul.bf16.gmra.mxu0 %v5396
        %v5826 = vpop.f32.mrf.mxu0
        %v5827 = vadd.f32 0.0, %v5826
        %v5828 = vpop.f32.mrf.mxu0
        %v5829 = vadd.f32 0.0, %v5828
        %5830 = vdwg.mxu0
        %5831 = vmatpush.bf16.msra.mxu0 %v5714
        %5832 = vmatpush.bf16.msra.mxu0 %v5710
        %5833 = vmatpush.bf16.msra.mxu0 %v5706
        %5834 = vmatpush.bf16.msra.mxu0 %v5702
        %5835 = vmatpush.bf16.msra.mxu0 %v5698
        %5836 = vmatpush.bf16.msra.mxu0 %v5694
        %5837 = vmatpush.bf16.msra.mxu0 %v5690
        %5838 = vmatpush.bf16.msra.mxu0 %v5686
        %5839 = vmatmul.bf16.gmra.mxu0 %v5383
        %v5840 = vpop.f32.mrf.mxu0
        %v5841 = vadd.f32 %v5792, %v5840
        %v5842 = vpop.f32.mrf.mxu0
        %v5843 = vadd.f32 %v5794, %v5842
        %5844 = vmatmul.bf16.gmra.mxu0 %v5385
        %v5845 = vpop.f32.mrf.mxu0
        %v5846 = vadd.f32 %v5797, %v5845
        %v5847 = vpop.f32.mrf.mxu0
        %v5848 = vadd.f32 %v5799, %v5847
        %5849 = vmatmul.bf16.gmra.mxu0 %v5387
        %v5850 = vpop.f32.mrf.mxu0
        %v5851 = vadd.f32 %v5802, %v5850
        %v5852 = vpop.f32.mrf.mxu0
        %v5853 = vadd.f32 %v5804, %v5852
        %5854 = vmatmul.bf16.gmra.mxu0 %v5389
        %v5855 = vpop.f32.mrf.mxu0
        %v5856 = vadd.f32 %v5807, %v5855
        %v5857 = vpop.f32.mrf.mxu0
        %v5858 = vadd.f32 %v5809, %v5857
        %5859 = vmatmul.bf16.gmra.mxu0 %v5391
        %v5860 = vpop.f32.mrf.mxu0
        %v5861 = vadd.f32 %v5812, %v5860
        %v5862 = vpop.f32.mrf.mxu0
        %v5863 = vadd.f32 %v5814, %v5862
        %5864 = vmatmul.bf16.gmra.mxu0 %v5393
        %v5865 = vpop.f32.mrf.mxu0
        %v5866 = vadd.f32 %v5817, %v5865
        %v5867 = vpop.f32.mrf.mxu0
        %v5868 = vadd.f32 %v5819, %v5867
        %5869 = vmatmul.bf16.gmra.mxu0 %v5395
        %v5870 = vpop.f32.mrf.mxu0
        %v5871 = vadd.f32 %v5822, %v5870
        %v5872 = vpop.f32.mrf.mxu0
        %v5873 = vadd.f32 %v5824, %v5872
        %5874 = vmatmul.bf16.gmra.mxu0 %v5397
        %v5875 = vpop.f32.mrf.mxu0
        %v5876 = vadd.f32 %v5827, %v5875
        %v5877 = vpop.f32.mrf.mxu0
        %v5878 = vadd.f32 %v5829, %v5877
        %5879 = vdwg.mxu0
        %5880 = vmatpush.bf16.msra.mxu0 %v5683
        %5881 = vmatpush.bf16.msra.mxu0 %v5679
        %5882 = vmatpush.bf16.msra.mxu0 %v5675
        %5883 = vmatpush.bf16.msra.mxu0 %v5671
        %5884 = vmatpush.bf16.msra.mxu0 %v5667
        %5885 = vmatpush.bf16.msra.mxu0 %v5663
        %5886 = vmatpush.bf16.msra.mxu0 %v5659
        %5887 = vmatpush.bf16.msra.mxu0 %v5655
        %5888 = vmatmul.bf16.gmra.mxu0 %v5382
        %v5889 = vpop.f32.mrf.mxu0
        %v5890 = vadd.f32 0.0, %v5889
        %v5891 = vpop.f32.mrf.mxu0
        %v5892 = vadd.f32 0.0, %v5891
        %5893 = vmatmul.bf16.gmra.mxu0 %v5384
        %v5894 = vpop.f32.mrf.mxu0
        %v5895 = vadd.f32 0.0, %v5894
        %v5896 = vpop.f32.mrf.mxu0
        %v5897 = vadd.f32 0.0, %v5896
        %5898 = vmatmul.bf16.gmra.mxu0 %v5386
        %v5899 = vpop.f32.mrf.mxu0
        %v5900 = vadd.f32 0.0, %v5899
        %v5901 = vpop.f32.mrf.mxu0
        %v5902 = vadd.f32 0.0, %v5901
        %5903 = vmatmul.bf16.gmra.mxu0 %v5388
        %v5904 = vpop.f32.mrf.mxu0
        %v5905 = vadd.f32 0.0, %v5904
        %v5906 = vpop.f32.mrf.mxu0
        %v5907 = vadd.f32 0.0, %v5906
        %5908 = vmatmul.bf16.gmra.mxu0 %v5390
        %v5909 = vpop.f32.mrf.mxu0
        %v5910 = vadd.f32 0.0, %v5909
        %v5911 = vpop.f32.mrf.mxu0
        %v5912 = vadd.f32 0.0, %v5911
        %5913 = vmatmul.bf16.gmra.mxu0 %v5392
        %v5914 = vpop.f32.mrf.mxu0
        %v5915 = vadd.f32 0.0, %v5914
        %v5916 = vpop.f32.mrf.mxu0
        %v5917 = vadd.f32 0.0, %v5916
        %5918 = vmatmul.bf16.gmra.mxu0 %v5394
        %v5919 = vpop.f32.mrf.mxu0
        %v5920 = vadd.f32 0.0, %v5919
        %v5921 = vpop.f32.mrf.mxu0
        %v5922 = vadd.f32 0.0, %v5921
        %5923 = vmatmul.bf16.gmra.mxu0 %v5396
        %v5924 = vpop.f32.mrf.mxu0
        %v5925 = vadd.f32 0.0, %v5924
        %v5926 = vpop.f32.mrf.mxu0
        %v5927 = vadd.f32 0.0, %v5926
        %5928 = vdwg.mxu0
        %5929 = vmatpush.bf16.msra.mxu0 %v5715
        %5930 = vmatpush.bf16.msra.mxu0 %v5711
        %5931 = vmatpush.bf16.msra.mxu0 %v5707
        %5932 = vmatpush.bf16.msra.mxu0 %v5703
        %5933 = vmatpush.bf16.msra.mxu0 %v5699
        %5934 = vmatpush.bf16.msra.mxu0 %v5695
        %5935 = vmatpush.bf16.msra.mxu0 %v5691
        %5936 = vmatpush.bf16.msra.mxu0 %v5687
        %5937 = vmatmul.bf16.gmra.mxu0 %v5383
        %v5938 = vpop.f32.mrf.mxu0
        %v5939 = vadd.f32 %v5890, %v5938
        %v5940 = vpop.f32.mrf.mxu0
        %v5941 = vadd.f32 %v5892, %v5940
        %5942 = vmatmul.bf16.gmra.mxu0 %v5385
        %v5943 = vpop.f32.mrf.mxu0
        %v5944 = vadd.f32 %v5895, %v5943
        %v5945 = vpop.f32.mrf.mxu0
        %v5946 = vadd.f32 %v5897, %v5945
        %5947 = vmatmul.bf16.gmra.mxu0 %v5387
        %v5948 = vpop.f32.mrf.mxu0
        %v5949 = vadd.f32 %v5900, %v5948
        %v5950 = vpop.f32.mrf.mxu0
        %v5951 = vadd.f32 %v5902, %v5950
        %5952 = vmatmul.bf16.gmra.mxu0 %v5389
        %v5953 = vpop.f32.mrf.mxu0
        %v5954 = vadd.f32 %v5905, %v5953
        %v5955 = vpop.f32.mrf.mxu0
        %v5956 = vadd.f32 %v5907, %v5955
        %5957 = vmatmul.bf16.gmra.mxu0 %v5391
        %v5958 = vpop.f32.mrf.mxu0
        %v5959 = vadd.f32 %v5910, %v5958
        %v5960 = vpop.f32.mrf.mxu0
        %v5961 = vadd.f32 %v5912, %v5960
        %5962 = vmatmul.bf16.gmra.mxu0 %v5393
        %v5963 = vpop.f32.mrf.mxu0
        %v5964 = vadd.f32 %v5915, %v5963
        %v5965 = vpop.f32.mrf.mxu0
        %v5966 = vadd.f32 %v5917, %v5965
        %5967 = vmatmul.bf16.gmra.mxu0 %v5395
        %v5968 = vpop.f32.mrf.mxu0
        %v5969 = vadd.f32 %v5920, %v5968
        %v5970 = vpop.f32.mrf.mxu0
        %v5971 = vadd.f32 %v5922, %v5970
        %5972 = vmatmul.bf16.gmra.mxu0 %v5397
        %v5973 = vpop.f32.mrf.mxu0
        %v5974 = vadd.f32 %v5925, %v5973
        %v5975 = vpop.f32.mrf.mxu0
        %v5976 = vadd.f32 %v5927, %v5975
        %5977 = vdwg.mxu0
        %5978 = vmatpush.bf16.msra.mxu0 %v5684
        %5979 = vmatpush.bf16.msra.mxu0 %v5680
        %5980 = vmatpush.bf16.msra.mxu0 %v5676
        %5981 = vmatpush.bf16.msra.mxu0 %v5672
        %5982 = vmatpush.bf16.msra.mxu0 %v5668
        %5983 = vmatpush.bf16.msra.mxu0 %v5664
        %5984 = vmatpush.bf16.msra.mxu0 %v5660
        %5985 = vmatpush.bf16.msra.mxu0 %v5656
        %5986 = vmatmul.bf16.gmra.mxu0 %v5382
        %v5987 = vpop.f32.mrf.mxu0
        %v5988 = vadd.f32 0.0, %v5987
        %v5989 = vpop.f32.mrf.mxu0
        %v5990 = vadd.f32 0.0, %v5989
        %5991 = vmatmul.bf16.gmra.mxu0 %v5384
        %v5992 = vpop.f32.mrf.mxu0
        %v5993 = vadd.f32 0.0, %v5992
        %v5994 = vpop.f32.mrf.mxu0
        %v5995 = vadd.f32 0.0, %v5994
        %5996 = vmatmul.bf16.gmra.mxu0 %v5386
        %v5997 = vpop.f32.mrf.mxu0
        %v5998 = vadd.f32 0.0, %v5997
        %v5999 = vpop.f32.mrf.mxu0
        %v6000 = vadd.f32 0.0, %v5999
        %6001 = vmatmul.bf16.gmra.mxu0 %v5388
        %v6002 = vpop.f32.mrf.mxu0
        %v6003 = vadd.f32 0.0, %v6002
        %v6004 = vpop.f32.mrf.mxu0
        %v6005 = vadd.f32 0.0, %v6004
        %6006 = vmatmul.bf16.gmra.mxu0 %v5390
        %v6007 = vpop.f32.mrf.mxu0
        %v6008 = vadd.f32 0.0, %v6007
        %v6009 = vpop.f32.mrf.mxu0
        %v6010 = vadd.f32 0.0, %v6009
        %6011 = vmatmul.bf16.gmra.mxu0 %v5392
        %v6012 = vpop.f32.mrf.mxu0
        %v6013 = vadd.f32 0.0, %v6012
        %v6014 = vpop.f32.mrf.mxu0
        %v6015 = vadd.f32 0.0, %v6014
        %6016 = vmatmul.bf16.gmra.mxu0 %v5394
        %v6017 = vpop.f32.mrf.mxu0
        %v6018 = vadd.f32 0.0, %v6017
        %v6019 = vpop.f32.mrf.mxu0
        %v6020 = vadd.f32 0.0, %v6019
        %6021 = vmatmul.bf16.gmra.mxu0 %v5396
        %v6022 = vpop.f32.mrf.mxu0
        %v6023 = vadd.f32 0.0, %v6022
        %v6024 = vpop.f32.mrf.mxu0
        %v6025 = vadd.f32 0.0, %v6024
        %6026 = vdwg.mxu0
        %6027 = vmatpush.bf16.msra.mxu0 %v5716
        %6028 = vmatpush.bf16.msra.mxu0 %v5712
        %6029 = vmatpush.bf16.msra.mxu0 %v5708
        %6030 = vmatpush.bf16.msra.mxu0 %v5704
        %6031 = vmatpush.bf16.msra.mxu0 %v5700
        %6032 = vmatpush.bf16.msra.mxu0 %v5696
        %6033 = vmatpush.bf16.msra.mxu0 %v5692
        %6034 = vmatpush.bf16.msra.mxu0 %v5688
        %6035 = vmatmul.bf16.gmra.mxu0 %v5383
        %v6036 = vpop.f32.mrf.mxu0
        %v6037 = vadd.f32 %v5988, %v6036
        %v6038 = vpop.f32.mrf.mxu0
        %v6039 = vadd.f32 %v5990, %v6038
        %6040 = vmatmul.bf16.gmra.mxu0 %v5385
        %v6041 = vpop.f32.mrf.mxu0
        %v6042 = vadd.f32 %v5993, %v6041
        %v6043 = vpop.f32.mrf.mxu0
        %v6044 = vadd.f32 %v5995, %v6043
        %6045 = vmatmul.bf16.gmra.mxu0 %v5387
        %v6046 = vpop.f32.mrf.mxu0
        %v6047 = vadd.f32 %v5998, %v6046
        %v6048 = vpop.f32.mrf.mxu0
        %v6049 = vadd.f32 %v6000, %v6048
        %6050 = vmatmul.bf16.gmra.mxu0 %v5389
        %v6051 = vpop.f32.mrf.mxu0
        %v6052 = vadd.f32 %v6003, %v6051
        %v6053 = vpop.f32.mrf.mxu0
        %v6054 = vadd.f32 %v6005, %v6053
        %6055 = vmatmul.bf16.gmra.mxu0 %v5391
        %v6056 = vpop.f32.mrf.mxu0
        %v6057 = vadd.f32 %v6008, %v6056
        %v6058 = vpop.f32.mrf.mxu0
        %v6059 = vadd.f32 %v6010, %v6058
        %6060 = vmatmul.bf16.gmra.mxu0 %v5393
        %v6061 = vpop.f32.mrf.mxu0
        %v6062 = vadd.f32 %v6013, %v6061
        %v6063 = vpop.f32.mrf.mxu0
        %v6064 = vadd.f32 %v6015, %v6063
        %6065 = vmatmul.bf16.gmra.mxu0 %v5395
        %v6066 = vpop.f32.mrf.mxu0
        %v6067 = vadd.f32 %v6018, %v6066
        %v6068 = vpop.f32.mrf.mxu0
        %v6069 = vadd.f32 %v6020, %v6068
        %6070 = vmatmul.bf16.gmra.mxu0 %v5397
        %v6071 = vpop.f32.mrf.mxu0
        %v6072 = vadd.f32 %v6023, %v6071
        %v6073 = vpop.f32.mrf.mxu0
        %v6074 = vadd.f32 %v6025, %v6073
        %6075 = vdwg.mxu0
        %6076 = vmatpush.bf16.msra.mxu0 %v5685
        %6077 = vmatpush.bf16.msra.mxu0 %v5681
        %6078 = vmatpush.bf16.msra.mxu0 %v5677
        %6079 = vmatpush.bf16.msra.mxu0 %v5673
        %6080 = vmatpush.bf16.msra.mxu0 %v5669
        %6081 = vmatpush.bf16.msra.mxu0 %v5665
        %6082 = vmatpush.bf16.msra.mxu0 %v5661
        %6083 = vmatpush.bf16.msra.mxu0 %v5657
        %6084 = vmatmul.bf16.gmra.mxu0 %v5382
        %v6085 = vpop.f32.mrf.mxu0
        %v6086 = vadd.f32 0.0, %v6085
        %v6087 = vpop.f32.mrf.mxu0
        %v6088 = vadd.f32 0.0, %v6087
        %6089 = vmatmul.bf16.gmra.mxu0 %v5384
        %v6090 = vpop.f32.mrf.mxu0
        %v6091 = vadd.f32 0.0, %v6090
        %v6092 = vpop.f32.mrf.mxu0
        %v6093 = vadd.f32 0.0, %v6092
        %6094 = vmatmul.bf16.gmra.mxu0 %v5386
        %v6095 = vpop.f32.mrf.mxu0
        %v6096 = vadd.f32 0.0, %v6095
        %v6097 = vpop.f32.mrf.mxu0
        %v6098 = vadd.f32 0.0, %v6097
        %6099 = vmatmul.bf16.gmra.mxu0 %v5388
        %v6100 = vpop.f32.mrf.mxu0
        %v6101 = vadd.f32 0.0, %v6100
        %v6102 = vpop.f32.mrf.mxu0
        %v6103 = vadd.f32 0.0, %v6102
        %6104 = vmatmul.bf16.gmra.mxu0 %v5390
        %v6105 = vpop.f32.mrf.mxu0
        %v6106 = vadd.f32 0.0, %v6105
        %v6107 = vpop.f32.mrf.mxu0
        %v6108 = vadd.f32 0.0, %v6107
        %6109 = vmatmul.bf16.gmra.mxu0 %v5392
        %v6110 = vpop.f32.mrf.mxu0
        %v6111 = vadd.f32 0.0, %v6110
        %v6112 = vpop.f32.mrf.mxu0
        %v6113 = vadd.f32 0.0, %v6112
        %6114 = vmatmul.bf16.gmra.mxu0 %v5394
        %v6115 = vpop.f32.mrf.mxu0
        %v6116 = vadd.f32 0.0, %v6115
        %v6117 = vpop.f32.mrf.mxu0
        %v6118 = vadd.f32 0.0, %v6117
        %6119 = vmatmul.bf16.gmra.mxu0 %v5396
        %v6120 = vpop.f32.mrf.mxu0
        %v6121 = vadd.f32 0.0, %v6120
        %v6122 = vpop.f32.mrf.mxu0
        %v6123 = vadd.f32 0.0, %v6122
        %6124 = vdwg.mxu0
        %6125 = vmatpush.bf16.msra.mxu0 %v5717
        %6126 = vmatpush.bf16.msra.mxu0 %v5713
        %6127 = vmatpush.bf16.msra.mxu0 %v5709
        %6128 = vmatpush.bf16.msra.mxu0 %v5705
        %6129 = vmatpush.bf16.msra.mxu0 %v5701
        %6130 = vmatpush.bf16.msra.mxu0 %v5697
        %6131 = vmatpush.bf16.msra.mxu0 %v5693
        %6132 = vmatpush.bf16.msra.mxu0 %v5689
        %6133 = vmatmul.bf16.gmra.mxu0 %v5383
        %v6134 = vpop.f32.mrf.mxu0
        %v6135 = vadd.f32 %v6086, %v6134
        %v6136 = vpop.f32.mrf.mxu0
        %v6137 = vadd.f32 %v6088, %v6136
        %6138 = vmatmul.bf16.gmra.mxu0 %v5385
        %v6139 = vpop.f32.mrf.mxu0
        %v6140 = vadd.f32 %v6091, %v6139
        %v6141 = vpop.f32.mrf.mxu0
        %v6142 = vadd.f32 %v6093, %v6141
        %6143 = vmatmul.bf16.gmra.mxu0 %v5387
        %v6144 = vpop.f32.mrf.mxu0
        %v6145 = vadd.f32 %v6096, %v6144
        %v6146 = vpop.f32.mrf.mxu0
        %v6147 = vadd.f32 %v6098, %v6146
        %6148 = vmatmul.bf16.gmra.mxu0 %v5389
        %v6149 = vpop.f32.mrf.mxu0
        %v6150 = vadd.f32 %v6101, %v6149
        %v6151 = vpop.f32.mrf.mxu0
        %v6152 = vadd.f32 %v6103, %v6151
        %6153 = vmatmul.bf16.gmra.mxu0 %v5391
        %v6154 = vpop.f32.mrf.mxu0
        %v6155 = vadd.f32 %v6106, %v6154
        %v6156 = vpop.f32.mrf.mxu0
        %v6157 = vadd.f32 %v6108, %v6156
        %6158 = vmatmul.bf16.gmra.mxu0 %v5393
        %v6159 = vpop.f32.mrf.mxu0
        %v6160 = vadd.f32 %v6111, %v6159
        %v6161 = vpop.f32.mrf.mxu0
        %v6162 = vadd.f32 %v6113, %v6161
        %6163 = vmatmul.bf16.gmra.mxu0 %v5395
        %v6164 = vpop.f32.mrf.mxu0
        %v6165 = vadd.f32 %v6116, %v6164
        %v6166 = vpop.f32.mrf.mxu0
        %v6167 = vadd.f32 %v6118, %v6166
        %6168 = vmatmul.bf16.gmra.mxu0 %v5397
        %v6169 = vpop.f32.mrf.mxu0
        %v6170 = vadd.f32 %v6121, %v6169
        %v6171 = vpop.f32.mrf.mxu0
        %v6172 = vadd.f32 %v6123, %v6171
        %6173 = vdwg.mxu0
        %v6174 = vmax.f32 %v5841, 0.0
        %v6175 = vmax.f32 %v5939, 0.0
        %v6176 = vmax.f32 %v6037, 0.0
        %v6177 = vmax.f32 %v6135, 0.0
        %v6178 = vmax.f32 %v5843, 0.0
        %v6179 = vmax.f32 %v5941, 0.0
        %v6180 = vmax.f32 %v6039, 0.0
        %v6181 = vmax.f32 %v6137, 0.0
        %v6182 = vmax.f32 %v5846, 0.0
        %v6183 = vmax.f32 %v5944, 0.0
        %v6184 = vmax.f32 %v6042, 0.0
        %v6185 = vmax.f32 %v6140, 0.0
        %v6186 = vmax.f32 %v5848, 0.0
        %v6187 = vmax.f32 %v5946, 0.0
        %v6188 = vmax.f32 %v6044, 0.0
        %v6189 = vmax.f32 %v6142, 0.0
        %v6190 = vmax.f32 %v5851, 0.0
        %v6191 = vmax.f32 %v5949, 0.0
        %v6192 = vmax.f32 %v6047, 0.0
        %v6193 = vmax.f32 %v6145, 0.0
        %v6194 = vmax.f32 %v5853, 0.0
        %v6195 = vmax.f32 %v5951, 0.0
        %v6196 = vmax.f32 %v6049, 0.0
        %v6197 = vmax.f32 %v6147, 0.0
        %v6198 = vmax.f32 %v5856, 0.0
        %v6199 = vmax.f32 %v5954, 0.0
        %v6200 = vmax.f32 %v6052, 0.0
        %v6201 = vmax.f32 %v6150, 0.0
        %v6202 = vmax.f32 %v5858, 0.0
        %v6203 = vmax.f32 %v5956, 0.0
        %v6204 = vmax.f32 %v6054, 0.0
        %v6205 = vmax.f32 %v6152, 0.0
        %v6206 = vmax.f32 %v5861, 0.0
        %v6207 = vmax.f32 %v5959, 0.0
        %v6208 = vmax.f32 %v6057, 0.0
        %v6209 = vmax.f32 %v6155, 0.0
        %v6210 = vmax.f32 %v5863, 0.0
        %v6211 = vmax.f32 %v5961, 0.0
        %v6212 = vmax.f32 %v6059, 0.0
        %v6213 = vmax.f32 %v6157, 0.0
        %v6214 = vmax.f32 %v5866, 0.0
        %v6215 = vmax.f32 %v5964, 0.0
        %v6216 = vmax.f32 %v6062, 0.0
        %v6217 = vmax.f32 %v6160, 0.0
        %v6218 = vmax.f32 %v5868, 0.0
        %v6219 = vmax.f32 %v5966, 0.0
        %v6220 = vmax.f32 %v6064, 0.0
        %v6221 = vmax.f32 %v6162, 0.0
        %v6222 = vmax.f32 %v5871, 0.0
        %v6223 = vmax.f32 %v5969, 0.0
        %v6224 = vmax.f32 %v6067, 0.0
        %v6225 = vmax.f32 %v6165, 0.0
        %v6226 = vmax.f32 %v5873, 0.0
        %v6227 = vmax.f32 %v5971, 0.0
        %v6228 = vmax.f32 %v6069, 0.0
        %v6229 = vmax.f32 %v6167, 0.0
        %v6230 = vmax.f32 %v5876, 0.0
        %v6231 = vmax.f32 %v5974, 0.0
        %v6232 = vmax.f32 %v6072, 0.0
        %v6233 = vmax.f32 %v6170, 0.0
        %v6234 = vmax.f32 %v5878, 0.0
        %v6235 = vmax.f32 %v5976, 0.0
        %v6236 = vmax.f32 %v6074, 0.0
        %v6237 = vmax.f32 %v6172, 0.0
        %v6238 = vpack.c.bf16 %v6178, %v6174
        %v6239 = vpack.c.bf16 %v6179, %v6175
        %v6240 = vpack.c.bf16 %v6180, %v6176
        %v6241 = vpack.c.bf16 %v6181, %v6177
        %v6242 = vpack.c.bf16 %v6186, %v6182
        %v6243 = vpack.c.bf16 %v6187, %v6183
        %v6244 = vpack.c.bf16 %v6188, %v6184
        %v6245 = vpack.c.bf16 %v6189, %v6185
        %v6246 = vpack.c.bf16 %v6194, %v6190
        %v6247 = vpack.c.bf16 %v6195, %v6191
        %v6248 = vpack.c.bf16 %v6196, %v6192
        %v6249 = vpack.c.bf16 %v6197, %v6193
        %v6250 = vpack.c.bf16 %v6202, %v6198
        %v6251 = vpack.c.bf16 %v6203, %v6199
        %v6252 = vpack.c.bf16 %v6204, %v6200
        %v6253 = vpack.c.bf16 %v6205, %v6201
        %v6254 = vpack.c.bf16 %v6210, %v6206
        %v6255 = vpack.c.bf16 %v6211, %v6207
        %v6256 = vpack.c.bf16 %v6212, %v6208
        %v6257 = vpack.c.bf16 %v6213, %v6209
        %v6258 = vpack.c.bf16 %v6218, %v6214
        %v6259 = vpack.c.bf16 %v6219, %v6215
        %v6260 = vpack.c.bf16 %v6220, %v6216
        %v6261 = vpack.c.bf16 %v6221, %v6217
        %v6262 = vpack.c.bf16 %v6226, %v6222
        %v6263 = vpack.c.bf16 %v6227, %v6223
        %v6264 = vpack.c.bf16 %v6228, %v6224
        %v6265 = vpack.c.bf16 %v6229, %v6225
        %v6266 = vpack.c.bf16 %v6234, %v6230
        %v6267 = vpack.c.bf16 %v6235, %v6231
        %v6268 = vpack.c.bf16 %v6236, %v6232
        %v6269 = vpack.c.bf16 %v6237, %v6233
        %v6270 = vld [vmem:[%s384] sm:$0xff]
        %v6271 = vld [vmem:[%s384 + $0x8] sm:$0xff]
        %v6272 = vld [vmem:[%s384 + $0x10] sm:$0xff]
        %v6273 = vld [vmem:[%s384 + $0x18] sm:$0xff]
        %v6274 = vld [vmem:[%s384 + $0x20] sm:$0xff]
        %v6275 = vld [vmem:[%s384 + $0x28] sm:$0xff]
        %v6276 = vld [vmem:[%s384 + $0x30] sm:$0xff]
        %v6277 = vld [vmem:[%s384 + $0x38] sm:$0xff]
        %v6278 = vld [vmem:[%s384 + $0x40] sm:$0xff]
        %v6279 = vld [vmem:[%s384 + $0x48] sm:$0xff]
        %v6280 = vld [vmem:[%s384 + $0x50] sm:$0xff]
        %v6281 = vld [vmem:[%s384 + $0x58] sm:$0xff]
        %v6282 = vld [vmem:[%s384 + $0x60] sm:$0xff]
        %v6283 = vld [vmem:[%s384 + $0x68] sm:$0xff]
        %v6284 = vld [vmem:[%s384 + $0x70] sm:$0xff]
        %v6285 = vld [vmem:[%s384 + $0x78] sm:$0xff]
        %v6286 = vld [vmem:[%s384 + $0x80] sm:$0xff]
        %v6287 = vld [vmem:[%s384 + $0x88] sm:$0xff]
        %v6288 = vld [vmem:[%s384 + $0x90] sm:$0xff]
        %v6289 = vld [vmem:[%s384 + $0x98] sm:$0xff]
        %v6290 = vld [vmem:[%s384 + $0xa0] sm:$0xff]
        %v6291 = vld [vmem:[%s384 + $0xa8] sm:$0xff]
        %v6292 = vld [vmem:[%s384 + $0xb0] sm:$0xff]
        %v6293 = vld [vmem:[%s384 + $0xb8] sm:$0xff]
        %v6294 = vld [vmem:[%s384 + $0xc0] sm:$0xff]
        %v6295 = vld [vmem:[%s384 + $0xc8] sm:$0xff]
        %v6296 = vld [vmem:[%s384 + $0xd0] sm:$0xff]
        %v6297 = vld [vmem:[%s384 + $0xd8] sm:$0xff]
        %v6298 = vld [vmem:[%s384 + $0xe0] sm:$0xff]
        %v6299 = vld [vmem:[%s384 + $0xe8] sm:$0xff]
        %v6300 = vld [vmem:[%s384 + $0xf0] sm:$0xff]
        %v6301 = vld [vmem:[%s384 + $0xf8] sm:$0xff]
        %v6302 = vld [vmem:[%s384 + $0x100] sm:$0xff]
        %v6303 = vld [vmem:[%s384 + $0x108] sm:$0xff]
        %v6304 = vld [vmem:[%s384 + $0x110] sm:$0xff]
        %v6305 = vld [vmem:[%s384 + $0x118] sm:$0xff]
        %v6306 = vld [vmem:[%s384 + $0x120] sm:$0xff]
        %v6307 = vld [vmem:[%s384 + $0x128] sm:$0xff]
        %v6308 = vld [vmem:[%s384 + $0x130] sm:$0xff]
        %v6309 = vld [vmem:[%s384 + $0x138] sm:$0xff]
        %v6310 = vld [vmem:[%s384 + $0x140] sm:$0xff]
        %v6311 = vld [vmem:[%s384 + $0x148] sm:$0xff]
        %v6312 = vld [vmem:[%s384 + $0x150] sm:$0xff]
        %v6313 = vld [vmem:[%s384 + $0x158] sm:$0xff]
        %v6314 = vld [vmem:[%s384 + $0x160] sm:$0xff]
        %v6315 = vld [vmem:[%s384 + $0x168] sm:$0xff]
        %v6316 = vld [vmem:[%s384 + $0x170] sm:$0xff]
        %v6317 = vld [vmem:[%s384 + $0x178] sm:$0xff]
        %v6318 = vld [vmem:[%s384 + $0x180] sm:$0xff]
        %v6319 = vld [vmem:[%s384 + $0x188] sm:$0xff]
        %v6320 = vld [vmem:[%s384 + $0x190] sm:$0xff]
        %v6321 = vld [vmem:[%s384 + $0x198] sm:$0xff]
        %v6322 = vld [vmem:[%s384 + $0x1a0] sm:$0xff]
        %v6323 = vld [vmem:[%s384 + $0x1a8] sm:$0xff]
        %v6324 = vld [vmem:[%s384 + $0x1b0] sm:$0xff]
        %v6325 = vld [vmem:[%s384 + $0x1b8] sm:$0xff]
        %v6326 = vld [vmem:[%s384 + $0x1c0] sm:$0xff]
        %v6327 = vld [vmem:[%s384 + $0x1c8] sm:$0xff]
        %v6328 = vld [vmem:[%s384 + $0x1d0] sm:$0xff]
        %v6329 = vld [vmem:[%s384 + $0x1d8] sm:$0xff]
        %v6330 = vld [vmem:[%s384 + $0x1e0] sm:$0xff]
        %v6331 = vld [vmem:[%s384 + $0x1e8] sm:$0xff]
        %v6332 = vld [vmem:[%s384 + $0x1f0] sm:$0xff]
        %v6333 = vld [vmem:[%s384 + $0x1f8] sm:$0xff]
        %v6398 = vunpack.c.l.b16 %v6270
        %v6399 = vunpack.c.h.b16 %v6270
        %v6400 = vunpack.c.l.b16 %v6271
        %v6401 = vunpack.c.h.b16 %v6271
        %v6402 = vunpack.c.l.b16 %v6272
        %v6403 = vunpack.c.h.b16 %v6272
        %v6404 = vunpack.c.l.b16 %v6273
        %v6405 = vunpack.c.h.b16 %v6273
        %v6406 = vunpack.c.l.b16 %v6274
        %v6407 = vunpack.c.h.b16 %v6274
        %v6408 = vunpack.c.l.b16 %v6275
        %v6409 = vunpack.c.h.b16 %v6275
        %v6410 = vunpack.c.l.b16 %v6276
        %v6411 = vunpack.c.h.b16 %v6276
        %v6412 = vunpack.c.l.b16 %v6277
        %v6413 = vunpack.c.h.b16 %v6277
        %v6414 = vunpack.c.l.b16 %v6278
        %v6415 = vunpack.c.h.b16 %v6278
        %v6416 = vunpack.c.l.b16 %v6279
        %v6417 = vunpack.c.h.b16 %v6279
        %v6418 = vunpack.c.l.b16 %v6280
        %v6419 = vunpack.c.h.b16 %v6280
        %v6420 = vunpack.c.l.b16 %v6281
        %v6421 = vunpack.c.h.b16 %v6281
        %v6422 = vunpack.c.l.b16 %v6282
        %v6423 = vunpack.c.h.b16 %v6282
        %v6424 = vunpack.c.l.b16 %v6283
        %v6425 = vunpack.c.h.b16 %v6283
        %v6426 = vunpack.c.l.b16 %v6284
        %v6427 = vunpack.c.h.b16 %v6284
        %v6428 = vunpack.c.l.b16 %v6285
        %v6429 = vunpack.c.h.b16 %v6285
        %v6430 = vunpack.c.l.b16 %v6286
        %v6431 = vunpack.c.h.b16 %v6286
        %v6432 = vunpack.c.l.b16 %v6287
        %v6433 = vunpack.c.h.b16 %v6287
        %v6434 = vunpack.c.l.b16 %v6288
        %v6435 = vunpack.c.h.b16 %v6288
        %v6436 = vunpack.c.l.b16 %v6289
        %v6437 = vunpack.c.h.b16 %v6289
        %v6438 = vunpack.c.l.b16 %v6290
        %v6439 = vunpack.c.h.b16 %v6290
        %v6440 = vunpack.c.l.b16 %v6291
        %v6441 = vunpack.c.h.b16 %v6291
        %v6442 = vunpack.c.l.b16 %v6292
        %v6443 = vunpack.c.h.b16 %v6292
        %v6444 = vunpack.c.l.b16 %v6293
        %v6445 = vunpack.c.h.b16 %v6293
        %v6446 = vunpack.c.l.b16 %v6294
        %v6447 = vunpack.c.h.b16 %v6294
        %v6448 = vunpack.c.l.b16 %v6295
        %v6449 = vunpack.c.h.b16 %v6295
        %v6450 = vunpack.c.l.b16 %v6296
        %v6451 = vunpack.c.h.b16 %v6296
        %v6452 = vunpack.c.l.b16 %v6297
        %v6453 = vunpack.c.h.b16 %v6297
        %v6454 = vunpack.c.l.b16 %v6298
        %v6455 = vunpack.c.h.b16 %v6298
        %v6456 = vunpack.c.l.b16 %v6299
        %v6457 = vunpack.c.h.b16 %v6299
        %v6458 = vunpack.c.l.b16 %v6300
        %v6459 = vunpack.c.h.b16 %v6300
        %v6460 = vunpack.c.l.b16 %v6301
        %v6461 = vunpack.c.h.b16 %v6301
        %v6462 = vunpack.c.l.b16 %v6302
        %v6463 = vunpack.c.h.b16 %v6302
        %v6464 = vunpack.c.l.b16 %v6303
        %v6465 = vunpack.c.h.b16 %v6303
        %v6466 = vunpack.c.l.b16 %v6304
        %v6467 = vunpack.c.h.b16 %v6304
        %v6468 = vunpack.c.l.b16 %v6305
        %v6469 = vunpack.c.h.b16 %v6305
        %v6470 = vunpack.c.l.b16 %v6306
        %v6471 = vunpack.c.h.b16 %v6306
        %v6472 = vunpack.c.l.b16 %v6307
        %v6473 = vunpack.c.h.b16 %v6307
        %v6474 = vunpack.c.l.b16 %v6308
        %v6475 = vunpack.c.h.b16 %v6308
        %v6476 = vunpack.c.l.b16 %v6309
        %v6477 = vunpack.c.h.b16 %v6309
        %v6478 = vunpack.c.l.b16 %v6310
        %v6479 = vunpack.c.h.b16 %v6310
        %v6480 = vunpack.c.l.b16 %v6311
        %v6481 = vunpack.c.h.b16 %v6311
        %v6482 = vunpack.c.l.b16 %v6312
        %v6483 = vunpack.c.h.b16 %v6312
        %v6484 = vunpack.c.l.b16 %v6313
        %v6485 = vunpack.c.h.b16 %v6313
        %v6486 = vunpack.c.l.b16 %v6314
        %v6487 = vunpack.c.h.b16 %v6314
        %v6488 = vunpack.c.l.b16 %v6315
        %v6489 = vunpack.c.h.b16 %v6315
        %v6490 = vunpack.c.l.b16 %v6316
        %v6491 = vunpack.c.h.b16 %v6316
        %v6492 = vunpack.c.l.b16 %v6317
        %v6493 = vunpack.c.h.b16 %v6317
        %v6494 = vunpack.c.l.b16 %v6318
        %v6495 = vunpack.c.h.b16 %v6318
        %v6496 = vunpack.c.l.b16 %v6319
        %v6497 = vunpack.c.h.b16 %v6319
        %v6498 = vunpack.c.l.b16 %v6320
        %v6499 = vunpack.c.h.b16 %v6320
        %v6500 = vunpack.c.l.b16 %v6321
        %v6501 = vunpack.c.h.b16 %v6321
        %v6502 = vunpack.c.l.b16 %v6322
        %v6503 = vunpack.c.h.b16 %v6322
        %v6504 = vunpack.c.l.b16 %v6323
        %v6505 = vunpack.c.h.b16 %v6323
        %v6506 = vunpack.c.l.b16 %v6324
        %v6507 = vunpack.c.h.b16 %v6324
        %v6508 = vunpack.c.l.b16 %v6325
        %v6509 = vunpack.c.h.b16 %v6325
        %v6510 = vunpack.c.l.b16 %v6326
        %v6511 = vunpack.c.h.b16 %v6326
        %v6512 = vunpack.c.l.b16 %v6327
        %v6513 = vunpack.c.h.b16 %v6327
        %v6514 = vunpack.c.l.b16 %v6328
        %v6515 = vunpack.c.h.b16 %v6328
        %v6516 = vunpack.c.l.b16 %v6329
        %v6517 = vunpack.c.h.b16 %v6329
        %v6518 = vunpack.c.l.b16 %v6330
        %v6519 = vunpack.c.h.b16 %v6330
        %v6520 = vunpack.c.l.b16 %v6331
        %v6521 = vunpack.c.h.b16 %v6331
        %v6522 = vunpack.c.l.b16 %v6332
        %v6523 = vunpack.c.h.b16 %v6332
        %v6524 = vunpack.c.l.b16 %v6333
        %v6525 = vunpack.c.h.b16 %v6333
        %v6526 = vpack.c.b16 %v6400, %v6398
        %v6527 = vpack.c.b16 %v6401, %v6399
        %v6528 = vpack.c.b16 %v6404, %v6402
        %v6529 = vpack.c.b16 %v6405, %v6403
        %v6530 = vpack.c.b16 %v6408, %v6406
        %v6531 = vpack.c.b16 %v6409, %v6407
        %v6532 = vpack.c.b16 %v6412, %v6410
        %v6533 = vpack.c.b16 %v6413, %v6411
        %v6534 = vpack.c.b16 %v6416, %v6414
        %v6535 = vpack.c.b16 %v6417, %v6415
        %v6536 = vpack.c.b16 %v6420, %v6418
        %v6537 = vpack.c.b16 %v6421, %v6419
        %v6538 = vpack.c.b16 %v6424, %v6422
        %v6539 = vpack.c.b16 %v6425, %v6423
        %v6540 = vpack.c.b16 %v6428, %v6426
        %v6541 = vpack.c.b16 %v6429, %v6427
        %v6542 = vpack.c.b16 %v6432, %v6430
        %v6543 = vpack.c.b16 %v6433, %v6431
        %v6544 = vpack.c.b16 %v6436, %v6434
        %v6545 = vpack.c.b16 %v6437, %v6435
        %v6546 = vpack.c.b16 %v6440, %v6438
        %v6547 = vpack.c.b16 %v6441, %v6439
        %v6548 = vpack.c.b16 %v6444, %v6442
        %v6549 = vpack.c.b16 %v6445, %v6443
        %v6550 = vpack.c.b16 %v6448, %v6446
        %v6551 = vpack.c.b16 %v6449, %v6447
        %v6552 = vpack.c.b16 %v6452, %v6450
        %v6553 = vpack.c.b16 %v6453, %v6451
        %v6554 = vpack.c.b16 %v6456, %v6454
        %v6555 = vpack.c.b16 %v6457, %v6455
        %v6556 = vpack.c.b16 %v6460, %v6458
        %v6557 = vpack.c.b16 %v6461, %v6459
        %v6558 = vpack.c.b16 %v6464, %v6462
        %v6559 = vpack.c.b16 %v6465, %v6463
        %v6560 = vpack.c.b16 %v6468, %v6466
        %v6561 = vpack.c.b16 %v6469, %v6467
        %v6562 = vpack.c.b16 %v6472, %v6470
        %v6563 = vpack.c.b16 %v6473, %v6471
        %v6564 = vpack.c.b16 %v6476, %v6474
        %v6565 = vpack.c.b16 %v6477, %v6475
        %v6566 = vpack.c.b16 %v6480, %v6478
        %v6567 = vpack.c.b16 %v6481, %v6479
        %v6568 = vpack.c.b16 %v6484, %v6482
        %v6569 = vpack.c.b16 %v6485, %v6483
        %v6570 = vpack.c.b16 %v6488, %v6486
        %v6571 = vpack.c.b16 %v6489, %v6487
        %v6572 = vpack.c.b16 %v6492, %v6490
        %v6573 = vpack.c.b16 %v6493, %v6491
        %v6574 = vpack.c.b16 %v6496, %v6494
        %v6575 = vpack.c.b16 %v6497, %v6495
        %v6576 = vpack.c.b16 %v6500, %v6498
        %v6577 = vpack.c.b16 %v6501, %v6499
        %v6578 = vpack.c.b16 %v6504, %v6502
        %v6579 = vpack.c.b16 %v6505, %v6503
        %v6580 = vpack.c.b16 %v6508, %v6506
        %v6581 = vpack.c.b16 %v6509, %v6507
        %v6582 = vpack.c.b16 %v6512, %v6510
        %v6583 = vpack.c.b16 %v6513, %v6511
        %v6584 = vpack.c.b16 %v6516, %v6514
        %v6585 = vpack.c.b16 %v6517, %v6515
        %v6586 = vpack.c.b16 %v6520, %v6518
        %v6587 = vpack.c.b16 %v6521, %v6519
        %v6588 = vpack.c.b16 %v6524, %v6522
        %v6589 = vpack.c.b16 %v6525, %v6523
        %6654 = vmatpush.bf16.msra.mxu0 %v6540
        %6655 = vmatpush.bf16.msra.mxu0 %v6538
        %6656 = vmatpush.bf16.msra.mxu0 %v6536
        %6657 = vmatpush.bf16.msra.mxu0 %v6534
        %6658 = vmatpush.bf16.msra.mxu0 %v6532
        %6659 = vmatpush.bf16.msra.mxu0 %v6530
        %6660 = vmatpush.bf16.msra.mxu0 %v6528
        %6661 = vmatpush.bf16.msra.mxu0 %v6526
        %6662 = vmatmul.bf16.gmra.mxu0 %v6238
        %v6663 = vpop.f32.mrf.mxu0
        %v6664 = vadd.f32 0.0, %v6663
        %v6665 = vpop.f32.mrf.mxu0
        %v6666 = vadd.f32 0.0, %v6665
        %6667 = vmatmul.bf16.gmra.mxu0 %v6242
        %v6668 = vpop.f32.mrf.mxu0
        %v6669 = vadd.f32 0.0, %v6668
        %v6670 = vpop.f32.mrf.mxu0
        %v6671 = vadd.f32 0.0, %v6670
        %6672 = vmatmul.bf16.gmra.mxu0 %v6246
        %v6673 = vpop.f32.mrf.mxu0
        %v6674 = vadd.f32 0.0, %v6673
        %v6675 = vpop.f32.mrf.mxu0
        %v6676 = vadd.f32 0.0, %v6675
        %6677 = vmatmul.bf16.gmra.mxu0 %v6250
        %v6678 = vpop.f32.mrf.mxu0
        %v6679 = vadd.f32 0.0, %v6678
        %v6680 = vpop.f32.mrf.mxu0
        %v6681 = vadd.f32 0.0, %v6680
        %6682 = vmatmul.bf16.gmra.mxu0 %v6254
        %v6683 = vpop.f32.mrf.mxu0
        %v6684 = vadd.f32 0.0, %v6683
        %v6685 = vpop.f32.mrf.mxu0
        %v6686 = vadd.f32 0.0, %v6685
        %6687 = vmatmul.bf16.gmra.mxu0 %v6258
        %v6688 = vpop.f32.mrf.mxu0
        %v6689 = vadd.f32 0.0, %v6688
        %v6690 = vpop.f32.mrf.mxu0
        %v6691 = vadd.f32 0.0, %v6690
        %6692 = vmatmul.bf16.gmra.mxu0 %v6262
        %v6693 = vpop.f32.mrf.mxu0
        %v6694 = vadd.f32 0.0, %v6693
        %v6695 = vpop.f32.mrf.mxu0
        %v6696 = vadd.f32 0.0, %v6695
        %6697 = vmatmul.bf16.gmra.mxu0 %v6266
        %v6698 = vpop.f32.mrf.mxu0
        %v6699 = vadd.f32 0.0, %v6698
        %v6700 = vpop.f32.mrf.mxu0
        %v6701 = vadd.f32 0.0, %v6700
        %6702 = vdwg.mxu0
        %6703 = vmatpush.bf16.msra.mxu0 %v6556
        %6704 = vmatpush.bf16.msra.mxu0 %v6554
        %6705 = vmatpush.bf16.msra.mxu0 %v6552
        %6706 = vmatpush.bf16.msra.mxu0 %v6550
        %6707 = vmatpush.bf16.msra.mxu0 %v6548
        %6708 = vmatpush.bf16.msra.mxu0 %v6546
        %6709 = vmatpush.bf16.msra.mxu0 %v6544
        %6710 = vmatpush.bf16.msra.mxu0 %v6542
        %6711 = vmatmul.bf16.gmra.mxu0 %v6239
        %v6712 = vpop.f32.mrf.mxu0
        %v6713 = vadd.f32 %v6664, %v6712
        %v6714 = vpop.f32.mrf.mxu0
        %v6715 = vadd.f32 %v6666, %v6714
        %6716 = vmatmul.bf16.gmra.mxu0 %v6243
        %v6717 = vpop.f32.mrf.mxu0
        %v6718 = vadd.f32 %v6669, %v6717
        %v6719 = vpop.f32.mrf.mxu0
        %v6720 = vadd.f32 %v6671, %v6719
        %6721 = vmatmul.bf16.gmra.mxu0 %v6247
        %v6722 = vpop.f32.mrf.mxu0
        %v6723 = vadd.f32 %v6674, %v6722
        %v6724 = vpop.f32.mrf.mxu0
        %v6725 = vadd.f32 %v6676, %v6724
        %6726 = vmatmul.bf16.gmra.mxu0 %v6251
        %v6727 = vpop.f32.mrf.mxu0
        %v6728 = vadd.f32 %v6679, %v6727
        %v6729 = vpop.f32.mrf.mxu0
        %v6730 = vadd.f32 %v6681, %v6729
        %6731 = vmatmul.bf16.gmra.mxu0 %v6255
        %v6732 = vpop.f32.mrf.mxu0
        %v6733 = vadd.f32 %v6684, %v6732
        %v6734 = vpop.f32.mrf.mxu0
        %v6735 = vadd.f32 %v6686, %v6734
        %6736 = vmatmul.bf16.gmra.mxu0 %v6259
        %v6737 = vpop.f32.mrf.mxu0
        %v6738 = vadd.f32 %v6689, %v6737
        %v6739 = vpop.f32.mrf.mxu0
        %v6740 = vadd.f32 %v6691, %v6739
        %6741 = vmatmul.bf16.gmra.mxu0 %v6263
        %v6742 = vpop.f32.mrf.mxu0
        %v6743 = vadd.f32 %v6694, %v6742
        %v6744 = vpop.f32.mrf.mxu0
        %v6745 = vadd.f32 %v6696, %v6744
        %6746 = vmatmul.bf16.gmra.mxu0 %v6267
        %v6747 = vpop.f32.mrf.mxu0
        %v6748 = vadd.f32 %v6699, %v6747
        %v6749 = vpop.f32.mrf.mxu0
        %v6750 = vadd.f32 %v6701, %v6749
        %6751 = vdwg.mxu0
        %6752 = vmatpush.bf16.msra.mxu0 %v6572
        %6753 = vmatpush.bf16.msra.mxu0 %v6570
        %6754 = vmatpush.bf16.msra.mxu0 %v6568
        %6755 = vmatpush.bf16.msra.mxu0 %v6566
        %6756 = vmatpush.bf16.msra.mxu0 %v6564
        %6757 = vmatpush.bf16.msra.mxu0 %v6562
        %6758 = vmatpush.bf16.msra.mxu0 %v6560
        %6759 = vmatpush.bf16.msra.mxu0 %v6558
        %6760 = vmatmul.bf16.gmra.mxu0 %v6240
        %v6761 = vpop.f32.mrf.mxu0
        %v6762 = vadd.f32 %v6713, %v6761
        %v6763 = vpop.f32.mrf.mxu0
        %v6764 = vadd.f32 %v6715, %v6763
        %6765 = vmatmul.bf16.gmra.mxu0 %v6244
        %v6766 = vpop.f32.mrf.mxu0
        %v6767 = vadd.f32 %v6718, %v6766
        %v6768 = vpop.f32.mrf.mxu0
        %v6769 = vadd.f32 %v6720, %v6768
        %6770 = vmatmul.bf16.gmra.mxu0 %v6248
        %v6771 = vpop.f32.mrf.mxu0
        %v6772 = vadd.f32 %v6723, %v6771
        %v6773 = vpop.f32.mrf.mxu0
        %v6774 = vadd.f32 %v6725, %v6773
        %6775 = vmatmul.bf16.gmra.mxu0 %v6252
        %v6776 = vpop.f32.mrf.mxu0
        %v6777 = vadd.f32 %v6728, %v6776
        %v6778 = vpop.f32.mrf.mxu0
        %v6779 = vadd.f32 %v6730, %v6778
        %6780 = vmatmul.bf16.gmra.mxu0 %v6256
        %v6781 = vpop.f32.mrf.mxu0
        %v6782 = vadd.f32 %v6733, %v6781
        %v6783 = vpop.f32.mrf.mxu0
        %v6784 = vadd.f32 %v6735, %v6783
        %6785 = vmatmul.bf16.gmra.mxu0 %v6260
        %v6786 = vpop.f32.mrf.mxu0
        %v6787 = vadd.f32 %v6738, %v6786
        %v6788 = vpop.f32.mrf.mxu0
        %v6789 = vadd.f32 %v6740, %v6788
        %6790 = vmatmul.bf16.gmra.mxu0 %v6264
        %v6791 = vpop.f32.mrf.mxu0
        %v6792 = vadd.f32 %v6743, %v6791
        %v6793 = vpop.f32.mrf.mxu0
        %v6794 = vadd.f32 %v6745, %v6793
        %6795 = vmatmul.bf16.gmra.mxu0 %v6268
        %v6796 = vpop.f32.mrf.mxu0
        %v6797 = vadd.f32 %v6748, %v6796
        %v6798 = vpop.f32.mrf.mxu0
        %v6799 = vadd.f32 %v6750, %v6798
        %6800 = vdwg.mxu0
        %6801 = vmatpush.bf16.msra.mxu0 %v6588
        %6802 = vmatpush.bf16.msra.mxu0 %v6586
        %6803 = vmatpush.bf16.msra.mxu0 %v6584
        %6804 = vmatpush.bf16.msra.mxu0 %v6582
        %6805 = vmatpush.bf16.msra.mxu0 %v6580
        %6806 = vmatpush.bf16.msra.mxu0 %v6578
        %6807 = vmatpush.bf16.msra.mxu0 %v6576
        %6808 = vmatpush.bf16.msra.mxu0 %v6574
        %6809 = vmatmul.bf16.gmra.mxu0 %v6241
        %v6810 = vpop.f32.mrf.mxu0
        %v6811 = vadd.f32 %v6762, %v6810
        %v6812 = vpop.f32.mrf.mxu0
        %v6813 = vadd.f32 %v6764, %v6812
        %6814 = vmatmul.bf16.gmra.mxu0 %v6245
        %v6815 = vpop.f32.mrf.mxu0
        %v6816 = vadd.f32 %v6767, %v6815
        %v6817 = vpop.f32.mrf.mxu0
        %v6818 = vadd.f32 %v6769, %v6817
        %6819 = vmatmul.bf16.gmra.mxu0 %v6249
        %v6820 = vpop.f32.mrf.mxu0
        %v6821 = vadd.f32 %v6772, %v6820
        %v6822 = vpop.f32.mrf.mxu0
        %v6823 = vadd.f32 %v6774, %v6822
        %6824 = vmatmul.bf16.gmra.mxu0 %v6253
        %v6825 = vpop.f32.mrf.mxu0
        %v6826 = vadd.f32 %v6777, %v6825
        %v6827 = vpop.f32.mrf.mxu0
        %v6828 = vadd.f32 %v6779, %v6827
        %6829 = vmatmul.bf16.gmra.mxu0 %v6257
        %v6830 = vpop.f32.mrf.mxu0
        %v6831 = vadd.f32 %v6782, %v6830
        %v6832 = vpop.f32.mrf.mxu0
        %v6833 = vadd.f32 %v6784, %v6832
        %6834 = vmatmul.bf16.gmra.mxu0 %v6261
        %v6835 = vpop.f32.mrf.mxu0
        %v6836 = vadd.f32 %v6787, %v6835
        %v6837 = vpop.f32.mrf.mxu0
        %v6838 = vadd.f32 %v6789, %v6837
        %6839 = vmatmul.bf16.gmra.mxu0 %v6265
        %v6840 = vpop.f32.mrf.mxu0
        %v6841 = vadd.f32 %v6792, %v6840
        %v6842 = vpop.f32.mrf.mxu0
        %v6843 = vadd.f32 %v6794, %v6842
        %6844 = vmatmul.bf16.gmra.mxu0 %v6269
        %v6845 = vpop.f32.mrf.mxu0
        %v6846 = vadd.f32 %v6797, %v6845
        %v6847 = vpop.f32.mrf.mxu0
        %v6848 = vadd.f32 %v6799, %v6847
        %6849 = vdwg.mxu0
        %6850 = vmatpush.bf16.msra.mxu0 %v6541
        %6851 = vmatpush.bf16.msra.mxu0 %v6539
        %6852 = vmatpush.bf16.msra.mxu0 %v6537
        %6853 = vmatpush.bf16.msra.mxu0 %v6535
        %6854 = vmatpush.bf16.msra.mxu0 %v6533
        %6855 = vmatpush.bf16.msra.mxu0 %v6531
        %6856 = vmatpush.bf16.msra.mxu0 %v6529
        %6857 = vmatpush.bf16.msra.mxu0 %v6527
        %6858 = vmatmul.bf16.gmra.mxu0 %v6238
        %v6859 = vpop.f32.mrf.mxu0
        %v6860 = vadd.f32 0.0, %v6859
        %v6861 = vpop.f32.mrf.mxu0
        %v6862 = vadd.f32 0.0, %v6861
        %6863 = vmatmul.bf16.gmra.mxu0 %v6242
        %v6864 = vpop.f32.mrf.mxu0
        %v6865 = vadd.f32 0.0, %v6864
        %v6866 = vpop.f32.mrf.mxu0
        %v6867 = vadd.f32 0.0, %v6866
        %6868 = vmatmul.bf16.gmra.mxu0 %v6246
        %v6869 = vpop.f32.mrf.mxu0
        %v6870 = vadd.f32 0.0, %v6869
        %v6871 = vpop.f32.mrf.mxu0
        %v6872 = vadd.f32 0.0, %v6871
        %6873 = vmatmul.bf16.gmra.mxu0 %v6250
        %v6874 = vpop.f32.mrf.mxu0
        %v6875 = vadd.f32 0.0, %v6874
        %v6876 = vpop.f32.mrf.mxu0
        %v6877 = vadd.f32 0.0, %v6876
        %6878 = vmatmul.bf16.gmra.mxu0 %v6254
        %v6879 = vpop.f32.mrf.mxu0
        %v6880 = vadd.f32 0.0, %v6879
        %v6881 = vpop.f32.mrf.mxu0
        %v6882 = vadd.f32 0.0, %v6881
        %6883 = vmatmul.bf16.gmra.mxu0 %v6258
        %v6884 = vpop.f32.mrf.mxu0
        %v6885 = vadd.f32 0.0, %v6884
        %v6886 = vpop.f32.mrf.mxu0
        %v6887 = vadd.f32 0.0, %v6886
        %6888 = vmatmul.bf16.gmra.mxu0 %v6262
        %v6889 = vpop.f32.mrf.mxu0
        %v6890 = vadd.f32 0.0, %v6889
        %v6891 = vpop.f32.mrf.mxu0
        %v6892 = vadd.f32 0.0, %v6891
        %6893 = vmatmul.bf16.gmra.mxu0 %v6266
        %v6894 = vpop.f32.mrf.mxu0
        %v6895 = vadd.f32 0.0, %v6894
        %v6896 = vpop.f32.mrf.mxu0
        %v6897 = vadd.f32 0.0, %v6896
        %6898 = vdwg.mxu0
        %6899 = vmatpush.bf16.msra.mxu0 %v6557
        %6900 = vmatpush.bf16.msra.mxu0 %v6555
        %6901 = vmatpush.bf16.msra.mxu0 %v6553
        %6902 = vmatpush.bf16.msra.mxu0 %v6551
        %6903 = vmatpush.bf16.msra.mxu0 %v6549
        %6904 = vmatpush.bf16.msra.mxu0 %v6547
        %6905 = vmatpush.bf16.msra.mxu0 %v6545
        %6906 = vmatpush.bf16.msra.mxu0 %v6543
        %6907 = vmatmul.bf16.gmra.mxu0 %v6239
        %v6908 = vpop.f32.mrf.mxu0
        %v6909 = vadd.f32 %v6860, %v6908
        %v6910 = vpop.f32.mrf.mxu0
        %v6911 = vadd.f32 %v6862, %v6910
        %6912 = vmatmul.bf16.gmra.mxu0 %v6243
        %v6913 = vpop.f32.mrf.mxu0
        %v6914 = vadd.f32 %v6865, %v6913
        %v6915 = vpop.f32.mrf.mxu0
        %v6916 = vadd.f32 %v6867, %v6915
        %6917 = vmatmul.bf16.gmra.mxu0 %v6247
        %v6918 = vpop.f32.mrf.mxu0
        %v6919 = vadd.f32 %v6870, %v6918
        %v6920 = vpop.f32.mrf.mxu0
        %v6921 = vadd.f32 %v6872, %v6920
        %6922 = vmatmul.bf16.gmra.mxu0 %v6251
        %v6923 = vpop.f32.mrf.mxu0
        %v6924 = vadd.f32 %v6875, %v6923
        %v6925 = vpop.f32.mrf.mxu0
        %v6926 = vadd.f32 %v6877, %v6925
        %6927 = vmatmul.bf16.gmra.mxu0 %v6255
        %v6928 = vpop.f32.mrf.mxu0
        %v6929 = vadd.f32 %v6880, %v6928
        %v6930 = vpop.f32.mrf.mxu0
        %v6931 = vadd.f32 %v6882, %v6930
        %6932 = vmatmul.bf16.gmra.mxu0 %v6259
        %v6933 = vpop.f32.mrf.mxu0
        %v6934 = vadd.f32 %v6885, %v6933
        %v6935 = vpop.f32.mrf.mxu0
        %v6936 = vadd.f32 %v6887, %v6935
        %6937 = vmatmul.bf16.gmra.mxu0 %v6263
        %v6938 = vpop.f32.mrf.mxu0
        %v6939 = vadd.f32 %v6890, %v6938
        %v6940 = vpop.f32.mrf.mxu0
        %v6941 = vadd.f32 %v6892, %v6940
        %6942 = vmatmul.bf16.gmra.mxu0 %v6267
        %v6943 = vpop.f32.mrf.mxu0
        %v6944 = vadd.f32 %v6895, %v6943
        %v6945 = vpop.f32.mrf.mxu0
        %v6946 = vadd.f32 %v6897, %v6945
        %6947 = vdwg.mxu0
        %6948 = vmatpush.bf16.msra.mxu0 %v6573
        %6949 = vmatpush.bf16.msra.mxu0 %v6571
        %6950 = vmatpush.bf16.msra.mxu0 %v6569
        %6951 = vmatpush.bf16.msra.mxu0 %v6567
        %6952 = vmatpush.bf16.msra.mxu0 %v6565
        %6953 = vmatpush.bf16.msra.mxu0 %v6563
        %6954 = vmatpush.bf16.msra.mxu0 %v6561
        %6955 = vmatpush.bf16.msra.mxu0 %v6559
        %6956 = vmatmul.bf16.gmra.mxu0 %v6240
        %v6957 = vpop.f32.mrf.mxu0
        %v6958 = vadd.f32 %v6909, %v6957
        %v6959 = vpop.f32.mrf.mxu0
        %v6960 = vadd.f32 %v6911, %v6959
        %6961 = vmatmul.bf16.gmra.mxu0 %v6244
        %v6962 = vpop.f32.mrf.mxu0
        %v6963 = vadd.f32 %v6914, %v6962
        %v6964 = vpop.f32.mrf.mxu0
        %v6965 = vadd.f32 %v6916, %v6964
        %6966 = vmatmul.bf16.gmra.mxu0 %v6248
        %v6967 = vpop.f32.mrf.mxu0
        %v6968 = vadd.f32 %v6919, %v6967
        %v6969 = vpop.f32.mrf.mxu0
        %v6970 = vadd.f32 %v6921, %v6969
        %6971 = vmatmul.bf16.gmra.mxu0 %v6252
        %v6972 = vpop.f32.mrf.mxu0
        %v6973 = vadd.f32 %v6924, %v6972
        %v6974 = vpop.f32.mrf.mxu0
        %v6975 = vadd.f32 %v6926, %v6974
        %6976 = vmatmul.bf16.gmra.mxu0 %v6256
        %v6977 = vpop.f32.mrf.mxu0
        %v6978 = vadd.f32 %v6929, %v6977
        %v6979 = vpop.f32.mrf.mxu0
        %v6980 = vadd.f32 %v6931, %v6979
        %6981 = vmatmul.bf16.gmra.mxu0 %v6260
        %v6982 = vpop.f32.mrf.mxu0
        %v6983 = vadd.f32 %v6934, %v6982
        %v6984 = vpop.f32.mrf.mxu0
        %v6985 = vadd.f32 %v6936, %v6984
        %6986 = vmatmul.bf16.gmra.mxu0 %v6264
        %v6987 = vpop.f32.mrf.mxu0
        %v6988 = vadd.f32 %v6939, %v6987
        %v6989 = vpop.f32.mrf.mxu0
        %v6990 = vadd.f32 %v6941, %v6989
        %6991 = vmatmul.bf16.gmra.mxu0 %v6268
        %v6992 = vpop.f32.mrf.mxu0
        %v6993 = vadd.f32 %v6944, %v6992
        %v6994 = vpop.f32.mrf.mxu0
        %v6995 = vadd.f32 %v6946, %v6994
        %6996 = vdwg.mxu0
        %6997 = vmatpush.bf16.msra.mxu0 %v6589
        %6998 = vmatpush.bf16.msra.mxu0 %v6587
        %6999 = vmatpush.bf16.msra.mxu0 %v6585
        %7000 = vmatpush.bf16.msra.mxu0 %v6583
        %7001 = vmatpush.bf16.msra.mxu0 %v6581
        %7002 = vmatpush.bf16.msra.mxu0 %v6579
        %7003 = vmatpush.bf16.msra.mxu0 %v6577
        %7004 = vmatpush.bf16.msra.mxu0 %v6575
        %7005 = vmatmul.bf16.gmra.mxu0 %v6241
        %v7006 = vpop.f32.mrf.mxu0
        %v7007 = vadd.f32 %v6958, %v7006
        %v7008 = vpop.f32.mrf.mxu0
        %v7009 = vadd.f32 %v6960, %v7008
        %7010 = vmatmul.bf16.gmra.mxu0 %v6245
        %v7011 = vpop.f32.mrf.mxu0
        %v7012 = vadd.f32 %v6963, %v7011
        %v7013 = vpop.f32.mrf.mxu0
        %v7014 = vadd.f32 %v6965, %v7013
        %7015 = vmatmul.bf16.gmra.mxu0 %v6249
        %v7016 = vpop.f32.mrf.mxu0
        %v7017 = vadd.f32 %v6968, %v7016
        %v7018 = vpop.f32.mrf.mxu0
        %v7019 = vadd.f32 %v6970, %v7018
        %7020 = vmatmul.bf16.gmra.mxu0 %v6253
        %v7021 = vpop.f32.mrf.mxu0
        %v7022 = vadd.f32 %v6973, %v7021
        %v7023 = vpop.f32.mrf.mxu0
        %v7024 = vadd.f32 %v6975, %v7023
        %7025 = vmatmul.bf16.gmra.mxu0 %v6257
        %v7026 = vpop.f32.mrf.mxu0
        %v7027 = vadd.f32 %v6978, %v7026
        %v7028 = vpop.f32.mrf.mxu0
        %v7029 = vadd.f32 %v6980, %v7028
        %7030 = vmatmul.bf16.gmra.mxu0 %v6261
        %v7031 = vpop.f32.mrf.mxu0
        %v7032 = vadd.f32 %v6983, %v7031
        %v7033 = vpop.f32.mrf.mxu0
        %v7034 = vadd.f32 %v6985, %v7033
        %7035 = vmatmul.bf16.gmra.mxu0 %v6265
        %v7036 = vpop.f32.mrf.mxu0
        %v7037 = vadd.f32 %v6988, %v7036
        %v7038 = vpop.f32.mrf.mxu0
        %v7039 = vadd.f32 %v6990, %v7038
        %7040 = vmatmul.bf16.gmra.mxu0 %v6269
        %v7041 = vpop.f32.mrf.mxu0
        %v7042 = vadd.f32 %v6993, %v7041
        %v7043 = vpop.f32.mrf.mxu0
        %v7044 = vadd.f32 %v6995, %v7043
        %7045 = vdwg.mxu0
        %v7046 = vadd.f32 %v5008, %v6811
        %v7047 = vadd.f32 %v5009, %v7007
        %v7048 = vadd.f32 %v5010, %v6813
        %v7049 = vadd.f32 %v5011, %v7009
        %v7050 = vadd.f32 %v5012, %v6816
        %v7051 = vadd.f32 %v5013, %v7012
        %v7052 = vadd.f32 %v5014, %v6818
        %v7053 = vadd.f32 %v5015, %v7014
        %v7054 = vadd.f32 %v5016, %v6821
        %v7055 = vadd.f32 %v5017, %v7017
        %v7056 = vadd.f32 %v5018, %v6823
        %v7057 = vadd.f32 %v5019, %v7019
        %v7058 = vadd.f32 %v5020, %v6826
        %v7059 = vadd.f32 %v5021, %v7022
        %v7060 = vadd.f32 %v5022, %v6828
        %v7061 = vadd.f32 %v5023, %v7024
        %v7062 = vadd.f32 %v5024, %v6831
        %v7063 = vadd.f32 %v5025, %v7027
        %v7064 = vadd.f32 %v5026, %v6833
        %v7065 = vadd.f32 %v5027, %v7029
        %v7066 = vadd.f32 %v5028, %v6836
        %v7067 = vadd.f32 %v5029, %v7032
        %v7068 = vadd.f32 %v5030, %v6838
        %v7069 = vadd.f32 %v5031, %v7034
        %v7070 = vadd.f32 %v5032, %v6841
        %v7071 = vadd.f32 %v5033, %v7037
        %v7072 = vadd.f32 %v5034, %v6843
        %v7073 = vadd.f32 %v5035, %v7039
        %v7074 = vadd.f32 %v5036, %v6846
        %v7075 = vadd.f32 %v5037, %v7042
        %v7076 = vadd.f32 %v5038, %v6848
        %v7077 = vadd.f32 %v5039, %v7044
        %7078 = vst [vmem:[#allocation2] sm:$0xff] %v7046
        %7079 = vst [vmem:[#allocation2 + $0x8] sm:$0xff] %v7047
        %7080 = vst [vmem:[#allocation2 + $0x10] sm:$0xff] %v7048
        %7081 = vst [vmem:[#allocation2 + $0x18] sm:$0xff] %v7049
        %7082 = vst [vmem:[#allocation2 + $0x20] sm:$0xff] %v7050
        %7083 = vst [vmem:[#allocation2 + $0x28] sm:$0xff] %v7051
        %7084 = vst [vmem:[#allocation2 + $0x30] sm:$0xff] %v7052
        %7085 = vst [vmem:[#allocation2 + $0x38] sm:$0xff] %v7053
        %7086 = vst [vmem:[#allocation2 + $0x40] sm:$0xff] %v7054
        %7087 = vst [vmem:[#allocation2 + $0x48] sm:$0xff] %v7055
        %7088 = vst [vmem:[#allocation2 + $0x50] sm:$0xff] %v7056
        %7089 = vst [vmem:[#allocation2 + $0x58] sm:$0xff] %v7057
        %7090 = vst [vmem:[#allocation2 + $0x60] sm:$0xff] %v7058
        %7091 = vst [vmem:[#allocation2 + $0x68] sm:$0xff] %v7059
        %7092 = vst [vmem:[#allocation2 + $0x70] sm:$0xff] %v7060
        %7093 = vst [vmem:[#allocation2 + $0x78] sm:$0xff] %v7061
        %7094 = vst [vmem:[#allocation2 + $0x80] sm:$0xff] %v7062
        %7095 = vst [vmem:[#allocation2 + $0x88] sm:$0xff] %v7063
        %7096 = vst [vmem:[#allocation2 + $0x90] sm:$0xff] %v7064
        %7097 = vst [vmem:[#allocation2 + $0x98] sm:$0xff] %v7065
        %7098 = vst [vmem:[#allocation2 + $0xa0] sm:$0xff] %v7066
        %7099 = vst [vmem:[#allocation2 + $0xa8] sm:$0xff] %v7067
        %7100 = vst [vmem:[#allocation2 + $0xb0] sm:$0xff] %v7068
        %7101 = vst [vmem:[#allocation2 + $0xb8] sm:$0xff] %v7069
        %7102 = vst [vmem:[#allocation2 + $0xc0] sm:$0xff] %v7070
        %7103 = vst [vmem:[#allocation2 + $0xc8] sm:$0xff] %v7071
        %7104 = vst [vmem:[#allocation2 + $0xd0] sm:$0xff] %v7072
        %7105 = vst [vmem:[#allocation2 + $0xd8] sm:$0xff] %v7073
        %7106 = vst [vmem:[#allocation2 + $0xe0] sm:$0xff] %v7074
        %7107 = vst [vmem:[#allocation2 + $0xe8] sm:$0xff] %v7075
        %7108 = vst [vmem:[#allocation2 + $0xf0] sm:$0xff] %v7076
        %7109 = vst [vmem:[#allocation2 + $0xf8] sm:$0xff] %v7077
        %p7110 = scmp.eq.s32.totalorder %s28, 1
        // Predicated region
        $region93: #{encoder_forward.1} parent=47 // pred_check
          %p7111 = pneg %p7110
        $region94: #{encoder_forward.1} parent=47 // pred_check_branch
          %7113 = sbr.rel (%p7111) target = $region96
        $region95: #{encoder_forward.1} parent=47 // pred_region
          %v7114 = vld [vmem:[%s8] sm:$0x3]
          %v7115 = vmul.f32 %v7046, %v7046
          %v7116 = vmul.f32 %v7047, %v7047
          %v7117 = vmul.f32 %v7048, %v7048
          %v7118 = vmul.f32 %v7049, %v7049
          %v7119 = vmul.f32 %v7050, %v7050
          %v7120 = vmul.f32 %v7051, %v7051
          %v7121 = vmul.f32 %v7052, %v7052
          %v7122 = vmul.f32 %v7053, %v7053
          %v7123 = vmul.f32 %v7054, %v7054
          %v7124 = vmul.f32 %v7055, %v7055
          %v7125 = vmul.f32 %v7056, %v7056
          %v7126 = vmul.f32 %v7057, %v7057
          %v7127 = vmul.f32 %v7058, %v7058
          %v7128 = vmul.f32 %v7059, %v7059
          %v7129 = vmul.f32 %v7060, %v7060
          %v7130 = vmul.f32 %v7061, %v7061
          %v7131 = vmul.f32 %v7062, %v7062
          %v7132 = vmul.f32 %v7063, %v7063
          %v7133 = vmul.f32 %v7064, %v7064
          %v7134 = vmul.f32 %v7065, %v7065
          %v7135 = vmul.f32 %v7066, %v7066
          %v7136 = vmul.f32 %v7067, %v7067
          %v7137 = vmul.f32 %v7068, %v7068
          %v7138 = vmul.f32 %v7069, %v7069
          %v7139 = vmul.f32 %v7070, %v7070
          %v7140 = vmul.f32 %v7071, %v7071
          %v7141 = vmul.f32 %v7072, %v7072
          %v7142 = vmul.f32 %v7073, %v7073
          %v7143 = vmul.f32 %v7074, %v7074
          %v7144 = vmul.f32 %v7075, %v7075
          %v7145 = vmul.f32 %v7076, %v7076
          %v7146 = vmul.f32 %v7077, %v7077
          %v7147 = vadd.f32 %v7115, %v7116
          %7148 = vadd.xlane.f32.xlu0 %v7147
          %v7149 = vpop.xlane.xlu0 %7148
          %v7150 = vadd.f32 %v7117, %v7118
          %7151 = vadd.xlane.f32.xlu0 %v7150
          %v7152 = vpop.xlane.xlu0 %7151
          %v7153 = vadd.f32 %v7119, %v7120
          %7154 = vadd.xlane.f32.xlu0 %v7153
          %v7155 = vpop.xlane.xlu0 %7154
          %v7156 = vadd.f32 %v7121, %v7122
          %7157 = vadd.xlane.f32.xlu0 %v7156
          %v7158 = vpop.xlane.xlu0 %7157
          %v7159 = vadd.f32 %v7123, %v7124
          %7160 = vadd.xlane.f32.xlu0 %v7159
          %v7161 = vpop.xlane.xlu0 %7160
          %v7162 = vadd.f32 %v7125, %v7126
          %7163 = vadd.xlane.f32.xlu0 %v7162
          %v7164 = vpop.xlane.xlu0 %7163
          %v7165 = vadd.f32 %v7127, %v7128
          %7166 = vadd.xlane.f32.xlu0 %v7165
          %v7167 = vpop.xlane.xlu0 %7166
          %v7168 = vadd.f32 %v7129, %v7130
          %7169 = vadd.xlane.f32.xlu0 %v7168
          %v7170 = vpop.xlane.xlu0 %7169
          %v7171 = vadd.f32 %v7131, %v7132
          %7172 = vadd.xlane.f32.xlu0 %v7171
          %v7173 = vpop.xlane.xlu0 %7172
          %v7174 = vadd.f32 %v7133, %v7134
          %7175 = vadd.xlane.f32.xlu0 %v7174
          %v7176 = vpop.xlane.xlu0 %7175
          %v7177 = vadd.f32 %v7135, %v7136
          %7178 = vadd.xlane.f32.xlu0 %v7177
          %v7179 = vpop.xlane.xlu0 %7178
          %v7180 = vadd.f32 %v7137, %v7138
          %7181 = vadd.xlane.f32.xlu0 %v7180
          %v7182 = vpop.xlane.xlu0 %7181
          %v7183 = vadd.f32 %v7139, %v7140
          %7184 = vadd.xlane.f32.xlu0 %v7183
          %v7185 = vpop.xlane.xlu0 %7184
          %v7186 = vadd.f32 %v7141, %v7142
          %7187 = vadd.xlane.f32.xlu0 %v7186
          %v7188 = vpop.xlane.xlu0 %7187
          %v7189 = vadd.f32 %v7143, %v7144
          %7190 = vadd.xlane.f32.xlu0 %v7189
          %v7191 = vpop.xlane.xlu0 %7190
          %v7192 = vadd.f32 %v7145, %v7146
          %7193 = vadd.xlane.f32.xlu0 %v7192
          %v7194 = vpop.xlane.xlu0 %7193
          %v7195 = vmul.f32 %v7149, %v682
          %v7196 = vmul.f32 %v7152, %v682
          %v7197 = vmul.f32 %v7155, %v682
          %v7198 = vmul.f32 %v7158, %v682
          %v7199 = vmul.f32 %v7161, %v682
          %v7200 = vmul.f32 %v7164, %v682
          %v7201 = vmul.f32 %v7167, %v682
          %v7202 = vmul.f32 %v7170, %v682
          %v7203 = vmul.f32 %v7173, %v682
          %v7204 = vmul.f32 %v7176, %v682
          %v7205 = vmul.f32 %v7179, %v682
          %v7206 = vmul.f32 %v7182, %v682
          %v7207 = vmul.f32 %v7185, %v682
          %v7208 = vmul.f32 %v7188, %v682
          %v7209 = vmul.f32 %v7191, %v682
          %v7210 = vmul.f32 %v7194, %v682
          %v7211 = vadd.f32 %v7195, 1e-06
          %v7212 = vadd.f32 %v7196, 1e-06
          %v7213 = vadd.f32 %v7197, 1e-06
          %v7214 = vadd.f32 %v7198, 1e-06
          %v7215 = vadd.f32 %v7199, 1e-06
          %v7216 = vadd.f32 %v7200, 1e-06
          %v7217 = vadd.f32 %v7201, 1e-06
          %v7218 = vadd.f32 %v7202, 1e-06
          %v7219 = vadd.f32 %v7203, 1e-06
          %v7220 = vadd.f32 %v7204, 1e-06
          %v7221 = vadd.f32 %v7205, 1e-06
          %v7222 = vadd.f32 %v7206, 1e-06
          %v7223 = vadd.f32 %v7207, 1e-06
          %v7224 = vadd.f32 %v7208, 1e-06
          %v7225 = vadd.f32 %v7209, 1e-06
          %v7226 = vadd.f32 %v7210, 1e-06
          %v7227 = vrsqrt.pop %v7211
          %v7228 = vmul.f32 %v7227, %v7211
          %v7229 = vmul.f32 %v7228, %v7227
          %v7230 = vmul.f32 0.5, %v7229
          %v7231 = vsub.f32 1.5, %v7230
          %v7232 = vmul.f32 %v7227, %v7231
          %vm7233 = vweird.f32 %v7211
          %vm7234 = vweird.f32 %v7227
          %vm7235 = vmor %vm7233, %vm7234
          %v7236 = vsel %vm7235, %v7227, %v7232
          %v7237 = vrsqrt.pop %v7212
          %v7238 = vmul.f32 %v7237, %v7212
          %v7239 = vmul.f32 %v7238, %v7237
          %v7240 = vmul.f32 0.5, %v7239
          %v7241 = vsub.f32 1.5, %v7240
          %v7242 = vmul.f32 %v7237, %v7241
          %vm7243 = vweird.f32 %v7212
          %vm7244 = vweird.f32 %v7237
          %vm7245 = vmor %vm7243, %vm7244
          %v7246 = vsel %vm7245, %v7237, %v7242
          %v7247 = vrsqrt.pop %v7213
          %v7248 = vmul.f32 %v7247, %v7213
          %v7249 = vmul.f32 %v7248, %v7247
          %v7250 = vmul.f32 0.5, %v7249
          %v7251 = vsub.f32 1.5, %v7250
          %v7252 = vmul.f32 %v7247, %v7251
          %vm7253 = vweird.f32 %v7213
          %vm7254 = vweird.f32 %v7247
          %vm7255 = vmor %vm7253, %vm7254
          %v7256 = vsel %vm7255, %v7247, %v7252
          %v7257 = vrsqrt.pop %v7214
          %v7258 = vmul.f32 %v7257, %v7214
          %v7259 = vmul.f32 %v7258, %v7257
          %v7260 = vmul.f32 0.5, %v7259
          %v7261 = vsub.f32 1.5, %v7260
          %v7262 = vmul.f32 %v7257, %v7261
          %vm7263 = vweird.f32 %v7214
          %vm7264 = vweird.f32 %v7257
          %vm7265 = vmor %vm7263, %vm7264
          %v7266 = vsel %vm7265, %v7257, %v7262
          %v7267 = vrsqrt.pop %v7215
          %v7268 = vmul.f32 %v7267, %v7215
          %v7269 = vmul.f32 %v7268, %v7267
          %v7270 = vmul.f32 0.5, %v7269
          %v7271 = vsub.f32 1.5, %v7270
          %v7272 = vmul.f32 %v7267, %v7271
          %vm7273 = vweird.f32 %v7215
          %vm7274 = vweird.f32 %v7267
          %vm7275 = vmor %vm7273, %vm7274
          %v7276 = vsel %vm7275, %v7267, %v7272
          %v7277 = vrsqrt.pop %v7216
          %v7278 = vmul.f32 %v7277, %v7216
          %v7279 = vmul.f32 %v7278, %v7277
          %v7280 = vmul.f32 0.5, %v7279
          %v7281 = vsub.f32 1.5, %v7280
          %v7282 = vmul.f32 %v7277, %v7281
          %vm7283 = vweird.f32 %v7216
          %vm7284 = vweird.f32 %v7277
          %vm7285 = vmor %vm7283, %vm7284
          %v7286 = vsel %vm7285, %v7277, %v7282
          %v7287 = vrsqrt.pop %v7217
          %v7288 = vmul.f32 %v7287, %v7217
          %v7289 = vmul.f32 %v7288, %v7287
          %v7290 = vmul.f32 0.5, %v7289
          %v7291 = vsub.f32 1.5, %v7290
          %v7292 = vmul.f32 %v7287, %v7291
          %vm7293 = vweird.f32 %v7217
          %vm7294 = vweird.f32 %v7287
          %vm7295 = vmor %vm7293, %vm7294
          %v7296 = vsel %vm7295, %v7287, %v7292
          %v7297 = vrsqrt.pop %v7218
          %v7298 = vmul.f32 %v7297, %v7218
          %v7299 = vmul.f32 %v7298, %v7297
          %v7300 = vmul.f32 0.5, %v7299
          %v7301 = vsub.f32 1.5, %v7300
          %v7302 = vmul.f32 %v7297, %v7301
          %vm7303 = vweird.f32 %v7218
          %vm7304 = vweird.f32 %v7297
          %vm7305 = vmor %vm7303, %vm7304
          %v7306 = vsel %vm7305, %v7297, %v7302
          %v7307 = vrsqrt.pop %v7219
          %v7308 = vmul.f32 %v7307, %v7219
          %v7309 = vmul.f32 %v7308, %v7307
          %v7310 = vmul.f32 0.5, %v7309
          %v7311 = vsub.f32 1.5, %v7310
          %v7312 = vmul.f32 %v7307, %v7311
          %vm7313 = vweird.f32 %v7219
          %vm7314 = vweird.f32 %v7307
          %vm7315 = vmor %vm7313, %vm7314
          %v7316 = vsel %vm7315, %v7307, %v7312
          %v7317 = vrsqrt.pop %v7220
          %v7318 = vmul.f32 %v7317, %v7220
          %v7319 = vmul.f32 %v7318, %v7317
          %v7320 = vmul.f32 0.5, %v7319
          %v7321 = vsub.f32 1.5, %v7320
          %v7322 = vmul.f32 %v7317, %v7321
          %vm7323 = vweird.f32 %v7220
          %vm7324 = vweird.f32 %v7317
          %vm7325 = vmor %vm7323, %vm7324
          %v7326 = vsel %vm7325, %v7317, %v7322
          %v7327 = vrsqrt.pop %v7221
          %v7328 = vmul.f32 %v7327, %v7221
          %v7329 = vmul.f32 %v7328, %v7327
          %v7330 = vmul.f32 0.5, %v7329
          %v7331 = vsub.f32 1.5, %v7330
          %v7332 = vmul.f32 %v7327, %v7331
          %vm7333 = vweird.f32 %v7221
          %vm7334 = vweird.f32 %v7327
          %vm7335 = vmor %vm7333, %vm7334
          %v7336 = vsel %vm7335, %v7327, %v7332
          %v7337 = vrsqrt.pop %v7222
          %v7338 = vmul.f32 %v7337, %v7222
          %v7339 = vmul.f32 %v7338, %v7337
          %v7340 = vmul.f32 0.5, %v7339
          %v7341 = vsub.f32 1.5, %v7340
          %v7342 = vmul.f32 %v7337, %v7341
          %vm7343 = vweird.f32 %v7222
          %vm7344 = vweird.f32 %v7337
          %vm7345 = vmor %vm7343, %vm7344
          %v7346 = vsel %vm7345, %v7337, %v7342
          %v7347 = vrsqrt.pop %v7223
          %v7348 = vmul.f32 %v7347, %v7223
          %v7349 = vmul.f32 %v7348, %v7347
          %v7350 = vmul.f32 0.5, %v7349
          %v7351 = vsub.f32 1.5, %v7350
          %v7352 = vmul.f32 %v7347, %v7351
          %vm7353 = vweird.f32 %v7223
          %vm7354 = vweird.f32 %v7347
          %vm7355 = vmor %vm7353, %vm7354
          %v7356 = vsel %vm7355, %v7347, %v7352
          %v7357 = vrsqrt.pop %v7224
          %v7358 = vmul.f32 %v7357, %v7224
          %v7359 = vmul.f32 %v7358, %v7357
          %v7360 = vmul.f32 0.5, %v7359
          %v7361 = vsub.f32 1.5, %v7360
          %v7362 = vmul.f32 %v7357, %v7361
          %vm7363 = vweird.f32 %v7224
          %vm7364 = vweird.f32 %v7357
          %vm7365 = vmor %vm7363, %vm7364
          %v7366 = vsel %vm7365, %v7357, %v7362
          %v7367 = vrsqrt.pop %v7225
          %v7368 = vmul.f32 %v7367, %v7225
          %v7369 = vmul.f32 %v7368, %v7367
          %v7370 = vmul.f32 0.5, %v7369
          %v7371 = vsub.f32 1.5, %v7370
          %v7372 = vmul.f32 %v7367, %v7371
          %vm7373 = vweird.f32 %v7225
          %vm7374 = vweird.f32 %v7367
          %vm7375 = vmor %vm7373, %vm7374
          %v7376 = vsel %vm7375, %v7367, %v7372
          %v7377 = vrsqrt.pop %v7226
          %v7378 = vmul.f32 %v7377, %v7226
          %v7379 = vmul.f32 %v7378, %v7377
          %v7380 = vmul.f32 0.5, %v7379
          %v7381 = vsub.f32 1.5, %v7380
          %v7382 = vmul.f32 %v7377, %v7381
          %vm7383 = vweird.f32 %v7226
          %vm7384 = vweird.f32 %v7377
          %vm7385 = vmor %vm7383, %vm7384
          %v7386 = vsel %vm7385, %v7377, %v7382
          %v7387 = vmul.f32 %v7046, %v7236
          %v7388 = vmul.f32 %v7047, %v7236
          %v7389 = vmul.f32 %v7048, %v7246
          %v7390 = vmul.f32 %v7049, %v7246
          %v7391 = vmul.f32 %v7050, %v7256
          %v7392 = vmul.f32 %v7051, %v7256
          %v7393 = vmul.f32 %v7052, %v7266
          %v7394 = vmul.f32 %v7053, %v7266
          %v7395 = vmul.f32 %v7054, %v7276
          %v7396 = vmul.f32 %v7055, %v7276
          %v7397 = vmul.f32 %v7056, %v7286
          %v7398 = vmul.f32 %v7057, %v7286
          %v7399 = vmul.f32 %v7058, %v7296
          %v7400 = vmul.f32 %v7059, %v7296
          %v7401 = vmul.f32 %v7060, %v7306
          %v7402 = vmul.f32 %v7061, %v7306
          %v7403 = vmul.f32 %v7062, %v7316
          %v7404 = vmul.f32 %v7063, %v7316
          %v7405 = vmul.f32 %v7064, %v7326
          %v7406 = vmul.f32 %v7065, %v7326
          %v7407 = vmul.f32 %v7066, %v7336
          %v7408 = vmul.f32 %v7067, %v7336
          %v7409 = vmul.f32 %v7068, %v7346
          %v7410 = vmul.f32 %v7069, %v7346
          %v7411 = vmul.f32 %v7070, %v7356
          %v7412 = vmul.f32 %v7071, %v7356
          %v7413 = vmul.f32 %v7072, %v7366
          %v7414 = vmul.f32 %v7073, %v7366
          %v7415 = vmul.f32 %v7074, %v7376
          %v7416 = vmul.f32 %v7075, %v7376
          %v7417 = vmul.f32 %v7076, %v7386
          %v7418 = vmul.f32 %v7077, %v7386
          %v7420 = vperm.slane %v7114, 0
          %v7421 = vperm.slane %v7114, 1
          %v7424 = vmul.f32 %v7387, %v7420
          %v7425 = vmul.f32 %v7388, %v7421
          %v7426 = vmul.f32 %v7389, %v7420
          %v7427 = vmul.f32 %v7390, %v7421
          %v7428 = vmul.f32 %v7391, %v7420
          %v7429 = vmul.f32 %v7392, %v7421
          %v7430 = vmul.f32 %v7393, %v7420
          %v7431 = vmul.f32 %v7394, %v7421
          %v7432 = vmul.f32 %v7395, %v7420
          %v7433 = vmul.f32 %v7396, %v7421
          %v7434 = vmul.f32 %v7397, %v7420
          %v7435 = vmul.f32 %v7398, %v7421
          %v7436 = vmul.f32 %v7399, %v7420
          %v7437 = vmul.f32 %v7400, %v7421
          %v7438 = vmul.f32 %v7401, %v7420
          %v7439 = vmul.f32 %v7402, %v7421
          %v7440 = vmul.f32 %v7403, %v7420
          %v7441 = vmul.f32 %v7404, %v7421
          %v7442 = vmul.f32 %v7405, %v7420
          %v7443 = vmul.f32 %v7406, %v7421
          %v7444 = vmul.f32 %v7407, %v7420
          %v7445 = vmul.f32 %v7408, %v7421
          %v7446 = vmul.f32 %v7409, %v7420
          %v7447 = vmul.f32 %v7410, %v7421
          %v7448 = vmul.f32 %v7411, %v7420
          %v7449 = vmul.f32 %v7412, %v7421
          %v7450 = vmul.f32 %v7413, %v7420
          %v7451 = vmul.f32 %v7414, %v7421
          %v7452 = vmul.f32 %v7415, %v7420
          %v7453 = vmul.f32 %v7416, %v7421
          %v7454 = vmul.f32 %v7417, %v7420
          %v7455 = vmul.f32 %v7418, %v7421
          %7456 = vst [vmem:[%s356] sm:$0xff] %v7424
          %7457 = vst [vmem:[%s356 + $0x8] sm:$0xff] %v7425
          %7458 = vst [vmem:[%s356 + $0x10] sm:$0xff] %v7426
          %7459 = vst [vmem:[%s356 + $0x18] sm:$0xff] %v7427
          %7460 = vst [vmem:[%s356 + $0x20] sm:$0xff] %v7428
          %7461 = vst [vmem:[%s356 + $0x28] sm:$0xff] %v7429
          %7462 = vst [vmem:[%s356 + $0x30] sm:$0xff] %v7430
          %7463 = vst [vmem:[%s356 + $0x38] sm:$0xff] %v7431
          %7464 = vst [vmem:[%s356 + $0x40] sm:$0xff] %v7432
          %7465 = vst [vmem:[%s356 + $0x48] sm:$0xff] %v7433
          %7466 = vst [vmem:[%s356 + $0x50] sm:$0xff] %v7434
          %7467 = vst [vmem:[%s356 + $0x58] sm:$0xff] %v7435
          %7468 = vst [vmem:[%s356 + $0x60] sm:$0xff] %v7436
          %7469 = vst [vmem:[%s356 + $0x68] sm:$0xff] %v7437
          %7470 = vst [vmem:[%s356 + $0x70] sm:$0xff] %v7438
          %7471 = vst [vmem:[%s356 + $0x78] sm:$0xff] %v7439
          %7472 = vst [vmem:[%s356 + $0x80] sm:$0xff] %v7440
          %7473 = vst [vmem:[%s356 + $0x88] sm:$0xff] %v7441
          %7474 = vst [vmem:[%s356 + $0x90] sm:$0xff] %v7442
          %7475 = vst [vmem:[%s356 + $0x98] sm:$0xff] %v7443
          %7476 = vst [vmem:[%s356 + $0xa0] sm:$0xff] %v7444
          %7477 = vst [vmem:[%s356 + $0xa8] sm:$0xff] %v7445
          %7478 = vst [vmem:[%s356 + $0xb0] sm:$0xff] %v7446
          %7479 = vst [vmem:[%s356 + $0xb8] sm:$0xff] %v7447
          %7480 = vst [vmem:[%s356 + $0xc0] sm:$0xff] %v7448
          %7481 = vst [vmem:[%s356 + $0xc8] sm:$0xff] %v7449
          %7482 = vst [vmem:[%s356 + $0xd0] sm:$0xff] %v7450
          %7483 = vst [vmem:[%s356 + $0xd8] sm:$0xff] %v7451
          %7484 = vst [vmem:[%s356 + $0xe0] sm:$0xff] %v7452
          %7485 = vst [vmem:[%s356 + $0xe8] sm:$0xff] %v7453
          %7486 = vst [vmem:[%s356 + $0xf0] sm:$0xff] %v7454
          %7487 = vst [vmem:[%s356 + $0xf8] sm:$0xff] %v7455
        $region96: #{encoder_forward.1} parent=47 // pred_fallthru
          _
        %s7488 = sand.u32 %s220, 1
        %s7489 = scalar_lea.sflag [#allocation6], %s7488
        %s7490 = sand.u32 %s220, 1
        %s7491 = smul.addr %s7490, 256
        %s7492 = scalar_lea.vmem [#allocation5], %s7491
        // Predicated region
        $region97: #{encoder_forward.1} parent=47 // pred_check
          %p7493 = pneg %p230
        $region98: #{encoder_forward.1} parent=47 // pred_check_branch
          %7495 = sbr.rel (%p7493) target = $region100
        $region99: #{encoder_forward.1} parent=47 // pred_region
          %s7496 = smul.u32 16, %s27
          %7498 = vsyncadd %s7489, 0
          %s7499 = smul.addr %s7496, 2
          %s7500 = smul.addr %s7499, 8
          %s7501 = scalar_lea.hbm %s9, %s7500
          %s7502 = sshll.u32 %s7492, 4
          %s7503 = int_to_ptr.vmem [resolvable:$true] %s7502
          %s7504 = sshll.u32 %s7501, 4
          %s7505 = int_to_ptr.hbm [resolvable:$true] %s7504
          %7510 = dma.vmem_to_hbm [thread:$0]  %s7503, 4096, %s7505, %s7489, 256, 256, 16
        $region100: #{encoder_forward.1} parent=47 // pred_fallthru
          _
      $region48: #{encoder_forward.1} parent=5 // pred_fallthru
        _
      %p7511 = scmp.le.s32.totalorder 2, %s18
      // Predicated region
      $region101: #{encoder_forward.1} parent=5 // pred_check
        %p7512 = pneg %p7511
      $region102: #{encoder_forward.1} parent=5 // pred_check_branch
        %7514 = sbr.rel (%p7512) target = $region104
      $region103: #{encoder_forward.1} parent=5 // pred_region
        %s7515 = ssub.s32 %s18, 2
        // Predicated region
        $region105: #{encoder_forward.1} parent=103 // pred_check
          %p7516 = pneg %p236
        $region106: #{encoder_forward.1} parent=103 // pred_check_branch
          %7518 = sbr.rel (%p7516) target = $region108
        $region107: #{encoder_forward.1} parent=103 // pred_region
          %s7519 = sand.u32 %s221, 1
          %s7520 = scalar_lea.sflag [#allocation6], %s7519
          %s7521 = sand.u32 %s221, 1
          %s7522 = smul.addr %s7521, 256
          %s7523 = scalar_lea.vmem [#allocation5], %s7522
          %7525 = dma.done %s7520, 4096
        $region108: #{encoder_forward.1} parent=103 // pred_fallthru
          _
      $region104: #{encoder_forward.1} parent=5 // pred_fallthru
        _
    $region6: #{encoder_forward.1} parent=1 // loop_footer
      %s22 = sadd.s32 1, %s18
    $region7: #{encoder_forward.1} parent=1 // loop_footer_branch
      %17 = sbr.rel target = $region3
    $region8: #{encoder_forward.1} parent=1 // loop_exit
      _
    %7526 = vsyncpa [#allocation6], 1
    %s7527 = scalar_lea.sflag [#allocation6], 1
    %7528 = vsyncpa %s7527, 1

</llo_original>
